<compile_context>
chip_gen: v7x
topology: tpu7x:2x2x1
jax: 0.10.0
libtpu: 0.0.40
codegen_flags: <defaults>
</compile_context>

<pallas_src>
import functools

import jax
import jax.numpy as jnp
from jax.experimental import pallas as pl
from jax.experimental.pallas import tpu as pltpu

CH = 16          # channels of ResidualUnit
RED = 16         # CALayer reduction (standard RCAN default)
HID = max(CH // RED, 1)
BN_EPS = 1e-5


# --------------------------------------------------------------------------
# Fused Pallas kernel: one image per grid step, everything VMEM-resident.
# --------------------------------------------------------------------------
def _unit_kernel(x_ref, rsh_ref,
                 t1_ref, sc1_ref, sh1_ref, t2_ref, b2_ref,
                 tcx_ref, tcr_ref, cb_ref,
                 caw1_ref, cab1_ref, caw2_ref, cab2_ref,
                 out_ref, *, n_blocks, hid, hw_inv):
    """Fused ResidualUnit forward for one image.

    x_ref   : (1, H, L)            L = W*C, lane-dense row-flattened NHWC image
    rsh_ref : (2, H, H)            row-shift matrices (a[h-1] / a[h+1], zero edges)
    t1_ref  : (n_blocks, 3, L, L)  block conv1 Toeplitz weights (one per row tap)
    sc1/sh1 : (n_blocks, 1, L)     folded conv1-bias + eval-mode BN affine (tiled)
    t2_ref  : (n_blocks, 3, L, L)  block conv2 Toeplitz weights
    b2_ref  : (n_blocks, 1, L)     conv2 bias (tiled)
    tcx/tcr : (3, L, L)            final-conv Toeplitz weights (x half / res half)
    cb_ref  : (1, L)               final-conv bias (tiled)
    caw1    : (HID, L), cab1: (HID, 1), caw2: (HID, L), cab2: (1, L)
    out_ref : (1, H, L)
    """
    f32 = jnp.float32

    def conv3x3(a, tap):
        # a: (H, L).  tap(dh) -> (L, L) Toeplitz weight for row offset dh-1.
        up = jnp.dot(rsh_ref[0], a, preferred_element_type=f32)   # a[h-1], row 0 -> 0
        dn = jnp.dot(rsh_ref[1], a, preferred_element_type=f32)   # a[h+1], row H-1 -> 0
        acc = jnp.dot(up, tap(0), preferred_element_type=f32)
        acc = acc + jnp.dot(a, tap(1), preferred_element_type=f32)
        acc = acc + jnp.dot(dn, tap(2), preferred_element_type=f32)
        return acc

    x0 = x_ref[0].astype(f32)                                     # (H, L)
    cur = x0
    for blk in range(n_blocks):
        # residual = relu(bn1(conv1(cur)))   (bias + BN folded into scale/shift)
        r = conv3x3(cur, lambda dh: t1_ref[blk, dh])
        r = jnp.maximum(r * sc1_ref[blk] + sh1_ref[blk], 0.0)
        # cur = relu(conv2(residual) + cur)
        o = conv3x3(r, lambda dh: t2_ref[blk, dh]) + b2_ref[blk]
        cur = jnp.maximum(o + cur, 0.0)

    # final conv over cat([x, res], channel) split into two accumulating convs
    y = (conv3x3(x0, lambda dh: tcx_ref[dh])
         + conv3x3(cur, lambda dh: tcr_ref[dh])
         + cb_ref[...])                                           # (H, L)

    # channel attention: y * sigmoid(W2 relu(W1 avgpool(y) + b1) + b2)
    # avgpool + 1x1 convs done with VPU mults + reductions (no tiny MXU dots).
    colsum = jnp.sum(y, axis=0, keepdims=True)                    # (1, L)
    s_pre = cab2_ref[...]                                         # (1, L)
    for h in range(hid):
        z = (jnp.sum(colsum * caw1_ref[h:h + 1, :], axis=1, keepdims=True) * hw_inv
             + cab1_ref[h:h + 1, :])                              # (1, 1)
        z = jnp.maximum(z, 0.0)
        s_pre = s_pre + z * caw2_ref[h:h + 1, :]                  # (1, L)
    s = 1.0 / (1.0 + jnp.exp(-s_pre))                             # sigmoid
    out_ref[0] = (y * s).astype(out_ref.dtype)


# --------------------------------------------------------------------------
# One-time parameter preparation (Toeplitz expansion + lane tiling).
# --------------------------------------------------------------------------
def _toeplitz(w3, width):
    """(3,3,Cin,Cout) conv weight -> (3, width*Cin, width*Cout) row-tap Toeplitz."""
    taps = []
    for dh in range(3):
        t = None
        for dw in range(3):
            # shift[wi, wo] = 1  iff  wi == wo + dw - 1  (width zero-pad built in)
            shift = jnp.eye(width, width, 1 - dw, dtype=jnp.float32)
            term = jnp.kron(shift, w3[dh, dw].astype(jnp.float32))
            t = term if t is None else t + term
        taps.append(t)
    return jnp.stack(taps, axis=0)


def _tile_lanes(v, width):
    """(C,) per-channel vector -> (1, W*C) lane-tiled vector."""
    return jnp.tile(jnp.asarray(v, jnp.float32).reshape(1, -1), (1, width))


def prepare_params(params, height, width):
    t1, t2, sc1, sh1, b2 = [], [], [], [], []
    for blkp in params["blocks"]:
        t1.append(_toeplitz(blkp["w1"], width))
        t2.append(_toeplitz(blkp["w2"], width))
        s = blkp["gamma"] / jnp.sqrt(blkp["var"] + BN_EPS)         # eval-mode BN fold
        sc1.append(_tile_lanes(s, width))
        sh1.append(_tile_lanes(s * blkp["b1"] + blkp["beta"] - s * blkp["mean"], width))
        b2.append(_tile_lanes(blkp["b2"], width))
    c = CH
    return dict(
        rsh=jnp.stack([jnp.eye(height, height, -1, dtype=jnp.float32),
                       jnp.eye(height, height, 1, dtype=jnp.float32)]),
        t1=jnp.stack(t1), t2=jnp.stack(t2),
        sc1=jnp.stack(sc1), sh1=jnp.stack(sh1), b2=jnp.stack(b2),
        tcx=_toeplitz(params["conv_w"][:, :, :c, :], width),       # cat order [x, res]
        tcr=_toeplitz(params["conv_w"][:, :, c:, :], width),
        cb=_tile_lanes(params["conv_b"], width),
        caw1=jnp.tile(params["ca"]["w1"].astype(jnp.float32), (1, width)),      # (HID, L)
        cab1=params["ca"]["b1"].astype(jnp.float32).reshape(HID, 1),            # (HID, 1)
        caw2=jnp.tile(params["ca"]["w2"].T.astype(jnp.float32), (1, width)),    # (HID, L)
        cab2=_tile_lanes(params["ca"]["b2"], width),                            # (1, L)
    )


# --------------------------------------------------------------------------
# pallas_call wrapper
# --------------------------------------------------------------------------
def residual_unit_fused(x_nhwc, kp):
    n, h, w, c = x_nhwc.shape
    l = w * c
    assert h % 8 == 0 and l % 128 == 0, "kernel assumes (8,128)-aligned tiles"
    n_blocks = kp["t1"].shape[0]
    hid = kp["caw1"].shape[0]

    x2 = x_nhwc.reshape(n, h, l)                                   # free, contiguous

    kernel = functools.partial(_unit_kernel, n_blocks=n_blocks, hid=hid,
                               hw_inv=1.0 / float(h * w))

    def full(shape):
        return pl.BlockSpec(shape, lambda i, _r=len(shape): (0,) * _r)

    out2 = pl.pallas_call(
        kernel,
        out_shape=jax.ShapeDtypeStruct((n, h, l), jnp.float32),
        grid=(n,),
        in_specs=[
            pl.BlockSpec((1, h, l), lambda i: (i, 0, 0)),
            full(kp["rsh"].shape),
            full(kp["t1"].shape), full(kp["sc1"].shape), full(kp["sh1"].shape),
            full(kp["t2"].shape), full(kp["b2"].shape),
            full(kp["tcx"].shape), full(kp["tcr"].shape), full(kp["cb"].shape),
            full(kp["caw1"].shape), full(kp["cab1"].shape),
            full(kp["caw2"].shape), full(kp["cab2"].shape),
        ],
        out_specs=pl.BlockSpec((1, h, l), lambda i: (i, 0, 0)),
        compiler_params=pltpu.CompilerParams(
            dimension_semantics=("parallel",),
            vmem_limit_bytes=32 * 1024 * 1024,
        ),
    )(x2, kp["rsh"], kp["t1"], kp["sc1"], kp["sh1"], kp["t2"], kp["b2"],
      kp["tcx"], kp["tcr"], kp["cb"],
      kp["caw1"], kp["cab1"], kp["caw2"], kp["cab2"])
    return out2.reshape(n, h, w, c)


# --------------------------------------------------------------------------
# Deterministic parameter init (PyTorch-like uniform bounds)
# --------------------------------------------------------------------------
def _conv_init(key, cin, cout, ksize):
    k1, k2 = jax.random.split(key)
    bound = 1.0 / jnp.sqrt(jnp.float32(cin * ksize * ksize))
    w = jax.random.uniform(k1, (ksize, ksize, cin, cout), jnp.float32, -bound, bound)
    b = jax.random.uniform(k2, (cout,), jnp.float32, -bound, bound)
    return w, b


def _block_init(key):
    k = jax.random.split(key, 6)
    w1, b1 = _conv_init(k[0], CH, CH, 3)
    w2, b2 = _conv_init(k[1], CH, CH, 3)
    gamma = 1.0 + 0.1 * jax.random.normal(k[2], (CH,), jnp.float32)
    beta = 0.1 * jax.random.normal(k[3], (CH,), jnp.float32)
    mean = 0.05 * jax.random.normal(k[4], (CH,), jnp.float32)
    var = 1.0 + 0.1 * jnp.abs(jax.random.normal(k[5], (CH,), jnp.float32))
    return dict(w1=w1, b1=b1, w2=w2, b2=b2, gamma=gamma, beta=beta, mean=mean, var=var)


def init_params(key):
    keys = jax.random.split(key, 6)
    blocks = [_block_init(keys[i]) for i in range(4)]
    conv_w, conv_b = _conv_init(keys[4], 2 * CH, CH, 3)
    # CALayer: Conv2d(C, C//r, 1) and Conv2d(C//r, C, 1), torch (out, in) layout.
    kw1, kb1, kw2, kb2 = jax.random.split(keys[5], 4)
    bound1 = 1.0 / jnp.sqrt(jnp.float32(CH))
    bound2 = 1.0 / jnp.sqrt(jnp.float32(HID))
    ca = dict(
        w1=jax.random.uniform(kw1, (HID, CH), jnp.float32, -bound1, bound1),
        b1=jax.random.uniform(kb1, (HID,), jnp.float32, -bound1, bound1),
        w2=jax.random.uniform(kw2, (CH, HID), jnp.float32, -bound2, bound2),
        b2=jax.random.uniform(kb2, (CH,), jnp.float32, -bound2, bound2),
    )
    return dict(blocks=blocks, conv_w=conv_w, conv_b=conv_b, ca=ca)


# --------------------------------------------------------------------------
if __name__ == "__main__":
    key = jax.random.PRNGKey(0)
    k_x, k_p = jax.random.split(key)

    N, H, W = 2, 16, 16
    x_nchw = jax.random.normal(k_x, (N, CH, H, W), jnp.float32)    # PyTorch layout
    params = init_params(k_p)
    kparams = prepare_params(params, H, W)                         # one-time weight prep

    @jax.jit
    def forward(x, kp):
        x_nhwc = jnp.transpose(x, (0, 2, 3, 1))                    # NCHW -> NHWC (glue)
        out_nhwc = residual_unit_fused(x_nhwc, kp)
        return jnp.transpose(out_nhwc, (0, 3, 1, 2))               # back to NCHW

    out = forward(x_nchw, kparams)
    jax.block_until_ready(out)
    assert out.shape == (N, CH, H, W)
    print("KERNEL_OK")
</pallas_src>

<mosaic_0001>
module attributes {stable_mosaic.version = 11 : i64} {
  func.func @_unit_kernel(%arg0: i32, %arg1: memref<1x16x256xf32, #tpu.memory_space<vmem>>, %arg2: memref<2x16x16xf32, #tpu.memory_space<vmem>>, %arg3: memref<4x3x256x256xf32, #tpu.memory_space<vmem>>, %arg4: memref<4x1x256xf32, #tpu.memory_space<vmem>>, %arg5: memref<4x1x256xf32, #tpu.memory_space<vmem>>, %arg6: memref<4x3x256x256xf32, #tpu.memory_space<vmem>>, %arg7: memref<4x1x256xf32, #tpu.memory_space<vmem>>, %arg8: memref<3x256x256xf32, #tpu.memory_space<vmem>>, %arg9: memref<3x256x256xf32, #tpu.memory_space<vmem>>, %arg10: memref<1x256xf32, #tpu.memory_space<vmem>>, %arg11: memref<1x256xf32, #tpu.memory_space<vmem>>, %arg12: memref<1x1xf32, #tpu.memory_space<vmem>>, %arg13: memref<1x256xf32, #tpu.memory_space<vmem>>, %arg14: memref<1x256xf32, #tpu.memory_space<vmem>>, %arg15: memref<1x16x256xf32, #tpu.memory_space<vmem>>) attributes {dimension_semantics = [#tpu.dimension_semantics<parallel>], iteration_bounds = array<i64: 2>, scalar_prefetch = 0 : i64, scratch_operands = 0 : i64, tpu.core_type = #tpu.core_type<tc>, window_params = [{transform_indices = @transform_0, window_bounds = array<i64: 1, 16, 256>}, {pipeline_mode = #tpu.pipeline_mode<synchronous>, transform_indices = @transform_1, window_bounds = array<i64: 2, 16, 16>}, {pipeline_mode = #tpu.pipeline_mode<synchronous>, transform_indices = @transform_2, window_bounds = array<i64: 4, 3, 256, 256>}, {pipeline_mode = #tpu.pipeline_mode<synchronous>, transform_indices = @transform_3, window_bounds = array<i64: 4, 1, 256>}, {pipeline_mode = #tpu.pipeline_mode<synchronous>, transform_indices = @transform_4, window_bounds = array<i64: 4, 1, 256>}, {pipeline_mode = #tpu.pipeline_mode<synchronous>, transform_indices = @transform_5, window_bounds = array<i64: 4, 3, 256, 256>}, {pipeline_mode = #tpu.pipeline_mode<synchronous>, transform_indices = @transform_6, window_bounds = array<i64: 4, 1, 256>}, {pipeline_mode = #tpu.pipeline_mode<synchronous>, transform_indices = @transform_7, window_bounds = array<i64: 3, 256, 256>}, {pipeline_mode = #tpu.pipeline_mode<synchronous>, transform_indices = @transform_8, window_bounds = array<i64: 3, 256, 256>}, {pipeline_mode = #tpu.pipeline_mode<synchronous>, transform_indices = @transform_9, window_bounds = array<i64: 1, 256>}, {pipeline_mode = #tpu.pipeline_mode<synchronous>, transform_indices = @transform_10, window_bounds = array<i64: 1, 256>}, {pipeline_mode = #tpu.pipeline_mode<synchronous>, transform_indices = @transform_11, window_bounds = array<i64: 1, 1>}, {pipeline_mode = #tpu.pipeline_mode<synchronous>, transform_indices = @transform_12, window_bounds = array<i64: 1, 256>}, {pipeline_mode = #tpu.pipeline_mode<synchronous>, transform_indices = @transform_13, window_bounds = array<i64: 1, 256>}, {transform_indices = @transform_14, window_bounds = array<i64: 1, 16, 256>}]} {
    %c0 = arith.constant 0 : index
    %c0_0 = arith.constant 0 : index
    %c0_1 = arith.constant 0 : index
    %0 = vector.load %arg1[%c0, %c0_0, %c0_1] : memref<1x16x256xf32, #tpu.memory_space<vmem>>, vector<1x16x256xf32>
    %1 = vector.shape_cast %0 : vector<1x16x256xf32> to vector<16x256xf32>
    %c0_2 = arith.constant 0 : index
    %c0_3 = arith.constant 0 : index
    %c0_4 = arith.constant 0 : index
    %2 = vector.load %arg2[%c0_2, %c0_3, %c0_4] : memref<2x16x16xf32, #tpu.memory_space<vmem>>, vector<1x16x16xf32>
    %3 = vector.shape_cast %2 : vector<1x16x16xf32> to vector<16x16xf32>
    %cst = arith.constant dense<0.000000e+00> : vector<16x256xf32>
    %4 = tpu.matmul %3, %1, %cst {dimension_numbers = #tpu.dot_dimension_numbers<[1], [0], [0], [1], [0, 0, 1, 1], [], []>} : vector<16x16xf32>, vector<16x256xf32>, vector<16x256xf32> -> vector<16x256xf32>
    %c1 = arith.constant 1 : index
    %c0_5 = arith.constant 0 : index
    %c0_6 = arith.constant 0 : index
    %5 = vector.load %arg2[%c1, %c0_5, %c0_6] : memref<2x16x16xf32, #tpu.memory_space<vmem>>, vector<1x16x16xf32>
    %6 = vector.shape_cast %5 : vector<1x16x16xf32> to vector<16x16xf32>
    %cst_7 = arith.constant dense<0.000000e+00> : vector<16x256xf32>
    %7 = tpu.matmul %6, %1, %cst_7 {dimension_numbers = #tpu.dot_dimension_numbers<[1], [0], [0], [1], [0, 0, 1, 1], [], []>} : vector<16x16xf32>, vector<16x256xf32>, vector<16x256xf32> -> vector<16x256xf32>
    %c0_8 = arith.constant 0 : index
    %c0_9 = arith.constant 0 : index
    %c0_10 = arith.constant 0 : index
    %c0_11 = arith.constant 0 : index
    %8 = vector.load %arg3[%c0_8, %c0_9, %c0_10, %c0_11] : memref<4x3x256x256xf32, #tpu.memory_space<vmem>>, vector<1x1x256x256xf32>
    %9 = vector.shape_cast %8 : vector<1x1x256x256xf32> to vector<256x256xf32>
    %cst_12 = arith.constant dense<0.000000e+00> : vector<16x256xf32>
    %10 = tpu.matmul %4, %9, %cst_12 {dimension_numbers = #tpu.dot_dimension_numbers<[1], [0], [0], [1], [0, 0, 1, 1], [], []>} : vector<16x256xf32>, vector<256x256xf32>, vector<16x256xf32> -> vector<16x256xf32>
    %c0_13 = arith.constant 0 : index
    %c1_14 = arith.constant 1 : index
    %c0_15 = arith.constant 0 : index
    %c0_16 = arith.constant 0 : index
    %11 = vector.load %arg3[%c0_13, %c1_14, %c0_15, %c0_16] : memref<4x3x256x256xf32, #tpu.memory_space<vmem>>, vector<1x1x256x256xf32>
    %12 = vector.shape_cast %11 : vector<1x1x256x256xf32> to vector<256x256xf32>
    %cst_17 = arith.constant dense<0.000000e+00> : vector<16x256xf32>
    %13 = tpu.matmul %1, %12, %cst_17 {dimension_numbers = #tpu.dot_dimension_numbers<[1], [0], [0], [1], [0, 0, 1, 1], [], []>} : vector<16x256xf32>, vector<256x256xf32>, vector<16x256xf32> -> vector<16x256xf32>
    %14 = arith.addf %10, %13 : vector<16x256xf32>
    %c0_18 = arith.constant 0 : index
    %c2 = arith.constant 2 : index
    %c0_19 = arith.constant 0 : index
    %c0_20 = arith.constant 0 : index
    %15 = vector.load %arg3[%c0_18, %c2, %c0_19, %c0_20] : memref<4x3x256x256xf32, #tpu.memory_space<vmem>>, vector<1x1x256x256xf32>
    %16 = vector.shape_cast %15 : vector<1x1x256x256xf32> to vector<256x256xf32>
    %cst_21 = arith.constant dense<0.000000e+00> : vector<16x256xf32>
    %17 = tpu.matmul %7, %16, %cst_21 {dimension_numbers = #tpu.dot_dimension_numbers<[1], [0], [0], [1], [0, 0, 1, 1], [], []>} : vector<16x256xf32>, vector<256x256xf32>, vector<16x256xf32> -> vector<16x256xf32>
    %18 = arith.addf %14, %17 : vector<16x256xf32>
    %c0_22 = arith.constant 0 : index
    %c0_23 = arith.constant 0 : index
    %c0_24 = arith.constant 0 : index
    %19 = vector.load %arg4[%c0_22, %c0_23, %c0_24] : memref<4x1x256xf32, #tpu.memory_space<vmem>>, vector<1x1x256xf32>
    %20 = vector.shape_cast %19 : vector<1x1x256xf32> to vector<1x256xf32>
    %21 = vector.broadcast %20 : vector<1x256xf32> to vector<16x256xf32>
    %22 = arith.mulf %18, %21 : vector<16x256xf32>
    %c0_25 = arith.constant 0 : index
    %c0_26 = arith.constant 0 : index
    %c0_27 = arith.constant 0 : index
    %23 = vector.load %arg5[%c0_25, %c0_26, %c0_27] : memref<4x1x256xf32, #tpu.memory_space<vmem>>, vector<1x1x256xf32>
    %24 = vector.shape_cast %23 : vector<1x1x256xf32> to vector<1x256xf32>
    %25 = vector.broadcast %24 : vector<1x256xf32> to vector<16x256xf32>
    %26 = arith.addf %22, %25 : vector<16x256xf32>
    %cst_28 = arith.constant 0.000000e+00 : f32
    %27 = vector.broadcast %cst_28 : f32 to vector<16x256xf32>
    %28 = arith.maximumf %26, %27 : vector<16x256xf32>
    %c0_29 = arith.constant 0 : index
    %c0_30 = arith.constant 0 : index
    %c0_31 = arith.constant 0 : index
    %29 = vector.load %arg2[%c0_29, %c0_30, %c0_31] : memref<2x16x16xf32, #tpu.memory_space<vmem>>, vector<1x16x16xf32>
    %30 = vector.shape_cast %29 : vector<1x16x16xf32> to vector<16x16xf32>
    %cst_32 = arith.constant dense<0.000000e+00> : vector<16x256xf32>
    %31 = tpu.matmul %30, %28, %cst_32 {dimension_numbers = #tpu.dot_dimension_numbers<[1], [0], [0], [1], [0, 0, 1, 1], [], []>} : vector<16x16xf32>, vector<16x256xf32>, vector<16x256xf32> -> vector<16x256xf32>
    %c1_33 = arith.constant 1 : index
    %c0_34 = arith.constant 0 : index
    %c0_35 = arith.constant 0 : index
    %32 = vector.load %arg2[%c1_33, %c0_34, %c0_35] : memref<2x16x16xf32, #tpu.memory_space<vmem>>, vector<1x16x16xf32>
    %33 = vector.shape_cast %32 : vector<1x16x16xf32> to vector<16x16xf32>
    %cst_36 = arith.constant dense<0.000000e+00> : vector<16x256xf32>
    %34 = tpu.matmul %33, %28, %cst_36 {dimension_numbers = #tpu.dot_dimension_numbers<[1], [0], [0], [1], [0, 0, 1, 1], [], []>} : vector<16x16xf32>, vector<16x256xf32>, vector<16x256xf32> -> vector<16x256xf32>
    %c0_37 = arith.constant 0 : index
    %c0_38 = arith.constant 0 : index
    %c0_39 = arith.constant 0 : index
    %c0_40 = arith.constant 0 : index
    %35 = vector.load %arg6[%c0_37, %c0_38, %c0_39, %c0_40] : memref<4x3x256x256xf32, #tpu.memory_space<vmem>>, vector<1x1x256x256xf32>
    %36 = vector.shape_cast %35 : vector<1x1x256x256xf32> to vector<256x256xf32>
    %cst_41 = arith.constant dense<0.000000e+00> : vector<16x256xf32>
    %37 = tpu.matmul %31, %36, %cst_41 {dimension_numbers = #tpu.dot_dimension_numbers<[1], [0], [0], [1], [0, 0, 1, 1], [], []>} : vector<16x256xf32>, vector<256x256xf32>, vector<16x256xf32> -> vector<16x256xf32>
    %c0_42 = arith.constant 0 : index
    %c1_43 = arith.constant 1 : index
    %c0_44 = arith.constant 0 : index
    %c0_45 = arith.constant 0 : index
    %38 = vector.load %arg6[%c0_42, %c1_43, %c0_44, %c0_45] : memref<4x3x256x256xf32, #tpu.memory_space<vmem>>, vector<1x1x256x256xf32>
    %39 = vector.shape_cast %38 : vector<1x1x256x256xf32> to vector<256x256xf32>
    %cst_46 = arith.constant dense<0.000000e+00> : vector<16x256xf32>
    %40 = tpu.matmul %28, %39, %cst_46 {dimension_numbers = #tpu.dot_dimension_numbers<[1], [0], [0], [1], [0, 0, 1, 1], [], []>} : vector<16x256xf32>, vector<256x256xf32>, vector<16x256xf32> -> vector<16x256xf32>
    %41 = arith.addf %37, %40 : vector<16x256xf32>
    %c0_47 = arith.constant 0 : index
    %c2_48 = arith.constant 2 : index
    %c0_49 = arith.constant 0 : index
    %c0_50 = arith.constant 0 : index
    %42 = vector.load %arg6[%c0_47, %c2_48, %c0_49, %c0_50] : memref<4x3x256x256xf32, #tpu.memory_space<vmem>>, vector<1x1x256x256xf32>
    %43 = vector.shape_cast %42 : vector<1x1x256x256xf32> to vector<256x256xf32>
    %cst_51 = arith.constant dense<0.000000e+00> : vector<16x256xf32>
    %44 = tpu.matmul %34, %43, %cst_51 {dimension_numbers = #tpu.dot_dimension_numbers<[1], [0], [0], [1], [0, 0, 1, 1], [], []>} : vector<16x256xf32>, vector<256x256xf32>, vector<16x256xf32> -> vector<16x256xf32>
    %45 = arith.addf %41, %44 : vector<16x256xf32>
    %c0_52 = arith.constant 0 : index
    %c0_53 = arith.constant 0 : index
    %c0_54 = arith.constant 0 : index
    %46 = vector.load %arg7[%c0_52, %c0_53, %c0_54] : memref<4x1x256xf32, #tpu.memory_space<vmem>>, vector<1x1x256xf32>
    %47 = vector.shape_cast %46 : vector<1x1x256xf32> to vector<1x256xf32>
    %48 = vector.broadcast %47 : vector<1x256xf32> to vector<16x256xf32>
    %49 = arith.addf %45, %48 : vector<16x256xf32>
    %50 = arith.addf %49, %1 : vector<16x256xf32>
    %cst_55 = arith.constant 0.000000e+00 : f32
    %51 = vector.broadcast %cst_55 : f32 to vector<16x256xf32>
    %52 = arith.maximumf %50, %51 : vector<16x256xf32>
    %c0_56 = arith.constant 0 : index
    %c0_57 = arith.constant 0 : index
    %c0_58 = arith.constant 0 : index
    %53 = vector.load %arg2[%c0_56, %c0_57, %c0_58] : memref<2x16x16xf32, #tpu.memory_space<vmem>>, vector<1x16x16xf32>
    %54 = vector.shape_cast %53 : vector<1x16x16xf32> to vector<16x16xf32>
    %cst_59 = arith.constant dense<0.000000e+00> : vector<16x256xf32>
    %55 = tpu.matmul %54, %52, %cst_59 {dimension_numbers = #tpu.dot_dimension_numbers<[1], [0], [0], [1], [0, 0, 1, 1], [], []>} : vector<16x16xf32>, vector<16x256xf32>, vector<16x256xf32> -> vector<16x256xf32>
    %c1_60 = arith.constant 1 : index
    %c0_61 = arith.constant 0 : index
    %c0_62 = arith.constant 0 : index
    %56 = vector.load %arg2[%c1_60, %c0_61, %c0_62] : memref<2x16x16xf32, #tpu.memory_space<vmem>>, vector<1x16x16xf32>
    %57 = vector.shape_cast %56 : vector<1x16x16xf32> to vector<16x16xf32>
    %cst_63 = arith.constant dense<0.000000e+00> : vector<16x256xf32>
    %58 = tpu.matmul %57, %52, %cst_63 {dimension_numbers = #tpu.dot_dimension_numbers<[1], [0], [0], [1], [0, 0, 1, 1], [], []>} : vector<16x16xf32>, vector<16x256xf32>, vector<16x256xf32> -> vector<16x256xf32>
    %c1_64 = arith.constant 1 : index
    %c0_65 = arith.constant 0 : index
    %c0_66 = arith.constant 0 : index
    %c0_67 = arith.constant 0 : index
    %59 = vector.load %arg3[%c1_64, %c0_65, %c0_66, %c0_67] : memref<4x3x256x256xf32, #tpu.memory_space<vmem>>, vector<1x1x256x256xf32>
    %60 = vector.shape_cast %59 : vector<1x1x256x256xf32> to vector<256x256xf32>
    %cst_68 = arith.constant dense<0.000000e+00> : vector<16x256xf32>
    %61 = tpu.matmul %55, %60, %cst_68 {dimension_numbers = #tpu.dot_dimension_numbers<[1], [0], [0], [1], [0, 0, 1, 1], [], []>} : vector<16x256xf32>, vector<256x256xf32>, vector<16x256xf32> -> vector<16x256xf32>
    %c1_69 = arith.constant 1 : index
    %c1_70 = arith.constant 1 : index
    %c0_71 = arith.constant 0 : index
    %c0_72 = arith.constant 0 : index
    %62 = vector.load %arg3[%c1_69, %c1_70, %c0_71, %c0_72] : memref<4x3x256x256xf32, #tpu.memory_space<vmem>>, vector<1x1x256x256xf32>
    %63 = vector.shape_cast %62 : vector<1x1x256x256xf32> to vector<256x256xf32>
    %cst_73 = arith.constant dense<0.000000e+00> : vector<16x256xf32>
    %64 = tpu.matmul %52, %63, %cst_73 {dimension_numbers = #tpu.dot_dimension_numbers<[1], [0], [0], [1], [0, 0, 1, 1], [], []>} : vector<16x256xf32>, vector<256x256xf32>, vector<16x256xf32> -> vector<16x256xf32>
    %65 = arith.addf %61, %64 : vector<16x256xf32>
    %c1_74 = arith.constant 1 : index
    %c2_75 = arith.constant 2 : index
    %c0_76 = arith.constant 0 : index
    %c0_77 = arith.constant 0 : index
    %66 = vector.load %arg3[%c1_74, %c2_75, %c0_76, %c0_77] : memref<4x3x256x256xf32, #tpu.memory_space<vmem>>, vector<1x1x256x256xf32>
    %67 = vector.shape_cast %66 : vector<1x1x256x256xf32> to vector<256x256xf32>
    %cst_78 = arith.constant dense<0.000000e+00> : vector<16x256xf32>
    %68 = tpu.matmul %58, %67, %cst_78 {dimension_numbers = #tpu.dot_dimension_numbers<[1], [0], [0], [1], [0, 0, 1, 1], [], []>} : vector<16x256xf32>, vector<256x256xf32>, vector<16x256xf32> -> vector<16x256xf32>
    %69 = arith.addf %65, %68 : vector<16x256xf32>
    %c1_79 = arith.constant 1 : index
    %c0_80 = arith.constant 0 : index
    %c0_81 = arith.constant 0 : index
    %70 = vector.load %arg4[%c1_79, %c0_80, %c0_81] : memref<4x1x256xf32, #tpu.memory_space<vmem>>, vector<1x1x256xf32>
    %71 = vector.shape_cast %70 : vector<1x1x256xf32> to vector<1x256xf32>
    %72 = vector.broadcast %71 : vector<1x256xf32> to vector<16x256xf32>
    %73 = arith.mulf %69, %72 : vector<16x256xf32>
    %c1_82 = arith.constant 1 : index
    %c0_83 = arith.constant 0 : index
    %c0_84 = arith.constant 0 : index
    %74 = vector.load %arg5[%c1_82, %c0_83, %c0_84] : memref<4x1x256xf32, #tpu.memory_space<vmem>>, vector<1x1x256xf32>
    %75 = vector.shape_cast %74 : vector<1x1x256xf32> to vector<1x256xf32>
    %76 = vector.broadcast %75 : vector<1x256xf32> to vector<16x256xf32>
    %77 = arith.addf %73, %76 : vector<16x256xf32>
    %cst_85 = arith.constant 0.000000e+00 : f32
    %78 = vector.broadcast %cst_85 : f32 to vector<16x256xf32>
    %79 = arith.maximumf %77, %78 : vector<16x256xf32>
    %c0_86 = arith.constant 0 : index
    %c0_87 = arith.constant 0 : index
    %c0_88 = arith.constant 0 : index
    %80 = vector.load %arg2[%c0_86, %c0_87, %c0_88] : memref<2x16x16xf32, #tpu.memory_space<vmem>>, vector<1x16x16xf32>
    %81 = vector.shape_cast %80 : vector<1x16x16xf32> to vector<16x16xf32>
    %cst_89 = arith.constant dense<0.000000e+00> : vector<16x256xf32>
    %82 = tpu.matmul %81, %79, %cst_89 {dimension_numbers = #tpu.dot_dimension_numbers<[1], [0], [0], [1], [0, 0, 1, 1], [], []>} : vector<16x16xf32>, vector<16x256xf32>, vector<16x256xf32> -> vector<16x256xf32>
    %c1_90 = arith.constant 1 : index
    %c0_91 = arith.constant 0 : index
    %c0_92 = arith.constant 0 : index
    %83 = vector.load %arg2[%c1_90, %c0_91, %c0_92] : memref<2x16x16xf32, #tpu.memory_space<vmem>>, vector<1x16x16xf32>
    %84 = vector.shape_cast %83 : vector<1x16x16xf32> to vector<16x16xf32>
    %cst_93 = arith.constant dense<0.000000e+00> : vector<16x256xf32>
    %85 = tpu.matmul %84, %79, %cst_93 {dimension_numbers = #tpu.dot_dimension_numbers<[1], [0], [0], [1], [0, 0, 1, 1], [], []>} : vector<16x16xf32>, vector<16x256xf32>, vector<16x256xf32> -> vector<16x256xf32>
    %c1_94 = arith.constant 1 : index
    %c0_95 = arith.constant 0 : index
    %c0_96 = arith.constant 0 : index
    %c0_97 = arith.constant 0 : index
    %86 = vector.load %arg6[%c1_94, %c0_95, %c0_96, %c0_97] : memref<4x3x256x256xf32, #tpu.memory_space<vmem>>, vector<1x1x256x256xf32>
    %87 = vector.shape_cast %86 : vector<1x1x256x256xf32> to vector<256x256xf32>
    %cst_98 = arith.constant dense<0.000000e+00> : vector<16x256xf32>
    %88 = tpu.matmul %82, %87, %cst_98 {dimension_numbers = #tpu.dot_dimension_numbers<[1], [0], [0], [1], [0, 0, 1, 1], [], []>} : vector<16x256xf32>, vector<256x256xf32>, vector<16x256xf32> -> vector<16x256xf32>
    %c1_99 = arith.constant 1 : index
    %c1_100 = arith.constant 1 : index
    %c0_101 = arith.constant 0 : index
    %c0_102 = arith.constant 0 : index
    %89 = vector.load %arg6[%c1_99, %c1_100, %c0_101, %c0_102] : memref<4x3x256x256xf32, #tpu.memory_space<vmem>>, vector<1x1x256x256xf32>
    %90 = vector.shape_cast %89 : vector<1x1x256x256xf32> to vector<256x256xf32>
    %cst_103 = arith.constant dense<0.000000e+00> : vector<16x256xf32>
    %91 = tpu.matmul %79, %90, %cst_103 {dimension_numbers = #tpu.dot_dimension_numbers<[1], [0], [0], [1], [0, 0, 1, 1], [], []>} : vector<16x256xf32>, vector<256x256xf32>, vector<16x256xf32> -> vector<16x256xf32>
    %92 = arith.addf %88, %91 : vector<16x256xf32>
    %c1_104 = arith.constant 1 : index
    %c2_105 = arith.constant 2 : index
    %c0_106 = arith.constant 0 : index
    %c0_107 = arith.constant 0 : index
    %93 = vector.load %arg6[%c1_104, %c2_105, %c0_106, %c0_107] : memref<4x3x256x256xf32, #tpu.memory_space<vmem>>, vector<1x1x256x256xf32>
    %94 = vector.shape_cast %93 : vector<1x1x256x256xf32> to vector<256x256xf32>
    %cst_108 = arith.constant dense<0.000000e+00> : vector<16x256xf32>
    %95 = tpu.matmul %85, %94, %cst_108 {dimension_numbers = #tpu.dot_dimension_numbers<[1], [0], [0], [1], [0, 0, 1, 1], [], []>} : vector<16x256xf32>, vector<256x256xf32>, vector<16x256xf32> -> vector<16x256xf32>
    %96 = arith.addf %92, %95 : vector<16x256xf32>
    %c1_109 = arith.constant 1 : index
    %c0_110 = arith.constant 0 : index
    %c0_111 = arith.constant 0 : index
    %97 = vector.load %arg7[%c1_109, %c0_110, %c0_111] : memref<4x1x256xf32, #tpu.memory_space<vmem>>, vector<1x1x256xf32>
    %98 = vector.shape_cast %97 : vector<1x1x256xf32> to vector<1x256xf32>
    %99 = vector.broadcast %98 : vector<1x256xf32> to vector<16x256xf32>
    %100 = arith.addf %96, %99 : vector<16x256xf32>
    %101 = arith.addf %100, %52 : vector<16x256xf32>
    %cst_112 = arith.constant 0.000000e+00 : f32
    %102 = vector.broadcast %cst_112 : f32 to vector<16x256xf32>
    %103 = arith.maximumf %101, %102 : vector<16x256xf32>
    %c0_113 = arith.constant 0 : index
    %c0_114 = arith.constant 0 : index
    %c0_115 = arith.constant 0 : index
    %104 = vector.load %arg2[%c0_113, %c0_114, %c0_115] : memref<2x16x16xf32, #tpu.memory_space<vmem>>, vector<1x16x16xf32>
    %105 = vector.shape_cast %104 : vector<1x16x16xf32> to vector<16x16xf32>
    %cst_116 = arith.constant dense<0.000000e+00> : vector<16x256xf32>
    %106 = tpu.matmul %105, %103, %cst_116 {dimension_numbers = #tpu.dot_dimension_numbers<[1], [0], [0], [1], [0, 0, 1, 1], [], []>} : vector<16x16xf32>, vector<16x256xf32>, vector<16x256xf32> -> vector<16x256xf32>
    %c1_117 = arith.constant 1 : index
    %c0_118 = arith.constant 0 : index
    %c0_119 = arith.constant 0 : index
    %107 = vector.load %arg2[%c1_117, %c0_118, %c0_119] : memref<2x16x16xf32, #tpu.memory_space<vmem>>, vector<1x16x16xf32>
    %108 = vector.shape_cast %107 : vector<1x16x16xf32> to vector<16x16xf32>
    %cst_120 = arith.constant dense<0.000000e+00> : vector<16x256xf32>
    %109 = tpu.matmul %108, %103, %cst_120 {dimension_numbers = #tpu.dot_dimension_numbers<[1], [0], [0], [1], [0, 0, 1, 1], [], []>} : vector<16x16xf32>, vector<16x256xf32>, vector<16x256xf32> -> vector<16x256xf32>
    %c2_121 = arith.constant 2 : index
    %c0_122 = arith.constant 0 : index
    %c0_123 = arith.constant 0 : index
    %c0_124 = arith.constant 0 : index
    %110 = vector.load %arg3[%c2_121, %c0_122, %c0_123, %c0_124] : memref<4x3x256x256xf32, #tpu.memory_space<vmem>>, vector<1x1x256x256xf32>
    %111 = vector.shape_cast %110 : vector<1x1x256x256xf32> to vector<256x256xf32>
    %cst_125 = arith.constant dense<0.000000e+00> : vector<16x256xf32>
    %112 = tpu.matmul %106, %111, %cst_125 {dimension_numbers = #tpu.dot_dimension_numbers<[1], [0], [0], [1], [0, 0, 1, 1], [], []>} : vector<16x256xf32>, vector<256x256xf32>, vector<16x256xf32> -> vector<16x256xf32>
    %c2_126 = arith.constant 2 : index
    %c1_127 = arith.constant 1 : index
    %c0_128 = arith.constant 0 : index
    %c0_129 = arith.constant 0 : index
    %113 = vector.load %arg3[%c2_126, %c1_127, %c0_128, %c0_129] : memref<4x3x256x256xf32, #tpu.memory_space<vmem>>, vector<1x1x256x256xf32>
    %114 = vector.shape_cast %113 : vector<1x1x256x256xf32> to vector<256x256xf32>
    %cst_130 = arith.constant dense<0.000000e+00> : vector<16x256xf32>
    %115 = tpu.matmul %103, %114, %cst_130 {dimension_numbers = #tpu.dot_dimension_numbers<[1], [0], [0], [1], [0, 0, 1, 1], [], []>} : vector<16x256xf32>, vector<256x256xf32>, vector<16x256xf32> -> vector<16x256xf32>
    %116 = arith.addf %112, %115 : vector<16x256xf32>
    %c2_131 = arith.constant 2 : index
    %c2_132 = arith.constant 2 : index
    %c0_133 = arith.constant 0 : index
    %c0_134 = arith.constant 0 : index
    %117 = vector.load %arg3[%c2_131, %c2_132, %c0_133, %c0_134] : memref<4x3x256x256xf32, #tpu.memory_space<vmem>>, vector<1x1x256x256xf32>
    %118 = vector.shape_cast %117 : vector<1x1x256x256xf32> to vector<256x256xf32>
    %cst_135 = arith.constant dense<0.000000e+00> : vector<16x256xf32>
    %119 = tpu.matmul %109, %118, %cst_135 {dimension_numbers = #tpu.dot_dimension_numbers<[1], [0], [0], [1], [0, 0, 1, 1], [], []>} : vector<16x256xf32>, vector<256x256xf32>, vector<16x256xf32> -> vector<16x256xf32>
    %120 = arith.addf %116, %119 : vector<16x256xf32>
    %c2_136 = arith.constant 2 : index
    %c0_137 = arith.constant 0 : index
    %c0_138 = arith.constant 0 : index
    %121 = vector.load %arg4[%c2_136, %c0_137, %c0_138] : memref<4x1x256xf32, #tpu.memory_space<vmem>>, vector<1x1x256xf32>
    %122 = vector.shape_cast %121 : vector<1x1x256xf32> to vector<1x256xf32>
    %123 = vector.broadcast %122 : vector<1x256xf32> to vector<16x256xf32>
    %124 = arith.mulf %120, %123 : vector<16x256xf32>
    %c2_139 = arith.constant 2 : index
    %c0_140 = arith.constant 0 : index
    %c0_141 = arith.constant 0 : index
    %125 = vector.load %arg5[%c2_139, %c0_140, %c0_141] : memref<4x1x256xf32, #tpu.memory_space<vmem>>, vector<1x1x256xf32>
    %126 = vector.shape_cast %125 : vector<1x1x256xf32> to vector<1x256xf32>
    %127 = vector.broadcast %126 : vector<1x256xf32> to vector<16x256xf32>
    %128 = arith.addf %124, %127 : vector<16x256xf32>
    %cst_142 = arith.constant 0.000000e+00 : f32
    %129 = vector.broadcast %cst_142 : f32 to vector<16x256xf32>
    %130 = arith.maximumf %128, %129 : vector<16x256xf32>
    %c0_143 = arith.constant 0 : index
    %c0_144 = arith.constant 0 : index
    %c0_145 = arith.constant 0 : index
    %131 = vector.load %arg2[%c0_143, %c0_144, %c0_145] : memref<2x16x16xf32, #tpu.memory_space<vmem>>, vector<1x16x16xf32>
    %132 = vector.shape_cast %131 : vector<1x16x16xf32> to vector<16x16xf32>
    %cst_146 = arith.constant dense<0.000000e+00> : vector<16x256xf32>
    %133 = tpu.matmul %132, %130, %cst_146 {dimension_numbers = #tpu.dot_dimension_numbers<[1], [0], [0], [1], [0, 0, 1, 1], [], []>} : vector<16x16xf32>, vector<16x256xf32>, vector<16x256xf32> -> vector<16x256xf32>
    %c1_147 = arith.constant 1 : index
    %c0_148 = arith.constant 0 : index
    %c0_149 = arith.constant 0 : index
    %134 = vector.load %arg2[%c1_147, %c0_148, %c0_149] : memref<2x16x16xf32, #tpu.memory_space<vmem>>, vector<1x16x16xf32>
    %135 = vector.shape_cast %134 : vector<1x16x16xf32> to vector<16x16xf32>
    %cst_150 = arith.constant dense<0.000000e+00> : vector<16x256xf32>
    %136 = tpu.matmul %135, %130, %cst_150 {dimension_numbers = #tpu.dot_dimension_numbers<[1], [0], [0], [1], [0, 0, 1, 1], [], []>} : vector<16x16xf32>, vector<16x256xf32>, vector<16x256xf32> -> vector<16x256xf32>
    %c2_151 = arith.constant 2 : index
    %c0_152 = arith.constant 0 : index
    %c0_153 = arith.constant 0 : index
    %c0_154 = arith.constant 0 : index
    %137 = vector.load %arg6[%c2_151, %c0_152, %c0_153, %c0_154] : memref<4x3x256x256xf32, #tpu.memory_space<vmem>>, vector<1x1x256x256xf32>
    %138 = vector.shape_cast %137 : vector<1x1x256x256xf32> to vector<256x256xf32>
    %cst_155 = arith.constant dense<0.000000e+00> : vector<16x256xf32>
    %139 = tpu.matmul %133, %138, %cst_155 {dimension_numbers = #tpu.dot_dimension_numbers<[1], [0], [0], [1], [0, 0, 1, 1], [], []>} : vector<16x256xf32>, vector<256x256xf32>, vector<16x256xf32> -> vector<16x256xf32>
    %c2_156 = arith.constant 2 : index
    %c1_157 = arith.constant 1 : index
    %c0_158 = arith.constant 0 : index
    %c0_159 = arith.constant 0 : index
    %140 = vector.load %arg6[%c2_156, %c1_157, %c0_158, %c0_159] : memref<4x3x256x256xf32, #tpu.memory_space<vmem>>, vector<1x1x256x256xf32>
    %141 = vector.shape_cast %140 : vector<1x1x256x256xf32> to vector<256x256xf32>
    %cst_160 = arith.constant dense<0.000000e+00> : vector<16x256xf32>
    %142 = tpu.matmul %130, %141, %cst_160 {dimension_numbers = #tpu.dot_dimension_numbers<[1], [0], [0], [1], [0, 0, 1, 1], [], []>} : vector<16x256xf32>, vector<256x256xf32>, vector<16x256xf32> -> vector<16x256xf32>
    %143 = arith.addf %139, %142 : vector<16x256xf32>
    %c2_161 = arith.constant 2 : index
    %c2_162 = arith.constant 2 : index
    %c0_163 = arith.constant 0 : index
    %c0_164 = arith.constant 0 : index
    %144 = vector.load %arg6[%c2_161, %c2_162, %c0_163, %c0_164] : memref<4x3x256x256xf32, #tpu.memory_space<vmem>>, vector<1x1x256x256xf32>
    %145 = vector.shape_cast %144 : vector<1x1x256x256xf32> to vector<256x256xf32>
    %cst_165 = arith.constant dense<0.000000e+00> : vector<16x256xf32>
    %146 = tpu.matmul %136, %145, %cst_165 {dimension_numbers = #tpu.dot_dimension_numbers<[1], [0], [0], [1], [0, 0, 1, 1], [], []>} : vector<16x256xf32>, vector<256x256xf32>, vector<16x256xf32> -> vector<16x256xf32>
    %147 = arith.addf %143, %146 : vector<16x256xf32>
    %c2_166 = arith.constant 2 : index
    %c0_167 = arith.constant 0 : index
    %c0_168 = arith.constant 0 : index
    %148 = vector.load %arg7[%c2_166, %c0_167, %c0_168] : memref<4x1x256xf32, #tpu.memory_space<vmem>>, vector<1x1x256xf32>
    %149 = vector.shape_cast %148 : vector<1x1x256xf32> to vector<1x256xf32>
    %150 = vector.broadcast %149 : vector<1x256xf32> to vector<16x256xf32>
    %151 = arith.addf %147, %150 : vector<16x256xf32>
    %152 = arith.addf %151, %103 : vector<16x256xf32>
    %cst_169 = arith.constant 0.000000e+00 : f32
    %153 = vector.broadcast %cst_169 : f32 to vector<16x256xf32>
    %154 = arith.maximumf %152, %153 : vector<16x256xf32>
    %c0_170 = arith.constant 0 : index
    %c0_171 = arith.constant 0 : index
    %c0_172 = arith.constant 0 : index
    %155 = vector.load %arg2[%c0_170, %c0_171, %c0_172] : memref<2x16x16xf32, #tpu.memory_space<vmem>>, vector<1x16x16xf32>
    %156 = vector.shape_cast %155 : vector<1x16x16xf32> to vector<16x16xf32>
    %cst_173 = arith.constant dense<0.000000e+00> : vector<16x256xf32>
    %157 = tpu.matmul %156, %154, %cst_173 {dimension_numbers = #tpu.dot_dimension_numbers<[1], [0], [0], [1], [0, 0, 1, 1], [], []>} : vector<16x16xf32>, vector<16x256xf32>, vector<16x256xf32> -> vector<16x256xf32>
    %c1_174 = arith.constant 1 : index
    %c0_175 = arith.constant 0 : index
    %c0_176 = arith.constant 0 : index
    %158 = vector.load %arg2[%c1_174, %c0_175, %c0_176] : memref<2x16x16xf32, #tpu.memory_space<vmem>>, vector<1x16x16xf32>
    %159 = vector.shape_cast %158 : vector<1x16x16xf32> to vector<16x16xf32>
    %cst_177 = arith.constant dense<0.000000e+00> : vector<16x256xf32>
    %160 = tpu.matmul %159, %154, %cst_177 {dimension_numbers = #tpu.dot_dimension_numbers<[1], [0], [0], [1], [0, 0, 1, 1], [], []>} : vector<16x16xf32>, vector<16x256xf32>, vector<16x256xf32> -> vector<16x256xf32>
    %c3 = arith.constant 3 : index
    %c0_178 = arith.constant 0 : index
    %c0_179 = arith.constant 0 : index
    %c0_180 = arith.constant 0 : index
    %161 = vector.load %arg3[%c3, %c0_178, %c0_179, %c0_180] : memref<4x3x256x256xf32, #tpu.memory_space<vmem>>, vector<1x1x256x256xf32>
    %162 = vector.shape_cast %161 : vector<1x1x256x256xf32> to vector<256x256xf32>
    %cst_181 = arith.constant dense<0.000000e+00> : vector<16x256xf32>
    %163 = tpu.matmul %157, %162, %cst_181 {dimension_numbers = #tpu.dot_dimension_numbers<[1], [0], [0], [1], [0, 0, 1, 1], [], []>} : vector<16x256xf32>, vector<256x256xf32>, vector<16x256xf32> -> vector<16x256xf32>
    %c3_182 = arith.constant 3 : index
    %c1_183 = arith.constant 1 : index
    %c0_184 = arith.constant 0 : index
    %c0_185 = arith.constant 0 : index
    %164 = vector.load %arg3[%c3_182, %c1_183, %c0_184, %c0_185] : memref<4x3x256x256xf32, #tpu.memory_space<vmem>>, vector<1x1x256x256xf32>
    %165 = vector.shape_cast %164 : vector<1x1x256x256xf32> to vector<256x256xf32>
    %cst_186 = arith.constant dense<0.000000e+00> : vector<16x256xf32>
    %166 = tpu.matmul %154, %165, %cst_186 {dimension_numbers = #tpu.dot_dimension_numbers<[1], [0], [0], [1], [0, 0, 1, 1], [], []>} : vector<16x256xf32>, vector<256x256xf32>, vector<16x256xf32> -> vector<16x256xf32>
    %167 = arith.addf %163, %166 : vector<16x256xf32>
    %c3_187 = arith.constant 3 : index
    %c2_188 = arith.constant 2 : index
    %c0_189 = arith.constant 0 : index
    %c0_190 = arith.constant 0 : index
    %168 = vector.load %arg3[%c3_187, %c2_188, %c0_189, %c0_190] : memref<4x3x256x256xf32, #tpu.memory_space<vmem>>, vector<1x1x256x256xf32>
    %169 = vector.shape_cast %168 : vector<1x1x256x256xf32> to vector<256x256xf32>
    %cst_191 = arith.constant dense<0.000000e+00> : vector<16x256xf32>
    %170 = tpu.matmul %160, %169, %cst_191 {dimension_numbers = #tpu.dot_dimension_numbers<[1], [0], [0], [1], [0, 0, 1, 1], [], []>} : vector<16x256xf32>, vector<256x256xf32>, vector<16x256xf32> -> vector<16x256xf32>
    %171 = arith.addf %167, %170 : vector<16x256xf32>
    %c3_192 = arith.constant 3 : index
    %c0_193 = arith.constant 0 : index
    %c0_194 = arith.constant 0 : index
    %172 = vector.load %arg4[%c3_192, %c0_193, %c0_194] : memref<4x1x256xf32, #tpu.memory_space<vmem>>, vector<1x1x256xf32>
    %173 = vector.shape_cast %172 : vector<1x1x256xf32> to vector<1x256xf32>
    %174 = vector.broadcast %173 : vector<1x256xf32> to vector<16x256xf32>
    %175 = arith.mulf %171, %174 : vector<16x256xf32>
    %c3_195 = arith.constant 3 : index
    %c0_196 = arith.constant 0 : index
    %c0_197 = arith.constant 0 : index
    %176 = vector.load %arg5[%c3_195, %c0_196, %c0_197] : memref<4x1x256xf32, #tpu.memory_space<vmem>>, vector<1x1x256xf32>
    %177 = vector.shape_cast %176 : vector<1x1x256xf32> to vector<1x256xf32>
    %178 = vector.broadcast %177 : vector<1x256xf32> to vector<16x256xf32>
    %179 = arith.addf %175, %178 : vector<16x256xf32>
    %cst_198 = arith.constant 0.000000e+00 : f32
    %180 = vector.broadcast %cst_198 : f32 to vector<16x256xf32>
    %181 = arith.maximumf %179, %180 : vector<16x256xf32>
    %c0_199 = arith.constant 0 : index
    %c0_200 = arith.constant 0 : index
    %c0_201 = arith.constant 0 : index
    %182 = vector.load %arg2[%c0_199, %c0_200, %c0_201] : memref<2x16x16xf32, #tpu.memory_space<vmem>>, vector<1x16x16xf32>
    %183 = vector.shape_cast %182 : vector<1x16x16xf32> to vector<16x16xf32>
    %cst_202 = arith.constant dense<0.000000e+00> : vector<16x256xf32>
    %184 = tpu.matmul %183, %181, %cst_202 {dimension_numbers = #tpu.dot_dimension_numbers<[1], [0], [0], [1], [0, 0, 1, 1], [], []>} : vector<16x16xf32>, vector<16x256xf32>, vector<16x256xf32> -> vector<16x256xf32>
    %c1_203 = arith.constant 1 : index
    %c0_204 = arith.constant 0 : index
    %c0_205 = arith.constant 0 : index
    %185 = vector.load %arg2[%c1_203, %c0_204, %c0_205] : memref<2x16x16xf32, #tpu.memory_space<vmem>>, vector<1x16x16xf32>
    %186 = vector.shape_cast %185 : vector<1x16x16xf32> to vector<16x16xf32>
    %cst_206 = arith.constant dense<0.000000e+00> : vector<16x256xf32>
    %187 = tpu.matmul %186, %181, %cst_206 {dimension_numbers = #tpu.dot_dimension_numbers<[1], [0], [0], [1], [0, 0, 1, 1], [], []>} : vector<16x16xf32>, vector<16x256xf32>, vector<16x256xf32> -> vector<16x256xf32>
    %c3_207 = arith.constant 3 : index
    %c0_208 = arith.constant 0 : index
    %c0_209 = arith.constant 0 : index
    %c0_210 = arith.constant 0 : index
    %188 = vector.load %arg6[%c3_207, %c0_208, %c0_209, %c0_210] : memref<4x3x256x256xf32, #tpu.memory_space<vmem>>, vector<1x1x256x256xf32>
    %189 = vector.shape_cast %188 : vector<1x1x256x256xf32> to vector<256x256xf32>
    %cst_211 = arith.constant dense<0.000000e+00> : vector<16x256xf32>
    %190 = tpu.matmul %184, %189, %cst_211 {dimension_numbers = #tpu.dot_dimension_numbers<[1], [0], [0], [1], [0, 0, 1, 1], [], []>} : vector<16x256xf32>, vector<256x256xf32>, vector<16x256xf32> -> vector<16x256xf32>
    %c3_212 = arith.constant 3 : index
    %c1_213 = arith.constant 1 : index
    %c0_214 = arith.constant 0 : index
    %c0_215 = arith.constant 0 : index
    %191 = vector.load %arg6[%c3_212, %c1_213, %c0_214, %c0_215] : memref<4x3x256x256xf32, #tpu.memory_space<vmem>>, vector<1x1x256x256xf32>
    %192 = vector.shape_cast %191 : vector<1x1x256x256xf32> to vector<256x256xf32>
    %cst_216 = arith.constant dense<0.000000e+00> : vector<16x256xf32>
    %193 = tpu.matmul %181, %192, %cst_216 {dimension_numbers = #tpu.dot_dimension_numbers<[1], [0], [0], [1], [0, 0, 1, 1], [], []>} : vector<16x256xf32>, vector<256x256xf32>, vector<16x256xf32> -> vector<16x256xf32>
    %194 = arith.addf %190, %193 : vector<16x256xf32>
    %c3_217 = arith.constant 3 : index
    %c2_218 = arith.constant 2 : index
    %c0_219 = arith.constant 0 : index
    %c0_220 = arith.constant 0 : index
    %195 = vector.load %arg6[%c3_217, %c2_218, %c0_219, %c0_220] : memref<4x3x256x256xf32, #tpu.memory_space<vmem>>, vector<1x1x256x256xf32>
    %196 = vector.shape_cast %195 : vector<1x1x256x256xf32> to vector<256x256xf32>
    %cst_221 = arith.constant dense<0.000000e+00> : vector<16x256xf32>
    %197 = tpu.matmul %187, %196, %cst_221 {dimension_numbers = #tpu.dot_dimension_numbers<[1], [0], [0], [1], [0, 0, 1, 1], [], []>} : vector<16x256xf32>, vector<256x256xf32>, vector<16x256xf32> -> vector<16x256xf32>
    %198 = arith.addf %194, %197 : vector<16x256xf32>
    %c3_222 = arith.constant 3 : index
    %c0_223 = arith.constant 0 : index
    %c0_224 = arith.constant 0 : index
    %199 = vector.load %arg7[%c3_222, %c0_223, %c0_224] : memref<4x1x256xf32, #tpu.memory_space<vmem>>, vector<1x1x256xf32>
    %200 = vector.shape_cast %199 : vector<1x1x256xf32> to vector<1x256xf32>
    %201 = vector.broadcast %200 : vector<1x256xf32> to vector<16x256xf32>
    %202 = arith.addf %198, %201 : vector<16x256xf32>
    %203 = arith.addf %202, %154 : vector<16x256xf32>
    %cst_225 = arith.constant 0.000000e+00 : f32
    %204 = vector.broadcast %cst_225 : f32 to vector<16x256xf32>
    %205 = arith.maximumf %203, %204 : vector<16x256xf32>
    %c0_226 = arith.constant 0 : index
    %c0_227 = arith.constant 0 : index
    %c0_228 = arith.constant 0 : index
    %206 = vector.load %arg2[%c0_226, %c0_227, %c0_228] : memref<2x16x16xf32, #tpu.memory_space<vmem>>, vector<1x16x16xf32>
    %207 = vector.shape_cast %206 : vector<1x16x16xf32> to vector<16x16xf32>
    %cst_229 = arith.constant dense<0.000000e+00> : vector<16x256xf32>
    %208 = tpu.matmul %207, %1, %cst_229 {dimension_numbers = #tpu.dot_dimension_numbers<[1], [0], [0], [1], [0, 0, 1, 1], [], []>} : vector<16x16xf32>, vector<16x256xf32>, vector<16x256xf32> -> vector<16x256xf32>
    %c1_230 = arith.constant 1 : index
    %c0_231 = arith.constant 0 : index
    %c0_232 = arith.constant 0 : index
    %209 = vector.load %arg2[%c1_230, %c0_231, %c0_232] : memref<2x16x16xf32, #tpu.memory_space<vmem>>, vector<1x16x16xf32>
    %210 = vector.shape_cast %209 : vector<1x16x16xf32> to vector<16x16xf32>
    %cst_233 = arith.constant dense<0.000000e+00> : vector<16x256xf32>
    %211 = tpu.matmul %210, %1, %cst_233 {dimension_numbers = #tpu.dot_dimension_numbers<[1], [0], [0], [1], [0, 0, 1, 1], [], []>} : vector<16x16xf32>, vector<16x256xf32>, vector<16x256xf32> -> vector<16x256xf32>
    %c0_234 = arith.constant 0 : index
    %c0_235 = arith.constant 0 : index
    %c0_236 = arith.constant 0 : index
    %212 = vector.load %arg8[%c0_234, %c0_235, %c0_236] : memref<3x256x256xf32, #tpu.memory_space<vmem>>, vector<1x256x256xf32>
    %213 = vector.shape_cast %212 : vector<1x256x256xf32> to vector<256x256xf32>
    %cst_237 = arith.constant dense<0.000000e+00> : vector<16x256xf32>
    %214 = tpu.matmul %208, %213, %cst_237 {dimension_numbers = #tpu.dot_dimension_numbers<[1], [0], [0], [1], [0, 0, 1, 1], [], []>} : vector<16x256xf32>, vector<256x256xf32>, vector<16x256xf32> -> vector<16x256xf32>
    %c1_238 = arith.constant 1 : index
    %c0_239 = arith.constant 0 : index
    %c0_240 = arith.constant 0 : index
    %215 = vector.load %arg8[%c1_238, %c0_239, %c0_240] : memref<3x256x256xf32, #tpu.memory_space<vmem>>, vector<1x256x256xf32>
    %216 = vector.shape_cast %215 : vector<1x256x256xf32> to vector<256x256xf32>
    %cst_241 = arith.constant dense<0.000000e+00> : vector<16x256xf32>
    %217 = tpu.matmul %1, %216, %cst_241 {dimension_numbers = #tpu.dot_dimension_numbers<[1], [0], [0], [1], [0, 0, 1, 1], [], []>} : vector<16x256xf32>, vector<256x256xf32>, vector<16x256xf32> -> vector<16x256xf32>
    %218 = arith.addf %214, %217 : vector<16x256xf32>
    %c2_242 = arith.constant 2 : index
    %c0_243 = arith.constant 0 : index
    %c0_244 = arith.constant 0 : index
    %219 = vector.load %arg8[%c2_242, %c0_243, %c0_244] : memref<3x256x256xf32, #tpu.memory_space<vmem>>, vector<1x256x256xf32>
    %220 = vector.shape_cast %219 : vector<1x256x256xf32> to vector<256x256xf32>
    %cst_245 = arith.constant dense<0.000000e+00> : vector<16x256xf32>
    %221 = tpu.matmul %211, %220, %cst_245 {dimension_numbers = #tpu.dot_dimension_numbers<[1], [0], [0], [1], [0, 0, 1, 1], [], []>} : vector<16x256xf32>, vector<256x256xf32>, vector<16x256xf32> -> vector<16x256xf32>
    %222 = arith.addf %218, %221 : vector<16x256xf32>
    %c0_246 = arith.constant 0 : index
    %c0_247 = arith.constant 0 : index
    %c0_248 = arith.constant 0 : index
    %223 = vector.load %arg2[%c0_246, %c0_247, %c0_248] : memref<2x16x16xf32, #tpu.memory_space<vmem>>, vector<1x16x16xf32>
    %224 = vector.shape_cast %223 : vector<1x16x16xf32> to vector<16x16xf32>
    %cst_249 = arith.constant dense<0.000000e+00> : vector<16x256xf32>
    %225 = tpu.matmul %224, %205, %cst_249 {dimension_numbers = #tpu.dot_dimension_numbers<[1], [0], [0], [1], [0, 0, 1, 1], [], []>} : vector<16x16xf32>, vector<16x256xf32>, vector<16x256xf32> -> vector<16x256xf32>
    %c1_250 = arith.constant 1 : index
    %c0_251 = arith.constant 0 : index
    %c0_252 = arith.constant 0 : index
    %226 = vector.load %arg2[%c1_250, %c0_251, %c0_252] : memref<2x16x16xf32, #tpu.memory_space<vmem>>, vector<1x16x16xf32>
    %227 = vector.shape_cast %226 : vector<1x16x16xf32> to vector<16x16xf32>
    %cst_253 = arith.constant dense<0.000000e+00> : vector<16x256xf32>
    %228 = tpu.matmul %227, %205, %cst_253 {dimension_numbers = #tpu.dot_dimension_numbers<[1], [0], [0], [1], [0, 0, 1, 1], [], []>} : vector<16x16xf32>, vector<16x256xf32>, vector<16x256xf32> -> vector<16x256xf32>
    %c0_254 = arith.constant 0 : index
    %c0_255 = arith.constant 0 : index
    %c0_256 = arith.constant 0 : index
    %229 = vector.load %arg9[%c0_254, %c0_255, %c0_256] : memref<3x256x256xf32, #tpu.memory_space<vmem>>, vector<1x256x256xf32>
    %230 = vector.shape_cast %229 : vector<1x256x256xf32> to vector<256x256xf32>
    %cst_257 = arith.constant dense<0.000000e+00> : vector<16x256xf32>
    %231 = tpu.matmul %225, %230, %cst_257 {dimension_numbers = #tpu.dot_dimension_numbers<[1], [0], [0], [1], [0, 0, 1, 1], [], []>} : vector<16x256xf32>, vector<256x256xf32>, vector<16x256xf32> -> vector<16x256xf32>
    %c1_258 = arith.constant 1 : index
    %c0_259 = arith.constant 0 : index
    %c0_260 = arith.constant 0 : index
    %232 = vector.load %arg9[%c1_258, %c0_259, %c0_260] : memref<3x256x256xf32, #tpu.memory_space<vmem>>, vector<1x256x256xf32>
    %233 = vector.shape_cast %232 : vector<1x256x256xf32> to vector<256x256xf32>
    %cst_261 = arith.constant dense<0.000000e+00> : vector<16x256xf32>
    %234 = tpu.matmul %205, %233, %cst_261 {dimension_numbers = #tpu.dot_dimension_numbers<[1], [0], [0], [1], [0, 0, 1, 1], [], []>} : vector<16x256xf32>, vector<256x256xf32>, vector<16x256xf32> -> vector<16x256xf32>
    %235 = arith.addf %231, %234 : vector<16x256xf32>
    %c2_262 = arith.constant 2 : index
    %c0_263 = arith.constant 0 : index
    %c0_264 = arith.constant 0 : index
    %236 = vector.load %arg9[%c2_262, %c0_263, %c0_264] : memref<3x256x256xf32, #tpu.memory_space<vmem>>, vector<1x256x256xf32>
    %237 = vector.shape_cast %236 : vector<1x256x256xf32> to vector<256x256xf32>
    %cst_265 = arith.constant dense<0.000000e+00> : vector<16x256xf32>
    %238 = tpu.matmul %228, %237, %cst_265 {dimension_numbers = #tpu.dot_dimension_numbers<[1], [0], [0], [1], [0, 0, 1, 1], [], []>} : vector<16x256xf32>, vector<256x256xf32>, vector<16x256xf32> -> vector<16x256xf32>
    %239 = arith.addf %235, %238 : vector<16x256xf32>
    %240 = arith.addf %222, %239 : vector<16x256xf32>
    %c0_266 = arith.constant 0 : index
    %c0_267 = arith.constant 0 : index
    %241 = vector.load %arg10[%c0_266, %c0_267] : memref<1x256xf32, #tpu.memory_space<vmem>>, vector<1x256xf32>
    %242 = vector.broadcast %241 : vector<1x256xf32> to vector<16x256xf32>
    %243 = arith.addf %240, %242 : vector<16x256xf32>
    %cst_268 = arith.constant dense<0.000000e+00> : vector<256xf32>
    %244 = vector.multi_reduction <add>, %243, %cst_268 [0] : vector<16x256xf32> to vector<256xf32>
    %245 = vector.shape_cast %244 : vector<256xf32> to vector<1x256xf32>
    %c0_269 = arith.constant 0 : index
    %c0_270 = arith.constant 0 : index
    %246 = vector.load %arg14[%c0_269, %c0_270] : memref<1x256xf32, #tpu.memory_space<vmem>>, vector<1x256xf32>
    %c0_271 = arith.constant 0 : index
    %c0_272 = arith.constant 0 : index
    %247 = vector.load %arg11[%c0_271, %c0_272] : memref<1x256xf32, #tpu.memory_space<vmem>>, vector<1x256xf32>
    %248 = arith.mulf %245, %247 : vector<1x256xf32>
    %cst_273 = arith.constant dense<0.000000e+00> : vector<1xf32>
    %249 = vector.multi_reduction <add>, %248, %cst_273 [1] : vector<1x256xf32> to vector<1xf32>
    %250 = vector.shape_cast %249 : vector<1xf32> to vector<1x1xf32>
    %cst_274 = arith.constant 3.906250e-03 : f32
    %251 = vector.broadcast %cst_274 : f32 to vector<1x1xf32>
    %252 = arith.mulf %250, %251 : vector<1x1xf32>
    %c0_275 = arith.constant 0 : index
    %c0_276 = arith.constant 0 : index
    %253 = vector.load %arg12[%c0_275, %c0_276] : memref<1x1xf32, #tpu.memory_space<vmem>>, vector<1x1xf32>
    %254 = arith.addf %252, %253 : vector<1x1xf32>
    %cst_277 = arith.constant 0.000000e+00 : f32
    %255 = vector.broadcast %cst_277 : f32 to vector<1x1xf32>
    %256 = arith.maximumf %254, %255 : vector<1x1xf32>
    %c0_278 = arith.constant 0 : index
    %c0_279 = arith.constant 0 : index
    %257 = vector.load %arg13[%c0_278, %c0_279] : memref<1x256xf32, #tpu.memory_space<vmem>>, vector<1x256xf32>
    %258 = vector.broadcast %256 : vector<1x1xf32> to vector<1x256xf32>
    %259 = arith.mulf %258, %257 : vector<1x256xf32>
    %260 = arith.addf %246, %259 : vector<1x256xf32>
    %cst_280 = arith.constant 0.000000e+00 : f32
    %261 = vector.broadcast %cst_280 : f32 to vector<1x256xf32>
    %262 = arith.subf %261, %260 : vector<1x256xf32>
    %263 = math.exp %262 : vector<1x256xf32>
    %cst_281 = arith.constant 1.000000e+00 : f32
    %264 = vector.broadcast %cst_281 : f32 to vector<1x256xf32>
    %265 = arith.addf %264, %263 : vector<1x256xf32>
    %cst_282 = arith.constant 1.000000e+00 : f32
    %266 = vector.broadcast %cst_282 : f32 to vector<1x256xf32>
    %267 = arith.divf %266, %265 : vector<1x256xf32>
    %268 = vector.broadcast %267 : vector<1x256xf32> to vector<16x256xf32>
    %269 = arith.mulf %243, %268 : vector<16x256xf32>
    %c0_283 = arith.constant 0 : index
    %c0_284 = arith.constant 0 : index
    %c0_285 = arith.constant 0 : index
    %270 = vector.load %arg15[%c0_283, %c0_284, %c0_285] : memref<1x16x256xf32, #tpu.memory_space<vmem>>, vector<1x16x256xf32>
    %271 = vector.shape_cast %270 : vector<1x16x256xf32> to vector<16x256xf32>
    %272 = vector.shape_cast %269 : vector<16x256xf32> to vector<1x16x256xf32>
    tpu.vector_store %arg15[%c0_283, %c0_284, %c0_285], %272 {strides = array<i32>} : memref<1x16x256xf32, #tpu.memory_space<vmem>>, vector<1x16x256xf32>,
    return
  }
  func.func @transform_0(%arg0: i32) -> (i32, i32, i32) {
    %c0_i32 = arith.constant 0 : i32
    %c0_i32_0 = arith.constant 0 : i32
    %c0_i32_1 = arith.constant 0 : i32
    return %arg0, %c0_i32, %c0_i32_0 : i32, i32, i32
  }
  func.func @transform_1(%arg0: i32) -> (i32, i32, i32) {
    %c0_i32 = arith.constant 0 : i32
    %c0_i32_0 = arith.constant 0 : i32
    %c0_i32_1 = arith.constant 0 : i32
    %c0_i32_2 = arith.constant 0 : i32
    return %c0_i32, %c0_i32_0, %c0_i32_1 : i32, i32, i32
  }
  func.func @transform_2(%arg0: i32) -> (i32, i32, i32, i32) {
    %c0_i32 = arith.constant 0 : i32
    %c0_i32_0 = arith.constant 0 : i32
    %c0_i32_1 = arith.constant 0 : i32
    %c0_i32_2 = arith.constant 0 : i32
    %c0_i32_3 = arith.constant 0 : i32
    return %c0_i32, %c0_i32_0, %c0_i32_1, %c0_i32_2 : i32, i32, i32, i32
  }
  func.func @transform_3(%arg0: i32) -> (i32, i32, i32) {
    %c0_i32 = arith.constant 0 : i32
    %c0_i32_0 = arith.constant 0 : i32
    %c0_i32_1 = arith.constant 0 : i32
    %c0_i32_2 = arith.constant 0 : i32
    return %c0_i32, %c0_i32_0, %c0_i32_1 : i32, i32, i32
  }
  func.func @transform_4(%arg0: i32) -> (i32, i32, i32) {
    %c0_i32 = arith.constant 0 : i32
    %c0_i32_0 = arith.constant 0 : i32
    %c0_i32_1 = arith.constant 0 : i32
    %c0_i32_2 = arith.constant 0 : i32
    return %c0_i32, %c0_i32_0, %c0_i32_1 : i32, i32, i32
  }
  func.func @transform_5(%arg0: i32) -> (i32, i32, i32, i32) {
    %c0_i32 = arith.constant 0 : i32
    %c0_i32_0 = arith.constant 0 : i32
    %c0_i32_1 = arith.constant 0 : i32
    %c0_i32_2 = arith.constant 0 : i32
    %c0_i32_3 = arith.constant 0 : i32
    return %c0_i32, %c0_i32_0, %c0_i32_1, %c0_i32_2 : i32, i32, i32, i32
  }
  func.func @transform_6(%arg0: i32) -> (i32, i32, i32) {
    %c0_i32 = arith.constant 0 : i32
    %c0_i32_0 = arith.constant 0 : i32
    %c0_i32_1 = arith.constant 0 : i32
    %c0_i32_2 = arith.constant 0 : i32
    return %c0_i32, %c0_i32_0, %c0_i32_1 : i32, i32, i32
  }
  func.func @transform_7(%arg0: i32) -> (i32, i32, i32) {
    %c0_i32 = arith.constant 0 : i32
    %c0_i32_0 = arith.constant 0 : i32
    %c0_i32_1 = arith.constant 0 : i32
    %c0_i32_2 = arith.constant 0 : i32
    return %c0_i32, %c0_i32_0, %c0_i32_1 : i32, i32, i32
  }
  func.func @transform_8(%arg0: i32) -> (i32, i32, i32) {
    %c0_i32 = arith.constant 0 : i32
    %c0_i32_0 = arith.constant 0 : i32
    %c0_i32_1 = arith.constant 0 : i32
    %c0_i32_2 = arith.constant 0 : i32
    return %c0_i32, %c0_i32_0, %c0_i32_1 : i32, i32, i32
  }
  func.func @transform_9(%arg0: i32) -> (i32, i32) {
    %c0_i32 = arith.constant 0 : i32
    %c0_i32_0 = arith.constant 0 : i32
    %c0_i32_1 = arith.constant 0 : i32
    return %c0_i32, %c0_i32_0 : i32, i32
  }
  func.func @transform_10(%arg0: i32) -> (i32, i32) {
    %c0_i32 = arith.constant 0 : i32
    %c0_i32_0 = arith.constant 0 : i32
    %c0_i32_1 = arith.constant 0 : i32
    return %c0_i32, %c0_i32_0 : i32, i32
  }
  func.func @transform_11(%arg0: i32) -> (i32, i32) {
    %c0_i32 = arith.constant 0 : i32
    %c0_i32_0 = arith.constant 0 : i32
    %c0_i32_1 = arith.constant 0 : i32
    return %c0_i32, %c0_i32_0 : i32, i32
  }
  func.func @transform_12(%arg0: i32) -> (i32, i32) {
    %c0_i32 = arith.constant 0 : i32
    %c0_i32_0 = arith.constant 0 : i32
    %c0_i32_1 = arith.constant 0 : i32
    return %c0_i32, %c0_i32_0 : i32, i32
  }
  func.func @transform_13(%arg0: i32) -> (i32, i32) {
    %c0_i32 = arith.constant 0 : i32
    %c0_i32_0 = arith.constant 0 : i32
    %c0_i32_1 = arith.constant 0 : i32
    return %c0_i32, %c0_i32_0 : i32, i32
  }
  func.func @transform_14(%arg0: i32) -> (i32, i32, i32) {
    %c0_i32 = arith.constant 0 : i32
    %c0_i32_0 = arith.constant 0 : i32
    %c0_i32_1 = arith.constant 0 : i32
    return %arg0, %c0_i32, %c0_i32_0 : i32, i32, i32
  }
}

</mosaic_0001>

<llo_original>
// kernel: forward.1
$region0: #{forward.1}
  #allocation0 [shape = 'u32[]', space=smem, size = 0x4, offset = 0x4, fixed_abs, tag = 'smem constant byte address 0x4 - core index']
  #allocation1 [shape = 'u32[144,128]{1,0:T(1,128)}', space=vmem, size = 0x12000, scoped, tag = 'internal scratch']
  #allocation2 [shape = 'f32[1,1]{1,0:T(1,128)S(1)}', space=vmem, size = 0x200, scoped, tag = 'scoped memory for forward.1']
  %s0 = inlined_call_operand.vmem [shape: f32[2,16,256], index: 0, kind: input, shape index: {}]
  %s1 = inlined_call_operand.hbm [shape: f32[2,16,16], index: 1, kind: input, shape index: {}]
  %s2 = inlined_call_operand.hbm [shape: f32[4,3,256,256], index: 2, kind: input, shape index: {}]
  %s3 = inlined_call_operand.hbm [shape: f32[4,1,256], index: 3, kind: input, shape index: {}]
  %s4 = inlined_call_operand.hbm [shape: f32[4,1,256], index: 4, kind: input, shape index: {}]
  %s5 = inlined_call_operand.hbm [shape: f32[4,3,256,256], index: 5, kind: input, shape index: {}]
  %s6 = inlined_call_operand.hbm [shape: f32[4,1,256], index: 6, kind: input, shape index: {}]
  %s7 = inlined_call_operand.hbm [shape: f32[3,256,256], index: 7, kind: input, shape index: {}]
  %s8 = inlined_call_operand.hbm [shape: f32[3,256,256], index: 8, kind: input, shape index: {}]
  %s9 = inlined_call_operand.hbm [shape: f32[1,256], index: 9, kind: input, shape index: {}]
  %s10 = inlined_call_operand.hbm [shape: f32[1,256], index: 10, kind: input, shape index: {}]
  %s11 = inlined_call_operand.<no memory space> [shape: f32[1,1], index: 11, kind: input, shape index: {}]
  %s12 = inlined_call_operand.hbm [shape: f32[1,256], index: 12, kind: input, shape index: {}]
  %s13 = inlined_call_operand.hbm [shape: f32[1,256], index: 13, kind: input, shape index: {}]
  %s14 = inlined_call_operand.vmem [shape: f32[2,16,256], index: 14, kind: output, shape index: {}]
  %s15 = sld [smem:[#allocation0]]
  $region137: #{forward.1} parent=0
    _
  %s17 = ssub.s32 1, %s15
  %s18 = scalar_select 0, %s17, %s15
  %v19 = vstv %s11
  %20 = vst [vmem:[#allocation2] sm:$0x1] %v19
  $region1: #{forward.1} parent=0
    #allocation3 [shape = 'u8[16384]{0}', space=vmem, size = 0x4000, scoped, tag = 'input window, operand 1, single buffered']
    #allocation4 [shape = 's32[2]{0}', space=sflag, size = 0x8, scoped, tag = 'scoped memory for forward.1']
    #allocation5 [shape = 'u8[3145728]{0}', space=vmem, size = 0x300000, scoped, tag = 'input window, operand 2, single buffered']
    #allocation6 [shape = 's32[1]{0}', space=sflag, size = 0x4, scoped, tag = 'scoped memory for forward.1']
    #allocation7 [shape = 'u8[4096]{0}', space=vmem, size = 0x1000, scoped, tag = 'input window, operand 3, single buffered']
    #allocation8 [shape = 'u8[4096]{0}', space=vmem, size = 0x1000, scoped, tag = 'input window, operand 4, single buffered']
    #allocation9 [shape = 's32[1]{0}', space=sflag, size = 0x4, scoped, tag = 'scoped memory for forward.1']
    #allocation10 [shape = 'u8[3145728]{0}', space=vmem, size = 0x300000, scoped, tag = 'input window, operand 5, single buffered']
    #allocation11 [shape = 'u8[4096]{0}', space=vmem, size = 0x1000, scoped, tag = 'input window, operand 6, single buffered']
    #allocation12 [shape = 's32[1]{0}', space=sflag, size = 0x4, scoped, tag = 'scoped memory for forward.1']
    #allocation13 [shape = 'u8[786432]{0}', space=vmem, size = 0xc0000, scoped, tag = 'input window, operand 7, single buffered']
    #allocation14 [shape = 'u8[786432]{0}', space=vmem, size = 0xc0000, scoped, tag = 'input window, operand 8, single buffered']
    #allocation15 [shape = 's32[1]{0}', space=sflag, size = 0x4, scoped, tag = 'scoped memory for forward.1']
    #allocation16 [shape = 'u8[1024]{0}', space=vmem, size = 0x400, scoped, tag = 'input window, operand 9, single buffered']
    #allocation17 [shape = 'u8[1024]{0}', space=vmem, size = 0x400, scoped, tag = 'input window, operand 10, single buffered']
    #allocation18 [shape = 's32[1]{0}', space=sflag, size = 0x4, scoped, tag = 'scoped memory for forward.1']
    #allocation19 [shape = 'u8[1024]{0}', space=vmem, size = 0x400, scoped, tag = 'input window, operand 12, single buffered']
    #allocation20 [shape = 'u8[1024]{0}', space=vmem, size = 0x400, scoped, tag = 'input window, operand 13, single buffered']
    #allocation21 [shape = 's32[1]{0}', space=sflag, size = 0x4, scoped, tag = 'scoped memory for forward.1']
    %21 = vsyncpa [#allocation4], 0
    %22 = vsyncpa [#allocation6], 0
    %23 = vsyncpa [#allocation9], 0
    %24 = vsyncpa [#allocation12], 0
    %25 = vsyncpa [#allocation15], 0
    %26 = vsyncpa [#allocation18], 0
    %27 = vsyncpa [#allocation21], 0
    loop: start=0, step=1, limit=4
    $region2: #{forward.1} parent=1 // loop_pre_header
      _
    $region3: #{forward.1} parent=1 // loop_header
      %s29 = sphi 0, %s33
      %p30 = scmp.ge.s32.totalorder %s29, 4
      %s39 = sphi 0, %s41
      %s42 = sphi 0, %s39
      %s43 = sphi 0, %s42
      %s59 = sphi 0, %s43
      %s63 = sphi 0, %s63
      %s65 = sphi 0, %s63
      %s66 = sphi 0, %s65
      %s80 = sphi 0, %s66
      %s84 = sphi 0, %s84
      %s86 = sphi 0, %s84
      %s87 = sphi 0, %s86
      %s101 = sphi 0, %s87
      %s105 = sphi 0, %s105
      %s107 = sphi 0, %s105
      %s108 = sphi 0, %s107
      %s122 = sphi 0, %s108
      %s126 = sphi 0, %s126
      %s128 = sphi 0, %s126
      %s129 = sphi 0, %s128
      %s143 = sphi 0, %s129
      %s147 = sphi 0, %s147
      %s149 = sphi 0, %s147
      %s150 = sphi 0, %s149
      %s164 = sphi 0, %s150
      %s168 = sphi 0, %s168
      %s170 = sphi 0, %s168
      %s171 = sphi 0, %s170
      %s185 = sphi 0, %s171
      %s189 = sphi 0, %s189
      %s191 = sphi 0, %s189
      %s192 = sphi 0, %s191
      %s206 = sphi 0, %s192
      %s210 = sphi 0, %s210
      %s212 = sphi 0, %s210
      %s213 = sphi 0, %s212
      %s227 = sphi 0, %s213
      %s231 = sphi 0, %s231
      %s233 = sphi 0, %s231
      %s234 = sphi 0, %s233
      %s248 = sphi 0, %s234
      %s252 = sphi 0, %s252
      %s254 = sphi 0, %s252
      %s255 = sphi 0, %s254
      %s269 = sphi 0, %s255
      %s273 = sphi 0, %s273
      %s275 = sphi 0, %s273
      %s276 = sphi 0, %s275
      %s290 = sphi 0, %s276
      %s294 = sphi 0, %s294
      %s296 = sphi 0, %s294
      %s297 = sphi 0, %s296
      %s311 = sphi 0, %s297
      %s315 = sphi 0, %s315
      %s317 = sphi 0, %s315
      %s318 = sphi 0, %s317
      %s332 = sphi 0, %s318
      %s338 = sphi 0, %s340
      %s341 = sphi 0, %s338
      %s342 = sphi 0, %s341
      %s358 = sphi 0, %s342
    $region4: #{forward.1} parent=1 // loop_header_branch
      %32 = sbr.rel (%p30) target = $region8
    $region5: #{forward.1} parent=1 // loop_body
      %s34 = ssub.s32 %s29, 1
      %s35 = ssub.s32 %s29, 2
      %s36 = sadd.s32 %s29, 1
      %s37 = ssub.s32 %s29, %s36
      %p38 = scmp.eq.s32.totalorder %s37, 0
      %s40 = sadd.s32 %s39, 1
      %s41 = scalar_select %p38, %s39, %s40
      %p44 = pneg %p38
      %p45 = scmp.eq.s32.totalorder %s29, 1
      %p46 = por %p44, %p45
      %p47 = scmp.ne.s32.totalorder %s39, %s42
      %p48 = scmp.eq.s32.totalorder %s29, 0
      %p49 = por %p47, %p48
      %p50 = scmp.ne.s32.totalorder %s39, %s42
      %p51 = scmp.eq.s32.totalorder %s34, 1
      %p52 = por %p50, %p51
      %p53 = scmp.ne.s32.totalorder %s42, %s43
      %p54 = scmp.eq.s32.totalorder %s34, 0
      %p55 = por %p53, %p54
      %p56 = scmp.ne.s32.totalorder %s42, %s43
      %p57 = scmp.eq.s32.totalorder %s35, 1
      %p58 = por %p56, %p57
      %p60 = scmp.ne.s32.totalorder %s43, %s59
      %p61 = scmp.eq.s32.totalorder %s35, 0
      %p62 = por %p60, %p61
      %s64 = sadd.s32 %s63, 1
      %p67 = scmp.eq.s32.totalorder %s29, 1
      %p68 = scmp.ne.s32.totalorder %s63, %s65
      %p69 = scmp.eq.s32.totalorder %s29, 0
      %p70 = por %p68, %p69
      %p71 = scmp.ne.s32.totalorder %s63, %s65
      %p72 = scmp.eq.s32.totalorder %s34, 1
      %p73 = por %p71, %p72
      %p74 = scmp.ne.s32.totalorder %s65, %s66
      %p75 = scmp.eq.s32.totalorder %s34, 0
      %p76 = por %p74, %p75
      %p77 = scmp.ne.s32.totalorder %s65, %s66
      %p78 = scmp.eq.s32.totalorder %s35, 1
      %p79 = por %p77, %p78
      %p81 = scmp.ne.s32.totalorder %s66, %s80
      %p82 = scmp.eq.s32.totalorder %s35, 0
      %p83 = por %p81, %p82
      %s85 = sadd.s32 %s84, 1
      %p88 = scmp.eq.s32.totalorder %s29, 1
      %p89 = scmp.ne.s32.totalorder %s84, %s86
      %p90 = scmp.eq.s32.totalorder %s29, 0
      %p91 = por %p89, %p90
      %p92 = scmp.ne.s32.totalorder %s84, %s86
      %p93 = scmp.eq.s32.totalorder %s34, 1
      %p94 = por %p92, %p93
      %p95 = scmp.ne.s32.totalorder %s86, %s87
      %p96 = scmp.eq.s32.totalorder %s34, 0
      %p97 = por %p95, %p96
      %p98 = scmp.ne.s32.totalorder %s86, %s87
      %p99 = scmp.eq.s32.totalorder %s35, 1
      %p100 = por %p98, %p99
      %p102 = scmp.ne.s32.totalorder %s87, %s101
      %p103 = scmp.eq.s32.totalorder %s35, 0
      %p104 = por %p102, %p103
      %s106 = sadd.s32 %s105, 1
      %p109 = scmp.eq.s32.totalorder %s29, 1
      %p110 = scmp.ne.s32.totalorder %s105, %s107
      %p111 = scmp.eq.s32.totalorder %s29, 0
      %p112 = por %p110, %p111
      %p113 = scmp.ne.s32.totalorder %s105, %s107
      %p114 = scmp.eq.s32.totalorder %s34, 1
      %p115 = por %p113, %p114
      %p116 = scmp.ne.s32.totalorder %s107, %s108
      %p117 = scmp.eq.s32.totalorder %s34, 0
      %p118 = por %p116, %p117
      %p119 = scmp.ne.s32.totalorder %s107, %s108
      %p120 = scmp.eq.s32.totalorder %s35, 1
      %p121 = por %p119, %p120
      %p123 = scmp.ne.s32.totalorder %s108, %s122
      %p124 = scmp.eq.s32.totalorder %s35, 0
      %p125 = por %p123, %p124
      %s127 = sadd.s32 %s126, 1
      %p130 = scmp.eq.s32.totalorder %s29, 1
      %p131 = scmp.ne.s32.totalorder %s126, %s128
      %p132 = scmp.eq.s32.totalorder %s29, 0
      %p133 = por %p131, %p132
      %p134 = scmp.ne.s32.totalorder %s126, %s128
      %p135 = scmp.eq.s32.totalorder %s34, 1
      %p136 = por %p134, %p135
      %p137 = scmp.ne.s32.totalorder %s128, %s129
      %p138 = scmp.eq.s32.totalorder %s34, 0
      %p139 = por %p137, %p138
      %p140 = scmp.ne.s32.totalorder %s128, %s129
      %p141 = scmp.eq.s32.totalorder %s35, 1
      %p142 = por %p140, %p141
      %p144 = scmp.ne.s32.totalorder %s129, %s143
      %p145 = scmp.eq.s32.totalorder %s35, 0
      %p146 = por %p144, %p145
      %s148 = sadd.s32 %s147, 1
      %p151 = scmp.eq.s32.totalorder %s29, 1
      %p152 = scmp.ne.s32.totalorder %s147, %s149
      %p153 = scmp.eq.s32.totalorder %s29, 0
      %p154 = por %p152, %p153
      %p155 = scmp.ne.s32.totalorder %s147, %s149
      %p156 = scmp.eq.s32.totalorder %s34, 1
      %p157 = por %p155, %p156
      %p158 = scmp.ne.s32.totalorder %s149, %s150
      %p159 = scmp.eq.s32.totalorder %s34, 0
      %p160 = por %p158, %p159
      %p161 = scmp.ne.s32.totalorder %s149, %s150
      %p162 = scmp.eq.s32.totalorder %s35, 1
      %p163 = por %p161, %p162
      %p165 = scmp.ne.s32.totalorder %s150, %s164
      %p166 = scmp.eq.s32.totalorder %s35, 0
      %p167 = por %p165, %p166
      %s169 = sadd.s32 %s168, 1
      %p172 = scmp.eq.s32.totalorder %s29, 1
      %p173 = scmp.ne.s32.totalorder %s168, %s170
      %p174 = scmp.eq.s32.totalorder %s29, 0
      %p175 = por %p173, %p174
      %p176 = scmp.ne.s32.totalorder %s168, %s170
      %p177 = scmp.eq.s32.totalorder %s34, 1
      %p178 = por %p176, %p177
      %p179 = scmp.ne.s32.totalorder %s170, %s171
      %p180 = scmp.eq.s32.totalorder %s34, 0
      %p181 = por %p179, %p180
      %p182 = scmp.ne.s32.totalorder %s170, %s171
      %p183 = scmp.eq.s32.totalorder %s35, 1
      %p184 = por %p182, %p183
      %p186 = scmp.ne.s32.totalorder %s171, %s185
      %p187 = scmp.eq.s32.totalorder %s35, 0
      %p188 = por %p186, %p187
      %s190 = sadd.s32 %s189, 1
      %p193 = scmp.eq.s32.totalorder %s29, 1
      %p194 = scmp.ne.s32.totalorder %s189, %s191
      %p195 = scmp.eq.s32.totalorder %s29, 0
      %p196 = por %p194, %p195
      %p197 = scmp.ne.s32.totalorder %s189, %s191
      %p198 = scmp.eq.s32.totalorder %s34, 1
      %p199 = por %p197, %p198
      %p200 = scmp.ne.s32.totalorder %s191, %s192
      %p201 = scmp.eq.s32.totalorder %s34, 0
      %p202 = por %p200, %p201
      %p203 = scmp.ne.s32.totalorder %s191, %s192
      %p204 = scmp.eq.s32.totalorder %s35, 1
      %p205 = por %p203, %p204
      %p207 = scmp.ne.s32.totalorder %s192, %s206
      %p208 = scmp.eq.s32.totalorder %s35, 0
      %p209 = por %p207, %p208
      %s211 = sadd.s32 %s210, 1
      %p214 = scmp.eq.s32.totalorder %s29, 1
      %p215 = scmp.ne.s32.totalorder %s210, %s212
      %p216 = scmp.eq.s32.totalorder %s29, 0
      %p217 = por %p215, %p216
      %p218 = scmp.ne.s32.totalorder %s210, %s212
      %p219 = scmp.eq.s32.totalorder %s34, 1
      %p220 = por %p218, %p219
      %p221 = scmp.ne.s32.totalorder %s212, %s213
      %p222 = scmp.eq.s32.totalorder %s34, 0
      %p223 = por %p221, %p222
      %p224 = scmp.ne.s32.totalorder %s212, %s213
      %p225 = scmp.eq.s32.totalorder %s35, 1
      %p226 = por %p224, %p225
      %p228 = scmp.ne.s32.totalorder %s213, %s227
      %p229 = scmp.eq.s32.totalorder %s35, 0
      %p230 = por %p228, %p229
      %s232 = sadd.s32 %s231, 1
      %p235 = scmp.eq.s32.totalorder %s29, 1
      %p236 = scmp.ne.s32.totalorder %s231, %s233
      %p237 = scmp.eq.s32.totalorder %s29, 0
      %p238 = por %p236, %p237
      %p239 = scmp.ne.s32.totalorder %s231, %s233
      %p240 = scmp.eq.s32.totalorder %s34, 1
      %p241 = por %p239, %p240
      %p242 = scmp.ne.s32.totalorder %s233, %s234
      %p243 = scmp.eq.s32.totalorder %s34, 0
      %p244 = por %p242, %p243
      %p245 = scmp.ne.s32.totalorder %s233, %s234
      %p246 = scmp.eq.s32.totalorder %s35, 1
      %p247 = por %p245, %p246
      %p249 = scmp.ne.s32.totalorder %s234, %s248
      %p250 = scmp.eq.s32.totalorder %s35, 0
      %p251 = por %p249, %p250
      %s253 = sadd.s32 %s252, 1
      %p256 = scmp.eq.s32.totalorder %s29, 1
      %p257 = scmp.ne.s32.totalorder %s252, %s254
      %p258 = scmp.eq.s32.totalorder %s29, 0
      %p259 = por %p257, %p258
      %p260 = scmp.ne.s32.totalorder %s252, %s254
      %p261 = scmp.eq.s32.totalorder %s34, 1
      %p262 = por %p260, %p261
      %p263 = scmp.ne.s32.totalorder %s254, %s255
      %p264 = scmp.eq.s32.totalorder %s34, 0
      %p265 = por %p263, %p264
      %p266 = scmp.ne.s32.totalorder %s254, %s255
      %p267 = scmp.eq.s32.totalorder %s35, 1
      %p268 = por %p266, %p267
      %p270 = scmp.ne.s32.totalorder %s255, %s269
      %p271 = scmp.eq.s32.totalorder %s35, 0
      %p272 = por %p270, %p271
      %s274 = sadd.s32 %s273, 1
      %p277 = scmp.eq.s32.totalorder %s29, 1
      %p278 = scmp.ne.s32.totalorder %s273, %s275
      %p279 = scmp.eq.s32.totalorder %s29, 0
      %p280 = por %p278, %p279
      %p281 = scmp.ne.s32.totalorder %s273, %s275
      %p282 = scmp.eq.s32.totalorder %s34, 1
      %p283 = por %p281, %p282
      %p284 = scmp.ne.s32.totalorder %s275, %s276
      %p285 = scmp.eq.s32.totalorder %s34, 0
      %p286 = por %p284, %p285
      %p287 = scmp.ne.s32.totalorder %s275, %s276
      %p288 = scmp.eq.s32.totalorder %s35, 1
      %p289 = por %p287, %p288
      %p291 = scmp.ne.s32.totalorder %s276, %s290
      %p292 = scmp.eq.s32.totalorder %s35, 0
      %p293 = por %p291, %p292
      %s295 = sadd.s32 %s294, 1
      %p298 = scmp.eq.s32.totalorder %s29, 1
      %p299 = scmp.ne.s32.totalorder %s294, %s296
      %p300 = scmp.eq.s32.totalorder %s29, 0
      %p301 = por %p299, %p300
      %p302 = scmp.ne.s32.totalorder %s294, %s296
      %p303 = scmp.eq.s32.totalorder %s34, 1
      %p304 = por %p302, %p303
      %p305 = scmp.ne.s32.totalorder %s296, %s297
      %p306 = scmp.eq.s32.totalorder %s34, 0
      %p307 = por %p305, %p306
      %p308 = scmp.ne.s32.totalorder %s296, %s297
      %p309 = scmp.eq.s32.totalorder %s35, 1
      %p310 = por %p308, %p309
      %p312 = scmp.ne.s32.totalorder %s297, %s311
      %p313 = scmp.eq.s32.totalorder %s35, 0
      %p314 = por %p312, %p313
      %s316 = sadd.s32 %s315, 1
      %p319 = scmp.eq.s32.totalorder %s29, 1
      %p320 = scmp.ne.s32.totalorder %s315, %s317
      %p321 = scmp.eq.s32.totalorder %s29, 0
      %p322 = por %p320, %p321
      %p323 = scmp.ne.s32.totalorder %s315, %s317
      %p324 = scmp.eq.s32.totalorder %s34, 1
      %p325 = por %p323, %p324
      %p326 = scmp.ne.s32.totalorder %s317, %s318
      %p327 = scmp.eq.s32.totalorder %s34, 0
      %p328 = por %p326, %p327
      %p329 = scmp.ne.s32.totalorder %s317, %s318
      %p330 = scmp.eq.s32.totalorder %s35, 1
      %p331 = por %p329, %p330
      %p333 = scmp.ne.s32.totalorder %s318, %s332
      %p334 = scmp.eq.s32.totalorder %s35, 0
      %p335 = por %p333, %p334
      %s336 = ssub.s32 %s29, %s36
      %p337 = scmp.eq.s32.totalorder %s336, 0
      %s339 = sadd.s32 %s338, 1
      %s340 = scalar_select %p337, %s338, %s339
      %p343 = pneg %p337
      %p344 = scmp.eq.s32.totalorder %s29, 1
      %p345 = por %p343, %p344
      %p346 = scmp.ne.s32.totalorder %s338, %s341
      %p347 = scmp.eq.s32.totalorder %s29, 0
      %p348 = por %p346, %p347
      %p349 = scmp.ne.s32.totalorder %s338, %s341
      %p350 = scmp.eq.s32.totalorder %s34, 1
      %p351 = por %p349, %p350
      %p352 = scmp.ne.s32.totalorder %s341, %s342
      %p353 = scmp.eq.s32.totalorder %s34, 0
      %p354 = por %p352, %p353
      %p355 = scmp.ne.s32.totalorder %s341, %s342
      %p356 = scmp.eq.s32.totalorder %s35, 1
      %p357 = por %p355, %p356
      %p359 = scmp.ne.s32.totalorder %s342, %s358
      %p360 = scmp.eq.s32.totalorder %s35, 0
      %p361 = por %p359, %p360
      %p362 = scmp.le.s32.totalorder 1, %s29
      %p363 = scmp.lt.s32.totalorder %s29, 3
      %p364 = pnand %p362, %p363
      %p365 = pneg %p364
      // Predicated region
      $region9: #{forward.1} parent=5 // pred_check
        _
      $region10: #{forward.1} parent=5 // pred_check_branch
        %367 = sbr.rel (%p364) target = $region12
      $region11: #{forward.1} parent=5 // pred_region
        %s368 = ssub.s32 %s29, 1
        // Predicated region
        $region13: #{forward.1} parent=11 // pred_check
          %p369 = pneg %p76
        $region14: #{forward.1} parent=11 // pred_check_branch
          %371 = sbr.rel (%p369) target = $region16
        $region15: #{forward.1} parent=11 // pred_region
          %s373 = ssub.s32 512, 512
          %374 = vsyncadd [#allocation4], %s373
          %s375 = sshll.u32 [#allocation3], 4
          %s376 = int_to_ptr.vmem [resolvable:$true] %s375
          %381 = dma.hbm_to_vmem [thread:$0]  %s1, 512, %s376, [#allocation4], 128, 128, 8
        $region16: #{forward.1} parent=11 // pred_fallthru
          _
        // Predicated region
        $region17: #{forward.1} parent=11 // pred_check
          %p382 = pneg %p97
        $region18: #{forward.1} parent=11 // pred_check_branch
          %384 = sbr.rel (%p382) target = $region20
        $region19: #{forward.1} parent=11 // pred_region
          %s386 = ssub.s32 98304, 98304
          %387 = vsyncadd [#allocation6], %s386
          %s388 = sshll.u32 [#allocation5], 4
          %s389 = int_to_ptr.vmem [resolvable:$true] %s388
          %394 = dma.hbm_to_vmem [thread:$0]  %s2, 98304, %s389, [#allocation6], 256, 256, 16
        $region20: #{forward.1} parent=11 // pred_fallthru
          _
        // Predicated region
        $region21: #{forward.1} parent=11 // pred_check
          %p395 = pneg %p118
        $region22: #{forward.1} parent=11 // pred_check_branch
          %397 = sbr.rel (%p395) target = $region24
        $region23: #{forward.1} parent=11 // pred_region
          %s399 = ssub.s32 128, 128
          %400 = vsyncadd [#allocation6], %s399
          %s401 = sshll.u32 [#allocation7], 4
          %s402 = int_to_ptr.vmem [resolvable:$true] %s401
          %407 = dma.hbm_to_vmem [thread:$0]  %s3, 128, %s402, [#allocation6], 32, 32, 2
        $region24: #{forward.1} parent=11 // pred_fallthru
          _
        // Predicated region
        $region25: #{forward.1} parent=11 // pred_check
          %p408 = pneg %p139
        $region26: #{forward.1} parent=11 // pred_check_branch
          %410 = sbr.rel (%p408) target = $region28
        $region27: #{forward.1} parent=11 // pred_region
          %s412 = ssub.s32 128, 128
          %413 = vsyncadd [#allocation9], %s412
          %s414 = sshll.u32 [#allocation8], 4
          %s415 = int_to_ptr.vmem [resolvable:$true] %s414
          %420 = dma.hbm_to_vmem [thread:$0]  %s4, 128, %s415, [#allocation9], 32, 32, 2
        $region28: #{forward.1} parent=11 // pred_fallthru
          _
        // Predicated region
        $region29: #{forward.1} parent=11 // pred_check
          %p421 = pneg %p160
        $region30: #{forward.1} parent=11 // pred_check_branch
          %423 = sbr.rel (%p421) target = $region32
        $region31: #{forward.1} parent=11 // pred_region
          %s425 = ssub.s32 98304, 98304
          %426 = vsyncadd [#allocation9], %s425
          %s427 = sshll.u32 [#allocation10], 4
          %s428 = int_to_ptr.vmem [resolvable:$true] %s427
          %433 = dma.hbm_to_vmem [thread:$0]  %s5, 98304, %s428, [#allocation9], 256, 256, 16
        $region32: #{forward.1} parent=11 // pred_fallthru
          _
        // Predicated region
        $region33: #{forward.1} parent=11 // pred_check
          %p434 = pneg %p181
        $region34: #{forward.1} parent=11 // pred_check_branch
          %436 = sbr.rel (%p434) target = $region36
        $region35: #{forward.1} parent=11 // pred_region
          %s438 = ssub.s32 128, 128
          %439 = vsyncadd [#allocation12], %s438
          %s440 = sshll.u32 [#allocation11], 4
          %s441 = int_to_ptr.vmem [resolvable:$true] %s440
          %446 = dma.hbm_to_vmem [thread:$0]  %s6, 128, %s441, [#allocation12], 32, 32, 2
        $region36: #{forward.1} parent=11 // pred_fallthru
          _
        // Predicated region
        $region37: #{forward.1} parent=11 // pred_check
          %p447 = pneg %p202
        $region38: #{forward.1} parent=11 // pred_check_branch
          %449 = sbr.rel (%p447) target = $region40
        $region39: #{forward.1} parent=11 // pred_region
          %s451 = ssub.s32 24576, 24576
          %452 = vsyncadd [#allocation12], %s451
          %s453 = sshll.u32 [#allocation13], 4
          %s454 = int_to_ptr.vmem [resolvable:$true] %s453
          %459 = dma.hbm_to_vmem [thread:$0]  %s7, 24576, %s454, [#allocation12], 256, 256, 16
        $region40: #{forward.1} parent=11 // pred_fallthru
          _
        // Predicated region
        $region41: #{forward.1} parent=11 // pred_check
          %p460 = pneg %p223
        $region42: #{forward.1} parent=11 // pred_check_branch
          %462 = sbr.rel (%p460) target = $region44
        $region43: #{forward.1} parent=11 // pred_region
          %s464 = ssub.s32 24576, 24576
          %465 = vsyncadd [#allocation15], %s464
          %s466 = sshll.u32 [#allocation14], 4
          %s467 = int_to_ptr.vmem [resolvable:$true] %s466
          %472 = dma.hbm_to_vmem [thread:$0]  %s8, 24576, %s467, [#allocation15], 256, 256, 16
        $region44: #{forward.1} parent=11 // pred_fallthru
          _
        // Predicated region
        $region45: #{forward.1} parent=11 // pred_check
          %p473 = pneg %p244
        $region46: #{forward.1} parent=11 // pred_check_branch
          %475 = sbr.rel (%p473) target = $region48
        $region47: #{forward.1} parent=11 // pred_region
          %s477 = ssub.s32 32, 32
          %478 = vsyncadd [#allocation15], %s477
          %s480 = sshll.u32 [#allocation16], 4
          %s481 = int_to_ptr.vmem [resolvable:$true] %s480
          %483 = dma.hbm_to_vmem [thread:$0]  %s9, 32, %s481, [#allocation15]
        $region48: #{forward.1} parent=11 // pred_fallthru
          _
        // Predicated region
        $region49: #{forward.1} parent=11 // pred_check
          %p484 = pneg %p265
        $region50: #{forward.1} parent=11 // pred_check_branch
          %486 = sbr.rel (%p484) target = $region52
        $region51: #{forward.1} parent=11 // pred_region
          %s488 = ssub.s32 32, 32
          %489 = vsyncadd [#allocation18], %s488
          %s491 = sshll.u32 [#allocation17], 4
          %s492 = int_to_ptr.vmem [resolvable:$true] %s491
          %494 = dma.hbm_to_vmem [thread:$0]  %s10, 32, %s492, [#allocation18]
        $region52: #{forward.1} parent=11 // pred_fallthru
          _
        // Predicated region
        $region53: #{forward.1} parent=11 // pred_check
          %p495 = pneg %p286
        $region54: #{forward.1} parent=11 // pred_check_branch
          %497 = sbr.rel (%p495) target = $region56
        $region55: #{forward.1} parent=11 // pred_region
          _
        $region56: #{forward.1} parent=11 // pred_fallthru
          _
        // Predicated region
        $region57: #{forward.1} parent=11 // pred_check
          %p498 = pneg %p307
        $region58: #{forward.1} parent=11 // pred_check_branch
          %500 = sbr.rel (%p498) target = $region60
        $region59: #{forward.1} parent=11 // pred_region
          %s502 = ssub.s32 32, 32
          %503 = vsyncadd [#allocation18], %s502
          %s505 = sshll.u32 [#allocation19], 4
          %s506 = int_to_ptr.vmem [resolvable:$true] %s505
          %508 = dma.hbm_to_vmem [thread:$0]  %s12, 32, %s506, [#allocation18]
        $region60: #{forward.1} parent=11 // pred_fallthru
          _
        // Predicated region
        $region61: #{forward.1} parent=11 // pred_check
          %p509 = pneg %p328
        $region62: #{forward.1} parent=11 // pred_check_branch
          %511 = sbr.rel (%p509) target = $region64
        $region63: #{forward.1} parent=11 // pred_region
          %s513 = ssub.s32 32, 32
          %514 = vsyncadd [#allocation21], %s513
          %s516 = sshll.u32 [#allocation20], 4
          %s517 = int_to_ptr.vmem [resolvable:$true] %s516
          %519 = dma.hbm_to_vmem [thread:$0]  %s13, 32, %s517, [#allocation21]
        $region64: #{forward.1} parent=11 // pred_fallthru
          _
      $region12: #{forward.1} parent=5 // pred_fallthru
        _
      %p520 = scmp.lt.s32.totalorder %s29, 2
      // Predicated region
      $region65: #{forward.1} parent=5 // pred_check
        %p521 = pneg %p520
      $region66: #{forward.1} parent=5 // pred_check_branch
        %523 = sbr.rel (%p521) target = $region68
      $region67: #{forward.1} parent=5 // pred_region
        // Predicated region
        $region69: #{forward.1} parent=67 // pred_check
          %p524 = pneg %p49
        $region70: #{forward.1} parent=67 // pred_check_branch
          %526 = sbr.rel (%p524) target = $region72
        $region71: #{forward.1} parent=67 // pred_region
          %p527 = scmp.lt.s32.totalorder %s29, 1
          %s528 = scalar_select %p527, %s29, 1
          %s529 = smul.addr %s528, 4
          %s530 = smul.addr %s529, 8
          %s531 = scalar_lea.vmem %s0, %s530
        $region72: #{forward.1} parent=67 // pred_fallthru
          _
      $region68: #{forward.1} parent=5 // pred_fallthru
        _
      %p532 = scmp.le.s32.totalorder 1, %s29
      %p533 = scmp.lt.s32.totalorder %s29, 3
      %p534 = pnand %p532, %p533
      %p535 = pneg %p534
      // Predicated region
      $region73: #{forward.1} parent=5 // pred_check
        _
      $region74: #{forward.1} parent=5 // pred_check_branch
        %537 = sbr.rel (%p534) target = $region76
      $region75: #{forward.1} parent=5 // pred_region
        %s538 = ssub.s32 %s29, 1
        // Predicated region
        $region77: #{forward.1} parent=75 // pred_check
          %p539 = pneg %p76
        $region78: #{forward.1} parent=75 // pred_check_branch
          %541 = sbr.rel (%p539) target = $region80
        $region79: #{forward.1} parent=75 // pred_region
          %542 = dma.done [#allocation4], 512
        $region80: #{forward.1} parent=75 // pred_fallthru
          _
        // Predicated region
        $region81: #{forward.1} parent=75 // pred_check
          %p543 = pneg %p97
        $region82: #{forward.1} parent=75 // pred_check_branch
          %545 = sbr.rel (%p543) target = $region84
        $region83: #{forward.1} parent=75 // pred_region
          %546 = dma.done [#allocation6], 98304
        $region84: #{forward.1} parent=75 // pred_fallthru
          _
        // Predicated region
        $region85: #{forward.1} parent=75 // pred_check
          %p547 = pneg %p118
        $region86: #{forward.1} parent=75 // pred_check_branch
          %549 = sbr.rel (%p547) target = $region88
        $region87: #{forward.1} parent=75 // pred_region
          %550 = dma.done [#allocation6], 128
        $region88: #{forward.1} parent=75 // pred_fallthru
          _
        // Predicated region
        $region89: #{forward.1} parent=75 // pred_check
          %p551 = pneg %p139
        $region90: #{forward.1} parent=75 // pred_check_branch
          %553 = sbr.rel (%p551) target = $region92
        $region91: #{forward.1} parent=75 // pred_region
          %554 = dma.done [#allocation9], 128
        $region92: #{forward.1} parent=75 // pred_fallthru
          _
        // Predicated region
        $region93: #{forward.1} parent=75 // pred_check
          %p555 = pneg %p160
        $region94: #{forward.1} parent=75 // pred_check_branch
          %557 = sbr.rel (%p555) target = $region96
        $region95: #{forward.1} parent=75 // pred_region
          %558 = dma.done [#allocation9], 98304
        $region96: #{forward.1} parent=75 // pred_fallthru
          _
        // Predicated region
        $region97: #{forward.1} parent=75 // pred_check
          %p559 = pneg %p181
        $region98: #{forward.1} parent=75 // pred_check_branch
          %561 = sbr.rel (%p559) target = $region100
        $region99: #{forward.1} parent=75 // pred_region
          %562 = dma.done [#allocation12], 128
        $region100: #{forward.1} parent=75 // pred_fallthru
          _
        // Predicated region
        $region101: #{forward.1} parent=75 // pred_check
          %p563 = pneg %p202
        $region102: #{forward.1} parent=75 // pred_check_branch
          %565 = sbr.rel (%p563) target = $region104
        $region103: #{forward.1} parent=75 // pred_region
          %566 = dma.done [#allocation12], 24576
        $region104: #{forward.1} parent=75 // pred_fallthru
          _
        // Predicated region
        $region105: #{forward.1} parent=75 // pred_check
          %p567 = pneg %p223
        $region106: #{forward.1} parent=75 // pred_check_branch
          %569 = sbr.rel (%p567) target = $region108
        $region107: #{forward.1} parent=75 // pred_region
          %570 = dma.done [#allocation15], 24576
        $region108: #{forward.1} parent=75 // pred_fallthru
          _
        // Predicated region
        $region109: #{forward.1} parent=75 // pred_check
          %p571 = pneg %p244
        $region110: #{forward.1} parent=75 // pred_check_branch
          %573 = sbr.rel (%p571) target = $region112
        $region111: #{forward.1} parent=75 // pred_region
          %574 = dma.done [#allocation15], 32
        $region112: #{forward.1} parent=75 // pred_fallthru
          _
        // Predicated region
        $region113: #{forward.1} parent=75 // pred_check
          %p575 = pneg %p265
        $region114: #{forward.1} parent=75 // pred_check_branch
          %577 = sbr.rel (%p575) target = $region116
        $region115: #{forward.1} parent=75 // pred_region
          %578 = dma.done [#allocation18], 32
        $region116: #{forward.1} parent=75 // pred_fallthru
          _
        // Predicated region
        $region117: #{forward.1} parent=75 // pred_check
          %p579 = pneg %p307
        $region118: #{forward.1} parent=75 // pred_check_branch
          %581 = sbr.rel (%p579) target = $region120
        $region119: #{forward.1} parent=75 // pred_region
          %582 = dma.done [#allocation18], 32
        $region120: #{forward.1} parent=75 // pred_fallthru
          _
        // Predicated region
        $region121: #{forward.1} parent=75 // pred_check
          %p583 = pneg %p328
        $region122: #{forward.1} parent=75 // pred_check_branch
          %585 = sbr.rel (%p583) target = $region124
        $region123: #{forward.1} parent=75 // pred_region
          %586 = dma.done [#allocation21], 32
        $region124: #{forward.1} parent=75 // pred_fallthru
          _
        %p587 = scmp.lt.s32.totalorder %s34, 1
        %s588 = scalar_select %p587, %s34, 1
        %s589 = smul.addr %s588, 4
        %s590 = smul.addr %s589, 8
        %s591 = scalar_lea.vmem %s0, %s590
        %p592 = pneg %p55
        %p593 = pneg %p52
        %p594 = pneg %p76
        %p595 = pneg %p73
        %p596 = pneg %p97
        %p597 = pneg %p94
        %p598 = pneg %p118
        %p599 = pneg %p115
        %p600 = pneg %p139
        %p601 = pneg %p136
        %p602 = pneg %p160
        %p603 = pneg %p157
        %p604 = pneg %p181
        %p605 = pneg %p178
        %p606 = pneg %p202
        %p607 = pneg %p199
        %p608 = pneg %p223
        %p609 = pneg %p220
        %p610 = pneg %p244
        %p611 = pneg %p241
        %p612 = pneg %p265
        %p613 = pneg %p262
        %p614 = pneg %p286
        %p615 = pneg %p283
        %p616 = pneg %p307
        %p617 = pneg %p304
        %p618 = pneg %p328
        %p619 = pneg %p325
        %p620 = pneg %p354
        %p621 = pneg %p351
        %p622 = scmp.lt.s32.totalorder %s34, 1
        %s623 = scalar_select %p622, %s34, 1
        %s624 = smul.addr %s623, 4
        %s625 = smul.addr %s624, 8
        %s626 = scalar_lea.vmem %s14, %s625
        %p627 = scmp.lt.s32.totalorder %s34, 1
        %s628 = scalar_select %p627, %s34, 1
        %s629 = smul.addr %s628, 4
        %s630 = smul.addr %s629, 8
        %s631 = scalar_lea.vmem %s0, %s630
        %p632 = scmp.lt.s32.totalorder %s34, 1
        %s633 = scalar_select %p632, %s34, 1
        %s634 = smul.addr %s633, 4
        %s635 = smul.addr %s634, 8
        %s636 = scalar_lea.vmem %s14, %s635
        %v637 = vld [vmem:[%s631] sm:$0xff]
        %v638 = vld [vmem:[%s631 + $0x8] sm:$0xff]
        %v639 = vld [vmem:[%s631 + $0x10] sm:$0xff]
        %v640 = vld [vmem:[%s631 + $0x18] sm:$0xff]
        %v641 = vld [vmem:[#allocation3] sm:$0xff]
        %v642 = vld [vmem:[#allocation3 + $0x8] sm:$0xff]
        %vm643 = vcmask 130048
        %v645 = vsel %vm643, %v641, 0
        %v648 = vsel %vm643, %v642, 0
        %650 = vmatprep.subr.mxu0 %v638
        %651 = vmatpush1.msra.mxu0 %v637
        %652 = vmatprep.subr.mxu0 %v640
        %653 = vmatpush1.msra.mxu0 %v639
        %654 = vmatprep.subr.mxu0 0.0
        %655 = vmatpush1.msra.mxu0 0.0
        %656 = vmatprep.subr.mxu0 0.0
        %657 = vmatpush1.msra.mxu0 0.0
        %658 = vmatprep.subr.mxu0 0.0
        %659 = vmatpush1.msra.mxu0 0.0
        %660 = vmatprep.subr.mxu0 0.0
        %661 = vmatpush1.msra.mxu0 0.0
        %662 = vmatprep.subr.mxu0 0.0
        %663 = vmatpush1.msra.mxu0 0.0
        %664 = vmatprep.subr.mxu0 0.0
        %665 = vmatpush1.msra.mxu0 0.0
        %666 = vmatprep.subr.mxu0 0.0
        %667 = vmatpush1.msra.mxu0 0.0
        %668 = vmatprep.subr.mxu0 0.0
        %669 = vmatpush1.msra.mxu0 0.0
        %670 = vmatprep.subr.mxu0 0.0
        %671 = vmatpush1.msra.mxu0 0.0
        %672 = vmatprep.subr.mxu0 0.0
        %673 = vmatpush1.msra.mxu0 0.0
        %674 = vmatprep.subr.mxu0 0.0
        %675 = vmatpush1.msra.mxu0 0.0
        %676 = vmatprep.subr.mxu0 0.0
        %677 = vmatpush1.msra.mxu0 0.0
        %678 = vmatprep.subr.mxu0 0.0
        %679 = vmatpush1.msra.mxu0 0.0
        %680 = vmatprep.subr.mxu0 0.0
        %681 = vmatpush1.msra.mxu0 0.0
        %682 = vmatprep.subr.mxu0 0.0
        %683 = vmatpush1.msra.mxu0 0.0
        %684 = vmatprep.subr.mxu0 0.0
        %685 = vmatpush1.msra.mxu0 0.0
        %686 = vmatprep.subr.mxu0 0.0
        %687 = vmatpush1.msra.mxu0 0.0
        %688 = vmatprep.subr.mxu0 0.0
        %689 = vmatpush1.msra.mxu0 0.0
        %690 = vmatprep.subr.mxu0 0.0
        %691 = vmatpush1.msra.mxu0 0.0
        %692 = vmatprep.subr.mxu0 0.0
        %693 = vmatpush1.msra.mxu0 0.0
        %694 = vmatprep.subr.mxu0 0.0
        %695 = vmatpush1.msra.mxu0 0.0
        %696 = vmatprep.subr.mxu0 0.0
        %697 = vmatpush1.msra.mxu0 0.0
        %698 = vmatprep.subr.mxu0 0.0
        %699 = vmatpush1.msra.mxu0 0.0
        %700 = vmatprep.subr.mxu0 0.0
        %701 = vmatpush1.msra.mxu0 0.0
        %702 = vmatprep.subr.mxu0 0.0
        %703 = vmatpush1.msra.mxu0 0.0
        %704 = vmatprep.subr.mxu0 0.0
        %705 = vmatpush1.msra.mxu0 0.0
        %706 = vmatprep.subr.mxu0 0.0
        %707 = vmatpush1.msra.mxu0 0.0
        %708 = vmatprep.subr.mxu0 0.0
        %709 = vmatpush1.msra.mxu0 0.0
        %710 = vmatprep.subr.mxu0 0.0
        %711 = vmatpush1.msra.mxu0 0.0
        %712 = vmatprep.subr.mxu0 0.0
        %713 = vmatpush1.msra.mxu0 0.0
        %714 = vmatprep.mubr.f32.mxu0 0.0
        %715 = vmatmul.mubr.f32.gmra.mrb[0].mxu0 %v645
        %v716 = vpop.f32.mrb[0].mxu0
        %v717 = vadd.f32 0.0, %v716
        %v718 = vpop.f32.mrb[0].mxu0
        %v719 = vadd.f32 0.0, %v718
        %720 = vmatprep.mubr.f32.mxu0 0.0
        %721 = vmatmul.mubr.f32.gmra.mrb[0].mxu0 %v648
        %v722 = vpop.f32.mrb[0].mxu0
        %v723 = vadd.f32 0.0, %v722
        %v724 = vpop.f32.mrb[0].mxu0
        %v725 = vadd.f32 0.0, %v724
        %726 = vdwg.mxu0
        %s727 = scalar_lea.vmem [#allocation3], 16
        %v728 = vld [vmem:[%s727] sm:$0xff]
        %v729 = vld [vmem:[%s727 + $0x8] sm:$0xff]
        %v731 = vsel %vm643, %v728, 0
        %v734 = vsel %vm643, %v729, 0
        %736 = vmatprep.subr.mxu0 %v638
        %737 = vmatpush1.msra.mxu0 %v637
        %738 = vmatprep.subr.mxu0 %v640
        %739 = vmatpush1.msra.mxu0 %v639
        %740 = vmatprep.subr.mxu0 0.0
        %741 = vmatpush1.msra.mxu0 0.0
        %742 = vmatprep.subr.mxu0 0.0
        %743 = vmatpush1.msra.mxu0 0.0
        %744 = vmatprep.subr.mxu0 0.0
        %745 = vmatpush1.msra.mxu0 0.0
        %746 = vmatprep.subr.mxu0 0.0
        %747 = vmatpush1.msra.mxu0 0.0
        %748 = vmatprep.subr.mxu0 0.0
        %749 = vmatpush1.msra.mxu0 0.0
        %750 = vmatprep.subr.mxu0 0.0
        %751 = vmatpush1.msra.mxu0 0.0
        %752 = vmatprep.subr.mxu0 0.0
        %753 = vmatpush1.msra.mxu0 0.0
        %754 = vmatprep.subr.mxu0 0.0
        %755 = vmatpush1.msra.mxu0 0.0
        %756 = vmatprep.subr.mxu0 0.0
        %757 = vmatpush1.msra.mxu0 0.0
        %758 = vmatprep.subr.mxu0 0.0
        %759 = vmatpush1.msra.mxu0 0.0
        %760 = vmatprep.subr.mxu0 0.0
        %761 = vmatpush1.msra.mxu0 0.0
        %762 = vmatprep.subr.mxu0 0.0
        %763 = vmatpush1.msra.mxu0 0.0
        %764 = vmatprep.subr.mxu0 0.0
        %765 = vmatpush1.msra.mxu0 0.0
        %766 = vmatprep.subr.mxu0 0.0
        %767 = vmatpush1.msra.mxu0 0.0
        %768 = vmatprep.subr.mxu0 0.0
        %769 = vmatpush1.msra.mxu0 0.0
        %770 = vmatprep.subr.mxu0 0.0
        %771 = vmatpush1.msra.mxu0 0.0
        %772 = vmatprep.subr.mxu0 0.0
        %773 = vmatpush1.msra.mxu0 0.0
        %774 = vmatprep.subr.mxu0 0.0
        %775 = vmatpush1.msra.mxu0 0.0
        %776 = vmatprep.subr.mxu0 0.0
        %777 = vmatpush1.msra.mxu0 0.0
        %778 = vmatprep.subr.mxu0 0.0
        %779 = vmatpush1.msra.mxu0 0.0
        %780 = vmatprep.subr.mxu0 0.0
        %781 = vmatpush1.msra.mxu0 0.0
        %782 = vmatprep.subr.mxu0 0.0
        %783 = vmatpush1.msra.mxu0 0.0
        %784 = vmatprep.subr.mxu0 0.0
        %785 = vmatpush1.msra.mxu0 0.0
        %786 = vmatprep.subr.mxu0 0.0
        %787 = vmatpush1.msra.mxu0 0.0
        %788 = vmatprep.subr.mxu0 0.0
        %789 = vmatpush1.msra.mxu0 0.0
        %790 = vmatprep.subr.mxu0 0.0
        %791 = vmatpush1.msra.mxu0 0.0
        %792 = vmatprep.subr.mxu0 0.0
        %793 = vmatpush1.msra.mxu0 0.0
        %794 = vmatprep.subr.mxu0 0.0
        %795 = vmatpush1.msra.mxu0 0.0
        %796 = vmatprep.subr.mxu0 0.0
        %797 = vmatpush1.msra.mxu0 0.0
        %798 = vmatprep.subr.mxu0 0.0
        %799 = vmatpush1.msra.mxu0 0.0
        %800 = vmatprep.mubr.f32.mxu0 0.0
        %801 = vmatmul.mubr.f32.gmra.mrb[0].mxu0 %v731
        %v802 = vpop.f32.mrb[0].mxu0
        %v803 = vadd.f32 0.0, %v802
        %v804 = vpop.f32.mrb[0].mxu0
        %v805 = vadd.f32 0.0, %v804
        %806 = vmatprep.mubr.f32.mxu0 0.0
        %807 = vmatmul.mubr.f32.gmra.mrb[0].mxu0 %v734
        %v808 = vpop.f32.mrb[0].mxu0
        %v809 = vadd.f32 0.0, %v808
        %v810 = vpop.f32.mrb[0].mxu0
        %v811 = vadd.f32 0.0, %v810
        %812 = vdwg.mxu0
        %v813 = vld [vmem:[#allocation5] sm:$0xff]
        %v814 = vld [vmem:[#allocation5 + $0x8] sm:$0xff]
        %v815 = vld [vmem:[#allocation5 + $0x10] sm:$0xff]
        %v816 = vld [vmem:[#allocation5 + $0x18] sm:$0xff]
        %v817 = vld [vmem:[#allocation5 + $0x20] sm:$0xff]
        %v818 = vld [vmem:[#allocation5 + $0x28] sm:$0xff]
        %v819 = vld [vmem:[#allocation5 + $0x30] sm:$0xff]
        %v820 = vld [vmem:[#allocation5 + $0x38] sm:$0xff]
        %v821 = vld [vmem:[#allocation5 + $0x40] sm:$0xff]
        %v822 = vld [vmem:[#allocation5 + $0x48] sm:$0xff]
        %v823 = vld [vmem:[#allocation5 + $0x50] sm:$0xff]
        %v824 = vld [vmem:[#allocation5 + $0x58] sm:$0xff]
        %v825 = vld [vmem:[#allocation5 + $0x60] sm:$0xff]
        %v826 = vld [vmem:[#allocation5 + $0x68] sm:$0xff]
        %v827 = vld [vmem:[#allocation5 + $0x70] sm:$0xff]
        %v828 = vld [vmem:[#allocation5 + $0x78] sm:$0xff]
        %v829 = vld [vmem:[#allocation5 + $0x80] sm:$0xff]
        %v830 = vld [vmem:[#allocation5 + $0x88] sm:$0xff]
        %v831 = vld [vmem:[#allocation5 + $0x90] sm:$0xff]
        %v832 = vld [vmem:[#allocation5 + $0x98] sm:$0xff]
        %v833 = vld [vmem:[#allocation5 + $0xa0] sm:$0xff]
        %v834 = vld [vmem:[#allocation5 + $0xa8] sm:$0xff]
        %v835 = vld [vmem:[#allocation5 + $0xb0] sm:$0xff]
        %v836 = vld [vmem:[#allocation5 + $0xb8] sm:$0xff]
        %v837 = vld [vmem:[#allocation5 + $0xc0] sm:$0xff]
        %v838 = vld [vmem:[#allocation5 + $0xc8] sm:$0xff]
        %v839 = vld [vmem:[#allocation5 + $0xd0] sm:$0xff]
        %v840 = vld [vmem:[#allocation5 + $0xd8] sm:$0xff]
        %v841 = vld [vmem:[#allocation5 + $0xe0] sm:$0xff]
        %v842 = vld [vmem:[#allocation5 + $0xe8] sm:$0xff]
        %v843 = vld [vmem:[#allocation5 + $0xf0] sm:$0xff]
        %v844 = vld [vmem:[#allocation5 + $0xf8] sm:$0xff]
        %v845 = vld [vmem:[#allocation5 + $0x100] sm:$0xff]
        %v846 = vld [vmem:[#allocation5 + $0x108] sm:$0xff]
        %v847 = vld [vmem:[#allocation5 + $0x110] sm:$0xff]
        %v848 = vld [vmem:[#allocation5 + $0x118] sm:$0xff]
        %v849 = vld [vmem:[#allocation5 + $0x120] sm:$0xff]
        %v850 = vld [vmem:[#allocation5 + $0x128] sm:$0xff]
        %v851 = vld [vmem:[#allocation5 + $0x130] sm:$0xff]
        %v852 = vld [vmem:[#allocation5 + $0x138] sm:$0xff]
        %v853 = vld [vmem:[#allocation5 + $0x140] sm:$0xff]
        %v854 = vld [vmem:[#allocation5 + $0x148] sm:$0xff]
        %v855 = vld [vmem:[#allocation5 + $0x150] sm:$0xff]
        %v856 = vld [vmem:[#allocation5 + $0x158] sm:$0xff]
        %v857 = vld [vmem:[#allocation5 + $0x160] sm:$0xff]
        %v858 = vld [vmem:[#allocation5 + $0x168] sm:$0xff]
        %v859 = vld [vmem:[#allocation5 + $0x170] sm:$0xff]
        %v860 = vld [vmem:[#allocation5 + $0x178] sm:$0xff]
        %v861 = vld [vmem:[#allocation5 + $0x180] sm:$0xff]
        %v862 = vld [vmem:[#allocation5 + $0x188] sm:$0xff]
        %v863 = vld [vmem:[#allocation5 + $0x190] sm:$0xff]
        %v864 = vld [vmem:[#allocation5 + $0x198] sm:$0xff]
        %v865 = vld [vmem:[#allocation5 + $0x1a0] sm:$0xff]
        %v866 = vld [vmem:[#allocation5 + $0x1a8] sm:$0xff]
        %v867 = vld [vmem:[#allocation5 + $0x1b0] sm:$0xff]
        %v868 = vld [vmem:[#allocation5 + $0x1b8] sm:$0xff]
        %v869 = vld [vmem:[#allocation5 + $0x1c0] sm:$0xff]
        %v870 = vld [vmem:[#allocation5 + $0x1c8] sm:$0xff]
        %v871 = vld [vmem:[#allocation5 + $0x1d0] sm:$0xff]
        %v872 = vld [vmem:[#allocation5 + $0x1d8] sm:$0xff]
        %v873 = vld [vmem:[#allocation5 + $0x1e0] sm:$0xff]
        %v874 = vld [vmem:[#allocation5 + $0x1e8] sm:$0xff]
        %v875 = vld [vmem:[#allocation5 + $0x1f0] sm:$0xff]
        %v876 = vld [vmem:[#allocation5 + $0x1f8] sm:$0xff]
        %s877 = scalar_lea.vmem [#allocation5], 512
        %v878 = vld [vmem:[%s877] sm:$0xff]
        %v879 = vld [vmem:[%s877 + $0x8] sm:$0xff]
        %v880 = vld [vmem:[%s877 + $0x10] sm:$0xff]
        %v881 = vld [vmem:[%s877 + $0x18] sm:$0xff]
        %v882 = vld [vmem:[%s877 + $0x20] sm:$0xff]
        %v883 = vld [vmem:[%s877 + $0x28] sm:$0xff]
        %v884 = vld [vmem:[%s877 + $0x30] sm:$0xff]
        %v885 = vld [vmem:[%s877 + $0x38] sm:$0xff]
        %v886 = vld [vmem:[%s877 + $0x40] sm:$0xff]
        %v887 = vld [vmem:[%s877 + $0x48] sm:$0xff]
        %v888 = vld [vmem:[%s877 + $0x50] sm:$0xff]
        %v889 = vld [vmem:[%s877 + $0x58] sm:$0xff]
        %v890 = vld [vmem:[%s877 + $0x60] sm:$0xff]
        %v891 = vld [vmem:[%s877 + $0x68] sm:$0xff]
        %v892 = vld [vmem:[%s877 + $0x70] sm:$0xff]
        %v893 = vld [vmem:[%s877 + $0x78] sm:$0xff]
        %v894 = vld [vmem:[%s877 + $0x80] sm:$0xff]
        %v895 = vld [vmem:[%s877 + $0x88] sm:$0xff]
        %v896 = vld [vmem:[%s877 + $0x90] sm:$0xff]
        %v897 = vld [vmem:[%s877 + $0x98] sm:$0xff]
        %v898 = vld [vmem:[%s877 + $0xa0] sm:$0xff]
        %v899 = vld [vmem:[%s877 + $0xa8] sm:$0xff]
        %v900 = vld [vmem:[%s877 + $0xb0] sm:$0xff]
        %v901 = vld [vmem:[%s877 + $0xb8] sm:$0xff]
        %v902 = vld [vmem:[%s877 + $0xc0] sm:$0xff]
        %v903 = vld [vmem:[%s877 + $0xc8] sm:$0xff]
        %v904 = vld [vmem:[%s877 + $0xd0] sm:$0xff]
        %v905 = vld [vmem:[%s877 + $0xd8] sm:$0xff]
        %v906 = vld [vmem:[%s877 + $0xe0] sm:$0xff]
        %v907 = vld [vmem:[%s877 + $0xe8] sm:$0xff]
        %v908 = vld [vmem:[%s877 + $0xf0] sm:$0xff]
        %v909 = vld [vmem:[%s877 + $0xf8] sm:$0xff]
        %v910 = vld [vmem:[%s877 + $0x100] sm:$0xff]
        %v911 = vld [vmem:[%s877 + $0x108] sm:$0xff]
        %v912 = vld [vmem:[%s877 + $0x110] sm:$0xff]
        %v913 = vld [vmem:[%s877 + $0x118] sm:$0xff]
        %v914 = vld [vmem:[%s877 + $0x120] sm:$0xff]
        %v915 = vld [vmem:[%s877 + $0x128] sm:$0xff]
        %v916 = vld [vmem:[%s877 + $0x130] sm:$0xff]
        %v917 = vld [vmem:[%s877 + $0x138] sm:$0xff]
        %v918 = vld [vmem:[%s877 + $0x140] sm:$0xff]
        %v919 = vld [vmem:[%s877 + $0x148] sm:$0xff]
        %v920 = vld [vmem:[%s877 + $0x150] sm:$0xff]
        %v921 = vld [vmem:[%s877 + $0x158] sm:$0xff]
        %v922 = vld [vmem:[%s877 + $0x160] sm:$0xff]
        %v923 = vld [vmem:[%s877 + $0x168] sm:$0xff]
        %v924 = vld [vmem:[%s877 + $0x170] sm:$0xff]
        %v925 = vld [vmem:[%s877 + $0x178] sm:$0xff]
        %v926 = vld [vmem:[%s877 + $0x180] sm:$0xff]
        %v927 = vld [vmem:[%s877 + $0x188] sm:$0xff]
        %v928 = vld [vmem:[%s877 + $0x190] sm:$0xff]
        %v929 = vld [vmem:[%s877 + $0x198] sm:$0xff]
        %v930 = vld [vmem:[%s877 + $0x1a0] sm:$0xff]
        %v931 = vld [vmem:[%s877 + $0x1a8] sm:$0xff]
        %v932 = vld [vmem:[%s877 + $0x1b0] sm:$0xff]
        %v933 = vld [vmem:[%s877 + $0x1b8] sm:$0xff]
        %v934 = vld [vmem:[%s877 + $0x1c0] sm:$0xff]
        %v935 = vld [vmem:[%s877 + $0x1c8] sm:$0xff]
        %v936 = vld [vmem:[%s877 + $0x1d0] sm:$0xff]
        %v937 = vld [vmem:[%s877 + $0x1d8] sm:$0xff]
        %v938 = vld [vmem:[%s877 + $0x1e0] sm:$0xff]
        %v939 = vld [vmem:[%s877 + $0x1e8] sm:$0xff]
        %v940 = vld [vmem:[%s877 + $0x1f0] sm:$0xff]
        %v941 = vld [vmem:[%s877 + $0x1f8] sm:$0xff]
        %942 = vmatprep.subr.mxu0 %v879
        %943 = vmatpush1.msra.mxu0 %v878
        %944 = vmatprep.subr.mxu0 %v881
        %945 = vmatpush1.msra.mxu0 %v880
        %946 = vmatprep.subr.mxu0 %v883
        %947 = vmatpush1.msra.mxu0 %v882
        %948 = vmatprep.subr.mxu0 %v885
        %949 = vmatpush1.msra.mxu0 %v884
        %950 = vmatprep.subr.mxu0 %v887
        %951 = vmatpush1.msra.mxu0 %v886
        %952 = vmatprep.subr.mxu0 %v889
        %953 = vmatpush1.msra.mxu0 %v888
        %954 = vmatprep.subr.mxu0 %v891
        %955 = vmatpush1.msra.mxu0 %v890
        %956 = vmatprep.subr.mxu0 %v893
        %957 = vmatpush1.msra.mxu0 %v892
        %958 = vmatprep.subr.mxu0 %v895
        %959 = vmatpush1.msra.mxu0 %v894
        %960 = vmatprep.subr.mxu0 %v897
        %961 = vmatpush1.msra.mxu0 %v896
        %962 = vmatprep.subr.mxu0 %v899
        %963 = vmatpush1.msra.mxu0 %v898
        %964 = vmatprep.subr.mxu0 %v901
        %965 = vmatpush1.msra.mxu0 %v900
        %966 = vmatprep.subr.mxu0 %v903
        %967 = vmatpush1.msra.mxu0 %v902
        %968 = vmatprep.subr.mxu0 %v905
        %969 = vmatpush1.msra.mxu0 %v904
        %970 = vmatprep.subr.mxu0 %v907
        %971 = vmatpush1.msra.mxu0 %v906
        %972 = vmatprep.subr.mxu0 %v909
        %973 = vmatpush1.msra.mxu0 %v908
        %974 = vmatprep.subr.mxu0 %v911
        %975 = vmatpush1.msra.mxu0 %v910
        %976 = vmatprep.subr.mxu0 %v913
        %977 = vmatpush1.msra.mxu0 %v912
        %978 = vmatprep.subr.mxu0 %v915
        %979 = vmatpush1.msra.mxu0 %v914
        %980 = vmatprep.subr.mxu0 %v917
        %981 = vmatpush1.msra.mxu0 %v916
        %982 = vmatprep.subr.mxu0 %v919
        %983 = vmatpush1.msra.mxu0 %v918
        %984 = vmatprep.subr.mxu0 %v921
        %985 = vmatpush1.msra.mxu0 %v920
        %986 = vmatprep.subr.mxu0 %v923
        %987 = vmatpush1.msra.mxu0 %v922
        %988 = vmatprep.subr.mxu0 %v925
        %989 = vmatpush1.msra.mxu0 %v924
        %990 = vmatprep.subr.mxu0 %v927
        %991 = vmatpush1.msra.mxu0 %v926
        %992 = vmatprep.subr.mxu0 %v929
        %993 = vmatpush1.msra.mxu0 %v928
        %994 = vmatprep.subr.mxu0 %v931
        %995 = vmatpush1.msra.mxu0 %v930
        %996 = vmatprep.subr.mxu0 %v933
        %997 = vmatpush1.msra.mxu0 %v932
        %998 = vmatprep.subr.mxu0 %v935
        %999 = vmatpush1.msra.mxu0 %v934
        %1000 = vmatprep.subr.mxu0 %v937
        %1001 = vmatpush1.msra.mxu0 %v936
        %1002 = vmatprep.subr.mxu0 %v939
        %1003 = vmatpush1.msra.mxu0 %v938
        %1004 = vmatprep.subr.mxu0 %v941
        %1005 = vmatpush1.msra.mxu0 %v940
        %1006 = vmatprep.mubr.f32.mxu0 %v638
        %1007 = vmatmul.mubr.f32.gmra.mrb[0].mxu0 %v637
        %v1008 = vpop.f32.mrb[0].mxu0
        %v1009 = vadd.f32 0.0, %v1008
        %v1010 = vpop.f32.mrb[0].mxu0
        %v1011 = vadd.f32 0.0, %v1010
        %1012 = vmatprep.mubr.f32.mxu0 %v640
        %1013 = vmatmul.mubr.f32.gmra.mrb[0].mxu0 %v639
        %v1014 = vpop.f32.mrb[0].mxu0
        %v1015 = vadd.f32 0.0, %v1014
        %v1016 = vpop.f32.mrb[0].mxu0
        %v1017 = vadd.f32 0.0, %v1016
        %1018 = vdwg.mxu0
        %1019 = vmatprep.subr.mxu0 %v814
        %1020 = vmatpush1.msra.mxu0 %v813
        %1021 = vmatprep.subr.mxu0 %v816
        %1022 = vmatpush1.msra.mxu0 %v815
        %1023 = vmatprep.subr.mxu0 %v818
        %1024 = vmatpush1.msra.mxu0 %v817
        %1025 = vmatprep.subr.mxu0 %v820
        %1026 = vmatpush1.msra.mxu0 %v819
        %1027 = vmatprep.subr.mxu0 %v822
        %1028 = vmatpush1.msra.mxu0 %v821
        %1029 = vmatprep.subr.mxu0 %v824
        %1030 = vmatpush1.msra.mxu0 %v823
        %1031 = vmatprep.subr.mxu0 %v826
        %1032 = vmatpush1.msra.mxu0 %v825
        %1033 = vmatprep.subr.mxu0 %v828
        %1034 = vmatpush1.msra.mxu0 %v827
        %1035 = vmatprep.subr.mxu0 %v830
        %1036 = vmatpush1.msra.mxu0 %v829
        %1037 = vmatprep.subr.mxu0 %v832
        %1038 = vmatpush1.msra.mxu0 %v831
        %1039 = vmatprep.subr.mxu0 %v834
        %1040 = vmatpush1.msra.mxu0 %v833
        %1041 = vmatprep.subr.mxu0 %v836
        %1042 = vmatpush1.msra.mxu0 %v835
        %1043 = vmatprep.subr.mxu0 %v838
        %1044 = vmatpush1.msra.mxu0 %v837
        %1045 = vmatprep.subr.mxu0 %v840
        %1046 = vmatpush1.msra.mxu0 %v839
        %1047 = vmatprep.subr.mxu0 %v842
        %1048 = vmatpush1.msra.mxu0 %v841
        %1049 = vmatprep.subr.mxu0 %v844
        %1050 = vmatpush1.msra.mxu0 %v843
        %1051 = vmatprep.subr.mxu0 %v846
        %1052 = vmatpush1.msra.mxu0 %v845
        %1053 = vmatprep.subr.mxu0 %v848
        %1054 = vmatpush1.msra.mxu0 %v847
        %1055 = vmatprep.subr.mxu0 %v850
        %1056 = vmatpush1.msra.mxu0 %v849
        %1057 = vmatprep.subr.mxu0 %v852
        %1058 = vmatpush1.msra.mxu0 %v851
        %1059 = vmatprep.subr.mxu0 %v854
        %1060 = vmatpush1.msra.mxu0 %v853
        %1061 = vmatprep.subr.mxu0 %v856
        %1062 = vmatpush1.msra.mxu0 %v855
        %1063 = vmatprep.subr.mxu0 %v858
        %1064 = vmatpush1.msra.mxu0 %v857
        %1065 = vmatprep.subr.mxu0 %v860
        %1066 = vmatpush1.msra.mxu0 %v859
        %1067 = vmatprep.subr.mxu0 %v862
        %1068 = vmatpush1.msra.mxu0 %v861
        %1069 = vmatprep.subr.mxu0 %v864
        %1070 = vmatpush1.msra.mxu0 %v863
        %1071 = vmatprep.subr.mxu0 %v866
        %1072 = vmatpush1.msra.mxu0 %v865
        %1073 = vmatprep.subr.mxu0 %v868
        %1074 = vmatpush1.msra.mxu0 %v867
        %1075 = vmatprep.subr.mxu0 %v870
        %1076 = vmatpush1.msra.mxu0 %v869
        %1077 = vmatprep.subr.mxu0 %v872
        %1078 = vmatpush1.msra.mxu0 %v871
        %1079 = vmatprep.subr.mxu0 %v874
        %1080 = vmatpush1.msra.mxu0 %v873
        %1081 = vmatprep.subr.mxu0 %v876
        %1082 = vmatpush1.msra.mxu0 %v875
        %1083 = vmatprep.mubr.f32.mxu0 %v719
        %1084 = vmatmul.mubr.f32.gmra.mrb[0].mxu0 %v717
        %v1085 = vpop.f32.mrb[0].mxu0
        %v1086 = vadd.f32 %v1009, %v1085
        %v1087 = vpop.f32.mrb[0].mxu0
        %v1088 = vadd.f32 %v1011, %v1087
        %1089 = vmatprep.mubr.f32.mxu0 %v725
        %1090 = vmatmul.mubr.f32.gmra.mrb[0].mxu0 %v723
        %v1091 = vpop.f32.mrb[0].mxu0
        %v1092 = vadd.f32 %v1015, %v1091
        %v1093 = vpop.f32.mrb[0].mxu0
        %v1094 = vadd.f32 %v1017, %v1093
        %1095 = vdwg.mxu0
        %s1096 = scalar_lea.vmem [#allocation5], 1024
        %v1097 = vld [vmem:[%s1096] sm:$0xff]
        %v1098 = vld [vmem:[%s1096 + $0x8] sm:$0xff]
        %v1099 = vld [vmem:[%s1096 + $0x10] sm:$0xff]
        %v1100 = vld [vmem:[%s1096 + $0x18] sm:$0xff]
        %v1101 = vld [vmem:[%s1096 + $0x20] sm:$0xff]
        %v1102 = vld [vmem:[%s1096 + $0x28] sm:$0xff]
        %v1103 = vld [vmem:[%s1096 + $0x30] sm:$0xff]
        %v1104 = vld [vmem:[%s1096 + $0x38] sm:$0xff]
        %v1105 = vld [vmem:[%s1096 + $0x40] sm:$0xff]
        %v1106 = vld [vmem:[%s1096 + $0x48] sm:$0xff]
        %v1107 = vld [vmem:[%s1096 + $0x50] sm:$0xff]
        %v1108 = vld [vmem:[%s1096 + $0x58] sm:$0xff]
        %v1109 = vld [vmem:[%s1096 + $0x60] sm:$0xff]
        %v1110 = vld [vmem:[%s1096 + $0x68] sm:$0xff]
        %v1111 = vld [vmem:[%s1096 + $0x70] sm:$0xff]
        %v1112 = vld [vmem:[%s1096 + $0x78] sm:$0xff]
        %v1113 = vld [vmem:[%s1096 + $0x80] sm:$0xff]
        %v1114 = vld [vmem:[%s1096 + $0x88] sm:$0xff]
        %v1115 = vld [vmem:[%s1096 + $0x90] sm:$0xff]
        %v1116 = vld [vmem:[%s1096 + $0x98] sm:$0xff]
        %v1117 = vld [vmem:[%s1096 + $0xa0] sm:$0xff]
        %v1118 = vld [vmem:[%s1096 + $0xa8] sm:$0xff]
        %v1119 = vld [vmem:[%s1096 + $0xb0] sm:$0xff]
        %v1120 = vld [vmem:[%s1096 + $0xb8] sm:$0xff]
        %v1121 = vld [vmem:[%s1096 + $0xc0] sm:$0xff]
        %v1122 = vld [vmem:[%s1096 + $0xc8] sm:$0xff]
        %v1123 = vld [vmem:[%s1096 + $0xd0] sm:$0xff]
        %v1124 = vld [vmem:[%s1096 + $0xd8] sm:$0xff]
        %v1125 = vld [vmem:[%s1096 + $0xe0] sm:$0xff]
        %v1126 = vld [vmem:[%s1096 + $0xe8] sm:$0xff]
        %v1127 = vld [vmem:[%s1096 + $0xf0] sm:$0xff]
        %v1128 = vld [vmem:[%s1096 + $0xf8] sm:$0xff]
        %v1129 = vld [vmem:[%s1096 + $0x100] sm:$0xff]
        %v1130 = vld [vmem:[%s1096 + $0x108] sm:$0xff]
        %v1131 = vld [vmem:[%s1096 + $0x110] sm:$0xff]
        %v1132 = vld [vmem:[%s1096 + $0x118] sm:$0xff]
        %v1133 = vld [vmem:[%s1096 + $0x120] sm:$0xff]
        %v1134 = vld [vmem:[%s1096 + $0x128] sm:$0xff]
        %v1135 = vld [vmem:[%s1096 + $0x130] sm:$0xff]
        %v1136 = vld [vmem:[%s1096 + $0x138] sm:$0xff]
        %v1137 = vld [vmem:[%s1096 + $0x140] sm:$0xff]
        %v1138 = vld [vmem:[%s1096 + $0x148] sm:$0xff]
        %v1139 = vld [vmem:[%s1096 + $0x150] sm:$0xff]
        %v1140 = vld [vmem:[%s1096 + $0x158] sm:$0xff]
        %v1141 = vld [vmem:[%s1096 + $0x160] sm:$0xff]
        %v1142 = vld [vmem:[%s1096 + $0x168] sm:$0xff]
        %v1143 = vld [vmem:[%s1096 + $0x170] sm:$0xff]
        %v1144 = vld [vmem:[%s1096 + $0x178] sm:$0xff]
        %v1145 = vld [vmem:[%s1096 + $0x180] sm:$0xff]
        %v1146 = vld [vmem:[%s1096 + $0x188] sm:$0xff]
        %v1147 = vld [vmem:[%s1096 + $0x190] sm:$0xff]
        %v1148 = vld [vmem:[%s1096 + $0x198] sm:$0xff]
        %v1149 = vld [vmem:[%s1096 + $0x1a0] sm:$0xff]
        %v1150 = vld [vmem:[%s1096 + $0x1a8] sm:$0xff]
        %v1151 = vld [vmem:[%s1096 + $0x1b0] sm:$0xff]
        %v1152 = vld [vmem:[%s1096 + $0x1b8] sm:$0xff]
        %v1153 = vld [vmem:[%s1096 + $0x1c0] sm:$0xff]
        %v1154 = vld [vmem:[%s1096 + $0x1c8] sm:$0xff]
        %v1155 = vld [vmem:[%s1096 + $0x1d0] sm:$0xff]
        %v1156 = vld [vmem:[%s1096 + $0x1d8] sm:$0xff]
        %v1157 = vld [vmem:[%s1096 + $0x1e0] sm:$0xff]
        %v1158 = vld [vmem:[%s1096 + $0x1e8] sm:$0xff]
        %v1159 = vld [vmem:[%s1096 + $0x1f0] sm:$0xff]
        %v1160 = vld [vmem:[%s1096 + $0x1f8] sm:$0xff]
        %1161 = vmatprep.subr.mxu0 %v1098
        %1162 = vmatpush1.msra.mxu0 %v1097
        %1163 = vmatprep.subr.mxu0 %v1100
        %1164 = vmatpush1.msra.mxu0 %v1099
        %1165 = vmatprep.subr.mxu0 %v1102
        %1166 = vmatpush1.msra.mxu0 %v1101
        %1167 = vmatprep.subr.mxu0 %v1104
        %1168 = vmatpush1.msra.mxu0 %v1103
        %1169 = vmatprep.subr.mxu0 %v1106
        %1170 = vmatpush1.msra.mxu0 %v1105
        %1171 = vmatprep.subr.mxu0 %v1108
        %1172 = vmatpush1.msra.mxu0 %v1107
        %1173 = vmatprep.subr.mxu0 %v1110
        %1174 = vmatpush1.msra.mxu0 %v1109
        %1175 = vmatprep.subr.mxu0 %v1112
        %1176 = vmatpush1.msra.mxu0 %v1111
        %1177 = vmatprep.subr.mxu0 %v1114
        %1178 = vmatpush1.msra.mxu0 %v1113
        %1179 = vmatprep.subr.mxu0 %v1116
        %1180 = vmatpush1.msra.mxu0 %v1115
        %1181 = vmatprep.subr.mxu0 %v1118
        %1182 = vmatpush1.msra.mxu0 %v1117
        %1183 = vmatprep.subr.mxu0 %v1120
        %1184 = vmatpush1.msra.mxu0 %v1119
        %1185 = vmatprep.subr.mxu0 %v1122
        %1186 = vmatpush1.msra.mxu0 %v1121
        %1187 = vmatprep.subr.mxu0 %v1124
        %1188 = vmatpush1.msra.mxu0 %v1123
        %1189 = vmatprep.subr.mxu0 %v1126
        %1190 = vmatpush1.msra.mxu0 %v1125
        %1191 = vmatprep.subr.mxu0 %v1128
        %1192 = vmatpush1.msra.mxu0 %v1127
        %1193 = vmatprep.subr.mxu0 %v1130
        %1194 = vmatpush1.msra.mxu0 %v1129
        %1195 = vmatprep.subr.mxu0 %v1132
        %1196 = vmatpush1.msra.mxu0 %v1131
        %1197 = vmatprep.subr.mxu0 %v1134
        %1198 = vmatpush1.msra.mxu0 %v1133
        %1199 = vmatprep.subr.mxu0 %v1136
        %1200 = vmatpush1.msra.mxu0 %v1135
        %1201 = vmatprep.subr.mxu0 %v1138
        %1202 = vmatpush1.msra.mxu0 %v1137
        %1203 = vmatprep.subr.mxu0 %v1140
        %1204 = vmatpush1.msra.mxu0 %v1139
        %1205 = vmatprep.subr.mxu0 %v1142
        %1206 = vmatpush1.msra.mxu0 %v1141
        %1207 = vmatprep.subr.mxu0 %v1144
        %1208 = vmatpush1.msra.mxu0 %v1143
        %1209 = vmatprep.subr.mxu0 %v1146
        %1210 = vmatpush1.msra.mxu0 %v1145
        %1211 = vmatprep.subr.mxu0 %v1148
        %1212 = vmatpush1.msra.mxu0 %v1147
        %1213 = vmatprep.subr.mxu0 %v1150
        %1214 = vmatpush1.msra.mxu0 %v1149
        %1215 = vmatprep.subr.mxu0 %v1152
        %1216 = vmatpush1.msra.mxu0 %v1151
        %1217 = vmatprep.subr.mxu0 %v1154
        %1218 = vmatpush1.msra.mxu0 %v1153
        %1219 = vmatprep.subr.mxu0 %v1156
        %1220 = vmatpush1.msra.mxu0 %v1155
        %1221 = vmatprep.subr.mxu0 %v1158
        %1222 = vmatpush1.msra.mxu0 %v1157
        %1223 = vmatprep.subr.mxu0 %v1160
        %1224 = vmatpush1.msra.mxu0 %v1159
        %1225 = vmatprep.mubr.f32.mxu0 %v805
        %1226 = vmatmul.mubr.f32.gmra.mrb[0].mxu0 %v803
        %v1227 = vpop.f32.mrb[0].mxu0
        %v1228 = vadd.f32 0.0, %v1227
        %v1229 = vpop.f32.mrb[0].mxu0
        %v1230 = vadd.f32 0.0, %v1229
        %1231 = vmatprep.mubr.f32.mxu0 %v811
        %1232 = vmatmul.mubr.f32.gmra.mrb[0].mxu0 %v809
        %v1233 = vpop.f32.mrb[0].mxu0
        %v1234 = vadd.f32 0.0, %v1233
        %v1235 = vpop.f32.mrb[0].mxu0
        %v1236 = vadd.f32 0.0, %v1235
        %1237 = vdwg.mxu0
        %v1238 = vadd.f32 %v1086, %v1228
        %v1239 = vadd.f32 %v1088, %v1230
        %v1240 = vadd.f32 %v1092, %v1234
        %v1241 = vadd.f32 %v1094, %v1236
        %v1242 = vld [vmem:[#allocation7] sm:$0x3]
        %v1244 = vlaneseq
        %v1245 = vshrl.u32 %v1244, 7
        %v1246 = vsub.s32 0, %v1245
        %v1247 = vrot.slane %v1242, %v1246
        %v1248 = vlaneseq
        %v1249 = vshrl.u32 %v1248, 7
        %v1250 = vsub.s32 1, %v1249
        %v1251 = vrot.slane %v1242, %v1250
        %v1254 = vmul.f32 %v1238, %v1247
        %v1255 = vmul.f32 %v1239, %v1251
        %v1256 = vmul.f32 %v1240, %v1247
        %v1257 = vmul.f32 %v1241, %v1251
        %v1258 = vld [vmem:[#allocation8] sm:$0x3]
        %v1260 = vlaneseq
        %v1261 = vshrl.u32 %v1260, 7
        %v1262 = vsub.s32 0, %v1261
        %v1263 = vrot.slane %v1258, %v1262
        %v1264 = vlaneseq
        %v1265 = vshrl.u32 %v1264, 7
        %v1266 = vsub.s32 1, %v1265
        %v1267 = vrot.slane %v1258, %v1266
        %v1270 = vadd.f32 %v1254, %v1263
        %v1271 = vadd.f32 %v1255, %v1267
        %v1272 = vadd.f32 %v1256, %v1263
        %v1273 = vadd.f32 %v1257, %v1267
        %v1274 = vmax.f32 %v1270, 0.0
        %v1275 = vmax.f32 %v1271, 0.0
        %v1276 = vmax.f32 %v1272, 0.0
        %v1277 = vmax.f32 %v1273, 0.0
        %1278 = vmatprep.subr.mxu0 %v1275
        %1279 = vmatpush1.msra.mxu0 %v1274
        %1280 = vmatprep.subr.mxu0 %v1277
        %1281 = vmatpush1.msra.mxu0 %v1276
        %1282 = vmatprep.subr.mxu0 0.0
        %1283 = vmatpush1.msra.mxu0 0.0
        %1284 = vmatprep.subr.mxu0 0.0
        %1285 = vmatpush1.msra.mxu0 0.0
        %1286 = vmatprep.subr.mxu0 0.0
        %1287 = vmatpush1.msra.mxu0 0.0
        %1288 = vmatprep.subr.mxu0 0.0
        %1289 = vmatpush1.msra.mxu0 0.0
        %1290 = vmatprep.subr.mxu0 0.0
        %1291 = vmatpush1.msra.mxu0 0.0
        %1292 = vmatprep.subr.mxu0 0.0
        %1293 = vmatpush1.msra.mxu0 0.0
        %1294 = vmatprep.subr.mxu0 0.0
        %1295 = vmatpush1.msra.mxu0 0.0
        %1296 = vmatprep.subr.mxu0 0.0
        %1297 = vmatpush1.msra.mxu0 0.0
        %1298 = vmatprep.subr.mxu0 0.0
        %1299 = vmatpush1.msra.mxu0 0.0
        %1300 = vmatprep.subr.mxu0 0.0
        %1301 = vmatpush1.msra.mxu0 0.0
        %1302 = vmatprep.subr.mxu0 0.0
        %1303 = vmatpush1.msra.mxu0 0.0
        %1304 = vmatprep.subr.mxu0 0.0
        %1305 = vmatpush1.msra.mxu0 0.0
        %1306 = vmatprep.subr.mxu0 0.0
        %1307 = vmatpush1.msra.mxu0 0.0
        %1308 = vmatprep.subr.mxu0 0.0
        %1309 = vmatpush1.msra.mxu0 0.0
        %1310 = vmatprep.subr.mxu0 0.0
        %1311 = vmatpush1.msra.mxu0 0.0
        %1312 = vmatprep.subr.mxu0 0.0
        %1313 = vmatpush1.msra.mxu0 0.0
        %1314 = vmatprep.subr.mxu0 0.0
        %1315 = vmatpush1.msra.mxu0 0.0
        %1316 = vmatprep.subr.mxu0 0.0
        %1317 = vmatpush1.msra.mxu0 0.0
        %1318 = vmatprep.subr.mxu0 0.0
        %1319 = vmatpush1.msra.mxu0 0.0
        %1320 = vmatprep.subr.mxu0 0.0
        %1321 = vmatpush1.msra.mxu0 0.0
        %1322 = vmatprep.subr.mxu0 0.0
        %1323 = vmatpush1.msra.mxu0 0.0
        %1324 = vmatprep.subr.mxu0 0.0
        %1325 = vmatpush1.msra.mxu0 0.0
        %1326 = vmatprep.subr.mxu0 0.0
        %1327 = vmatpush1.msra.mxu0 0.0
        %1328 = vmatprep.subr.mxu0 0.0
        %1329 = vmatpush1.msra.mxu0 0.0
        %1330 = vmatprep.subr.mxu0 0.0
        %1331 = vmatpush1.msra.mxu0 0.0
        %1332 = vmatprep.subr.mxu0 0.0
        %1333 = vmatpush1.msra.mxu0 0.0
        %1334 = vmatprep.subr.mxu0 0.0
        %1335 = vmatpush1.msra.mxu0 0.0
        %1336 = vmatprep.subr.mxu0 0.0
        %1337 = vmatpush1.msra.mxu0 0.0
        %1338 = vmatprep.subr.mxu0 0.0
        %1339 = vmatpush1.msra.mxu0 0.0
        %1340 = vmatprep.subr.mxu0 0.0
        %1341 = vmatpush1.msra.mxu0 0.0
        %1342 = vmatprep.mubr.f32.mxu0 0.0
        %1343 = vmatmul.mubr.f32.gmra.mrb[0].mxu0 %v645
        %v1344 = vpop.f32.mrb[0].mxu0
        %v1345 = vadd.f32 0.0, %v1344
        %v1346 = vpop.f32.mrb[0].mxu0
        %v1347 = vadd.f32 0.0, %v1346
        %1348 = vmatprep.mubr.f32.mxu0 0.0
        %1349 = vmatmul.mubr.f32.gmra.mrb[0].mxu0 %v648
        %v1350 = vpop.f32.mrb[0].mxu0
        %v1351 = vadd.f32 0.0, %v1350
        %v1352 = vpop.f32.mrb[0].mxu0
        %v1353 = vadd.f32 0.0, %v1352
        %1354 = vdwg.mxu0
        %1355 = vmatprep.subr.mxu0 %v1275
        %1356 = vmatpush1.msra.mxu0 %v1274
        %1357 = vmatprep.subr.mxu0 %v1277
        %1358 = vmatpush1.msra.mxu0 %v1276
        %1359 = vmatprep.subr.mxu0 0.0
        %1360 = vmatpush1.msra.mxu0 0.0
        %1361 = vmatprep.subr.mxu0 0.0
        %1362 = vmatpush1.msra.mxu0 0.0
        %1363 = vmatprep.subr.mxu0 0.0
        %1364 = vmatpush1.msra.mxu0 0.0
        %1365 = vmatprep.subr.mxu0 0.0
        %1366 = vmatpush1.msra.mxu0 0.0
        %1367 = vmatprep.subr.mxu0 0.0
        %1368 = vmatpush1.msra.mxu0 0.0
        %1369 = vmatprep.subr.mxu0 0.0
        %1370 = vmatpush1.msra.mxu0 0.0
        %1371 = vmatprep.subr.mxu0 0.0
        %1372 = vmatpush1.msra.mxu0 0.0
        %1373 = vmatprep.subr.mxu0 0.0
        %1374 = vmatpush1.msra.mxu0 0.0
        %1375 = vmatprep.subr.mxu0 0.0
        %1376 = vmatpush1.msra.mxu0 0.0
        %1377 = vmatprep.subr.mxu0 0.0
        %1378 = vmatpush1.msra.mxu0 0.0
        %1379 = vmatprep.subr.mxu0 0.0
        %1380 = vmatpush1.msra.mxu0 0.0
        %1381 = vmatprep.subr.mxu0 0.0
        %1382 = vmatpush1.msra.mxu0 0.0
        %1383 = vmatprep.subr.mxu0 0.0
        %1384 = vmatpush1.msra.mxu0 0.0
        %1385 = vmatprep.subr.mxu0 0.0
        %1386 = vmatpush1.msra.mxu0 0.0
        %1387 = vmatprep.subr.mxu0 0.0
        %1388 = vmatpush1.msra.mxu0 0.0
        %1389 = vmatprep.subr.mxu0 0.0
        %1390 = vmatpush1.msra.mxu0 0.0
        %1391 = vmatprep.subr.mxu0 0.0
        %1392 = vmatpush1.msra.mxu0 0.0
        %1393 = vmatprep.subr.mxu0 0.0
        %1394 = vmatpush1.msra.mxu0 0.0
        %1395 = vmatprep.subr.mxu0 0.0
        %1396 = vmatpush1.msra.mxu0 0.0
        %1397 = vmatprep.subr.mxu0 0.0
        %1398 = vmatpush1.msra.mxu0 0.0
        %1399 = vmatprep.subr.mxu0 0.0
        %1400 = vmatpush1.msra.mxu0 0.0
        %1401 = vmatprep.subr.mxu0 0.0
        %1402 = vmatpush1.msra.mxu0 0.0
        %1403 = vmatprep.subr.mxu0 0.0
        %1404 = vmatpush1.msra.mxu0 0.0
        %1405 = vmatprep.subr.mxu0 0.0
        %1406 = vmatpush1.msra.mxu0 0.0
        %1407 = vmatprep.subr.mxu0 0.0
        %1408 = vmatpush1.msra.mxu0 0.0
        %1409 = vmatprep.subr.mxu0 0.0
        %1410 = vmatpush1.msra.mxu0 0.0
        %1411 = vmatprep.subr.mxu0 0.0
        %1412 = vmatpush1.msra.mxu0 0.0
        %1413 = vmatprep.subr.mxu0 0.0
        %1414 = vmatpush1.msra.mxu0 0.0
        %1415 = vmatprep.subr.mxu0 0.0
        %1416 = vmatpush1.msra.mxu0 0.0
        %1417 = vmatprep.subr.mxu0 0.0
        %1418 = vmatpush1.msra.mxu0 0.0
        %1419 = vmatprep.mubr.f32.mxu0 0.0
        %1420 = vmatmul.mubr.f32.gmra.mrb[0].mxu0 %v731
        %v1421 = vpop.f32.mrb[0].mxu0
        %v1422 = vadd.f32 0.0, %v1421
        %v1423 = vpop.f32.mrb[0].mxu0
        %v1424 = vadd.f32 0.0, %v1423
        %1425 = vmatprep.mubr.f32.mxu0 0.0
        %1426 = vmatmul.mubr.f32.gmra.mrb[0].mxu0 %v734
        %v1427 = vpop.f32.mrb[0].mxu0
        %v1428 = vadd.f32 0.0, %v1427
        %v1429 = vpop.f32.mrb[0].mxu0
        %v1430 = vadd.f32 0.0, %v1429
        %1431 = vdwg.mxu0
        %v1432 = vld [vmem:[#allocation10] sm:$0xff]
        %v1433 = vld [vmem:[#allocation10 + $0x8] sm:$0xff]
        %v1434 = vld [vmem:[#allocation10 + $0x10] sm:$0xff]
        %v1435 = vld [vmem:[#allocation10 + $0x18] sm:$0xff]
        %v1436 = vld [vmem:[#allocation10 + $0x20] sm:$0xff]
        %v1437 = vld [vmem:[#allocation10 + $0x28] sm:$0xff]
        %v1438 = vld [vmem:[#allocation10 + $0x30] sm:$0xff]
        %v1439 = vld [vmem:[#allocation10 + $0x38] sm:$0xff]
        %v1440 = vld [vmem:[#allocation10 + $0x40] sm:$0xff]
        %v1441 = vld [vmem:[#allocation10 + $0x48] sm:$0xff]
        %v1442 = vld [vmem:[#allocation10 + $0x50] sm:$0xff]
        %v1443 = vld [vmem:[#allocation10 + $0x58] sm:$0xff]
        %v1444 = vld [vmem:[#allocation10 + $0x60] sm:$0xff]
        %v1445 = vld [vmem:[#allocation10 + $0x68] sm:$0xff]
        %v1446 = vld [vmem:[#allocation10 + $0x70] sm:$0xff]
        %v1447 = vld [vmem:[#allocation10 + $0x78] sm:$0xff]
        %v1448 = vld [vmem:[#allocation10 + $0x80] sm:$0xff]
        %v1449 = vld [vmem:[#allocation10 + $0x88] sm:$0xff]
        %v1450 = vld [vmem:[#allocation10 + $0x90] sm:$0xff]
        %v1451 = vld [vmem:[#allocation10 + $0x98] sm:$0xff]
        %v1452 = vld [vmem:[#allocation10 + $0xa0] sm:$0xff]
        %v1453 = vld [vmem:[#allocation10 + $0xa8] sm:$0xff]
        %v1454 = vld [vmem:[#allocation10 + $0xb0] sm:$0xff]
        %v1455 = vld [vmem:[#allocation10 + $0xb8] sm:$0xff]
        %v1456 = vld [vmem:[#allocation10 + $0xc0] sm:$0xff]
        %v1457 = vld [vmem:[#allocation10 + $0xc8] sm:$0xff]
        %v1458 = vld [vmem:[#allocation10 + $0xd0] sm:$0xff]
        %v1459 = vld [vmem:[#allocation10 + $0xd8] sm:$0xff]
        %v1460 = vld [vmem:[#allocation10 + $0xe0] sm:$0xff]
        %v1461 = vld [vmem:[#allocation10 + $0xe8] sm:$0xff]
        %v1462 = vld [vmem:[#allocation10 + $0xf0] sm:$0xff]
        %v1463 = vld [vmem:[#allocation10 + $0xf8] sm:$0xff]
        %v1464 = vld [vmem:[#allocation10 + $0x100] sm:$0xff]
        %v1465 = vld [vmem:[#allocation10 + $0x108] sm:$0xff]
        %v1466 = vld [vmem:[#allocation10 + $0x110] sm:$0xff]
        %v1467 = vld [vmem:[#allocation10 + $0x118] sm:$0xff]
        %v1468 = vld [vmem:[#allocation10 + $0x120] sm:$0xff]
        %v1469 = vld [vmem:[#allocation10 + $0x128] sm:$0xff]
        %v1470 = vld [vmem:[#allocation10 + $0x130] sm:$0xff]
        %v1471 = vld [vmem:[#allocation10 + $0x138] sm:$0xff]
        %v1472 = vld [vmem:[#allocation10 + $0x140] sm:$0xff]
        %v1473 = vld [vmem:[#allocation10 + $0x148] sm:$0xff]
        %v1474 = vld [vmem:[#allocation10 + $0x150] sm:$0xff]
        %v1475 = vld [vmem:[#allocation10 + $0x158] sm:$0xff]
        %v1476 = vld [vmem:[#allocation10 + $0x160] sm:$0xff]
        %v1477 = vld [vmem:[#allocation10 + $0x168] sm:$0xff]
        %v1478 = vld [vmem:[#allocation10 + $0x170] sm:$0xff]
        %v1479 = vld [vmem:[#allocation10 + $0x178] sm:$0xff]
        %v1480 = vld [vmem:[#allocation10 + $0x180] sm:$0xff]
        %v1481 = vld [vmem:[#allocation10 + $0x188] sm:$0xff]
        %v1482 = vld [vmem:[#allocation10 + $0x190] sm:$0xff]
        %v1483 = vld [vmem:[#allocation10 + $0x198] sm:$0xff]
        %v1484 = vld [vmem:[#allocation10 + $0x1a0] sm:$0xff]
        %v1485 = vld [vmem:[#allocation10 + $0x1a8] sm:$0xff]
        %v1486 = vld [vmem:[#allocation10 + $0x1b0] sm:$0xff]
        %v1487 = vld [vmem:[#allocation10 + $0x1b8] sm:$0xff]
        %v1488 = vld [vmem:[#allocation10 + $0x1c0] sm:$0xff]
        %v1489 = vld [vmem:[#allocation10 + $0x1c8] sm:$0xff]
        %v1490 = vld [vmem:[#allocation10 + $0x1d0] sm:$0xff]
        %v1491 = vld [vmem:[#allocation10 + $0x1d8] sm:$0xff]
        %v1492 = vld [vmem:[#allocation10 + $0x1e0] sm:$0xff]
        %v1493 = vld [vmem:[#allocation10 + $0x1e8] sm:$0xff]
        %v1494 = vld [vmem:[#allocation10 + $0x1f0] sm:$0xff]
        %v1495 = vld [vmem:[#allocation10 + $0x1f8] sm:$0xff]
        %s1496 = scalar_lea.vmem [#allocation10], 512
        %v1497 = vld [vmem:[%s1496] sm:$0xff]
        %v1498 = vld [vmem:[%s1496 + $0x8] sm:$0xff]
        %v1499 = vld [vmem:[%s1496 + $0x10] sm:$0xff]
        %v1500 = vld [vmem:[%s1496 + $0x18] sm:$0xff]
        %v1501 = vld [vmem:[%s1496 + $0x20] sm:$0xff]
        %v1502 = vld [vmem:[%s1496 + $0x28] sm:$0xff]
        %v1503 = vld [vmem:[%s1496 + $0x30] sm:$0xff]
        %v1504 = vld [vmem:[%s1496 + $0x38] sm:$0xff]
        %v1505 = vld [vmem:[%s1496 + $0x40] sm:$0xff]
        %v1506 = vld [vmem:[%s1496 + $0x48] sm:$0xff]
        %v1507 = vld [vmem:[%s1496 + $0x50] sm:$0xff]
        %v1508 = vld [vmem:[%s1496 + $0x58] sm:$0xff]
        %v1509 = vld [vmem:[%s1496 + $0x60] sm:$0xff]
        %v1510 = vld [vmem:[%s1496 + $0x68] sm:$0xff]
        %v1511 = vld [vmem:[%s1496 + $0x70] sm:$0xff]
        %v1512 = vld [vmem:[%s1496 + $0x78] sm:$0xff]
        %v1513 = vld [vmem:[%s1496 + $0x80] sm:$0xff]
        %v1514 = vld [vmem:[%s1496 + $0x88] sm:$0xff]
        %v1515 = vld [vmem:[%s1496 + $0x90] sm:$0xff]
        %v1516 = vld [vmem:[%s1496 + $0x98] sm:$0xff]
        %v1517 = vld [vmem:[%s1496 + $0xa0] sm:$0xff]
        %v1518 = vld [vmem:[%s1496 + $0xa8] sm:$0xff]
        %v1519 = vld [vmem:[%s1496 + $0xb0] sm:$0xff]
        %v1520 = vld [vmem:[%s1496 + $0xb8] sm:$0xff]
        %v1521 = vld [vmem:[%s1496 + $0xc0] sm:$0xff]
        %v1522 = vld [vmem:[%s1496 + $0xc8] sm:$0xff]
        %v1523 = vld [vmem:[%s1496 + $0xd0] sm:$0xff]
        %v1524 = vld [vmem:[%s1496 + $0xd8] sm:$0xff]
        %v1525 = vld [vmem:[%s1496 + $0xe0] sm:$0xff]
        %v1526 = vld [vmem:[%s1496 + $0xe8] sm:$0xff]
        %v1527 = vld [vmem:[%s1496 + $0xf0] sm:$0xff]
        %v1528 = vld [vmem:[%s1496 + $0xf8] sm:$0xff]
        %v1529 = vld [vmem:[%s1496 + $0x100] sm:$0xff]
        %v1530 = vld [vmem:[%s1496 + $0x108] sm:$0xff]
        %v1531 = vld [vmem:[%s1496 + $0x110] sm:$0xff]
        %v1532 = vld [vmem:[%s1496 + $0x118] sm:$0xff]
        %v1533 = vld [vmem:[%s1496 + $0x120] sm:$0xff]
        %v1534 = vld [vmem:[%s1496 + $0x128] sm:$0xff]
        %v1535 = vld [vmem:[%s1496 + $0x130] sm:$0xff]
        %v1536 = vld [vmem:[%s1496 + $0x138] sm:$0xff]
        %v1537 = vld [vmem:[%s1496 + $0x140] sm:$0xff]
        %v1538 = vld [vmem:[%s1496 + $0x148] sm:$0xff]
        %v1539 = vld [vmem:[%s1496 + $0x150] sm:$0xff]
        %v1540 = vld [vmem:[%s1496 + $0x158] sm:$0xff]
        %v1541 = vld [vmem:[%s1496 + $0x160] sm:$0xff]
        %v1542 = vld [vmem:[%s1496 + $0x168] sm:$0xff]
        %v1543 = vld [vmem:[%s1496 + $0x170] sm:$0xff]
        %v1544 = vld [vmem:[%s1496 + $0x178] sm:$0xff]
        %v1545 = vld [vmem:[%s1496 + $0x180] sm:$0xff]
        %v1546 = vld [vmem:[%s1496 + $0x188] sm:$0xff]
        %v1547 = vld [vmem:[%s1496 + $0x190] sm:$0xff]
        %v1548 = vld [vmem:[%s1496 + $0x198] sm:$0xff]
        %v1549 = vld [vmem:[%s1496 + $0x1a0] sm:$0xff]
        %v1550 = vld [vmem:[%s1496 + $0x1a8] sm:$0xff]
        %v1551 = vld [vmem:[%s1496 + $0x1b0] sm:$0xff]
        %v1552 = vld [vmem:[%s1496 + $0x1b8] sm:$0xff]
        %v1553 = vld [vmem:[%s1496 + $0x1c0] sm:$0xff]
        %v1554 = vld [vmem:[%s1496 + $0x1c8] sm:$0xff]
        %v1555 = vld [vmem:[%s1496 + $0x1d0] sm:$0xff]
        %v1556 = vld [vmem:[%s1496 + $0x1d8] sm:$0xff]
        %v1557 = vld [vmem:[%s1496 + $0x1e0] sm:$0xff]
        %v1558 = vld [vmem:[%s1496 + $0x1e8] sm:$0xff]
        %v1559 = vld [vmem:[%s1496 + $0x1f0] sm:$0xff]
        %v1560 = vld [vmem:[%s1496 + $0x1f8] sm:$0xff]
        %1561 = vmatprep.subr.mxu0 %v1498
        %1562 = vmatpush1.msra.mxu0 %v1497
        %1563 = vmatprep.subr.mxu0 %v1500
        %1564 = vmatpush1.msra.mxu0 %v1499
        %1565 = vmatprep.subr.mxu0 %v1502
        %1566 = vmatpush1.msra.mxu0 %v1501
        %1567 = vmatprep.subr.mxu0 %v1504
        %1568 = vmatpush1.msra.mxu0 %v1503
        %1569 = vmatprep.subr.mxu0 %v1506
        %1570 = vmatpush1.msra.mxu0 %v1505
        %1571 = vmatprep.subr.mxu0 %v1508
        %1572 = vmatpush1.msra.mxu0 %v1507
        %1573 = vmatprep.subr.mxu0 %v1510
        %1574 = vmatpush1.msra.mxu0 %v1509
        %1575 = vmatprep.subr.mxu0 %v1512
        %1576 = vmatpush1.msra.mxu0 %v1511
        %1577 = vmatprep.subr.mxu0 %v1514
        %1578 = vmatpush1.msra.mxu0 %v1513
        %1579 = vmatprep.subr.mxu0 %v1516
        %1580 = vmatpush1.msra.mxu0 %v1515
        %1581 = vmatprep.subr.mxu0 %v1518
        %1582 = vmatpush1.msra.mxu0 %v1517
        %1583 = vmatprep.subr.mxu0 %v1520
        %1584 = vmatpush1.msra.mxu0 %v1519
        %1585 = vmatprep.subr.mxu0 %v1522
        %1586 = vmatpush1.msra.mxu0 %v1521
        %1587 = vmatprep.subr.mxu0 %v1524
        %1588 = vmatpush1.msra.mxu0 %v1523
        %1589 = vmatprep.subr.mxu0 %v1526
        %1590 = vmatpush1.msra.mxu0 %v1525
        %1591 = vmatprep.subr.mxu0 %v1528
        %1592 = vmatpush1.msra.mxu0 %v1527
        %1593 = vmatprep.subr.mxu0 %v1530
        %1594 = vmatpush1.msra.mxu0 %v1529
        %1595 = vmatprep.subr.mxu0 %v1532
        %1596 = vmatpush1.msra.mxu0 %v1531
        %1597 = vmatprep.subr.mxu0 %v1534
        %1598 = vmatpush1.msra.mxu0 %v1533
        %1599 = vmatprep.subr.mxu0 %v1536
        %1600 = vmatpush1.msra.mxu0 %v1535
        %1601 = vmatprep.subr.mxu0 %v1538
        %1602 = vmatpush1.msra.mxu0 %v1537
        %1603 = vmatprep.subr.mxu0 %v1540
        %1604 = vmatpush1.msra.mxu0 %v1539
        %1605 = vmatprep.subr.mxu0 %v1542
        %1606 = vmatpush1.msra.mxu0 %v1541
        %1607 = vmatprep.subr.mxu0 %v1544
        %1608 = vmatpush1.msra.mxu0 %v1543
        %1609 = vmatprep.subr.mxu0 %v1546
        %1610 = vmatpush1.msra.mxu0 %v1545
        %1611 = vmatprep.subr.mxu0 %v1548
        %1612 = vmatpush1.msra.mxu0 %v1547
        %1613 = vmatprep.subr.mxu0 %v1550
        %1614 = vmatpush1.msra.mxu0 %v1549
        %1615 = vmatprep.subr.mxu0 %v1552
        %1616 = vmatpush1.msra.mxu0 %v1551
        %1617 = vmatprep.subr.mxu0 %v1554
        %1618 = vmatpush1.msra.mxu0 %v1553
        %1619 = vmatprep.subr.mxu0 %v1556
        %1620 = vmatpush1.msra.mxu0 %v1555
        %1621 = vmatprep.subr.mxu0 %v1558
        %1622 = vmatpush1.msra.mxu0 %v1557
        %1623 = vmatprep.subr.mxu0 %v1560
        %1624 = vmatpush1.msra.mxu0 %v1559
        %1625 = vmatprep.mubr.f32.mxu0 %v1275
        %1626 = vmatmul.mubr.f32.gmra.mrb[0].mxu0 %v1274
        %v1627 = vpop.f32.mrb[0].mxu0
        %v1628 = vadd.f32 0.0, %v1627
        %v1629 = vpop.f32.mrb[0].mxu0
        %v1630 = vadd.f32 0.0, %v1629
        %1631 = vmatprep.mubr.f32.mxu0 %v1277
        %1632 = vmatmul.mubr.f32.gmra.mrb[0].mxu0 %v1276
        %v1633 = vpop.f32.mrb[0].mxu0
        %v1634 = vadd.f32 0.0, %v1633
        %v1635 = vpop.f32.mrb[0].mxu0
        %v1636 = vadd.f32 0.0, %v1635
        %1637 = vdwg.mxu0
        %1638 = vmatprep.subr.mxu0 %v1433
        %1639 = vmatpush1.msra.mxu0 %v1432
        %1640 = vmatprep.subr.mxu0 %v1435
        %1641 = vmatpush1.msra.mxu0 %v1434
        %1642 = vmatprep.subr.mxu0 %v1437
        %1643 = vmatpush1.msra.mxu0 %v1436
        %1644 = vmatprep.subr.mxu0 %v1439
        %1645 = vmatpush1.msra.mxu0 %v1438
        %1646 = vmatprep.subr.mxu0 %v1441
        %1647 = vmatpush1.msra.mxu0 %v1440
        %1648 = vmatprep.subr.mxu0 %v1443
        %1649 = vmatpush1.msra.mxu0 %v1442
        %1650 = vmatprep.subr.mxu0 %v1445
        %1651 = vmatpush1.msra.mxu0 %v1444
        %1652 = vmatprep.subr.mxu0 %v1447
        %1653 = vmatpush1.msra.mxu0 %v1446
        %1654 = vmatprep.subr.mxu0 %v1449
        %1655 = vmatpush1.msra.mxu0 %v1448
        %1656 = vmatprep.subr.mxu0 %v1451
        %1657 = vmatpush1.msra.mxu0 %v1450
        %1658 = vmatprep.subr.mxu0 %v1453
        %1659 = vmatpush1.msra.mxu0 %v1452
        %1660 = vmatprep.subr.mxu0 %v1455
        %1661 = vmatpush1.msra.mxu0 %v1454
        %1662 = vmatprep.subr.mxu0 %v1457
        %1663 = vmatpush1.msra.mxu0 %v1456
        %1664 = vmatprep.subr.mxu0 %v1459
        %1665 = vmatpush1.msra.mxu0 %v1458
        %1666 = vmatprep.subr.mxu0 %v1461
        %1667 = vmatpush1.msra.mxu0 %v1460
        %1668 = vmatprep.subr.mxu0 %v1463
        %1669 = vmatpush1.msra.mxu0 %v1462
        %1670 = vmatprep.subr.mxu0 %v1465
        %1671 = vmatpush1.msra.mxu0 %v1464
        %1672 = vmatprep.subr.mxu0 %v1467
        %1673 = vmatpush1.msra.mxu0 %v1466
        %1674 = vmatprep.subr.mxu0 %v1469
        %1675 = vmatpush1.msra.mxu0 %v1468
        %1676 = vmatprep.subr.mxu0 %v1471
        %1677 = vmatpush1.msra.mxu0 %v1470
        %1678 = vmatprep.subr.mxu0 %v1473
        %1679 = vmatpush1.msra.mxu0 %v1472
        %1680 = vmatprep.subr.mxu0 %v1475
        %1681 = vmatpush1.msra.mxu0 %v1474
        %1682 = vmatprep.subr.mxu0 %v1477
        %1683 = vmatpush1.msra.mxu0 %v1476
        %1684 = vmatprep.subr.mxu0 %v1479
        %1685 = vmatpush1.msra.mxu0 %v1478
        %1686 = vmatprep.subr.mxu0 %v1481
        %1687 = vmatpush1.msra.mxu0 %v1480
        %1688 = vmatprep.subr.mxu0 %v1483
        %1689 = vmatpush1.msra.mxu0 %v1482
        %1690 = vmatprep.subr.mxu0 %v1485
        %1691 = vmatpush1.msra.mxu0 %v1484
        %1692 = vmatprep.subr.mxu0 %v1487
        %1693 = vmatpush1.msra.mxu0 %v1486
        %1694 = vmatprep.subr.mxu0 %v1489
        %1695 = vmatpush1.msra.mxu0 %v1488
        %1696 = vmatprep.subr.mxu0 %v1491
        %1697 = vmatpush1.msra.mxu0 %v1490
        %1698 = vmatprep.subr.mxu0 %v1493
        %1699 = vmatpush1.msra.mxu0 %v1492
        %1700 = vmatprep.subr.mxu0 %v1495
        %1701 = vmatpush1.msra.mxu0 %v1494
        %1702 = vmatprep.mubr.f32.mxu0 %v1347
        %1703 = vmatmul.mubr.f32.gmra.mrb[0].mxu0 %v1345
        %v1704 = vpop.f32.mrb[0].mxu0
        %v1705 = vadd.f32 %v1628, %v1704
        %v1706 = vpop.f32.mrb[0].mxu0
        %v1707 = vadd.f32 %v1630, %v1706
        %1708 = vmatprep.mubr.f32.mxu0 %v1353
        %1709 = vmatmul.mubr.f32.gmra.mrb[0].mxu0 %v1351
        %v1710 = vpop.f32.mrb[0].mxu0
        %v1711 = vadd.f32 %v1634, %v1710
        %v1712 = vpop.f32.mrb[0].mxu0
        %v1713 = vadd.f32 %v1636, %v1712
        %1714 = vdwg.mxu0
        %s1715 = scalar_lea.vmem [#allocation10], 1024
        %v1716 = vld [vmem:[%s1715] sm:$0xff]
        %v1717 = vld [vmem:[%s1715 + $0x8] sm:$0xff]
        %v1718 = vld [vmem:[%s1715 + $0x10] sm:$0xff]
        %v1719 = vld [vmem:[%s1715 + $0x18] sm:$0xff]
        %v1720 = vld [vmem:[%s1715 + $0x20] sm:$0xff]
        %v1721 = vld [vmem:[%s1715 + $0x28] sm:$0xff]
        %v1722 = vld [vmem:[%s1715 + $0x30] sm:$0xff]
        %v1723 = vld [vmem:[%s1715 + $0x38] sm:$0xff]
        %v1724 = vld [vmem:[%s1715 + $0x40] sm:$0xff]
        %v1725 = vld [vmem:[%s1715 + $0x48] sm:$0xff]
        %v1726 = vld [vmem:[%s1715 + $0x50] sm:$0xff]
        %v1727 = vld [vmem:[%s1715 + $0x58] sm:$0xff]
        %v1728 = vld [vmem:[%s1715 + $0x60] sm:$0xff]
        %v1729 = vld [vmem:[%s1715 + $0x68] sm:$0xff]
        %v1730 = vld [vmem:[%s1715 + $0x70] sm:$0xff]
        %v1731 = vld [vmem:[%s1715 + $0x78] sm:$0xff]
        %v1732 = vld [vmem:[%s1715 + $0x80] sm:$0xff]
        %v1733 = vld [vmem:[%s1715 + $0x88] sm:$0xff]
        %v1734 = vld [vmem:[%s1715 + $0x90] sm:$0xff]
        %v1735 = vld [vmem:[%s1715 + $0x98] sm:$0xff]
        %v1736 = vld [vmem:[%s1715 + $0xa0] sm:$0xff]
        %v1737 = vld [vmem:[%s1715 + $0xa8] sm:$0xff]
        %v1738 = vld [vmem:[%s1715 + $0xb0] sm:$0xff]
        %v1739 = vld [vmem:[%s1715 + $0xb8] sm:$0xff]
        %v1740 = vld [vmem:[%s1715 + $0xc0] sm:$0xff]
        %v1741 = vld [vmem:[%s1715 + $0xc8] sm:$0xff]
        %v1742 = vld [vmem:[%s1715 + $0xd0] sm:$0xff]
        %v1743 = vld [vmem:[%s1715 + $0xd8] sm:$0xff]
        %v1744 = vld [vmem:[%s1715 + $0xe0] sm:$0xff]
        %v1745 = vld [vmem:[%s1715 + $0xe8] sm:$0xff]
        %v1746 = vld [vmem:[%s1715 + $0xf0] sm:$0xff]
        %v1747 = vld [vmem:[%s1715 + $0xf8] sm:$0xff]
        %v1748 = vld [vmem:[%s1715 + $0x100] sm:$0xff]
        %v1749 = vld [vmem:[%s1715 + $0x108] sm:$0xff]
        %v1750 = vld [vmem:[%s1715 + $0x110] sm:$0xff]
        %v1751 = vld [vmem:[%s1715 + $0x118] sm:$0xff]
        %v1752 = vld [vmem:[%s1715 + $0x120] sm:$0xff]
        %v1753 = vld [vmem:[%s1715 + $0x128] sm:$0xff]
        %v1754 = vld [vmem:[%s1715 + $0x130] sm:$0xff]
        %v1755 = vld [vmem:[%s1715 + $0x138] sm:$0xff]
        %v1756 = vld [vmem:[%s1715 + $0x140] sm:$0xff]
        %v1757 = vld [vmem:[%s1715 + $0x148] sm:$0xff]
        %v1758 = vld [vmem:[%s1715 + $0x150] sm:$0xff]
        %v1759 = vld [vmem:[%s1715 + $0x158] sm:$0xff]
        %v1760 = vld [vmem:[%s1715 + $0x160] sm:$0xff]
        %v1761 = vld [vmem:[%s1715 + $0x168] sm:$0xff]
        %v1762 = vld [vmem:[%s1715 + $0x170] sm:$0xff]
        %v1763 = vld [vmem:[%s1715 + $0x178] sm:$0xff]
        %v1764 = vld [vmem:[%s1715 + $0x180] sm:$0xff]
        %v1765 = vld [vmem:[%s1715 + $0x188] sm:$0xff]
        %v1766 = vld [vmem:[%s1715 + $0x190] sm:$0xff]
        %v1767 = vld [vmem:[%s1715 + $0x198] sm:$0xff]
        %v1768 = vld [vmem:[%s1715 + $0x1a0] sm:$0xff]
        %v1769 = vld [vmem:[%s1715 + $0x1a8] sm:$0xff]
        %v1770 = vld [vmem:[%s1715 + $0x1b0] sm:$0xff]
        %v1771 = vld [vmem:[%s1715 + $0x1b8] sm:$0xff]
        %v1772 = vld [vmem:[%s1715 + $0x1c0] sm:$0xff]
        %v1773 = vld [vmem:[%s1715 + $0x1c8] sm:$0xff]
        %v1774 = vld [vmem:[%s1715 + $0x1d0] sm:$0xff]
        %v1775 = vld [vmem:[%s1715 + $0x1d8] sm:$0xff]
        %v1776 = vld [vmem:[%s1715 + $0x1e0] sm:$0xff]
        %v1777 = vld [vmem:[%s1715 + $0x1e8] sm:$0xff]
        %v1778 = vld [vmem:[%s1715 + $0x1f0] sm:$0xff]
        %v1779 = vld [vmem:[%s1715 + $0x1f8] sm:$0xff]
        %1780 = vmatprep.subr.mxu0 %v1717
        %1781 = vmatpush1.msra.mxu0 %v1716
        %1782 = vmatprep.subr.mxu0 %v1719
        %1783 = vmatpush1.msra.mxu0 %v1718
        %1784 = vmatprep.subr.mxu0 %v1721
        %1785 = vmatpush1.msra.mxu0 %v1720
        %1786 = vmatprep.subr.mxu0 %v1723
        %1787 = vmatpush1.msra.mxu0 %v1722
        %1788 = vmatprep.subr.mxu0 %v1725
        %1789 = vmatpush1.msra.mxu0 %v1724
        %1790 = vmatprep.subr.mxu0 %v1727
        %1791 = vmatpush1.msra.mxu0 %v1726
        %1792 = vmatprep.subr.mxu0 %v1729
        %1793 = vmatpush1.msra.mxu0 %v1728
        %1794 = vmatprep.subr.mxu0 %v1731
        %1795 = vmatpush1.msra.mxu0 %v1730
        %1796 = vmatprep.subr.mxu0 %v1733
        %1797 = vmatpush1.msra.mxu0 %v1732
        %1798 = vmatprep.subr.mxu0 %v1735
        %1799 = vmatpush1.msra.mxu0 %v1734
        %1800 = vmatprep.subr.mxu0 %v1737
        %1801 = vmatpush1.msra.mxu0 %v1736
        %1802 = vmatprep.subr.mxu0 %v1739
        %1803 = vmatpush1.msra.mxu0 %v1738
        %1804 = vmatprep.subr.mxu0 %v1741
        %1805 = vmatpush1.msra.mxu0 %v1740
        %1806 = vmatprep.subr.mxu0 %v1743
        %1807 = vmatpush1.msra.mxu0 %v1742
        %1808 = vmatprep.subr.mxu0 %v1745
        %1809 = vmatpush1.msra.mxu0 %v1744
        %1810 = vmatprep.subr.mxu0 %v1747
        %1811 = vmatpush1.msra.mxu0 %v1746
        %1812 = vmatprep.subr.mxu0 %v1749
        %1813 = vmatpush1.msra.mxu0 %v1748
        %1814 = vmatprep.subr.mxu0 %v1751
        %1815 = vmatpush1.msra.mxu0 %v1750
        %1816 = vmatprep.subr.mxu0 %v1753
        %1817 = vmatpush1.msra.mxu0 %v1752
        %1818 = vmatprep.subr.mxu0 %v1755
        %1819 = vmatpush1.msra.mxu0 %v1754
        %1820 = vmatprep.subr.mxu0 %v1757
        %1821 = vmatpush1.msra.mxu0 %v1756
        %1822 = vmatprep.subr.mxu0 %v1759
        %1823 = vmatpush1.msra.mxu0 %v1758
        %1824 = vmatprep.subr.mxu0 %v1761
        %1825 = vmatpush1.msra.mxu0 %v1760
        %1826 = vmatprep.subr.mxu0 %v1763
        %1827 = vmatpush1.msra.mxu0 %v1762
        %1828 = vmatprep.subr.mxu0 %v1765
        %1829 = vmatpush1.msra.mxu0 %v1764
        %1830 = vmatprep.subr.mxu0 %v1767
        %1831 = vmatpush1.msra.mxu0 %v1766
        %1832 = vmatprep.subr.mxu0 %v1769
        %1833 = vmatpush1.msra.mxu0 %v1768
        %1834 = vmatprep.subr.mxu0 %v1771
        %1835 = vmatpush1.msra.mxu0 %v1770
        %1836 = vmatprep.subr.mxu0 %v1773
        %1837 = vmatpush1.msra.mxu0 %v1772
        %1838 = vmatprep.subr.mxu0 %v1775
        %1839 = vmatpush1.msra.mxu0 %v1774
        %1840 = vmatprep.subr.mxu0 %v1777
        %1841 = vmatpush1.msra.mxu0 %v1776
        %1842 = vmatprep.subr.mxu0 %v1779
        %1843 = vmatpush1.msra.mxu0 %v1778
        %1844 = vmatprep.mubr.f32.mxu0 %v1424
        %1845 = vmatmul.mubr.f32.gmra.mrb[0].mxu0 %v1422
        %v1846 = vpop.f32.mrb[0].mxu0
        %v1847 = vadd.f32 0.0, %v1846
        %v1848 = vpop.f32.mrb[0].mxu0
        %v1849 = vadd.f32 0.0, %v1848
        %1850 = vmatprep.mubr.f32.mxu0 %v1430
        %1851 = vmatmul.mubr.f32.gmra.mrb[0].mxu0 %v1428
        %v1852 = vpop.f32.mrb[0].mxu0
        %v1853 = vadd.f32 0.0, %v1852
        %v1854 = vpop.f32.mrb[0].mxu0
        %v1855 = vadd.f32 0.0, %v1854
        %1856 = vdwg.mxu0
        %v1857 = vadd.f32 %v1705, %v1847
        %v1858 = vadd.f32 %v1707, %v1849
        %v1859 = vadd.f32 %v1711, %v1853
        %v1860 = vadd.f32 %v1713, %v1855
        %v1861 = vld [vmem:[#allocation11] sm:$0x3]
        %v1863 = vlaneseq
        %v1864 = vshrl.u32 %v1863, 7
        %v1865 = vsub.s32 0, %v1864
        %v1866 = vrot.slane %v1861, %v1865
        %v1867 = vlaneseq
        %v1868 = vshrl.u32 %v1867, 7
        %v1869 = vsub.s32 1, %v1868
        %v1870 = vrot.slane %v1861, %v1869
        %v1873 = vadd.f32 %v1857, %v1866
        %v1874 = vadd.f32 %v1858, %v1870
        %v1875 = vadd.f32 %v1859, %v1866
        %v1876 = vadd.f32 %v1860, %v1870
        %v1877 = vadd.f32 %v1873, %v637
        %v1878 = vadd.f32 %v1874, %v638
        %v1879 = vadd.f32 %v1875, %v639
        %v1880 = vadd.f32 %v1876, %v640
        %v1881 = vmax.f32 %v1877, 0.0
        %v1882 = vmax.f32 %v1878, 0.0
        %v1883 = vmax.f32 %v1879, 0.0
        %v1884 = vmax.f32 %v1880, 0.0
        %1885 = vmatprep.subr.mxu0 %v1882
        %1886 = vmatpush1.msra.mxu0 %v1881
        %1887 = vmatprep.subr.mxu0 %v1884
        %1888 = vmatpush1.msra.mxu0 %v1883
        %1889 = vmatprep.subr.mxu0 0.0
        %1890 = vmatpush1.msra.mxu0 0.0
        %1891 = vmatprep.subr.mxu0 0.0
        %1892 = vmatpush1.msra.mxu0 0.0
        %1893 = vmatprep.subr.mxu0 0.0
        %1894 = vmatpush1.msra.mxu0 0.0
        %1895 = vmatprep.subr.mxu0 0.0
        %1896 = vmatpush1.msra.mxu0 0.0
        %1897 = vmatprep.subr.mxu0 0.0
        %1898 = vmatpush1.msra.mxu0 0.0
        %1899 = vmatprep.subr.mxu0 0.0
        %1900 = vmatpush1.msra.mxu0 0.0
        %1901 = vmatprep.subr.mxu0 0.0
        %1902 = vmatpush1.msra.mxu0 0.0
        %1903 = vmatprep.subr.mxu0 0.0
        %1904 = vmatpush1.msra.mxu0 0.0
        %1905 = vmatprep.subr.mxu0 0.0
        %1906 = vmatpush1.msra.mxu0 0.0
        %1907 = vmatprep.subr.mxu0 0.0
        %1908 = vmatpush1.msra.mxu0 0.0
        %1909 = vmatprep.subr.mxu0 0.0
        %1910 = vmatpush1.msra.mxu0 0.0
        %1911 = vmatprep.subr.mxu0 0.0
        %1912 = vmatpush1.msra.mxu0 0.0
        %1913 = vmatprep.subr.mxu0 0.0
        %1914 = vmatpush1.msra.mxu0 0.0
        %1915 = vmatprep.subr.mxu0 0.0
        %1916 = vmatpush1.msra.mxu0 0.0
        %1917 = vmatprep.subr.mxu0 0.0
        %1918 = vmatpush1.msra.mxu0 0.0
        %1919 = vmatprep.subr.mxu0 0.0
        %1920 = vmatpush1.msra.mxu0 0.0
        %1921 = vmatprep.subr.mxu0 0.0
        %1922 = vmatpush1.msra.mxu0 0.0
        %1923 = vmatprep.subr.mxu0 0.0
        %1924 = vmatpush1.msra.mxu0 0.0
        %1925 = vmatprep.subr.mxu0 0.0
        %1926 = vmatpush1.msra.mxu0 0.0
        %1927 = vmatprep.subr.mxu0 0.0
        %1928 = vmatpush1.msra.mxu0 0.0
        %1929 = vmatprep.subr.mxu0 0.0
        %1930 = vmatpush1.msra.mxu0 0.0
        %1931 = vmatprep.subr.mxu0 0.0
        %1932 = vmatpush1.msra.mxu0 0.0
        %1933 = vmatprep.subr.mxu0 0.0
        %1934 = vmatpush1.msra.mxu0 0.0
        %1935 = vmatprep.subr.mxu0 0.0
        %1936 = vmatpush1.msra.mxu0 0.0
        %1937 = vmatprep.subr.mxu0 0.0
        %1938 = vmatpush1.msra.mxu0 0.0
        %1939 = vmatprep.subr.mxu0 0.0
        %1940 = vmatpush1.msra.mxu0 0.0
        %1941 = vmatprep.subr.mxu0 0.0
        %1942 = vmatpush1.msra.mxu0 0.0
        %1943 = vmatprep.subr.mxu0 0.0
        %1944 = vmatpush1.msra.mxu0 0.0
        %1945 = vmatprep.subr.mxu0 0.0
        %1946 = vmatpush1.msra.mxu0 0.0
        %1947 = vmatprep.subr.mxu0 0.0
        %1948 = vmatpush1.msra.mxu0 0.0
        %1949 = vmatprep.mubr.f32.mxu0 0.0
        %1950 = vmatmul.mubr.f32.gmra.mrb[0].mxu0 %v645
        %v1951 = vpop.f32.mrb[0].mxu0
        %v1952 = vadd.f32 0.0, %v1951
        %v1953 = vpop.f32.mrb[0].mxu0
        %v1954 = vadd.f32 0.0, %v1953
        %1955 = vmatprep.mubr.f32.mxu0 0.0
        %1956 = vmatmul.mubr.f32.gmra.mrb[0].mxu0 %v648
        %v1957 = vpop.f32.mrb[0].mxu0
        %v1958 = vadd.f32 0.0, %v1957
        %v1959 = vpop.f32.mrb[0].mxu0
        %v1960 = vadd.f32 0.0, %v1959
        %1961 = vdwg.mxu0
        %1962 = vmatprep.subr.mxu0 %v1882
        %1963 = vmatpush1.msra.mxu0 %v1881
        %1964 = vmatprep.subr.mxu0 %v1884
        %1965 = vmatpush1.msra.mxu0 %v1883
        %1966 = vmatprep.subr.mxu0 0.0
        %1967 = vmatpush1.msra.mxu0 0.0
        %1968 = vmatprep.subr.mxu0 0.0
        %1969 = vmatpush1.msra.mxu0 0.0
        %1970 = vmatprep.subr.mxu0 0.0
        %1971 = vmatpush1.msra.mxu0 0.0
        %1972 = vmatprep.subr.mxu0 0.0
        %1973 = vmatpush1.msra.mxu0 0.0
        %1974 = vmatprep.subr.mxu0 0.0
        %1975 = vmatpush1.msra.mxu0 0.0
        %1976 = vmatprep.subr.mxu0 0.0
        %1977 = vmatpush1.msra.mxu0 0.0
        %1978 = vmatprep.subr.mxu0 0.0
        %1979 = vmatpush1.msra.mxu0 0.0
        %1980 = vmatprep.subr.mxu0 0.0
        %1981 = vmatpush1.msra.mxu0 0.0
        %1982 = vmatprep.subr.mxu0 0.0
        %1983 = vmatpush1.msra.mxu0 0.0
        %1984 = vmatprep.subr.mxu0 0.0
        %1985 = vmatpush1.msra.mxu0 0.0
        %1986 = vmatprep.subr.mxu0 0.0
        %1987 = vmatpush1.msra.mxu0 0.0
        %1988 = vmatprep.subr.mxu0 0.0
        %1989 = vmatpush1.msra.mxu0 0.0
        %1990 = vmatprep.subr.mxu0 0.0
        %1991 = vmatpush1.msra.mxu0 0.0
        %1992 = vmatprep.subr.mxu0 0.0
        %1993 = vmatpush1.msra.mxu0 0.0
        %1994 = vmatprep.subr.mxu0 0.0
        %1995 = vmatpush1.msra.mxu0 0.0
        %1996 = vmatprep.subr.mxu0 0.0
        %1997 = vmatpush1.msra.mxu0 0.0
        %1998 = vmatprep.subr.mxu0 0.0
        %1999 = vmatpush1.msra.mxu0 0.0
        %2000 = vmatprep.subr.mxu0 0.0
        %2001 = vmatpush1.msra.mxu0 0.0
        %2002 = vmatprep.subr.mxu0 0.0
        %2003 = vmatpush1.msra.mxu0 0.0
        %2004 = vmatprep.subr.mxu0 0.0
        %2005 = vmatpush1.msra.mxu0 0.0
        %2006 = vmatprep.subr.mxu0 0.0
        %2007 = vmatpush1.msra.mxu0 0.0
        %2008 = vmatprep.subr.mxu0 0.0
        %2009 = vmatpush1.msra.mxu0 0.0
        %2010 = vmatprep.subr.mxu0 0.0
        %2011 = vmatpush1.msra.mxu0 0.0
        %2012 = vmatprep.subr.mxu0 0.0
        %2013 = vmatpush1.msra.mxu0 0.0
        %2014 = vmatprep.subr.mxu0 0.0
        %2015 = vmatpush1.msra.mxu0 0.0
        %2016 = vmatprep.subr.mxu0 0.0
        %2017 = vmatpush1.msra.mxu0 0.0
        %2018 = vmatprep.subr.mxu0 0.0
        %2019 = vmatpush1.msra.mxu0 0.0
        %2020 = vmatprep.subr.mxu0 0.0
        %2021 = vmatpush1.msra.mxu0 0.0
        %2022 = vmatprep.subr.mxu0 0.0
        %2023 = vmatpush1.msra.mxu0 0.0
        %2024 = vmatprep.subr.mxu0 0.0
        %2025 = vmatpush1.msra.mxu0 0.0
        %2026 = vmatprep.mubr.f32.mxu0 0.0
        %2027 = vmatmul.mubr.f32.gmra.mrb[0].mxu0 %v731
        %v2028 = vpop.f32.mrb[0].mxu0
        %v2029 = vadd.f32 0.0, %v2028
        %v2030 = vpop.f32.mrb[0].mxu0
        %v2031 = vadd.f32 0.0, %v2030
        %2032 = vmatprep.mubr.f32.mxu0 0.0
        %2033 = vmatmul.mubr.f32.gmra.mrb[0].mxu0 %v734
        %v2034 = vpop.f32.mrb[0].mxu0
        %v2035 = vadd.f32 0.0, %v2034
        %v2036 = vpop.f32.mrb[0].mxu0
        %v2037 = vadd.f32 0.0, %v2036
        %2038 = vdwg.mxu0
        %s2039 = scalar_lea.vmem [#allocation5], 1536
        %v2040 = vld [vmem:[%s2039] sm:$0xff]
        %v2041 = vld [vmem:[%s2039 + $0x8] sm:$0xff]
        %v2042 = vld [vmem:[%s2039 + $0x10] sm:$0xff]
        %v2043 = vld [vmem:[%s2039 + $0x18] sm:$0xff]
        %v2044 = vld [vmem:[%s2039 + $0x20] sm:$0xff]
        %v2045 = vld [vmem:[%s2039 + $0x28] sm:$0xff]
        %v2046 = vld [vmem:[%s2039 + $0x30] sm:$0xff]
        %v2047 = vld [vmem:[%s2039 + $0x38] sm:$0xff]
        %v2048 = vld [vmem:[%s2039 + $0x40] sm:$0xff]
        %v2049 = vld [vmem:[%s2039 + $0x48] sm:$0xff]
        %v2050 = vld [vmem:[%s2039 + $0x50] sm:$0xff]
        %v2051 = vld [vmem:[%s2039 + $0x58] sm:$0xff]
        %v2052 = vld [vmem:[%s2039 + $0x60] sm:$0xff]
        %v2053 = vld [vmem:[%s2039 + $0x68] sm:$0xff]
        %v2054 = vld [vmem:[%s2039 + $0x70] sm:$0xff]
        %v2055 = vld [vmem:[%s2039 + $0x78] sm:$0xff]
        %v2056 = vld [vmem:[%s2039 + $0x80] sm:$0xff]
        %v2057 = vld [vmem:[%s2039 + $0x88] sm:$0xff]
        %v2058 = vld [vmem:[%s2039 + $0x90] sm:$0xff]
        %v2059 = vld [vmem:[%s2039 + $0x98] sm:$0xff]
        %v2060 = vld [vmem:[%s2039 + $0xa0] sm:$0xff]
        %v2061 = vld [vmem:[%s2039 + $0xa8] sm:$0xff]
        %v2062 = vld [vmem:[%s2039 + $0xb0] sm:$0xff]
        %v2063 = vld [vmem:[%s2039 + $0xb8] sm:$0xff]
        %v2064 = vld [vmem:[%s2039 + $0xc0] sm:$0xff]
        %v2065 = vld [vmem:[%s2039 + $0xc8] sm:$0xff]
        %v2066 = vld [vmem:[%s2039 + $0xd0] sm:$0xff]
        %v2067 = vld [vmem:[%s2039 + $0xd8] sm:$0xff]
        %v2068 = vld [vmem:[%s2039 + $0xe0] sm:$0xff]
        %v2069 = vld [vmem:[%s2039 + $0xe8] sm:$0xff]
        %v2070 = vld [vmem:[%s2039 + $0xf0] sm:$0xff]
        %v2071 = vld [vmem:[%s2039 + $0xf8] sm:$0xff]
        %v2072 = vld [vmem:[%s2039 + $0x100] sm:$0xff]
        %v2073 = vld [vmem:[%s2039 + $0x108] sm:$0xff]
        %v2074 = vld [vmem:[%s2039 + $0x110] sm:$0xff]
        %v2075 = vld [vmem:[%s2039 + $0x118] sm:$0xff]
        %v2076 = vld [vmem:[%s2039 + $0x120] sm:$0xff]
        %v2077 = vld [vmem:[%s2039 + $0x128] sm:$0xff]
        %v2078 = vld [vmem:[%s2039 + $0x130] sm:$0xff]
        %v2079 = vld [vmem:[%s2039 + $0x138] sm:$0xff]
        %v2080 = vld [vmem:[%s2039 + $0x140] sm:$0xff]
        %v2081 = vld [vmem:[%s2039 + $0x148] sm:$0xff]
        %v2082 = vld [vmem:[%s2039 + $0x150] sm:$0xff]
        %v2083 = vld [vmem:[%s2039 + $0x158] sm:$0xff]
        %v2084 = vld [vmem:[%s2039 + $0x160] sm:$0xff]
        %v2085 = vld [vmem:[%s2039 + $0x168] sm:$0xff]
        %v2086 = vld [vmem:[%s2039 + $0x170] sm:$0xff]
        %v2087 = vld [vmem:[%s2039 + $0x178] sm:$0xff]
        %v2088 = vld [vmem:[%s2039 + $0x180] sm:$0xff]
        %v2089 = vld [vmem:[%s2039 + $0x188] sm:$0xff]
        %v2090 = vld [vmem:[%s2039 + $0x190] sm:$0xff]
        %v2091 = vld [vmem:[%s2039 + $0x198] sm:$0xff]
        %v2092 = vld [vmem:[%s2039 + $0x1a0] sm:$0xff]
        %v2093 = vld [vmem:[%s2039 + $0x1a8] sm:$0xff]
        %v2094 = vld [vmem:[%s2039 + $0x1b0] sm:$0xff]
        %v2095 = vld [vmem:[%s2039 + $0x1b8] sm:$0xff]
        %v2096 = vld [vmem:[%s2039 + $0x1c0] sm:$0xff]
        %v2097 = vld [vmem:[%s2039 + $0x1c8] sm:$0xff]
        %v2098 = vld [vmem:[%s2039 + $0x1d0] sm:$0xff]
        %v2099 = vld [vmem:[%s2039 + $0x1d8] sm:$0xff]
        %v2100 = vld [vmem:[%s2039 + $0x1e0] sm:$0xff]
        %v2101 = vld [vmem:[%s2039 + $0x1e8] sm:$0xff]
        %v2102 = vld [vmem:[%s2039 + $0x1f0] sm:$0xff]
        %v2103 = vld [vmem:[%s2039 + $0x1f8] sm:$0xff]
        %s2104 = scalar_lea.vmem [#allocation5], 2048
        %v2105 = vld [vmem:[%s2104] sm:$0xff]
        %v2106 = vld [vmem:[%s2104 + $0x8] sm:$0xff]
        %v2107 = vld [vmem:[%s2104 + $0x10] sm:$0xff]
        %v2108 = vld [vmem:[%s2104 + $0x18] sm:$0xff]
        %v2109 = vld [vmem:[%s2104 + $0x20] sm:$0xff]
        %v2110 = vld [vmem:[%s2104 + $0x28] sm:$0xff]
        %v2111 = vld [vmem:[%s2104 + $0x30] sm:$0xff]
        %v2112 = vld [vmem:[%s2104 + $0x38] sm:$0xff]
        %v2113 = vld [vmem:[%s2104 + $0x40] sm:$0xff]
        %v2114 = vld [vmem:[%s2104 + $0x48] sm:$0xff]
        %v2115 = vld [vmem:[%s2104 + $0x50] sm:$0xff]
        %v2116 = vld [vmem:[%s2104 + $0x58] sm:$0xff]
        %v2117 = vld [vmem:[%s2104 + $0x60] sm:$0xff]
        %v2118 = vld [vmem:[%s2104 + $0x68] sm:$0xff]
        %v2119 = vld [vmem:[%s2104 + $0x70] sm:$0xff]
        %v2120 = vld [vmem:[%s2104 + $0x78] sm:$0xff]
        %v2121 = vld [vmem:[%s2104 + $0x80] sm:$0xff]
        %v2122 = vld [vmem:[%s2104 + $0x88] sm:$0xff]
        %v2123 = vld [vmem:[%s2104 + $0x90] sm:$0xff]
        %v2124 = vld [vmem:[%s2104 + $0x98] sm:$0xff]
        %v2125 = vld [vmem:[%s2104 + $0xa0] sm:$0xff]
        %v2126 = vld [vmem:[%s2104 + $0xa8] sm:$0xff]
        %v2127 = vld [vmem:[%s2104 + $0xb0] sm:$0xff]
        %v2128 = vld [vmem:[%s2104 + $0xb8] sm:$0xff]
        %v2129 = vld [vmem:[%s2104 + $0xc0] sm:$0xff]
        %v2130 = vld [vmem:[%s2104 + $0xc8] sm:$0xff]
        %v2131 = vld [vmem:[%s2104 + $0xd0] sm:$0xff]
        %v2132 = vld [vmem:[%s2104 + $0xd8] sm:$0xff]
        %v2133 = vld [vmem:[%s2104 + $0xe0] sm:$0xff]
        %v2134 = vld [vmem:[%s2104 + $0xe8] sm:$0xff]
        %v2135 = vld [vmem:[%s2104 + $0xf0] sm:$0xff]
        %v2136 = vld [vmem:[%s2104 + $0xf8] sm:$0xff]
        %v2137 = vld [vmem:[%s2104 + $0x100] sm:$0xff]
        %v2138 = vld [vmem:[%s2104 + $0x108] sm:$0xff]
        %v2139 = vld [vmem:[%s2104 + $0x110] sm:$0xff]
        %v2140 = vld [vmem:[%s2104 + $0x118] sm:$0xff]
        %v2141 = vld [vmem:[%s2104 + $0x120] sm:$0xff]
        %v2142 = vld [vmem:[%s2104 + $0x128] sm:$0xff]
        %v2143 = vld [vmem:[%s2104 + $0x130] sm:$0xff]
        %v2144 = vld [vmem:[%s2104 + $0x138] sm:$0xff]
        %v2145 = vld [vmem:[%s2104 + $0x140] sm:$0xff]
        %v2146 = vld [vmem:[%s2104 + $0x148] sm:$0xff]
        %v2147 = vld [vmem:[%s2104 + $0x150] sm:$0xff]
        %v2148 = vld [vmem:[%s2104 + $0x158] sm:$0xff]
        %v2149 = vld [vmem:[%s2104 + $0x160] sm:$0xff]
        %v2150 = vld [vmem:[%s2104 + $0x168] sm:$0xff]
        %v2151 = vld [vmem:[%s2104 + $0x170] sm:$0xff]
        %v2152 = vld [vmem:[%s2104 + $0x178] sm:$0xff]
        %v2153 = vld [vmem:[%s2104 + $0x180] sm:$0xff]
        %v2154 = vld [vmem:[%s2104 + $0x188] sm:$0xff]
        %v2155 = vld [vmem:[%s2104 + $0x190] sm:$0xff]
        %v2156 = vld [vmem:[%s2104 + $0x198] sm:$0xff]
        %v2157 = vld [vmem:[%s2104 + $0x1a0] sm:$0xff]
        %v2158 = vld [vmem:[%s2104 + $0x1a8] sm:$0xff]
        %v2159 = vld [vmem:[%s2104 + $0x1b0] sm:$0xff]
        %v2160 = vld [vmem:[%s2104 + $0x1b8] sm:$0xff]
        %v2161 = vld [vmem:[%s2104 + $0x1c0] sm:$0xff]
        %v2162 = vld [vmem:[%s2104 + $0x1c8] sm:$0xff]
        %v2163 = vld [vmem:[%s2104 + $0x1d0] sm:$0xff]
        %v2164 = vld [vmem:[%s2104 + $0x1d8] sm:$0xff]
        %v2165 = vld [vmem:[%s2104 + $0x1e0] sm:$0xff]
        %v2166 = vld [vmem:[%s2104 + $0x1e8] sm:$0xff]
        %v2167 = vld [vmem:[%s2104 + $0x1f0] sm:$0xff]
        %v2168 = vld [vmem:[%s2104 + $0x1f8] sm:$0xff]
        %2169 = vmatprep.subr.mxu0 %v2106
        %2170 = vmatpush1.msra.mxu0 %v2105
        %2171 = vmatprep.subr.mxu0 %v2108
        %2172 = vmatpush1.msra.mxu0 %v2107
        %2173 = vmatprep.subr.mxu0 %v2110
        %2174 = vmatpush1.msra.mxu0 %v2109
        %2175 = vmatprep.subr.mxu0 %v2112
        %2176 = vmatpush1.msra.mxu0 %v2111
        %2177 = vmatprep.subr.mxu0 %v2114
        %2178 = vmatpush1.msra.mxu0 %v2113
        %2179 = vmatprep.subr.mxu0 %v2116
        %2180 = vmatpush1.msra.mxu0 %v2115
        %2181 = vmatprep.subr.mxu0 %v2118
        %2182 = vmatpush1.msra.mxu0 %v2117
        %2183 = vmatprep.subr.mxu0 %v2120
        %2184 = vmatpush1.msra.mxu0 %v2119
        %2185 = vmatprep.subr.mxu0 %v2122
        %2186 = vmatpush1.msra.mxu0 %v2121
        %2187 = vmatprep.subr.mxu0 %v2124
        %2188 = vmatpush1.msra.mxu0 %v2123
        %2189 = vmatprep.subr.mxu0 %v2126
        %2190 = vmatpush1.msra.mxu0 %v2125
        %2191 = vmatprep.subr.mxu0 %v2128
        %2192 = vmatpush1.msra.mxu0 %v2127
        %2193 = vmatprep.subr.mxu0 %v2130
        %2194 = vmatpush1.msra.mxu0 %v2129
        %2195 = vmatprep.subr.mxu0 %v2132
        %2196 = vmatpush1.msra.mxu0 %v2131
        %2197 = vmatprep.subr.mxu0 %v2134
        %2198 = vmatpush1.msra.mxu0 %v2133
        %2199 = vmatprep.subr.mxu0 %v2136
        %2200 = vmatpush1.msra.mxu0 %v2135
        %2201 = vmatprep.subr.mxu0 %v2138
        %2202 = vmatpush1.msra.mxu0 %v2137
        %2203 = vmatprep.subr.mxu0 %v2140
        %2204 = vmatpush1.msra.mxu0 %v2139
        %2205 = vmatprep.subr.mxu0 %v2142
        %2206 = vmatpush1.msra.mxu0 %v2141
        %2207 = vmatprep.subr.mxu0 %v2144
        %2208 = vmatpush1.msra.mxu0 %v2143
        %2209 = vmatprep.subr.mxu0 %v2146
        %2210 = vmatpush1.msra.mxu0 %v2145
        %2211 = vmatprep.subr.mxu0 %v2148
        %2212 = vmatpush1.msra.mxu0 %v2147
        %2213 = vmatprep.subr.mxu0 %v2150
        %2214 = vmatpush1.msra.mxu0 %v2149
        %2215 = vmatprep.subr.mxu0 %v2152
        %2216 = vmatpush1.msra.mxu0 %v2151
        %2217 = vmatprep.subr.mxu0 %v2154
        %2218 = vmatpush1.msra.mxu0 %v2153
        %2219 = vmatprep.subr.mxu0 %v2156
        %2220 = vmatpush1.msra.mxu0 %v2155
        %2221 = vmatprep.subr.mxu0 %v2158
        %2222 = vmatpush1.msra.mxu0 %v2157
        %2223 = vmatprep.subr.mxu0 %v2160
        %2224 = vmatpush1.msra.mxu0 %v2159
        %2225 = vmatprep.subr.mxu0 %v2162
        %2226 = vmatpush1.msra.mxu0 %v2161
        %2227 = vmatprep.subr.mxu0 %v2164
        %2228 = vmatpush1.msra.mxu0 %v2163
        %2229 = vmatprep.subr.mxu0 %v2166
        %2230 = vmatpush1.msra.mxu0 %v2165
        %2231 = vmatprep.subr.mxu0 %v2168
        %2232 = vmatpush1.msra.mxu0 %v2167
        %2233 = vmatprep.mubr.f32.mxu0 %v1882
        %2234 = vmatmul.mubr.f32.gmra.mrb[0].mxu0 %v1881
        %v2235 = vpop.f32.mrb[0].mxu0
        %v2236 = vadd.f32 0.0, %v2235
        %v2237 = vpop.f32.mrb[0].mxu0
        %v2238 = vadd.f32 0.0, %v2237
        %2239 = vmatprep.mubr.f32.mxu0 %v1884
        %2240 = vmatmul.mubr.f32.gmra.mrb[0].mxu0 %v1883
        %v2241 = vpop.f32.mrb[0].mxu0
        %v2242 = vadd.f32 0.0, %v2241
        %v2243 = vpop.f32.mrb[0].mxu0
        %v2244 = vadd.f32 0.0, %v2243
        %2245 = vdwg.mxu0
        %2246 = vmatprep.subr.mxu0 %v2041
        %2247 = vmatpush1.msra.mxu0 %v2040
        %2248 = vmatprep.subr.mxu0 %v2043
        %2249 = vmatpush1.msra.mxu0 %v2042
        %2250 = vmatprep.subr.mxu0 %v2045
        %2251 = vmatpush1.msra.mxu0 %v2044
        %2252 = vmatprep.subr.mxu0 %v2047
        %2253 = vmatpush1.msra.mxu0 %v2046
        %2254 = vmatprep.subr.mxu0 %v2049
        %2255 = vmatpush1.msra.mxu0 %v2048
        %2256 = vmatprep.subr.mxu0 %v2051
        %2257 = vmatpush1.msra.mxu0 %v2050
        %2258 = vmatprep.subr.mxu0 %v2053
        %2259 = vmatpush1.msra.mxu0 %v2052
        %2260 = vmatprep.subr.mxu0 %v2055
        %2261 = vmatpush1.msra.mxu0 %v2054
        %2262 = vmatprep.subr.mxu0 %v2057
        %2263 = vmatpush1.msra.mxu0 %v2056
        %2264 = vmatprep.subr.mxu0 %v2059
        %2265 = vmatpush1.msra.mxu0 %v2058
        %2266 = vmatprep.subr.mxu0 %v2061
        %2267 = vmatpush1.msra.mxu0 %v2060
        %2268 = vmatprep.subr.mxu0 %v2063
        %2269 = vmatpush1.msra.mxu0 %v2062
        %2270 = vmatprep.subr.mxu0 %v2065
        %2271 = vmatpush1.msra.mxu0 %v2064
        %2272 = vmatprep.subr.mxu0 %v2067
        %2273 = vmatpush1.msra.mxu0 %v2066
        %2274 = vmatprep.subr.mxu0 %v2069
        %2275 = vmatpush1.msra.mxu0 %v2068
        %2276 = vmatprep.subr.mxu0 %v2071
        %2277 = vmatpush1.msra.mxu0 %v2070
        %2278 = vmatprep.subr.mxu0 %v2073
        %2279 = vmatpush1.msra.mxu0 %v2072
        %2280 = vmatprep.subr.mxu0 %v2075
        %2281 = vmatpush1.msra.mxu0 %v2074
        %2282 = vmatprep.subr.mxu0 %v2077
        %2283 = vmatpush1.msra.mxu0 %v2076
        %2284 = vmatprep.subr.mxu0 %v2079
        %2285 = vmatpush1.msra.mxu0 %v2078
        %2286 = vmatprep.subr.mxu0 %v2081
        %2287 = vmatpush1.msra.mxu0 %v2080
        %2288 = vmatprep.subr.mxu0 %v2083
        %2289 = vmatpush1.msra.mxu0 %v2082
        %2290 = vmatprep.subr.mxu0 %v2085
        %2291 = vmatpush1.msra.mxu0 %v2084
        %2292 = vmatprep.subr.mxu0 %v2087
        %2293 = vmatpush1.msra.mxu0 %v2086
        %2294 = vmatprep.subr.mxu0 %v2089
        %2295 = vmatpush1.msra.mxu0 %v2088
        %2296 = vmatprep.subr.mxu0 %v2091
        %2297 = vmatpush1.msra.mxu0 %v2090
        %2298 = vmatprep.subr.mxu0 %v2093
        %2299 = vmatpush1.msra.mxu0 %v2092
        %2300 = vmatprep.subr.mxu0 %v2095
        %2301 = vmatpush1.msra.mxu0 %v2094
        %2302 = vmatprep.subr.mxu0 %v2097
        %2303 = vmatpush1.msra.mxu0 %v2096
        %2304 = vmatprep.subr.mxu0 %v2099
        %2305 = vmatpush1.msra.mxu0 %v2098
        %2306 = vmatprep.subr.mxu0 %v2101
        %2307 = vmatpush1.msra.mxu0 %v2100
        %2308 = vmatprep.subr.mxu0 %v2103
        %2309 = vmatpush1.msra.mxu0 %v2102
        %2310 = vmatprep.mubr.f32.mxu0 %v1954
        %2311 = vmatmul.mubr.f32.gmra.mrb[0].mxu0 %v1952
        %v2312 = vpop.f32.mrb[0].mxu0
        %v2313 = vadd.f32 %v2236, %v2312
        %v2314 = vpop.f32.mrb[0].mxu0
        %v2315 = vadd.f32 %v2238, %v2314
        %2316 = vmatprep.mubr.f32.mxu0 %v1960
        %2317 = vmatmul.mubr.f32.gmra.mrb[0].mxu0 %v1958
        %v2318 = vpop.f32.mrb[0].mxu0
        %v2319 = vadd.f32 %v2242, %v2318
        %v2320 = vpop.f32.mrb[0].mxu0
        %v2321 = vadd.f32 %v2244, %v2320
        %2322 = vdwg.mxu0
        %s2323 = scalar_lea.vmem [#allocation5], 2560
        %v2324 = vld [vmem:[%s2323] sm:$0xff]
        %v2325 = vld [vmem:[%s2323 + $0x8] sm:$0xff]
        %v2326 = vld [vmem:[%s2323 + $0x10] sm:$0xff]
        %v2327 = vld [vmem:[%s2323 + $0x18] sm:$0xff]
        %v2328 = vld [vmem:[%s2323 + $0x20] sm:$0xff]
        %v2329 = vld [vmem:[%s2323 + $0x28] sm:$0xff]
        %v2330 = vld [vmem:[%s2323 + $0x30] sm:$0xff]
        %v2331 = vld [vmem:[%s2323 + $0x38] sm:$0xff]
        %v2332 = vld [vmem:[%s2323 + $0x40] sm:$0xff]
        %v2333 = vld [vmem:[%s2323 + $0x48] sm:$0xff]
        %v2334 = vld [vmem:[%s2323 + $0x50] sm:$0xff]
        %v2335 = vld [vmem:[%s2323 + $0x58] sm:$0xff]
        %v2336 = vld [vmem:[%s2323 + $0x60] sm:$0xff]
        %v2337 = vld [vmem:[%s2323 + $0x68] sm:$0xff]
        %v2338 = vld [vmem:[%s2323 + $0x70] sm:$0xff]
        %v2339 = vld [vmem:[%s2323 + $0x78] sm:$0xff]
        %v2340 = vld [vmem:[%s2323 + $0x80] sm:$0xff]
        %v2341 = vld [vmem:[%s2323 + $0x88] sm:$0xff]
        %v2342 = vld [vmem:[%s2323 + $0x90] sm:$0xff]
        %v2343 = vld [vmem:[%s2323 + $0x98] sm:$0xff]
        %v2344 = vld [vmem:[%s2323 + $0xa0] sm:$0xff]
        %v2345 = vld [vmem:[%s2323 + $0xa8] sm:$0xff]
        %v2346 = vld [vmem:[%s2323 + $0xb0] sm:$0xff]
        %v2347 = vld [vmem:[%s2323 + $0xb8] sm:$0xff]
        %v2348 = vld [vmem:[%s2323 + $0xc0] sm:$0xff]
        %v2349 = vld [vmem:[%s2323 + $0xc8] sm:$0xff]
        %v2350 = vld [vmem:[%s2323 + $0xd0] sm:$0xff]
        %v2351 = vld [vmem:[%s2323 + $0xd8] sm:$0xff]
        %v2352 = vld [vmem:[%s2323 + $0xe0] sm:$0xff]
        %v2353 = vld [vmem:[%s2323 + $0xe8] sm:$0xff]
        %v2354 = vld [vmem:[%s2323 + $0xf0] sm:$0xff]
        %v2355 = vld [vmem:[%s2323 + $0xf8] sm:$0xff]
        %v2356 = vld [vmem:[%s2323 + $0x100] sm:$0xff]
        %v2357 = vld [vmem:[%s2323 + $0x108] sm:$0xff]
        %v2358 = vld [vmem:[%s2323 + $0x110] sm:$0xff]
        %v2359 = vld [vmem:[%s2323 + $0x118] sm:$0xff]
        %v2360 = vld [vmem:[%s2323 + $0x120] sm:$0xff]
        %v2361 = vld [vmem:[%s2323 + $0x128] sm:$0xff]
        %v2362 = vld [vmem:[%s2323 + $0x130] sm:$0xff]
        %v2363 = vld [vmem:[%s2323 + $0x138] sm:$0xff]
        %v2364 = vld [vmem:[%s2323 + $0x140] sm:$0xff]
        %v2365 = vld [vmem:[%s2323 + $0x148] sm:$0xff]
        %v2366 = vld [vmem:[%s2323 + $0x150] sm:$0xff]
        %v2367 = vld [vmem:[%s2323 + $0x158] sm:$0xff]
        %v2368 = vld [vmem:[%s2323 + $0x160] sm:$0xff]
        %v2369 = vld [vmem:[%s2323 + $0x168] sm:$0xff]
        %v2370 = vld [vmem:[%s2323 + $0x170] sm:$0xff]
        %v2371 = vld [vmem:[%s2323 + $0x178] sm:$0xff]
        %v2372 = vld [vmem:[%s2323 + $0x180] sm:$0xff]
        %v2373 = vld [vmem:[%s2323 + $0x188] sm:$0xff]
        %v2374 = vld [vmem:[%s2323 + $0x190] sm:$0xff]
        %v2375 = vld [vmem:[%s2323 + $0x198] sm:$0xff]
        %v2376 = vld [vmem:[%s2323 + $0x1a0] sm:$0xff]
        %v2377 = vld [vmem:[%s2323 + $0x1a8] sm:$0xff]
        %v2378 = vld [vmem:[%s2323 + $0x1b0] sm:$0xff]
        %v2379 = vld [vmem:[%s2323 + $0x1b8] sm:$0xff]
        %v2380 = vld [vmem:[%s2323 + $0x1c0] sm:$0xff]
        %v2381 = vld [vmem:[%s2323 + $0x1c8] sm:$0xff]
        %v2382 = vld [vmem:[%s2323 + $0x1d0] sm:$0xff]
        %v2383 = vld [vmem:[%s2323 + $0x1d8] sm:$0xff]
        %v2384 = vld [vmem:[%s2323 + $0x1e0] sm:$0xff]
        %v2385 = vld [vmem:[%s2323 + $0x1e8] sm:$0xff]
        %v2386 = vld [vmem:[%s2323 + $0x1f0] sm:$0xff]
        %v2387 = vld [vmem:[%s2323 + $0x1f8] sm:$0xff]
        %2388 = vmatprep.subr.mxu0 %v2325
        %2389 = vmatpush1.msra.mxu0 %v2324
        %2390 = vmatprep.subr.mxu0 %v2327
        %2391 = vmatpush1.msra.mxu0 %v2326
        %2392 = vmatprep.subr.mxu0 %v2329
        %2393 = vmatpush1.msra.mxu0 %v2328
        %2394 = vmatprep.subr.mxu0 %v2331
        %2395 = vmatpush1.msra.mxu0 %v2330
        %2396 = vmatprep.subr.mxu0 %v2333
        %2397 = vmatpush1.msra.mxu0 %v2332
        %2398 = vmatprep.subr.mxu0 %v2335
        %2399 = vmatpush1.msra.mxu0 %v2334
        %2400 = vmatprep.subr.mxu0 %v2337
        %2401 = vmatpush1.msra.mxu0 %v2336
        %2402 = vmatprep.subr.mxu0 %v2339
        %2403 = vmatpush1.msra.mxu0 %v2338
        %2404 = vmatprep.subr.mxu0 %v2341
        %2405 = vmatpush1.msra.mxu0 %v2340
        %2406 = vmatprep.subr.mxu0 %v2343
        %2407 = vmatpush1.msra.mxu0 %v2342
        %2408 = vmatprep.subr.mxu0 %v2345
        %2409 = vmatpush1.msra.mxu0 %v2344
        %2410 = vmatprep.subr.mxu0 %v2347
        %2411 = vmatpush1.msra.mxu0 %v2346
        %2412 = vmatprep.subr.mxu0 %v2349
        %2413 = vmatpush1.msra.mxu0 %v2348
        %2414 = vmatprep.subr.mxu0 %v2351
        %2415 = vmatpush1.msra.mxu0 %v2350
        %2416 = vmatprep.subr.mxu0 %v2353
        %2417 = vmatpush1.msra.mxu0 %v2352
        %2418 = vmatprep.subr.mxu0 %v2355
        %2419 = vmatpush1.msra.mxu0 %v2354
        %2420 = vmatprep.subr.mxu0 %v2357
        %2421 = vmatpush1.msra.mxu0 %v2356
        %2422 = vmatprep.subr.mxu0 %v2359
        %2423 = vmatpush1.msra.mxu0 %v2358
        %2424 = vmatprep.subr.mxu0 %v2361
        %2425 = vmatpush1.msra.mxu0 %v2360
        %2426 = vmatprep.subr.mxu0 %v2363
        %2427 = vmatpush1.msra.mxu0 %v2362
        %2428 = vmatprep.subr.mxu0 %v2365
        %2429 = vmatpush1.msra.mxu0 %v2364
        %2430 = vmatprep.subr.mxu0 %v2367
        %2431 = vmatpush1.msra.mxu0 %v2366
        %2432 = vmatprep.subr.mxu0 %v2369
        %2433 = vmatpush1.msra.mxu0 %v2368
        %2434 = vmatprep.subr.mxu0 %v2371
        %2435 = vmatpush1.msra.mxu0 %v2370
        %2436 = vmatprep.subr.mxu0 %v2373
        %2437 = vmatpush1.msra.mxu0 %v2372
        %2438 = vmatprep.subr.mxu0 %v2375
        %2439 = vmatpush1.msra.mxu0 %v2374
        %2440 = vmatprep.subr.mxu0 %v2377
        %2441 = vmatpush1.msra.mxu0 %v2376
        %2442 = vmatprep.subr.mxu0 %v2379
        %2443 = vmatpush1.msra.mxu0 %v2378
        %2444 = vmatprep.subr.mxu0 %v2381
        %2445 = vmatpush1.msra.mxu0 %v2380
        %2446 = vmatprep.subr.mxu0 %v2383
        %2447 = vmatpush1.msra.mxu0 %v2382
        %2448 = vmatprep.subr.mxu0 %v2385
        %2449 = vmatpush1.msra.mxu0 %v2384
        %2450 = vmatprep.subr.mxu0 %v2387
        %2451 = vmatpush1.msra.mxu0 %v2386
        %2452 = vmatprep.mubr.f32.mxu0 %v2031
        %2453 = vmatmul.mubr.f32.gmra.mrb[0].mxu0 %v2029
        %v2454 = vpop.f32.mrb[0].mxu0
        %v2455 = vadd.f32 0.0, %v2454
        %v2456 = vpop.f32.mrb[0].mxu0
        %v2457 = vadd.f32 0.0, %v2456
        %2458 = vmatprep.mubr.f32.mxu0 %v2037
        %2459 = vmatmul.mubr.f32.gmra.mrb[0].mxu0 %v2035
        %v2460 = vpop.f32.mrb[0].mxu0
        %v2461 = vadd.f32 0.0, %v2460
        %v2462 = vpop.f32.mrb[0].mxu0
        %v2463 = vadd.f32 0.0, %v2462
        %2464 = vdwg.mxu0
        %v2465 = vadd.f32 %v2313, %v2455
        %v2466 = vadd.f32 %v2315, %v2457
        %v2467 = vadd.f32 %v2319, %v2461
        %v2468 = vadd.f32 %v2321, %v2463
        %s2469 = scalar_lea.vmem [#allocation7], 2
        %v2470 = vld [vmem:[%s2469] sm:$0x3]
        %v2472 = vlaneseq
        %v2473 = vshrl.u32 %v2472, 7
        %v2474 = vsub.s32 0, %v2473
        %v2475 = vrot.slane %v2470, %v2474
        %v2476 = vlaneseq
        %v2477 = vshrl.u32 %v2476, 7
        %v2478 = vsub.s32 1, %v2477
        %v2479 = vrot.slane %v2470, %v2478
        %v2482 = vmul.f32 %v2465, %v2475
        %v2483 = vmul.f32 %v2466, %v2479
        %v2484 = vmul.f32 %v2467, %v2475
        %v2485 = vmul.f32 %v2468, %v2479
        %s2486 = scalar_lea.vmem [#allocation8], 2
        %v2487 = vld [vmem:[%s2486] sm:$0x3]
        %v2489 = vlaneseq
        %v2490 = vshrl.u32 %v2489, 7
        %v2491 = vsub.s32 0, %v2490
        %v2492 = vrot.slane %v2487, %v2491
        %v2493 = vlaneseq
        %v2494 = vshrl.u32 %v2493, 7
        %v2495 = vsub.s32 1, %v2494
        %v2496 = vrot.slane %v2487, %v2495
        %v2499 = vadd.f32 %v2482, %v2492
        %v2500 = vadd.f32 %v2483, %v2496
        %v2501 = vadd.f32 %v2484, %v2492
        %v2502 = vadd.f32 %v2485, %v2496
        %v2503 = vmax.f32 %v2499, 0.0
        %v2504 = vmax.f32 %v2500, 0.0
        %v2505 = vmax.f32 %v2501, 0.0
        %v2506 = vmax.f32 %v2502, 0.0
        %2507 = vmatprep.subr.mxu0 %v2504
        %2508 = vmatpush1.msra.mxu0 %v2503
        %2509 = vmatprep.subr.mxu0 %v2506
        %2510 = vmatpush1.msra.mxu0 %v2505
        %2511 = vmatprep.subr.mxu0 0.0
        %2512 = vmatpush1.msra.mxu0 0.0
        %2513 = vmatprep.subr.mxu0 0.0
        %2514 = vmatpush1.msra.mxu0 0.0
        %2515 = vmatprep.subr.mxu0 0.0
        %2516 = vmatpush1.msra.mxu0 0.0
        %2517 = vmatprep.subr.mxu0 0.0
        %2518 = vmatpush1.msra.mxu0 0.0
        %2519 = vmatprep.subr.mxu0 0.0
        %2520 = vmatpush1.msra.mxu0 0.0
        %2521 = vmatprep.subr.mxu0 0.0
        %2522 = vmatpush1.msra.mxu0 0.0
        %2523 = vmatprep.subr.mxu0 0.0
        %2524 = vmatpush1.msra.mxu0 0.0
        %2525 = vmatprep.subr.mxu0 0.0
        %2526 = vmatpush1.msra.mxu0 0.0
        %2527 = vmatprep.subr.mxu0 0.0
        %2528 = vmatpush1.msra.mxu0 0.0
        %2529 = vmatprep.subr.mxu0 0.0
        %2530 = vmatpush1.msra.mxu0 0.0
        %2531 = vmatprep.subr.mxu0 0.0
        %2532 = vmatpush1.msra.mxu0 0.0
        %2533 = vmatprep.subr.mxu0 0.0
        %2534 = vmatpush1.msra.mxu0 0.0
        %2535 = vmatprep.subr.mxu0 0.0
        %2536 = vmatpush1.msra.mxu0 0.0
        %2537 = vmatprep.subr.mxu0 0.0
        %2538 = vmatpush1.msra.mxu0 0.0
        %2539 = vmatprep.subr.mxu0 0.0
        %2540 = vmatpush1.msra.mxu0 0.0
        %2541 = vmatprep.subr.mxu0 0.0
        %2542 = vmatpush1.msra.mxu0 0.0
        %2543 = vmatprep.subr.mxu0 0.0
        %2544 = vmatpush1.msra.mxu0 0.0
        %2545 = vmatprep.subr.mxu0 0.0
        %2546 = vmatpush1.msra.mxu0 0.0
        %2547 = vmatprep.subr.mxu0 0.0
        %2548 = vmatpush1.msra.mxu0 0.0
        %2549 = vmatprep.subr.mxu0 0.0
        %2550 = vmatpush1.msra.mxu0 0.0
        %2551 = vmatprep.subr.mxu0 0.0
        %2552 = vmatpush1.msra.mxu0 0.0
        %2553 = vmatprep.subr.mxu0 0.0
        %2554 = vmatpush1.msra.mxu0 0.0
        %2555 = vmatprep.subr.mxu0 0.0
        %2556 = vmatpush1.msra.mxu0 0.0
        %2557 = vmatprep.subr.mxu0 0.0
        %2558 = vmatpush1.msra.mxu0 0.0
        %2559 = vmatprep.subr.mxu0 0.0
        %2560 = vmatpush1.msra.mxu0 0.0
        %2561 = vmatprep.subr.mxu0 0.0
        %2562 = vmatpush1.msra.mxu0 0.0
        %2563 = vmatprep.subr.mxu0 0.0
        %2564 = vmatpush1.msra.mxu0 0.0
        %2565 = vmatprep.subr.mxu0 0.0
        %2566 = vmatpush1.msra.mxu0 0.0
        %2567 = vmatprep.subr.mxu0 0.0
        %2568 = vmatpush1.msra.mxu0 0.0
        %2569 = vmatprep.subr.mxu0 0.0
        %2570 = vmatpush1.msra.mxu0 0.0
        %2571 = vmatprep.mubr.f32.mxu0 0.0
        %2572 = vmatmul.mubr.f32.gmra.mrb[0].mxu0 %v645
        %v2573 = vpop.f32.mrb[0].mxu0
        %v2574 = vadd.f32 0.0, %v2573
        %v2575 = vpop.f32.mrb[0].mxu0
        %v2576 = vadd.f32 0.0, %v2575
        %2577 = vmatprep.mubr.f32.mxu0 0.0
        %2578 = vmatmul.mubr.f32.gmra.mrb[0].mxu0 %v648
        %v2579 = vpop.f32.mrb[0].mxu0
        %v2580 = vadd.f32 0.0, %v2579
        %v2581 = vpop.f32.mrb[0].mxu0
        %v2582 = vadd.f32 0.0, %v2581
        %2583 = vdwg.mxu0
        %2584 = vmatprep.subr.mxu0 %v2504
        %2585 = vmatpush1.msra.mxu0 %v2503
        %2586 = vmatprep.subr.mxu0 %v2506
        %2587 = vmatpush1.msra.mxu0 %v2505
        %2588 = vmatprep.subr.mxu0 0.0
        %2589 = vmatpush1.msra.mxu0 0.0
        %2590 = vmatprep.subr.mxu0 0.0
        %2591 = vmatpush1.msra.mxu0 0.0
        %2592 = vmatprep.subr.mxu0 0.0
        %2593 = vmatpush1.msra.mxu0 0.0
        %2594 = vmatprep.subr.mxu0 0.0
        %2595 = vmatpush1.msra.mxu0 0.0
        %2596 = vmatprep.subr.mxu0 0.0
        %2597 = vmatpush1.msra.mxu0 0.0
        %2598 = vmatprep.subr.mxu0 0.0
        %2599 = vmatpush1.msra.mxu0 0.0
        %2600 = vmatprep.subr.mxu0 0.0
        %2601 = vmatpush1.msra.mxu0 0.0
        %2602 = vmatprep.subr.mxu0 0.0
        %2603 = vmatpush1.msra.mxu0 0.0
        %2604 = vmatprep.subr.mxu0 0.0
        %2605 = vmatpush1.msra.mxu0 0.0
        %2606 = vmatprep.subr.mxu0 0.0
        %2607 = vmatpush1.msra.mxu0 0.0
        %2608 = vmatprep.subr.mxu0 0.0
        %2609 = vmatpush1.msra.mxu0 0.0
        %2610 = vmatprep.subr.mxu0 0.0
        %2611 = vmatpush1.msra.mxu0 0.0
        %2612 = vmatprep.subr.mxu0 0.0
        %2613 = vmatpush1.msra.mxu0 0.0
        %2614 = vmatprep.subr.mxu0 0.0
        %2615 = vmatpush1.msra.mxu0 0.0
        %2616 = vmatprep.subr.mxu0 0.0
        %2617 = vmatpush1.msra.mxu0 0.0
        %2618 = vmatprep.subr.mxu0 0.0
        %2619 = vmatpush1.msra.mxu0 0.0
        %2620 = vmatprep.subr.mxu0 0.0
        %2621 = vmatpush1.msra.mxu0 0.0
        %2622 = vmatprep.subr.mxu0 0.0
        %2623 = vmatpush1.msra.mxu0 0.0
        %2624 = vmatprep.subr.mxu0 0.0
        %2625 = vmatpush1.msra.mxu0 0.0
        %2626 = vmatprep.subr.mxu0 0.0
        %2627 = vmatpush1.msra.mxu0 0.0
        %2628 = vmatprep.subr.mxu0 0.0
        %2629 = vmatpush1.msra.mxu0 0.0
        %2630 = vmatprep.subr.mxu0 0.0
        %2631 = vmatpush1.msra.mxu0 0.0
        %2632 = vmatprep.subr.mxu0 0.0
        %2633 = vmatpush1.msra.mxu0 0.0
        %2634 = vmatprep.subr.mxu0 0.0
        %2635 = vmatpush1.msra.mxu0 0.0
        %2636 = vmatprep.subr.mxu0 0.0
        %2637 = vmatpush1.msra.mxu0 0.0
        %2638 = vmatprep.subr.mxu0 0.0
        %2639 = vmatpush1.msra.mxu0 0.0
        %2640 = vmatprep.subr.mxu0 0.0
        %2641 = vmatpush1.msra.mxu0 0.0
        %2642 = vmatprep.subr.mxu0 0.0
        %2643 = vmatpush1.msra.mxu0 0.0
        %2644 = vmatprep.subr.mxu0 0.0
        %2645 = vmatpush1.msra.mxu0 0.0
        %2646 = vmatprep.subr.mxu0 0.0
        %2647 = vmatpush1.msra.mxu0 0.0
        %2648 = vmatprep.mubr.f32.mxu0 0.0
        %2649 = vmatmul.mubr.f32.gmra.mrb[0].mxu0 %v731
        %v2650 = vpop.f32.mrb[0].mxu0
        %v2651 = vadd.f32 0.0, %v2650
        %v2652 = vpop.f32.mrb[0].mxu0
        %v2653 = vadd.f32 0.0, %v2652
        %2654 = vmatprep.mubr.f32.mxu0 0.0
        %2655 = vmatmul.mubr.f32.gmra.mrb[0].mxu0 %v734
        %v2656 = vpop.f32.mrb[0].mxu0
        %v2657 = vadd.f32 0.0, %v2656
        %v2658 = vpop.f32.mrb[0].mxu0
        %v2659 = vadd.f32 0.0, %v2658
        %2660 = vdwg.mxu0
        %s2661 = scalar_lea.vmem [#allocation10], 1536
        %v2662 = vld [vmem:[%s2661] sm:$0xff]
        %v2663 = vld [vmem:[%s2661 + $0x8] sm:$0xff]
        %v2664 = vld [vmem:[%s2661 + $0x10] sm:$0xff]
        %v2665 = vld [vmem:[%s2661 + $0x18] sm:$0xff]
        %v2666 = vld [vmem:[%s2661 + $0x20] sm:$0xff]
        %v2667 = vld [vmem:[%s2661 + $0x28] sm:$0xff]
        %v2668 = vld [vmem:[%s2661 + $0x30] sm:$0xff]
        %v2669 = vld [vmem:[%s2661 + $0x38] sm:$0xff]
        %v2670 = vld [vmem:[%s2661 + $0x40] sm:$0xff]
        %v2671 = vld [vmem:[%s2661 + $0x48] sm:$0xff]
        %v2672 = vld [vmem:[%s2661 + $0x50] sm:$0xff]
        %v2673 = vld [vmem:[%s2661 + $0x58] sm:$0xff]
        %v2674 = vld [vmem:[%s2661 + $0x60] sm:$0xff]
        %v2675 = vld [vmem:[%s2661 + $0x68] sm:$0xff]
        %v2676 = vld [vmem:[%s2661 + $0x70] sm:$0xff]
        %v2677 = vld [vmem:[%s2661 + $0x78] sm:$0xff]
        %v2678 = vld [vmem:[%s2661 + $0x80] sm:$0xff]
        %v2679 = vld [vmem:[%s2661 + $0x88] sm:$0xff]
        %v2680 = vld [vmem:[%s2661 + $0x90] sm:$0xff]
        %v2681 = vld [vmem:[%s2661 + $0x98] sm:$0xff]
        %v2682 = vld [vmem:[%s2661 + $0xa0] sm:$0xff]
        %v2683 = vld [vmem:[%s2661 + $0xa8] sm:$0xff]
        %v2684 = vld [vmem:[%s2661 + $0xb0] sm:$0xff]
        %v2685 = vld [vmem:[%s2661 + $0xb8] sm:$0xff]
        %v2686 = vld [vmem:[%s2661 + $0xc0] sm:$0xff]
        %v2687 = vld [vmem:[%s2661 + $0xc8] sm:$0xff]
        %v2688 = vld [vmem:[%s2661 + $0xd0] sm:$0xff]
        %v2689 = vld [vmem:[%s2661 + $0xd8] sm:$0xff]
        %v2690 = vld [vmem:[%s2661 + $0xe0] sm:$0xff]
        %v2691 = vld [vmem:[%s2661 + $0xe8] sm:$0xff]
        %v2692 = vld [vmem:[%s2661 + $0xf0] sm:$0xff]
        %v2693 = vld [vmem:[%s2661 + $0xf8] sm:$0xff]
        %v2694 = vld [vmem:[%s2661 + $0x100] sm:$0xff]
        %v2695 = vld [vmem:[%s2661 + $0x108] sm:$0xff]
        %v2696 = vld [vmem:[%s2661 + $0x110] sm:$0xff]
        %v2697 = vld [vmem:[%s2661 + $0x118] sm:$0xff]
        %v2698 = vld [vmem:[%s2661 + $0x120] sm:$0xff]
        %v2699 = vld [vmem:[%s2661 + $0x128] sm:$0xff]
        %v2700 = vld [vmem:[%s2661 + $0x130] sm:$0xff]
        %v2701 = vld [vmem:[%s2661 + $0x138] sm:$0xff]
        %v2702 = vld [vmem:[%s2661 + $0x140] sm:$0xff]
        %v2703 = vld [vmem:[%s2661 + $0x148] sm:$0xff]
        %v2704 = vld [vmem:[%s2661 + $0x150] sm:$0xff]
        %v2705 = vld [vmem:[%s2661 + $0x158] sm:$0xff]
        %v2706 = vld [vmem:[%s2661 + $0x160] sm:$0xff]
        %v2707 = vld [vmem:[%s2661 + $0x168] sm:$0xff]
        %v2708 = vld [vmem:[%s2661 + $0x170] sm:$0xff]
        %v2709 = vld [vmem:[%s2661 + $0x178] sm:$0xff]
        %v2710 = vld [vmem:[%s2661 + $0x180] sm:$0xff]
        %v2711 = vld [vmem:[%s2661 + $0x188] sm:$0xff]
        %v2712 = vld [vmem:[%s2661 + $0x190] sm:$0xff]
        %v2713 = vld [vmem:[%s2661 + $0x198] sm:$0xff]
        %v2714 = vld [vmem:[%s2661 + $0x1a0] sm:$0xff]
        %v2715 = vld [vmem:[%s2661 + $0x1a8] sm:$0xff]
        %v2716 = vld [vmem:[%s2661 + $0x1b0] sm:$0xff]
        %v2717 = vld [vmem:[%s2661 + $0x1b8] sm:$0xff]
        %v2718 = vld [vmem:[%s2661 + $0x1c0] sm:$0xff]
        %v2719 = vld [vmem:[%s2661 + $0x1c8] sm:$0xff]
        %v2720 = vld [vmem:[%s2661 + $0x1d0] sm:$0xff]
        %v2721 = vld [vmem:[%s2661 + $0x1d8] sm:$0xff]
        %v2722 = vld [vmem:[%s2661 + $0x1e0] sm:$0xff]
        %v2723 = vld [vmem:[%s2661 + $0x1e8] sm:$0xff]
        %v2724 = vld [vmem:[%s2661 + $0x1f0] sm:$0xff]
        %v2725 = vld [vmem:[%s2661 + $0x1f8] sm:$0xff]
        %s2726 = scalar_lea.vmem [#allocation10], 2048
        %v2727 = vld [vmem:[%s2726] sm:$0xff]
        %v2728 = vld [vmem:[%s2726 + $0x8] sm:$0xff]
        %v2729 = vld [vmem:[%s2726 + $0x10] sm:$0xff]
        %v2730 = vld [vmem:[%s2726 + $0x18] sm:$0xff]
        %v2731 = vld [vmem:[%s2726 + $0x20] sm:$0xff]
        %v2732 = vld [vmem:[%s2726 + $0x28] sm:$0xff]
        %v2733 = vld [vmem:[%s2726 + $0x30] sm:$0xff]
        %v2734 = vld [vmem:[%s2726 + $0x38] sm:$0xff]
        %v2735 = vld [vmem:[%s2726 + $0x40] sm:$0xff]
        %v2736 = vld [vmem:[%s2726 + $0x48] sm:$0xff]
        %v2737 = vld [vmem:[%s2726 + $0x50] sm:$0xff]
        %v2738 = vld [vmem:[%s2726 + $0x58] sm:$0xff]
        %v2739 = vld [vmem:[%s2726 + $0x60] sm:$0xff]
        %v2740 = vld [vmem:[%s2726 + $0x68] sm:$0xff]
        %v2741 = vld [vmem:[%s2726 + $0x70] sm:$0xff]
        %v2742 = vld [vmem:[%s2726 + $0x78] sm:$0xff]
        %v2743 = vld [vmem:[%s2726 + $0x80] sm:$0xff]
        %v2744 = vld [vmem:[%s2726 + $0x88] sm:$0xff]
        %v2745 = vld [vmem:[%s2726 + $0x90] sm:$0xff]
        %v2746 = vld [vmem:[%s2726 + $0x98] sm:$0xff]
        %v2747 = vld [vmem:[%s2726 + $0xa0] sm:$0xff]
        %v2748 = vld [vmem:[%s2726 + $0xa8] sm:$0xff]
        %v2749 = vld [vmem:[%s2726 + $0xb0] sm:$0xff]
        %v2750 = vld [vmem:[%s2726 + $0xb8] sm:$0xff]
        %v2751 = vld [vmem:[%s2726 + $0xc0] sm:$0xff]
        %v2752 = vld [vmem:[%s2726 + $0xc8] sm:$0xff]
        %v2753 = vld [vmem:[%s2726 + $0xd0] sm:$0xff]
        %v2754 = vld [vmem:[%s2726 + $0xd8] sm:$0xff]
        %v2755 = vld [vmem:[%s2726 + $0xe0] sm:$0xff]
        %v2756 = vld [vmem:[%s2726 + $0xe8] sm:$0xff]
        %v2757 = vld [vmem:[%s2726 + $0xf0] sm:$0xff]
        %v2758 = vld [vmem:[%s2726 + $0xf8] sm:$0xff]
        %v2759 = vld [vmem:[%s2726 + $0x100] sm:$0xff]
        %v2760 = vld [vmem:[%s2726 + $0x108] sm:$0xff]
        %v2761 = vld [vmem:[%s2726 + $0x110] sm:$0xff]
        %v2762 = vld [vmem:[%s2726 + $0x118] sm:$0xff]
        %v2763 = vld [vmem:[%s2726 + $0x120] sm:$0xff]
        %v2764 = vld [vmem:[%s2726 + $0x128] sm:$0xff]
        %v2765 = vld [vmem:[%s2726 + $0x130] sm:$0xff]
        %v2766 = vld [vmem:[%s2726 + $0x138] sm:$0xff]
        %v2767 = vld [vmem:[%s2726 + $0x140] sm:$0xff]
        %v2768 = vld [vmem:[%s2726 + $0x148] sm:$0xff]
        %v2769 = vld [vmem:[%s2726 + $0x150] sm:$0xff]
        %v2770 = vld [vmem:[%s2726 + $0x158] sm:$0xff]
        %v2771 = vld [vmem:[%s2726 + $0x160] sm:$0xff]
        %v2772 = vld [vmem:[%s2726 + $0x168] sm:$0xff]
        %v2773 = vld [vmem:[%s2726 + $0x170] sm:$0xff]
        %v2774 = vld [vmem:[%s2726 + $0x178] sm:$0xff]
        %v2775 = vld [vmem:[%s2726 + $0x180] sm:$0xff]
        %v2776 = vld [vmem:[%s2726 + $0x188] sm:$0xff]
        %v2777 = vld [vmem:[%s2726 + $0x190] sm:$0xff]
        %v2778 = vld [vmem:[%s2726 + $0x198] sm:$0xff]
        %v2779 = vld [vmem:[%s2726 + $0x1a0] sm:$0xff]
        %v2780 = vld [vmem:[%s2726 + $0x1a8] sm:$0xff]
        %v2781 = vld [vmem:[%s2726 + $0x1b0] sm:$0xff]
        %v2782 = vld [vmem:[%s2726 + $0x1b8] sm:$0xff]
        %v2783 = vld [vmem:[%s2726 + $0x1c0] sm:$0xff]
        %v2784 = vld [vmem:[%s2726 + $0x1c8] sm:$0xff]
        %v2785 = vld [vmem:[%s2726 + $0x1d0] sm:$0xff]
        %v2786 = vld [vmem:[%s2726 + $0x1d8] sm:$0xff]
        %v2787 = vld [vmem:[%s2726 + $0x1e0] sm:$0xff]
        %v2788 = vld [vmem:[%s2726 + $0x1e8] sm:$0xff]
        %v2789 = vld [vmem:[%s2726 + $0x1f0] sm:$0xff]
        %v2790 = vld [vmem:[%s2726 + $0x1f8] sm:$0xff]
        %2791 = vmatprep.subr.mxu0 %v2728
        %2792 = vmatpush1.msra.mxu0 %v2727
        %2793 = vmatprep.subr.mxu0 %v2730
        %2794 = vmatpush1.msra.mxu0 %v2729
        %2795 = vmatprep.subr.mxu0 %v2732
        %2796 = vmatpush1.msra.mxu0 %v2731
        %2797 = vmatprep.subr.mxu0 %v2734
        %2798 = vmatpush1.msra.mxu0 %v2733
        %2799 = vmatprep.subr.mxu0 %v2736
        %2800 = vmatpush1.msra.mxu0 %v2735
        %2801 = vmatprep.subr.mxu0 %v2738
        %2802 = vmatpush1.msra.mxu0 %v2737
        %2803 = vmatprep.subr.mxu0 %v2740
        %2804 = vmatpush1.msra.mxu0 %v2739
        %2805 = vmatprep.subr.mxu0 %v2742
        %2806 = vmatpush1.msra.mxu0 %v2741
        %2807 = vmatprep.subr.mxu0 %v2744
        %2808 = vmatpush1.msra.mxu0 %v2743
        %2809 = vmatprep.subr.mxu0 %v2746
        %2810 = vmatpush1.msra.mxu0 %v2745
        %2811 = vmatprep.subr.mxu0 %v2748
        %2812 = vmatpush1.msra.mxu0 %v2747
        %2813 = vmatprep.subr.mxu0 %v2750
        %2814 = vmatpush1.msra.mxu0 %v2749
        %2815 = vmatprep.subr.mxu0 %v2752
        %2816 = vmatpush1.msra.mxu0 %v2751
        %2817 = vmatprep.subr.mxu0 %v2754
        %2818 = vmatpush1.msra.mxu0 %v2753
        %2819 = vmatprep.subr.mxu0 %v2756
        %2820 = vmatpush1.msra.mxu0 %v2755
        %2821 = vmatprep.subr.mxu0 %v2758
        %2822 = vmatpush1.msra.mxu0 %v2757
        %2823 = vmatprep.subr.mxu0 %v2760
        %2824 = vmatpush1.msra.mxu0 %v2759
        %2825 = vmatprep.subr.mxu0 %v2762
        %2826 = vmatpush1.msra.mxu0 %v2761
        %2827 = vmatprep.subr.mxu0 %v2764
        %2828 = vmatpush1.msra.mxu0 %v2763
        %2829 = vmatprep.subr.mxu0 %v2766
        %2830 = vmatpush1.msra.mxu0 %v2765
        %2831 = vmatprep.subr.mxu0 %v2768
        %2832 = vmatpush1.msra.mxu0 %v2767
        %2833 = vmatprep.subr.mxu0 %v2770
        %2834 = vmatpush1.msra.mxu0 %v2769
        %2835 = vmatprep.subr.mxu0 %v2772
        %2836 = vmatpush1.msra.mxu0 %v2771
        %2837 = vmatprep.subr.mxu0 %v2774
        %2838 = vmatpush1.msra.mxu0 %v2773
        %2839 = vmatprep.subr.mxu0 %v2776
        %2840 = vmatpush1.msra.mxu0 %v2775
        %2841 = vmatprep.subr.mxu0 %v2778
        %2842 = vmatpush1.msra.mxu0 %v2777
        %2843 = vmatprep.subr.mxu0 %v2780
        %2844 = vmatpush1.msra.mxu0 %v2779
        %2845 = vmatprep.subr.mxu0 %v2782
        %2846 = vmatpush1.msra.mxu0 %v2781
        %2847 = vmatprep.subr.mxu0 %v2784
        %2848 = vmatpush1.msra.mxu0 %v2783
        %2849 = vmatprep.subr.mxu0 %v2786
        %2850 = vmatpush1.msra.mxu0 %v2785
        %2851 = vmatprep.subr.mxu0 %v2788
        %2852 = vmatpush1.msra.mxu0 %v2787
        %2853 = vmatprep.subr.mxu0 %v2790
        %2854 = vmatpush1.msra.mxu0 %v2789
        %2855 = vmatprep.mubr.f32.mxu0 %v2504
        %2856 = vmatmul.mubr.f32.gmra.mrb[0].mxu0 %v2503
        %v2857 = vpop.f32.mrb[0].mxu0
        %v2858 = vadd.f32 0.0, %v2857
        %v2859 = vpop.f32.mrb[0].mxu0
        %v2860 = vadd.f32 0.0, %v2859
        %2861 = vmatprep.mubr.f32.mxu0 %v2506
        %2862 = vmatmul.mubr.f32.gmra.mrb[0].mxu0 %v2505
        %v2863 = vpop.f32.mrb[0].mxu0
        %v2864 = vadd.f32 0.0, %v2863
        %v2865 = vpop.f32.mrb[0].mxu0
        %v2866 = vadd.f32 0.0, %v2865
        %2867 = vdwg.mxu0
        %2868 = vmatprep.subr.mxu0 %v2663
        %2869 = vmatpush1.msra.mxu0 %v2662
        %2870 = vmatprep.subr.mxu0 %v2665
        %2871 = vmatpush1.msra.mxu0 %v2664
        %2872 = vmatprep.subr.mxu0 %v2667
        %2873 = vmatpush1.msra.mxu0 %v2666
        %2874 = vmatprep.subr.mxu0 %v2669
        %2875 = vmatpush1.msra.mxu0 %v2668
        %2876 = vmatprep.subr.mxu0 %v2671
        %2877 = vmatpush1.msra.mxu0 %v2670
        %2878 = vmatprep.subr.mxu0 %v2673
        %2879 = vmatpush1.msra.mxu0 %v2672
        %2880 = vmatprep.subr.mxu0 %v2675
        %2881 = vmatpush1.msra.mxu0 %v2674
        %2882 = vmatprep.subr.mxu0 %v2677
        %2883 = vmatpush1.msra.mxu0 %v2676
        %2884 = vmatprep.subr.mxu0 %v2679
        %2885 = vmatpush1.msra.mxu0 %v2678
        %2886 = vmatprep.subr.mxu0 %v2681
        %2887 = vmatpush1.msra.mxu0 %v2680
        %2888 = vmatprep.subr.mxu0 %v2683
        %2889 = vmatpush1.msra.mxu0 %v2682
        %2890 = vmatprep.subr.mxu0 %v2685
        %2891 = vmatpush1.msra.mxu0 %v2684
        %2892 = vmatprep.subr.mxu0 %v2687
        %2893 = vmatpush1.msra.mxu0 %v2686
        %2894 = vmatprep.subr.mxu0 %v2689
        %2895 = vmatpush1.msra.mxu0 %v2688
        %2896 = vmatprep.subr.mxu0 %v2691
        %2897 = vmatpush1.msra.mxu0 %v2690
        %2898 = vmatprep.subr.mxu0 %v2693
        %2899 = vmatpush1.msra.mxu0 %v2692
        %2900 = vmatprep.subr.mxu0 %v2695
        %2901 = vmatpush1.msra.mxu0 %v2694
        %2902 = vmatprep.subr.mxu0 %v2697
        %2903 = vmatpush1.msra.mxu0 %v2696
        %2904 = vmatprep.subr.mxu0 %v2699
        %2905 = vmatpush1.msra.mxu0 %v2698
        %2906 = vmatprep.subr.mxu0 %v2701
        %2907 = vmatpush1.msra.mxu0 %v2700
        %2908 = vmatprep.subr.mxu0 %v2703
        %2909 = vmatpush1.msra.mxu0 %v2702
        %2910 = vmatprep.subr.mxu0 %v2705
        %2911 = vmatpush1.msra.mxu0 %v2704
        %2912 = vmatprep.subr.mxu0 %v2707
        %2913 = vmatpush1.msra.mxu0 %v2706
        %2914 = vmatprep.subr.mxu0 %v2709
        %2915 = vmatpush1.msra.mxu0 %v2708
        %2916 = vmatprep.subr.mxu0 %v2711
        %2917 = vmatpush1.msra.mxu0 %v2710
        %2918 = vmatprep.subr.mxu0 %v2713
        %2919 = vmatpush1.msra.mxu0 %v2712
        %2920 = vmatprep.subr.mxu0 %v2715
        %2921 = vmatpush1.msra.mxu0 %v2714
        %2922 = vmatprep.subr.mxu0 %v2717
        %2923 = vmatpush1.msra.mxu0 %v2716
        %2924 = vmatprep.subr.mxu0 %v2719
        %2925 = vmatpush1.msra.mxu0 %v2718
        %2926 = vmatprep.subr.mxu0 %v2721
        %2927 = vmatpush1.msra.mxu0 %v2720
        %2928 = vmatprep.subr.mxu0 %v2723
        %2929 = vmatpush1.msra.mxu0 %v2722
        %2930 = vmatprep.subr.mxu0 %v2725
        %2931 = vmatpush1.msra.mxu0 %v2724
        %2932 = vmatprep.mubr.f32.mxu0 %v2576
        %2933 = vmatmul.mubr.f32.gmra.mrb[0].mxu0 %v2574
        %v2934 = vpop.f32.mrb[0].mxu0
        %v2935 = vadd.f32 %v2858, %v2934
        %v2936 = vpop.f32.mrb[0].mxu0
        %v2937 = vadd.f32 %v2860, %v2936
        %2938 = vmatprep.mubr.f32.mxu0 %v2582
        %2939 = vmatmul.mubr.f32.gmra.mrb[0].mxu0 %v2580
        %v2940 = vpop.f32.mrb[0].mxu0
        %v2941 = vadd.f32 %v2864, %v2940
        %v2942 = vpop.f32.mrb[0].mxu0
        %v2943 = vadd.f32 %v2866, %v2942
        %2944 = vdwg.mxu0
        %s2945 = scalar_lea.vmem [#allocation10], 2560
        %v2946 = vld [vmem:[%s2945] sm:$0xff]
        %v2947 = vld [vmem:[%s2945 + $0x8] sm:$0xff]
        %v2948 = vld [vmem:[%s2945 + $0x10] sm:$0xff]
        %v2949 = vld [vmem:[%s2945 + $0x18] sm:$0xff]
        %v2950 = vld [vmem:[%s2945 + $0x20] sm:$0xff]
        %v2951 = vld [vmem:[%s2945 + $0x28] sm:$0xff]
        %v2952 = vld [vmem:[%s2945 + $0x30] sm:$0xff]
        %v2953 = vld [vmem:[%s2945 + $0x38] sm:$0xff]
        %v2954 = vld [vmem:[%s2945 + $0x40] sm:$0xff]
        %v2955 = vld [vmem:[%s2945 + $0x48] sm:$0xff]
        %v2956 = vld [vmem:[%s2945 + $0x50] sm:$0xff]
        %v2957 = vld [vmem:[%s2945 + $0x58] sm:$0xff]
        %v2958 = vld [vmem:[%s2945 + $0x60] sm:$0xff]
        %v2959 = vld [vmem:[%s2945 + $0x68] sm:$0xff]
        %v2960 = vld [vmem:[%s2945 + $0x70] sm:$0xff]
        %v2961 = vld [vmem:[%s2945 + $0x78] sm:$0xff]
        %v2962 = vld [vmem:[%s2945 + $0x80] sm:$0xff]
        %v2963 = vld [vmem:[%s2945 + $0x88] sm:$0xff]
        %v2964 = vld [vmem:[%s2945 + $0x90] sm:$0xff]
        %v2965 = vld [vmem:[%s2945 + $0x98] sm:$0xff]
        %v2966 = vld [vmem:[%s2945 + $0xa0] sm:$0xff]
        %v2967 = vld [vmem:[%s2945 + $0xa8] sm:$0xff]
        %v2968 = vld [vmem:[%s2945 + $0xb0] sm:$0xff]
        %v2969 = vld [vmem:[%s2945 + $0xb8] sm:$0xff]
        %v2970 = vld [vmem:[%s2945 + $0xc0] sm:$0xff]
        %v2971 = vld [vmem:[%s2945 + $0xc8] sm:$0xff]
        %v2972 = vld [vmem:[%s2945 + $0xd0] sm:$0xff]
        %v2973 = vld [vmem:[%s2945 + $0xd8] sm:$0xff]
        %v2974 = vld [vmem:[%s2945 + $0xe0] sm:$0xff]
        %v2975 = vld [vmem:[%s2945 + $0xe8] sm:$0xff]
        %v2976 = vld [vmem:[%s2945 + $0xf0] sm:$0xff]
        %v2977 = vld [vmem:[%s2945 + $0xf8] sm:$0xff]
        %v2978 = vld [vmem:[%s2945 + $0x100] sm:$0xff]
        %v2979 = vld [vmem:[%s2945 + $0x108] sm:$0xff]
        %v2980 = vld [vmem:[%s2945 + $0x110] sm:$0xff]
        %v2981 = vld [vmem:[%s2945 + $0x118] sm:$0xff]
        %v2982 = vld [vmem:[%s2945 + $0x120] sm:$0xff]
        %v2983 = vld [vmem:[%s2945 + $0x128] sm:$0xff]
        %v2984 = vld [vmem:[%s2945 + $0x130] sm:$0xff]
        %v2985 = vld [vmem:[%s2945 + $0x138] sm:$0xff]
        %v2986 = vld [vmem:[%s2945 + $0x140] sm:$0xff]
        %v2987 = vld [vmem:[%s2945 + $0x148] sm:$0xff]
        %v2988 = vld [vmem:[%s2945 + $0x150] sm:$0xff]
        %v2989 = vld [vmem:[%s2945 + $0x158] sm:$0xff]
        %v2990 = vld [vmem:[%s2945 + $0x160] sm:$0xff]
        %v2991 = vld [vmem:[%s2945 + $0x168] sm:$0xff]
        %v2992 = vld [vmem:[%s2945 + $0x170] sm:$0xff]
        %v2993 = vld [vmem:[%s2945 + $0x178] sm:$0xff]
        %v2994 = vld [vmem:[%s2945 + $0x180] sm:$0xff]
        %v2995 = vld [vmem:[%s2945 + $0x188] sm:$0xff]
        %v2996 = vld [vmem:[%s2945 + $0x190] sm:$0xff]
        %v2997 = vld [vmem:[%s2945 + $0x198] sm:$0xff]
        %v2998 = vld [vmem:[%s2945 + $0x1a0] sm:$0xff]
        %v2999 = vld [vmem:[%s2945 + $0x1a8] sm:$0xff]
        %v3000 = vld [vmem:[%s2945 + $0x1b0] sm:$0xff]
        %v3001 = vld [vmem:[%s2945 + $0x1b8] sm:$0xff]
        %v3002 = vld [vmem:[%s2945 + $0x1c0] sm:$0xff]
        %v3003 = vld [vmem:[%s2945 + $0x1c8] sm:$0xff]
        %v3004 = vld [vmem:[%s2945 + $0x1d0] sm:$0xff]
        %v3005 = vld [vmem:[%s2945 + $0x1d8] sm:$0xff]
        %v3006 = vld [vmem:[%s2945 + $0x1e0] sm:$0xff]
        %v3007 = vld [vmem:[%s2945 + $0x1e8] sm:$0xff]
        %v3008 = vld [vmem:[%s2945 + $0x1f0] sm:$0xff]
        %v3009 = vld [vmem:[%s2945 + $0x1f8] sm:$0xff]
        %3010 = vmatprep.subr.mxu0 %v2947
        %3011 = vmatpush1.msra.mxu0 %v2946
        %3012 = vmatprep.subr.mxu0 %v2949
        %3013 = vmatpush1.msra.mxu0 %v2948
        %3014 = vmatprep.subr.mxu0 %v2951
        %3015 = vmatpush1.msra.mxu0 %v2950
        %3016 = vmatprep.subr.mxu0 %v2953
        %3017 = vmatpush1.msra.mxu0 %v2952
        %3018 = vmatprep.subr.mxu0 %v2955
        %3019 = vmatpush1.msra.mxu0 %v2954
        %3020 = vmatprep.subr.mxu0 %v2957
        %3021 = vmatpush1.msra.mxu0 %v2956
        %3022 = vmatprep.subr.mxu0 %v2959
        %3023 = vmatpush1.msra.mxu0 %v2958
        %3024 = vmatprep.subr.mxu0 %v2961
        %3025 = vmatpush1.msra.mxu0 %v2960
        %3026 = vmatprep.subr.mxu0 %v2963
        %3027 = vmatpush1.msra.mxu0 %v2962
        %3028 = vmatprep.subr.mxu0 %v2965
        %3029 = vmatpush1.msra.mxu0 %v2964
        %3030 = vmatprep.subr.mxu0 %v2967
        %3031 = vmatpush1.msra.mxu0 %v2966
        %3032 = vmatprep.subr.mxu0 %v2969
        %3033 = vmatpush1.msra.mxu0 %v2968
        %3034 = vmatprep.subr.mxu0 %v2971
        %3035 = vmatpush1.msra.mxu0 %v2970
        %3036 = vmatprep.subr.mxu0 %v2973
        %3037 = vmatpush1.msra.mxu0 %v2972
        %3038 = vmatprep.subr.mxu0 %v2975
        %3039 = vmatpush1.msra.mxu0 %v2974
        %3040 = vmatprep.subr.mxu0 %v2977
        %3041 = vmatpush1.msra.mxu0 %v2976
        %3042 = vmatprep.subr.mxu0 %v2979
        %3043 = vmatpush1.msra.mxu0 %v2978
        %3044 = vmatprep.subr.mxu0 %v2981
        %3045 = vmatpush1.msra.mxu0 %v2980
        %3046 = vmatprep.subr.mxu0 %v2983
        %3047 = vmatpush1.msra.mxu0 %v2982
        %3048 = vmatprep.subr.mxu0 %v2985
        %3049 = vmatpush1.msra.mxu0 %v2984
        %3050 = vmatprep.subr.mxu0 %v2987
        %3051 = vmatpush1.msra.mxu0 %v2986
        %3052 = vmatprep.subr.mxu0 %v2989
        %3053 = vmatpush1.msra.mxu0 %v2988
        %3054 = vmatprep.subr.mxu0 %v2991
        %3055 = vmatpush1.msra.mxu0 %v2990
        %3056 = vmatprep.subr.mxu0 %v2993
        %3057 = vmatpush1.msra.mxu0 %v2992
        %3058 = vmatprep.subr.mxu0 %v2995
        %3059 = vmatpush1.msra.mxu0 %v2994
        %3060 = vmatprep.subr.mxu0 %v2997
        %3061 = vmatpush1.msra.mxu0 %v2996
        %3062 = vmatprep.subr.mxu0 %v2999
        %3063 = vmatpush1.msra.mxu0 %v2998
        %3064 = vmatprep.subr.mxu0 %v3001
        %3065 = vmatpush1.msra.mxu0 %v3000
        %3066 = vmatprep.subr.mxu0 %v3003
        %3067 = vmatpush1.msra.mxu0 %v3002
        %3068 = vmatprep.subr.mxu0 %v3005
        %3069 = vmatpush1.msra.mxu0 %v3004
        %3070 = vmatprep.subr.mxu0 %v3007
        %3071 = vmatpush1.msra.mxu0 %v3006
        %3072 = vmatprep.subr.mxu0 %v3009
        %3073 = vmatpush1.msra.mxu0 %v3008
        %3074 = vmatprep.mubr.f32.mxu0 %v2653
        %3075 = vmatmul.mubr.f32.gmra.mrb[0].mxu0 %v2651
        %v3076 = vpop.f32.mrb[0].mxu0
        %v3077 = vadd.f32 0.0, %v3076
        %v3078 = vpop.f32.mrb[0].mxu0
        %v3079 = vadd.f32 0.0, %v3078
        %3080 = vmatprep.mubr.f32.mxu0 %v2659
        %3081 = vmatmul.mubr.f32.gmra.mrb[0].mxu0 %v2657
        %v3082 = vpop.f32.mrb[0].mxu0
        %v3083 = vadd.f32 0.0, %v3082
        %v3084 = vpop.f32.mrb[0].mxu0
        %v3085 = vadd.f32 0.0, %v3084
        %3086 = vdwg.mxu0
        %v3087 = vadd.f32 %v2935, %v3077
        %v3088 = vadd.f32 %v2937, %v3079
        %v3089 = vadd.f32 %v2941, %v3083
        %v3090 = vadd.f32 %v2943, %v3085
        %s3091 = scalar_lea.vmem [#allocation11], 2
        %v3092 = vld [vmem:[%s3091] sm:$0x3]
        %v3094 = vlaneseq
        %v3095 = vshrl.u32 %v3094, 7
        %v3096 = vsub.s32 0, %v3095
        %v3097 = vrot.slane %v3092, %v3096
        %v3098 = vlaneseq
        %v3099 = vshrl.u32 %v3098, 7
        %v3100 = vsub.s32 1, %v3099
        %v3101 = vrot.slane %v3092, %v3100
        %v3104 = vadd.f32 %v3087, %v3097
        %v3105 = vadd.f32 %v3088, %v3101
        %v3106 = vadd.f32 %v3089, %v3097
        %v3107 = vadd.f32 %v3090, %v3101
        %v3108 = vadd.f32 %v3104, %v1881
        %v3109 = vadd.f32 %v3105, %v1882
        %v3110 = vadd.f32 %v3106, %v1883
        %v3111 = vadd.f32 %v3107, %v1884
        %v3112 = vmax.f32 %v3108, 0.0
        %v3113 = vmax.f32 %v3109, 0.0
        %v3114 = vmax.f32 %v3110, 0.0
        %v3115 = vmax.f32 %v3111, 0.0
        %3116 = vmatprep.subr.mxu0 %v3113
        %3117 = vmatpush1.msra.mxu0 %v3112
        %3118 = vmatprep.subr.mxu0 %v3115
        %3119 = vmatpush1.msra.mxu0 %v3114
        %3120 = vmatprep.subr.mxu0 0.0
        %3121 = vmatpush1.msra.mxu0 0.0
        %3122 = vmatprep.subr.mxu0 0.0
        %3123 = vmatpush1.msra.mxu0 0.0
        %3124 = vmatprep.subr.mxu0 0.0
        %3125 = vmatpush1.msra.mxu0 0.0
        %3126 = vmatprep.subr.mxu0 0.0
        %3127 = vmatpush1.msra.mxu0 0.0
        %3128 = vmatprep.subr.mxu0 0.0
        %3129 = vmatpush1.msra.mxu0 0.0
        %3130 = vmatprep.subr.mxu0 0.0
        %3131 = vmatpush1.msra.mxu0 0.0
        %3132 = vmatprep.subr.mxu0 0.0
        %3133 = vmatpush1.msra.mxu0 0.0
        %3134 = vmatprep.subr.mxu0 0.0
        %3135 = vmatpush1.msra.mxu0 0.0
        %3136 = vmatprep.subr.mxu0 0.0
        %3137 = vmatpush1.msra.mxu0 0.0
        %3138 = vmatprep.subr.mxu0 0.0
        %3139 = vmatpush1.msra.mxu0 0.0
        %3140 = vmatprep.subr.mxu0 0.0
        %3141 = vmatpush1.msra.mxu0 0.0
        %3142 = vmatprep.subr.mxu0 0.0
        %3143 = vmatpush1.msra.mxu0 0.0
        %3144 = vmatprep.subr.mxu0 0.0
        %3145 = vmatpush1.msra.mxu0 0.0
        %3146 = vmatprep.subr.mxu0 0.0
        %3147 = vmatpush1.msra.mxu0 0.0
        %3148 = vmatprep.subr.mxu0 0.0
        %3149 = vmatpush1.msra.mxu0 0.0
        %3150 = vmatprep.subr.mxu0 0.0
        %3151 = vmatpush1.msra.mxu0 0.0
        %3152 = vmatprep.subr.mxu0 0.0
        %3153 = vmatpush1.msra.mxu0 0.0
        %3154 = vmatprep.subr.mxu0 0.0
        %3155 = vmatpush1.msra.mxu0 0.0
        %3156 = vmatprep.subr.mxu0 0.0
        %3157 = vmatpush1.msra.mxu0 0.0
        %3158 = vmatprep.subr.mxu0 0.0
        %3159 = vmatpush1.msra.mxu0 0.0
        %3160 = vmatprep.subr.mxu0 0.0
        %3161 = vmatpush1.msra.mxu0 0.0
        %3162 = vmatprep.subr.mxu0 0.0
        %3163 = vmatpush1.msra.mxu0 0.0
        %3164 = vmatprep.subr.mxu0 0.0
        %3165 = vmatpush1.msra.mxu0 0.0
        %3166 = vmatprep.subr.mxu0 0.0
        %3167 = vmatpush1.msra.mxu0 0.0
        %3168 = vmatprep.subr.mxu0 0.0
        %3169 = vmatpush1.msra.mxu0 0.0
        %3170 = vmatprep.subr.mxu0 0.0
        %3171 = vmatpush1.msra.mxu0 0.0
        %3172 = vmatprep.subr.mxu0 0.0
        %3173 = vmatpush1.msra.mxu0 0.0
        %3174 = vmatprep.subr.mxu0 0.0
        %3175 = vmatpush1.msra.mxu0 0.0
        %3176 = vmatprep.subr.mxu0 0.0
        %3177 = vmatpush1.msra.mxu0 0.0
        %3178 = vmatprep.subr.mxu0 0.0
        %3179 = vmatpush1.msra.mxu0 0.0
        %3180 = vmatprep.mubr.f32.mxu0 0.0
        %3181 = vmatmul.mubr.f32.gmra.mrb[0].mxu0 %v645
        %v3182 = vpop.f32.mrb[0].mxu0
        %v3183 = vadd.f32 0.0, %v3182
        %v3184 = vpop.f32.mrb[0].mxu0
        %v3185 = vadd.f32 0.0, %v3184
        %3186 = vmatprep.mubr.f32.mxu0 0.0
        %3187 = vmatmul.mubr.f32.gmra.mrb[0].mxu0 %v648
        %v3188 = vpop.f32.mrb[0].mxu0
        %v3189 = vadd.f32 0.0, %v3188
        %v3190 = vpop.f32.mrb[0].mxu0
        %v3191 = vadd.f32 0.0, %v3190
        %3192 = vdwg.mxu0
        %3193 = vmatprep.subr.mxu0 %v3113
        %3194 = vmatpush1.msra.mxu0 %v3112
        %3195 = vmatprep.subr.mxu0 %v3115
        %3196 = vmatpush1.msra.mxu0 %v3114
        %3197 = vmatprep.subr.mxu0 0.0
        %3198 = vmatpush1.msra.mxu0 0.0
        %3199 = vmatprep.subr.mxu0 0.0
        %3200 = vmatpush1.msra.mxu0 0.0
        %3201 = vmatprep.subr.mxu0 0.0
        %3202 = vmatpush1.msra.mxu0 0.0
        %3203 = vmatprep.subr.mxu0 0.0
        %3204 = vmatpush1.msra.mxu0 0.0
        %3205 = vmatprep.subr.mxu0 0.0
        %3206 = vmatpush1.msra.mxu0 0.0
        %3207 = vmatprep.subr.mxu0 0.0
        %3208 = vmatpush1.msra.mxu0 0.0
        %3209 = vmatprep.subr.mxu0 0.0
        %3210 = vmatpush1.msra.mxu0 0.0
        %3211 = vmatprep.subr.mxu0 0.0
        %3212 = vmatpush1.msra.mxu0 0.0
        %3213 = vmatprep.subr.mxu0 0.0
        %3214 = vmatpush1.msra.mxu0 0.0
        %3215 = vmatprep.subr.mxu0 0.0
        %3216 = vmatpush1.msra.mxu0 0.0
        %3217 = vmatprep.subr.mxu0 0.0
        %3218 = vmatpush1.msra.mxu0 0.0
        %3219 = vmatprep.subr.mxu0 0.0
        %3220 = vmatpush1.msra.mxu0 0.0
        %3221 = vmatprep.subr.mxu0 0.0
        %3222 = vmatpush1.msra.mxu0 0.0
        %3223 = vmatprep.subr.mxu0 0.0
        %3224 = vmatpush1.msra.mxu0 0.0
        %3225 = vmatprep.subr.mxu0 0.0
        %3226 = vmatpush1.msra.mxu0 0.0
        %3227 = vmatprep.subr.mxu0 0.0
        %3228 = vmatpush1.msra.mxu0 0.0
        %3229 = vmatprep.subr.mxu0 0.0
        %3230 = vmatpush1.msra.mxu0 0.0
        %3231 = vmatprep.subr.mxu0 0.0
        %3232 = vmatpush1.msra.mxu0 0.0
        %3233 = vmatprep.subr.mxu0 0.0
        %3234 = vmatpush1.msra.mxu0 0.0
        %3235 = vmatprep.subr.mxu0 0.0
        %3236 = vmatpush1.msra.mxu0 0.0
        %3237 = vmatprep.subr.mxu0 0.0
        %3238 = vmatpush1.msra.mxu0 0.0
        %3239 = vmatprep.subr.mxu0 0.0
        %3240 = vmatpush1.msra.mxu0 0.0
        %3241 = vmatprep.subr.mxu0 0.0
        %3242 = vmatpush1.msra.mxu0 0.0
        %3243 = vmatprep.subr.mxu0 0.0
        %3244 = vmatpush1.msra.mxu0 0.0
        %3245 = vmatprep.subr.mxu0 0.0
        %3246 = vmatpush1.msra.mxu0 0.0
        %3247 = vmatprep.subr.mxu0 0.0
        %3248 = vmatpush1.msra.mxu0 0.0
        %3249 = vmatprep.subr.mxu0 0.0
        %3250 = vmatpush1.msra.mxu0 0.0
        %3251 = vmatprep.subr.mxu0 0.0
        %3252 = vmatpush1.msra.mxu0 0.0
        %3253 = vmatprep.subr.mxu0 0.0
        %3254 = vmatpush1.msra.mxu0 0.0
        %3255 = vmatprep.subr.mxu0 0.0
        %3256 = vmatpush1.msra.mxu0 0.0
        %3257 = vmatprep.mubr.f32.mxu0 0.0
        %3258 = vmatmul.mubr.f32.gmra.mrb[0].mxu0 %v731
        %v3259 = vpop.f32.mrb[0].mxu0
        %v3260 = vadd.f32 0.0, %v3259
        %v3261 = vpop.f32.mrb[0].mxu0
        %v3262 = vadd.f32 0.0, %v3261
        %3263 = vmatprep.mubr.f32.mxu0 0.0
        %3264 = vmatmul.mubr.f32.gmra.mrb[0].mxu0 %v734
        %v3265 = vpop.f32.mrb[0].mxu0
        %v3266 = vadd.f32 0.0, %v3265
        %v3267 = vpop.f32.mrb[0].mxu0
        %v3268 = vadd.f32 0.0, %v3267
        %3269 = vdwg.mxu0
        %s3270 = scalar_lea.vmem [#allocation5], 3072
        %v3271 = vld [vmem:[%s3270] sm:$0xff]
        %v3272 = vld [vmem:[%s3270 + $0x8] sm:$0xff]
        %v3273 = vld [vmem:[%s3270 + $0x10] sm:$0xff]
        %v3274 = vld [vmem:[%s3270 + $0x18] sm:$0xff]
        %v3275 = vld [vmem:[%s3270 + $0x20] sm:$0xff]
        %v3276 = vld [vmem:[%s3270 + $0x28] sm:$0xff]
        %v3277 = vld [vmem:[%s3270 + $0x30] sm:$0xff]
        %v3278 = vld [vmem:[%s3270 + $0x38] sm:$0xff]
        %v3279 = vld [vmem:[%s3270 + $0x40] sm:$0xff]
        %v3280 = vld [vmem:[%s3270 + $0x48] sm:$0xff]
        %v3281 = vld [vmem:[%s3270 + $0x50] sm:$0xff]
        %v3282 = vld [vmem:[%s3270 + $0x58] sm:$0xff]
        %v3283 = vld [vmem:[%s3270 + $0x60] sm:$0xff]
        %v3284 = vld [vmem:[%s3270 + $0x68] sm:$0xff]
        %v3285 = vld [vmem:[%s3270 + $0x70] sm:$0xff]
        %v3286 = vld [vmem:[%s3270 + $0x78] sm:$0xff]
        %v3287 = vld [vmem:[%s3270 + $0x80] sm:$0xff]
        %v3288 = vld [vmem:[%s3270 + $0x88] sm:$0xff]
        %v3289 = vld [vmem:[%s3270 + $0x90] sm:$0xff]
        %v3290 = vld [vmem:[%s3270 + $0x98] sm:$0xff]
        %v3291 = vld [vmem:[%s3270 + $0xa0] sm:$0xff]
        %v3292 = vld [vmem:[%s3270 + $0xa8] sm:$0xff]
        %v3293 = vld [vmem:[%s3270 + $0xb0] sm:$0xff]
        %v3294 = vld [vmem:[%s3270 + $0xb8] sm:$0xff]
        %v3295 = vld [vmem:[%s3270 + $0xc0] sm:$0xff]
        %v3296 = vld [vmem:[%s3270 + $0xc8] sm:$0xff]
        %v3297 = vld [vmem:[%s3270 + $0xd0] sm:$0xff]
        %v3298 = vld [vmem:[%s3270 + $0xd8] sm:$0xff]
        %v3299 = vld [vmem:[%s3270 + $0xe0] sm:$0xff]
        %v3300 = vld [vmem:[%s3270 + $0xe8] sm:$0xff]
        %v3301 = vld [vmem:[%s3270 + $0xf0] sm:$0xff]
        %v3302 = vld [vmem:[%s3270 + $0xf8] sm:$0xff]
        %v3303 = vld [vmem:[%s3270 + $0x100] sm:$0xff]
        %v3304 = vld [vmem:[%s3270 + $0x108] sm:$0xff]
        %v3305 = vld [vmem:[%s3270 + $0x110] sm:$0xff]
        %v3306 = vld [vmem:[%s3270 + $0x118] sm:$0xff]
        %v3307 = vld [vmem:[%s3270 + $0x120] sm:$0xff]
        %v3308 = vld [vmem:[%s3270 + $0x128] sm:$0xff]
        %v3309 = vld [vmem:[%s3270 + $0x130] sm:$0xff]
        %v3310 = vld [vmem:[%s3270 + $0x138] sm:$0xff]
        %v3311 = vld [vmem:[%s3270 + $0x140] sm:$0xff]
        %v3312 = vld [vmem:[%s3270 + $0x148] sm:$0xff]
        %v3313 = vld [vmem:[%s3270 + $0x150] sm:$0xff]
        %v3314 = vld [vmem:[%s3270 + $0x158] sm:$0xff]
        %v3315 = vld [vmem:[%s3270 + $0x160] sm:$0xff]
        %v3316 = vld [vmem:[%s3270 + $0x168] sm:$0xff]
        %v3317 = vld [vmem:[%s3270 + $0x170] sm:$0xff]
        %v3318 = vld [vmem:[%s3270 + $0x178] sm:$0xff]
        %v3319 = vld [vmem:[%s3270 + $0x180] sm:$0xff]
        %v3320 = vld [vmem:[%s3270 + $0x188] sm:$0xff]
        %v3321 = vld [vmem:[%s3270 + $0x190] sm:$0xff]
        %v3322 = vld [vmem:[%s3270 + $0x198] sm:$0xff]
        %v3323 = vld [vmem:[%s3270 + $0x1a0] sm:$0xff]
        %v3324 = vld [vmem:[%s3270 + $0x1a8] sm:$0xff]
        %v3325 = vld [vmem:[%s3270 + $0x1b0] sm:$0xff]
        %v3326 = vld [vmem:[%s3270 + $0x1b8] sm:$0xff]
        %v3327 = vld [vmem:[%s3270 + $0x1c0] sm:$0xff]
        %v3328 = vld [vmem:[%s3270 + $0x1c8] sm:$0xff]
        %v3329 = vld [vmem:[%s3270 + $0x1d0] sm:$0xff]
        %v3330 = vld [vmem:[%s3270 + $0x1d8] sm:$0xff]
        %v3331 = vld [vmem:[%s3270 + $0x1e0] sm:$0xff]
        %v3332 = vld [vmem:[%s3270 + $0x1e8] sm:$0xff]
        %v3333 = vld [vmem:[%s3270 + $0x1f0] sm:$0xff]
        %v3334 = vld [vmem:[%s3270 + $0x1f8] sm:$0xff]
        %s3335 = scalar_lea.vmem [#allocation5], 3584
        %v3336 = vld [vmem:[%s3335] sm:$0xff]
        %v3337 = vld [vmem:[%s3335 + $0x8] sm:$0xff]
        %v3338 = vld [vmem:[%s3335 + $0x10] sm:$0xff]
        %v3339 = vld [vmem:[%s3335 + $0x18] sm:$0xff]
        %v3340 = vld [vmem:[%s3335 + $0x20] sm:$0xff]
        %v3341 = vld [vmem:[%s3335 + $0x28] sm:$0xff]
        %v3342 = vld [vmem:[%s3335 + $0x30] sm:$0xff]
        %v3343 = vld [vmem:[%s3335 + $0x38] sm:$0xff]
        %v3344 = vld [vmem:[%s3335 + $0x40] sm:$0xff]
        %v3345 = vld [vmem:[%s3335 + $0x48] sm:$0xff]
        %v3346 = vld [vmem:[%s3335 + $0x50] sm:$0xff]
        %v3347 = vld [vmem:[%s3335 + $0x58] sm:$0xff]
        %v3348 = vld [vmem:[%s3335 + $0x60] sm:$0xff]
        %v3349 = vld [vmem:[%s3335 + $0x68] sm:$0xff]
        %v3350 = vld [vmem:[%s3335 + $0x70] sm:$0xff]
        %v3351 = vld [vmem:[%s3335 + $0x78] sm:$0xff]
        %v3352 = vld [vmem:[%s3335 + $0x80] sm:$0xff]
        %v3353 = vld [vmem:[%s3335 + $0x88] sm:$0xff]
        %v3354 = vld [vmem:[%s3335 + $0x90] sm:$0xff]
        %v3355 = vld [vmem:[%s3335 + $0x98] sm:$0xff]
        %v3356 = vld [vmem:[%s3335 + $0xa0] sm:$0xff]
        %v3357 = vld [vmem:[%s3335 + $0xa8] sm:$0xff]
        %v3358 = vld [vmem:[%s3335 + $0xb0] sm:$0xff]
        %v3359 = vld [vmem:[%s3335 + $0xb8] sm:$0xff]
        %v3360 = vld [vmem:[%s3335 + $0xc0] sm:$0xff]
        %v3361 = vld [vmem:[%s3335 + $0xc8] sm:$0xff]
        %v3362 = vld [vmem:[%s3335 + $0xd0] sm:$0xff]
        %v3363 = vld [vmem:[%s3335 + $0xd8] sm:$0xff]
        %v3364 = vld [vmem:[%s3335 + $0xe0] sm:$0xff]
        %v3365 = vld [vmem:[%s3335 + $0xe8] sm:$0xff]
        %v3366 = vld [vmem:[%s3335 + $0xf0] sm:$0xff]
        %v3367 = vld [vmem:[%s3335 + $0xf8] sm:$0xff]
        %v3368 = vld [vmem:[%s3335 + $0x100] sm:$0xff]
        %v3369 = vld [vmem:[%s3335 + $0x108] sm:$0xff]
        %v3370 = vld [vmem:[%s3335 + $0x110] sm:$0xff]
        %v3371 = vld [vmem:[%s3335 + $0x118] sm:$0xff]
        %v3372 = vld [vmem:[%s3335 + $0x120] sm:$0xff]
        %v3373 = vld [vmem:[%s3335 + $0x128] sm:$0xff]
        %v3374 = vld [vmem:[%s3335 + $0x130] sm:$0xff]
        %v3375 = vld [vmem:[%s3335 + $0x138] sm:$0xff]
        %v3376 = vld [vmem:[%s3335 + $0x140] sm:$0xff]
        %v3377 = vld [vmem:[%s3335 + $0x148] sm:$0xff]
        %v3378 = vld [vmem:[%s3335 + $0x150] sm:$0xff]
        %v3379 = vld [vmem:[%s3335 + $0x158] sm:$0xff]
        %v3380 = vld [vmem:[%s3335 + $0x160] sm:$0xff]
        %v3381 = vld [vmem:[%s3335 + $0x168] sm:$0xff]
        %v3382 = vld [vmem:[%s3335 + $0x170] sm:$0xff]
        %v3383 = vld [vmem:[%s3335 + $0x178] sm:$0xff]
        %v3384 = vld [vmem:[%s3335 + $0x180] sm:$0xff]
        %v3385 = vld [vmem:[%s3335 + $0x188] sm:$0xff]
        %v3386 = vld [vmem:[%s3335 + $0x190] sm:$0xff]
        %v3387 = vld [vmem:[%s3335 + $0x198] sm:$0xff]
        %v3388 = vld [vmem:[%s3335 + $0x1a0] sm:$0xff]
        %v3389 = vld [vmem:[%s3335 + $0x1a8] sm:$0xff]
        %v3390 = vld [vmem:[%s3335 + $0x1b0] sm:$0xff]
        %v3391 = vld [vmem:[%s3335 + $0x1b8] sm:$0xff]
        %v3392 = vld [vmem:[%s3335 + $0x1c0] sm:$0xff]
        %v3393 = vld [vmem:[%s3335 + $0x1c8] sm:$0xff]
        %v3394 = vld [vmem:[%s3335 + $0x1d0] sm:$0xff]
        %v3395 = vld [vmem:[%s3335 + $0x1d8] sm:$0xff]
        %v3396 = vld [vmem:[%s3335 + $0x1e0] sm:$0xff]
        %v3397 = vld [vmem:[%s3335 + $0x1e8] sm:$0xff]
        %v3398 = vld [vmem:[%s3335 + $0x1f0] sm:$0xff]
        %v3399 = vld [vmem:[%s3335 + $0x1f8] sm:$0xff]
        %3400 = vmatprep.subr.mxu0 %v3337
        %3401 = vmatpush1.msra.mxu0 %v3336
        %3402 = vmatprep.subr.mxu0 %v3339
        %3403 = vmatpush1.msra.mxu0 %v3338
        %3404 = vmatprep.subr.mxu0 %v3341
        %3405 = vmatpush1.msra.mxu0 %v3340
        %3406 = vmatprep.subr.mxu0 %v3343
        %3407 = vmatpush1.msra.mxu0 %v3342
        %3408 = vmatprep.subr.mxu0 %v3345
        %3409 = vmatpush1.msra.mxu0 %v3344
        %3410 = vmatprep.subr.mxu0 %v3347
        %3411 = vmatpush1.msra.mxu0 %v3346
        %3412 = vmatprep.subr.mxu0 %v3349
        %3413 = vmatpush1.msra.mxu0 %v3348
        %3414 = vmatprep.subr.mxu0 %v3351
        %3415 = vmatpush1.msra.mxu0 %v3350
        %3416 = vmatprep.subr.mxu0 %v3353
        %3417 = vmatpush1.msra.mxu0 %v3352
        %3418 = vmatprep.subr.mxu0 %v3355
        %3419 = vmatpush1.msra.mxu0 %v3354
        %3420 = vmatprep.subr.mxu0 %v3357
        %3421 = vmatpush1.msra.mxu0 %v3356
        %3422 = vmatprep.subr.mxu0 %v3359
        %3423 = vmatpush1.msra.mxu0 %v3358
        %3424 = vmatprep.subr.mxu0 %v3361
        %3425 = vmatpush1.msra.mxu0 %v3360
        %3426 = vmatprep.subr.mxu0 %v3363
        %3427 = vmatpush1.msra.mxu0 %v3362
        %3428 = vmatprep.subr.mxu0 %v3365
        %3429 = vmatpush1.msra.mxu0 %v3364
        %3430 = vmatprep.subr.mxu0 %v3367
        %3431 = vmatpush1.msra.mxu0 %v3366
        %3432 = vmatprep.subr.mxu0 %v3369
        %3433 = vmatpush1.msra.mxu0 %v3368
        %3434 = vmatprep.subr.mxu0 %v3371
        %3435 = vmatpush1.msra.mxu0 %v3370
        %3436 = vmatprep.subr.mxu0 %v3373
        %3437 = vmatpush1.msra.mxu0 %v3372
        %3438 = vmatprep.subr.mxu0 %v3375
        %3439 = vmatpush1.msra.mxu0 %v3374
        %3440 = vmatprep.subr.mxu0 %v3377
        %3441 = vmatpush1.msra.mxu0 %v3376
        %3442 = vmatprep.subr.mxu0 %v3379
        %3443 = vmatpush1.msra.mxu0 %v3378
        %3444 = vmatprep.subr.mxu0 %v3381
        %3445 = vmatpush1.msra.mxu0 %v3380
        %3446 = vmatprep.subr.mxu0 %v3383
        %3447 = vmatpush1.msra.mxu0 %v3382
        %3448 = vmatprep.subr.mxu0 %v3385
        %3449 = vmatpush1.msra.mxu0 %v3384
        %3450 = vmatprep.subr.mxu0 %v3387
        %3451 = vmatpush1.msra.mxu0 %v3386
        %3452 = vmatprep.subr.mxu0 %v3389
        %3453 = vmatpush1.msra.mxu0 %v3388
        %3454 = vmatprep.subr.mxu0 %v3391
        %3455 = vmatpush1.msra.mxu0 %v3390
        %3456 = vmatprep.subr.mxu0 %v3393
        %3457 = vmatpush1.msra.mxu0 %v3392
        %3458 = vmatprep.subr.mxu0 %v3395
        %3459 = vmatpush1.msra.mxu0 %v3394
        %3460 = vmatprep.subr.mxu0 %v3397
        %3461 = vmatpush1.msra.mxu0 %v3396
        %3462 = vmatprep.subr.mxu0 %v3399
        %3463 = vmatpush1.msra.mxu0 %v3398
        %3464 = vmatprep.mubr.f32.mxu0 %v3113
        %3465 = vmatmul.mubr.f32.gmra.mrb[0].mxu0 %v3112
        %v3466 = vpop.f32.mrb[0].mxu0
        %v3467 = vadd.f32 0.0, %v3466
        %v3468 = vpop.f32.mrb[0].mxu0
        %v3469 = vadd.f32 0.0, %v3468
        %3470 = vmatprep.mubr.f32.mxu0 %v3115
        %3471 = vmatmul.mubr.f32.gmra.mrb[0].mxu0 %v3114
        %v3472 = vpop.f32.mrb[0].mxu0
        %v3473 = vadd.f32 0.0, %v3472
        %v3474 = vpop.f32.mrb[0].mxu0
        %v3475 = vadd.f32 0.0, %v3474
        %3476 = vdwg.mxu0
        %3477 = vmatprep.subr.mxu0 %v3272
        %3478 = vmatpush1.msra.mxu0 %v3271
        %3479 = vmatprep.subr.mxu0 %v3274
        %3480 = vmatpush1.msra.mxu0 %v3273
        %3481 = vmatprep.subr.mxu0 %v3276
        %3482 = vmatpush1.msra.mxu0 %v3275
        %3483 = vmatprep.subr.mxu0 %v3278
        %3484 = vmatpush1.msra.mxu0 %v3277
        %3485 = vmatprep.subr.mxu0 %v3280
        %3486 = vmatpush1.msra.mxu0 %v3279
        %3487 = vmatprep.subr.mxu0 %v3282
        %3488 = vmatpush1.msra.mxu0 %v3281
        %3489 = vmatprep.subr.mxu0 %v3284
        %3490 = vmatpush1.msra.mxu0 %v3283
        %3491 = vmatprep.subr.mxu0 %v3286
        %3492 = vmatpush1.msra.mxu0 %v3285
        %3493 = vmatprep.subr.mxu0 %v3288
        %3494 = vmatpush1.msra.mxu0 %v3287
        %3495 = vmatprep.subr.mxu0 %v3290
        %3496 = vmatpush1.msra.mxu0 %v3289
        %3497 = vmatprep.subr.mxu0 %v3292
        %3498 = vmatpush1.msra.mxu0 %v3291
        %3499 = vmatprep.subr.mxu0 %v3294
        %3500 = vmatpush1.msra.mxu0 %v3293
        %3501 = vmatprep.subr.mxu0 %v3296
        %3502 = vmatpush1.msra.mxu0 %v3295
        %3503 = vmatprep.subr.mxu0 %v3298
        %3504 = vmatpush1.msra.mxu0 %v3297
        %3505 = vmatprep.subr.mxu0 %v3300
        %3506 = vmatpush1.msra.mxu0 %v3299
        %3507 = vmatprep.subr.mxu0 %v3302
        %3508 = vmatpush1.msra.mxu0 %v3301
        %3509 = vmatprep.subr.mxu0 %v3304
        %3510 = vmatpush1.msra.mxu0 %v3303
        %3511 = vmatprep.subr.mxu0 %v3306
        %3512 = vmatpush1.msra.mxu0 %v3305
        %3513 = vmatprep.subr.mxu0 %v3308
        %3514 = vmatpush1.msra.mxu0 %v3307
        %3515 = vmatprep.subr.mxu0 %v3310
        %3516 = vmatpush1.msra.mxu0 %v3309
        %3517 = vmatprep.subr.mxu0 %v3312
        %3518 = vmatpush1.msra.mxu0 %v3311
        %3519 = vmatprep.subr.mxu0 %v3314
        %3520 = vmatpush1.msra.mxu0 %v3313
        %3521 = vmatprep.subr.mxu0 %v3316
        %3522 = vmatpush1.msra.mxu0 %v3315
        %3523 = vmatprep.subr.mxu0 %v3318
        %3524 = vmatpush1.msra.mxu0 %v3317
        %3525 = vmatprep.subr.mxu0 %v3320
        %3526 = vmatpush1.msra.mxu0 %v3319
        %3527 = vmatprep.subr.mxu0 %v3322
        %3528 = vmatpush1.msra.mxu0 %v3321
        %3529 = vmatprep.subr.mxu0 %v3324
        %3530 = vmatpush1.msra.mxu0 %v3323
        %3531 = vmatprep.subr.mxu0 %v3326
        %3532 = vmatpush1.msra.mxu0 %v3325
        %3533 = vmatprep.subr.mxu0 %v3328
        %3534 = vmatpush1.msra.mxu0 %v3327
        %3535 = vmatprep.subr.mxu0 %v3330
        %3536 = vmatpush1.msra.mxu0 %v3329
        %3537 = vmatprep.subr.mxu0 %v3332
        %3538 = vmatpush1.msra.mxu0 %v3331
        %3539 = vmatprep.subr.mxu0 %v3334
        %3540 = vmatpush1.msra.mxu0 %v3333
        %3541 = vmatprep.mubr.f32.mxu0 %v3185
        %3542 = vmatmul.mubr.f32.gmra.mrb[0].mxu0 %v3183
        %v3543 = vpop.f32.mrb[0].mxu0
        %v3544 = vadd.f32 %v3467, %v3543
        %v3545 = vpop.f32.mrb[0].mxu0
        %v3546 = vadd.f32 %v3469, %v3545
        %3547 = vmatprep.mubr.f32.mxu0 %v3191
        %3548 = vmatmul.mubr.f32.gmra.mrb[0].mxu0 %v3189
        %v3549 = vpop.f32.mrb[0].mxu0
        %v3550 = vadd.f32 %v3473, %v3549
        %v3551 = vpop.f32.mrb[0].mxu0
        %v3552 = vadd.f32 %v3475, %v3551
        %3553 = vdwg.mxu0
        %s3554 = scalar_lea.vmem [#allocation5], 4096
        %v3555 = vld [vmem:[%s3554] sm:$0xff]
        %v3556 = vld [vmem:[%s3554 + $0x8] sm:$0xff]
        %v3557 = vld [vmem:[%s3554 + $0x10] sm:$0xff]
        %v3558 = vld [vmem:[%s3554 + $0x18] sm:$0xff]
        %v3559 = vld [vmem:[%s3554 + $0x20] sm:$0xff]
        %v3560 = vld [vmem:[%s3554 + $0x28] sm:$0xff]
        %v3561 = vld [vmem:[%s3554 + $0x30] sm:$0xff]
        %v3562 = vld [vmem:[%s3554 + $0x38] sm:$0xff]
        %v3563 = vld [vmem:[%s3554 + $0x40] sm:$0xff]
        %v3564 = vld [vmem:[%s3554 + $0x48] sm:$0xff]
        %v3565 = vld [vmem:[%s3554 + $0x50] sm:$0xff]
        %v3566 = vld [vmem:[%s3554 + $0x58] sm:$0xff]
        %v3567 = vld [vmem:[%s3554 + $0x60] sm:$0xff]
        %v3568 = vld [vmem:[%s3554 + $0x68] sm:$0xff]
        %v3569 = vld [vmem:[%s3554 + $0x70] sm:$0xff]
        %v3570 = vld [vmem:[%s3554 + $0x78] sm:$0xff]
        %v3571 = vld [vmem:[%s3554 + $0x80] sm:$0xff]
        %v3572 = vld [vmem:[%s3554 + $0x88] sm:$0xff]
        %v3573 = vld [vmem:[%s3554 + $0x90] sm:$0xff]
        %v3574 = vld [vmem:[%s3554 + $0x98] sm:$0xff]
        %v3575 = vld [vmem:[%s3554 + $0xa0] sm:$0xff]
        %v3576 = vld [vmem:[%s3554 + $0xa8] sm:$0xff]
        %v3577 = vld [vmem:[%s3554 + $0xb0] sm:$0xff]
        %v3578 = vld [vmem:[%s3554 + $0xb8] sm:$0xff]
        %v3579 = vld [vmem:[%s3554 + $0xc0] sm:$0xff]
        %v3580 = vld [vmem:[%s3554 + $0xc8] sm:$0xff]
        %v3581 = vld [vmem:[%s3554 + $0xd0] sm:$0xff]
        %v3582 = vld [vmem:[%s3554 + $0xd8] sm:$0xff]
        %v3583 = vld [vmem:[%s3554 + $0xe0] sm:$0xff]
        %v3584 = vld [vmem:[%s3554 + $0xe8] sm:$0xff]
        %v3585 = vld [vmem:[%s3554 + $0xf0] sm:$0xff]
        %v3586 = vld [vmem:[%s3554 + $0xf8] sm:$0xff]
        %v3587 = vld [vmem:[%s3554 + $0x100] sm:$0xff]
        %v3588 = vld [vmem:[%s3554 + $0x108] sm:$0xff]
        %v3589 = vld [vmem:[%s3554 + $0x110] sm:$0xff]
        %v3590 = vld [vmem:[%s3554 + $0x118] sm:$0xff]
        %v3591 = vld [vmem:[%s3554 + $0x120] sm:$0xff]
        %v3592 = vld [vmem:[%s3554 + $0x128] sm:$0xff]
        %v3593 = vld [vmem:[%s3554 + $0x130] sm:$0xff]
        %v3594 = vld [vmem:[%s3554 + $0x138] sm:$0xff]
        %v3595 = vld [vmem:[%s3554 + $0x140] sm:$0xff]
        %v3596 = vld [vmem:[%s3554 + $0x148] sm:$0xff]
        %v3597 = vld [vmem:[%s3554 + $0x150] sm:$0xff]
        %v3598 = vld [vmem:[%s3554 + $0x158] sm:$0xff]
        %v3599 = vld [vmem:[%s3554 + $0x160] sm:$0xff]
        %v3600 = vld [vmem:[%s3554 + $0x168] sm:$0xff]
        %v3601 = vld [vmem:[%s3554 + $0x170] sm:$0xff]
        %v3602 = vld [vmem:[%s3554 + $0x178] sm:$0xff]
        %v3603 = vld [vmem:[%s3554 + $0x180] sm:$0xff]
        %v3604 = vld [vmem:[%s3554 + $0x188] sm:$0xff]
        %v3605 = vld [vmem:[%s3554 + $0x190] sm:$0xff]
        %v3606 = vld [vmem:[%s3554 + $0x198] sm:$0xff]
        %v3607 = vld [vmem:[%s3554 + $0x1a0] sm:$0xff]
        %v3608 = vld [vmem:[%s3554 + $0x1a8] sm:$0xff]
        %v3609 = vld [vmem:[%s3554 + $0x1b0] sm:$0xff]
        %v3610 = vld [vmem:[%s3554 + $0x1b8] sm:$0xff]
        %v3611 = vld [vmem:[%s3554 + $0x1c0] sm:$0xff]
        %v3612 = vld [vmem:[%s3554 + $0x1c8] sm:$0xff]
        %v3613 = vld [vmem:[%s3554 + $0x1d0] sm:$0xff]
        %v3614 = vld [vmem:[%s3554 + $0x1d8] sm:$0xff]
        %v3615 = vld [vmem:[%s3554 + $0x1e0] sm:$0xff]
        %v3616 = vld [vmem:[%s3554 + $0x1e8] sm:$0xff]
        %v3617 = vld [vmem:[%s3554 + $0x1f0] sm:$0xff]
        %v3618 = vld [vmem:[%s3554 + $0x1f8] sm:$0xff]
        %3619 = vmatprep.subr.mxu0 %v3556
        %3620 = vmatpush1.msra.mxu0 %v3555
        %3621 = vmatprep.subr.mxu0 %v3558
        %3622 = vmatpush1.msra.mxu0 %v3557
        %3623 = vmatprep.subr.mxu0 %v3560
        %3624 = vmatpush1.msra.mxu0 %v3559
        %3625 = vmatprep.subr.mxu0 %v3562
        %3626 = vmatpush1.msra.mxu0 %v3561
        %3627 = vmatprep.subr.mxu0 %v3564
        %3628 = vmatpush1.msra.mxu0 %v3563
        %3629 = vmatprep.subr.mxu0 %v3566
        %3630 = vmatpush1.msra.mxu0 %v3565
        %3631 = vmatprep.subr.mxu0 %v3568
        %3632 = vmatpush1.msra.mxu0 %v3567
        %3633 = vmatprep.subr.mxu0 %v3570
        %3634 = vmatpush1.msra.mxu0 %v3569
        %3635 = vmatprep.subr.mxu0 %v3572
        %3636 = vmatpush1.msra.mxu0 %v3571
        %3637 = vmatprep.subr.mxu0 %v3574
        %3638 = vmatpush1.msra.mxu0 %v3573
        %3639 = vmatprep.subr.mxu0 %v3576
        %3640 = vmatpush1.msra.mxu0 %v3575
        %3641 = vmatprep.subr.mxu0 %v3578
        %3642 = vmatpush1.msra.mxu0 %v3577
        %3643 = vmatprep.subr.mxu0 %v3580
        %3644 = vmatpush1.msra.mxu0 %v3579
        %3645 = vmatprep.subr.mxu0 %v3582
        %3646 = vmatpush1.msra.mxu0 %v3581
        %3647 = vmatprep.subr.mxu0 %v3584
        %3648 = vmatpush1.msra.mxu0 %v3583
        %3649 = vmatprep.subr.mxu0 %v3586
        %3650 = vmatpush1.msra.mxu0 %v3585
        %3651 = vmatprep.subr.mxu0 %v3588
        %3652 = vmatpush1.msra.mxu0 %v3587
        %3653 = vmatprep.subr.mxu0 %v3590
        %3654 = vmatpush1.msra.mxu0 %v3589
        %3655 = vmatprep.subr.mxu0 %v3592
        %3656 = vmatpush1.msra.mxu0 %v3591
        %3657 = vmatprep.subr.mxu0 %v3594
        %3658 = vmatpush1.msra.mxu0 %v3593
        %3659 = vmatprep.subr.mxu0 %v3596
        %3660 = vmatpush1.msra.mxu0 %v3595
        %3661 = vmatprep.subr.mxu0 %v3598
        %3662 = vmatpush1.msra.mxu0 %v3597
        %3663 = vmatprep.subr.mxu0 %v3600
        %3664 = vmatpush1.msra.mxu0 %v3599
        %3665 = vmatprep.subr.mxu0 %v3602
        %3666 = vmatpush1.msra.mxu0 %v3601
        %3667 = vmatprep.subr.mxu0 %v3604
        %3668 = vmatpush1.msra.mxu0 %v3603
        %3669 = vmatprep.subr.mxu0 %v3606
        %3670 = vmatpush1.msra.mxu0 %v3605
        %3671 = vmatprep.subr.mxu0 %v3608
        %3672 = vmatpush1.msra.mxu0 %v3607
        %3673 = vmatprep.subr.mxu0 %v3610
        %3674 = vmatpush1.msra.mxu0 %v3609
        %3675 = vmatprep.subr.mxu0 %v3612
        %3676 = vmatpush1.msra.mxu0 %v3611
        %3677 = vmatprep.subr.mxu0 %v3614
        %3678 = vmatpush1.msra.mxu0 %v3613
        %3679 = vmatprep.subr.mxu0 %v3616
        %3680 = vmatpush1.msra.mxu0 %v3615
        %3681 = vmatprep.subr.mxu0 %v3618
        %3682 = vmatpush1.msra.mxu0 %v3617
        %3683 = vmatprep.mubr.f32.mxu0 %v3262
        %3684 = vmatmul.mubr.f32.gmra.mrb[0].mxu0 %v3260
        %v3685 = vpop.f32.mrb[0].mxu0
        %v3686 = vadd.f32 0.0, %v3685
        %v3687 = vpop.f32.mrb[0].mxu0
        %v3688 = vadd.f32 0.0, %v3687
        %3689 = vmatprep.mubr.f32.mxu0 %v3268
        %3690 = vmatmul.mubr.f32.gmra.mrb[0].mxu0 %v3266
        %v3691 = vpop.f32.mrb[0].mxu0
        %v3692 = vadd.f32 0.0, %v3691
        %v3693 = vpop.f32.mrb[0].mxu0
        %v3694 = vadd.f32 0.0, %v3693
        %3695 = vdwg.mxu0
        %v3696 = vadd.f32 %v3544, %v3686
        %v3697 = vadd.f32 %v3546, %v3688
        %v3698 = vadd.f32 %v3550, %v3692
        %v3699 = vadd.f32 %v3552, %v3694
        %s3700 = scalar_lea.vmem [#allocation7], 4
        %v3701 = vld [vmem:[%s3700] sm:$0x3]
        %v3703 = vlaneseq
        %v3704 = vshrl.u32 %v3703, 7
        %v3705 = vsub.s32 0, %v3704
        %v3706 = vrot.slane %v3701, %v3705
        %v3707 = vlaneseq
        %v3708 = vshrl.u32 %v3707, 7
        %v3709 = vsub.s32 1, %v3708
        %v3710 = vrot.slane %v3701, %v3709
        %v3713 = vmul.f32 %v3696, %v3706
        %v3714 = vmul.f32 %v3697, %v3710
        %v3715 = vmul.f32 %v3698, %v3706
        %v3716 = vmul.f32 %v3699, %v3710
        %s3717 = scalar_lea.vmem [#allocation8], 4
        %v3718 = vld [vmem:[%s3717] sm:$0x3]
        %v3720 = vlaneseq
        %v3721 = vshrl.u32 %v3720, 7
        %v3722 = vsub.s32 0, %v3721
        %v3723 = vrot.slane %v3718, %v3722
        %v3724 = vlaneseq
        %v3725 = vshrl.u32 %v3724, 7
        %v3726 = vsub.s32 1, %v3725
        %v3727 = vrot.slane %v3718, %v3726
        %v3730 = vadd.f32 %v3713, %v3723
        %v3731 = vadd.f32 %v3714, %v3727
        %v3732 = vadd.f32 %v3715, %v3723
        %v3733 = vadd.f32 %v3716, %v3727
        %v3734 = vmax.f32 %v3730, 0.0
        %v3735 = vmax.f32 %v3731, 0.0
        %v3736 = vmax.f32 %v3732, 0.0
        %v3737 = vmax.f32 %v3733, 0.0
        %3738 = vmatprep.subr.mxu0 %v3735
        %3739 = vmatpush1.msra.mxu0 %v3734
        %3740 = vmatprep.subr.mxu0 %v3737
        %3741 = vmatpush1.msra.mxu0 %v3736
        %3742 = vmatprep.subr.mxu0 0.0
        %3743 = vmatpush1.msra.mxu0 0.0
        %3744 = vmatprep.subr.mxu0 0.0
        %3745 = vmatpush1.msra.mxu0 0.0
        %3746 = vmatprep.subr.mxu0 0.0
        %3747 = vmatpush1.msra.mxu0 0.0
        %3748 = vmatprep.subr.mxu0 0.0
        %3749 = vmatpush1.msra.mxu0 0.0
        %3750 = vmatprep.subr.mxu0 0.0
        %3751 = vmatpush1.msra.mxu0 0.0
        %3752 = vmatprep.subr.mxu0 0.0
        %3753 = vmatpush1.msra.mxu0 0.0
        %3754 = vmatprep.subr.mxu0 0.0
        %3755 = vmatpush1.msra.mxu0 0.0
        %3756 = vmatprep.subr.mxu0 0.0
        %3757 = vmatpush1.msra.mxu0 0.0
        %3758 = vmatprep.subr.mxu0 0.0
        %3759 = vmatpush1.msra.mxu0 0.0
        %3760 = vmatprep.subr.mxu0 0.0
        %3761 = vmatpush1.msra.mxu0 0.0
        %3762 = vmatprep.subr.mxu0 0.0
        %3763 = vmatpush1.msra.mxu0 0.0
        %3764 = vmatprep.subr.mxu0 0.0
        %3765 = vmatpush1.msra.mxu0 0.0
        %3766 = vmatprep.subr.mxu0 0.0
        %3767 = vmatpush1.msra.mxu0 0.0
        %3768 = vmatprep.subr.mxu0 0.0
        %3769 = vmatpush1.msra.mxu0 0.0
        %3770 = vmatprep.subr.mxu0 0.0
        %3771 = vmatpush1.msra.mxu0 0.0
        %3772 = vmatprep.subr.mxu0 0.0
        %3773 = vmatpush1.msra.mxu0 0.0
        %3774 = vmatprep.subr.mxu0 0.0
        %3775 = vmatpush1.msra.mxu0 0.0
        %3776 = vmatprep.subr.mxu0 0.0
        %3777 = vmatpush1.msra.mxu0 0.0
        %3778 = vmatprep.subr.mxu0 0.0
        %3779 = vmatpush1.msra.mxu0 0.0
        %3780 = vmatprep.subr.mxu0 0.0
        %3781 = vmatpush1.msra.mxu0 0.0
        %3782 = vmatprep.subr.mxu0 0.0
        %3783 = vmatpush1.msra.mxu0 0.0
        %3784 = vmatprep.subr.mxu0 0.0
        %3785 = vmatpush1.msra.mxu0 0.0
        %3786 = vmatprep.subr.mxu0 0.0
        %3787 = vmatpush1.msra.mxu0 0.0
        %3788 = vmatprep.subr.mxu0 0.0
        %3789 = vmatpush1.msra.mxu0 0.0
        %3790 = vmatprep.subr.mxu0 0.0
        %3791 = vmatpush1.msra.mxu0 0.0
        %3792 = vmatprep.subr.mxu0 0.0
        %3793 = vmatpush1.msra.mxu0 0.0
        %3794 = vmatprep.subr.mxu0 0.0
        %3795 = vmatpush1.msra.mxu0 0.0
        %3796 = vmatprep.subr.mxu0 0.0
        %3797 = vmatpush1.msra.mxu0 0.0
        %3798 = vmatprep.subr.mxu0 0.0
        %3799 = vmatpush1.msra.mxu0 0.0
        %3800 = vmatprep.subr.mxu0 0.0
        %3801 = vmatpush1.msra.mxu0 0.0
        %3802 = vmatprep.mubr.f32.mxu0 0.0
        %3803 = vmatmul.mubr.f32.gmra.mrb[0].mxu0 %v645
        %v3804 = vpop.f32.mrb[0].mxu0
        %v3805 = vadd.f32 0.0, %v3804
        %v3806 = vpop.f32.mrb[0].mxu0
        %v3807 = vadd.f32 0.0, %v3806
        %3808 = vmatprep.mubr.f32.mxu0 0.0
        %3809 = vmatmul.mubr.f32.gmra.mrb[0].mxu0 %v648
        %v3810 = vpop.f32.mrb[0].mxu0
        %v3811 = vadd.f32 0.0, %v3810
        %v3812 = vpop.f32.mrb[0].mxu0
        %v3813 = vadd.f32 0.0, %v3812
        %3814 = vdwg.mxu0
        %3815 = vmatprep.subr.mxu0 %v3735
        %3816 = vmatpush1.msra.mxu0 %v3734
        %3817 = vmatprep.subr.mxu0 %v3737
        %3818 = vmatpush1.msra.mxu0 %v3736
        %3819 = vmatprep.subr.mxu0 0.0
        %3820 = vmatpush1.msra.mxu0 0.0
        %3821 = vmatprep.subr.mxu0 0.0
        %3822 = vmatpush1.msra.mxu0 0.0
        %3823 = vmatprep.subr.mxu0 0.0
        %3824 = vmatpush1.msra.mxu0 0.0
        %3825 = vmatprep.subr.mxu0 0.0
        %3826 = vmatpush1.msra.mxu0 0.0
        %3827 = vmatprep.subr.mxu0 0.0
        %3828 = vmatpush1.msra.mxu0 0.0
        %3829 = vmatprep.subr.mxu0 0.0
        %3830 = vmatpush1.msra.mxu0 0.0
        %3831 = vmatprep.subr.mxu0 0.0
        %3832 = vmatpush1.msra.mxu0 0.0
        %3833 = vmatprep.subr.mxu0 0.0
        %3834 = vmatpush1.msra.mxu0 0.0
        %3835 = vmatprep.subr.mxu0 0.0
        %3836 = vmatpush1.msra.mxu0 0.0
        %3837 = vmatprep.subr.mxu0 0.0
        %3838 = vmatpush1.msra.mxu0 0.0
        %3839 = vmatprep.subr.mxu0 0.0
        %3840 = vmatpush1.msra.mxu0 0.0
        %3841 = vmatprep.subr.mxu0 0.0
        %3842 = vmatpush1.msra.mxu0 0.0
        %3843 = vmatprep.subr.mxu0 0.0
        %3844 = vmatpush1.msra.mxu0 0.0
        %3845 = vmatprep.subr.mxu0 0.0
        %3846 = vmatpush1.msra.mxu0 0.0
        %3847 = vmatprep.subr.mxu0 0.0
        %3848 = vmatpush1.msra.mxu0 0.0
        %3849 = vmatprep.subr.mxu0 0.0
        %3850 = vmatpush1.msra.mxu0 0.0
        %3851 = vmatprep.subr.mxu0 0.0
        %3852 = vmatpush1.msra.mxu0 0.0
        %3853 = vmatprep.subr.mxu0 0.0
        %3854 = vmatpush1.msra.mxu0 0.0
        %3855 = vmatprep.subr.mxu0 0.0
        %3856 = vmatpush1.msra.mxu0 0.0
        %3857 = vmatprep.subr.mxu0 0.0
        %3858 = vmatpush1.msra.mxu0 0.0
        %3859 = vmatprep.subr.mxu0 0.0
        %3860 = vmatpush1.msra.mxu0 0.0
        %3861 = vmatprep.subr.mxu0 0.0
        %3862 = vmatpush1.msra.mxu0 0.0
        %3863 = vmatprep.subr.mxu0 0.0
        %3864 = vmatpush1.msra.mxu0 0.0
        %3865 = vmatprep.subr.mxu0 0.0
        %3866 = vmatpush1.msra.mxu0 0.0
        %3867 = vmatprep.subr.mxu0 0.0
        %3868 = vmatpush1.msra.mxu0 0.0
        %3869 = vmatprep.subr.mxu0 0.0
        %3870 = vmatpush1.msra.mxu0 0.0
        %3871 = vmatprep.subr.mxu0 0.0
        %3872 = vmatpush1.msra.mxu0 0.0
        %3873 = vmatprep.subr.mxu0 0.0
        %3874 = vmatpush1.msra.mxu0 0.0
        %3875 = vmatprep.subr.mxu0 0.0
        %3876 = vmatpush1.msra.mxu0 0.0
        %3877 = vmatprep.subr.mxu0 0.0
        %3878 = vmatpush1.msra.mxu0 0.0
        %3879 = vmatprep.mubr.f32.mxu0 0.0
        %3880 = vmatmul.mubr.f32.gmra.mrb[0].mxu0 %v731
        %v3881 = vpop.f32.mrb[0].mxu0
        %v3882 = vadd.f32 0.0, %v3881
        %v3883 = vpop.f32.mrb[0].mxu0
        %v3884 = vadd.f32 0.0, %v3883
        %3885 = vmatprep.mubr.f32.mxu0 0.0
        %3886 = vmatmul.mubr.f32.gmra.mrb[0].mxu0 %v734
        %v3887 = vpop.f32.mrb[0].mxu0
        %v3888 = vadd.f32 0.0, %v3887
        %v3889 = vpop.f32.mrb[0].mxu0
        %v3890 = vadd.f32 0.0, %v3889
        %3891 = vdwg.mxu0
        %s3892 = scalar_lea.vmem [#allocation10], 3072
        %v3893 = vld [vmem:[%s3892] sm:$0xff]
        %v3894 = vld [vmem:[%s3892 + $0x8] sm:$0xff]
        %v3895 = vld [vmem:[%s3892 + $0x10] sm:$0xff]
        %v3896 = vld [vmem:[%s3892 + $0x18] sm:$0xff]
        %v3897 = vld [vmem:[%s3892 + $0x20] sm:$0xff]
        %v3898 = vld [vmem:[%s3892 + $0x28] sm:$0xff]
        %v3899 = vld [vmem:[%s3892 + $0x30] sm:$0xff]
        %v3900 = vld [vmem:[%s3892 + $0x38] sm:$0xff]
        %v3901 = vld [vmem:[%s3892 + $0x40] sm:$0xff]
        %v3902 = vld [vmem:[%s3892 + $0x48] sm:$0xff]
        %v3903 = vld [vmem:[%s3892 + $0x50] sm:$0xff]
        %v3904 = vld [vmem:[%s3892 + $0x58] sm:$0xff]
        %v3905 = vld [vmem:[%s3892 + $0x60] sm:$0xff]
        %v3906 = vld [vmem:[%s3892 + $0x68] sm:$0xff]
        %v3907 = vld [vmem:[%s3892 + $0x70] sm:$0xff]
        %v3908 = vld [vmem:[%s3892 + $0x78] sm:$0xff]
        %v3909 = vld [vmem:[%s3892 + $0x80] sm:$0xff]
        %v3910 = vld [vmem:[%s3892 + $0x88] sm:$0xff]
        %v3911 = vld [vmem:[%s3892 + $0x90] sm:$0xff]
        %v3912 = vld [vmem:[%s3892 + $0x98] sm:$0xff]
        %v3913 = vld [vmem:[%s3892 + $0xa0] sm:$0xff]
        %v3914 = vld [vmem:[%s3892 + $0xa8] sm:$0xff]
        %v3915 = vld [vmem:[%s3892 + $0xb0] sm:$0xff]
        %v3916 = vld [vmem:[%s3892 + $0xb8] sm:$0xff]
        %v3917 = vld [vmem:[%s3892 + $0xc0] sm:$0xff]
        %v3918 = vld [vmem:[%s3892 + $0xc8] sm:$0xff]
        %v3919 = vld [vmem:[%s3892 + $0xd0] sm:$0xff]
        %v3920 = vld [vmem:[%s3892 + $0xd8] sm:$0xff]
        %v3921 = vld [vmem:[%s3892 + $0xe0] sm:$0xff]
        %v3922 = vld [vmem:[%s3892 + $0xe8] sm:$0xff]
        %v3923 = vld [vmem:[%s3892 + $0xf0] sm:$0xff]
        %v3924 = vld [vmem:[%s3892 + $0xf8] sm:$0xff]
        %v3925 = vld [vmem:[%s3892 + $0x100] sm:$0xff]
        %v3926 = vld [vmem:[%s3892 + $0x108] sm:$0xff]
        %v3927 = vld [vmem:[%s3892 + $0x110] sm:$0xff]
        %v3928 = vld [vmem:[%s3892 + $0x118] sm:$0xff]
        %v3929 = vld [vmem:[%s3892 + $0x120] sm:$0xff]
        %v3930 = vld [vmem:[%s3892 + $0x128] sm:$0xff]
        %v3931 = vld [vmem:[%s3892 + $0x130] sm:$0xff]
        %v3932 = vld [vmem:[%s3892 + $0x138] sm:$0xff]
        %v3933 = vld [vmem:[%s3892 + $0x140] sm:$0xff]
        %v3934 = vld [vmem:[%s3892 + $0x148] sm:$0xff]
        %v3935 = vld [vmem:[%s3892 + $0x150] sm:$0xff]
        %v3936 = vld [vmem:[%s3892 + $0x158] sm:$0xff]
        %v3937 = vld [vmem:[%s3892 + $0x160] sm:$0xff]
        %v3938 = vld [vmem:[%s3892 + $0x168] sm:$0xff]
        %v3939 = vld [vmem:[%s3892 + $0x170] sm:$0xff]
        %v3940 = vld [vmem:[%s3892 + $0x178] sm:$0xff]
        %v3941 = vld [vmem:[%s3892 + $0x180] sm:$0xff]
        %v3942 = vld [vmem:[%s3892 + $0x188] sm:$0xff]
        %v3943 = vld [vmem:[%s3892 + $0x190] sm:$0xff]
        %v3944 = vld [vmem:[%s3892 + $0x198] sm:$0xff]
        %v3945 = vld [vmem:[%s3892 + $0x1a0] sm:$0xff]
        %v3946 = vld [vmem:[%s3892 + $0x1a8] sm:$0xff]
        %v3947 = vld [vmem:[%s3892 + $0x1b0] sm:$0xff]
        %v3948 = vld [vmem:[%s3892 + $0x1b8] sm:$0xff]
        %v3949 = vld [vmem:[%s3892 + $0x1c0] sm:$0xff]
        %v3950 = vld [vmem:[%s3892 + $0x1c8] sm:$0xff]
        %v3951 = vld [vmem:[%s3892 + $0x1d0] sm:$0xff]
        %v3952 = vld [vmem:[%s3892 + $0x1d8] sm:$0xff]
        %v3953 = vld [vmem:[%s3892 + $0x1e0] sm:$0xff]
        %v3954 = vld [vmem:[%s3892 + $0x1e8] sm:$0xff]
        %v3955 = vld [vmem:[%s3892 + $0x1f0] sm:$0xff]
        %v3956 = vld [vmem:[%s3892 + $0x1f8] sm:$0xff]
        %s3957 = scalar_lea.vmem [#allocation10], 3584
        %v3958 = vld [vmem:[%s3957] sm:$0xff]
        %v3959 = vld [vmem:[%s3957 + $0x8] sm:$0xff]
        %v3960 = vld [vmem:[%s3957 + $0x10] sm:$0xff]
        %v3961 = vld [vmem:[%s3957 + $0x18] sm:$0xff]
        %v3962 = vld [vmem:[%s3957 + $0x20] sm:$0xff]
        %v3963 = vld [vmem:[%s3957 + $0x28] sm:$0xff]
        %v3964 = vld [vmem:[%s3957 + $0x30] sm:$0xff]
        %v3965 = vld [vmem:[%s3957 + $0x38] sm:$0xff]
        %v3966 = vld [vmem:[%s3957 + $0x40] sm:$0xff]
        %v3967 = vld [vmem:[%s3957 + $0x48] sm:$0xff]
        %v3968 = vld [vmem:[%s3957 + $0x50] sm:$0xff]
        %v3969 = vld [vmem:[%s3957 + $0x58] sm:$0xff]
        %v3970 = vld [vmem:[%s3957 + $0x60] sm:$0xff]
        %v3971 = vld [vmem:[%s3957 + $0x68] sm:$0xff]
        %v3972 = vld [vmem:[%s3957 + $0x70] sm:$0xff]
        %v3973 = vld [vmem:[%s3957 + $0x78] sm:$0xff]
        %v3974 = vld [vmem:[%s3957 + $0x80] sm:$0xff]
        %v3975 = vld [vmem:[%s3957 + $0x88] sm:$0xff]
        %v3976 = vld [vmem:[%s3957 + $0x90] sm:$0xff]
        %v3977 = vld [vmem:[%s3957 + $0x98] sm:$0xff]
        %v3978 = vld [vmem:[%s3957 + $0xa0] sm:$0xff]
        %v3979 = vld [vmem:[%s3957 + $0xa8] sm:$0xff]
        %v3980 = vld [vmem:[%s3957 + $0xb0] sm:$0xff]
        %v3981 = vld [vmem:[%s3957 + $0xb8] sm:$0xff]
        %v3982 = vld [vmem:[%s3957 + $0xc0] sm:$0xff]
        %v3983 = vld [vmem:[%s3957 + $0xc8] sm:$0xff]
        %v3984 = vld [vmem:[%s3957 + $0xd0] sm:$0xff]
        %v3985 = vld [vmem:[%s3957 + $0xd8] sm:$0xff]
        %v3986 = vld [vmem:[%s3957 + $0xe0] sm:$0xff]
        %v3987 = vld [vmem:[%s3957 + $0xe8] sm:$0xff]
        %v3988 = vld [vmem:[%s3957 + $0xf0] sm:$0xff]
        %v3989 = vld [vmem:[%s3957 + $0xf8] sm:$0xff]
        %v3990 = vld [vmem:[%s3957 + $0x100] sm:$0xff]
        %v3991 = vld [vmem:[%s3957 + $0x108] sm:$0xff]
        %v3992 = vld [vmem:[%s3957 + $0x110] sm:$0xff]
        %v3993 = vld [vmem:[%s3957 + $0x118] sm:$0xff]
        %v3994 = vld [vmem:[%s3957 + $0x120] sm:$0xff]
        %v3995 = vld [vmem:[%s3957 + $0x128] sm:$0xff]
        %v3996 = vld [vmem:[%s3957 + $0x130] sm:$0xff]
        %v3997 = vld [vmem:[%s3957 + $0x138] sm:$0xff]
        %v3998 = vld [vmem:[%s3957 + $0x140] sm:$0xff]
        %v3999 = vld [vmem:[%s3957 + $0x148] sm:$0xff]
        %v4000 = vld [vmem:[%s3957 + $0x150] sm:$0xff]
        %v4001 = vld [vmem:[%s3957 + $0x158] sm:$0xff]
        %v4002 = vld [vmem:[%s3957 + $0x160] sm:$0xff]
        %v4003 = vld [vmem:[%s3957 + $0x168] sm:$0xff]
        %v4004 = vld [vmem:[%s3957 + $0x170] sm:$0xff]
        %v4005 = vld [vmem:[%s3957 + $0x178] sm:$0xff]
        %v4006 = vld [vmem:[%s3957 + $0x180] sm:$0xff]
        %v4007 = vld [vmem:[%s3957 + $0x188] sm:$0xff]
        %v4008 = vld [vmem:[%s3957 + $0x190] sm:$0xff]
        %v4009 = vld [vmem:[%s3957 + $0x198] sm:$0xff]
        %v4010 = vld [vmem:[%s3957 + $0x1a0] sm:$0xff]
        %v4011 = vld [vmem:[%s3957 + $0x1a8] sm:$0xff]
        %v4012 = vld [vmem:[%s3957 + $0x1b0] sm:$0xff]
        %v4013 = vld [vmem:[%s3957 + $0x1b8] sm:$0xff]
        %v4014 = vld [vmem:[%s3957 + $0x1c0] sm:$0xff]
        %v4015 = vld [vmem:[%s3957 + $0x1c8] sm:$0xff]
        %v4016 = vld [vmem:[%s3957 + $0x1d0] sm:$0xff]
        %v4017 = vld [vmem:[%s3957 + $0x1d8] sm:$0xff]
        %v4018 = vld [vmem:[%s3957 + $0x1e0] sm:$0xff]
        %v4019 = vld [vmem:[%s3957 + $0x1e8] sm:$0xff]
        %v4020 = vld [vmem:[%s3957 + $0x1f0] sm:$0xff]
        %v4021 = vld [vmem:[%s3957 + $0x1f8] sm:$0xff]
        %4022 = vmatprep.subr.mxu0 %v3959
        %4023 = vmatpush1.msra.mxu0 %v3958
        %4024 = vmatprep.subr.mxu0 %v3961
        %4025 = vmatpush1.msra.mxu0 %v3960
        %4026 = vmatprep.subr.mxu0 %v3963
        %4027 = vmatpush1.msra.mxu0 %v3962
        %4028 = vmatprep.subr.mxu0 %v3965
        %4029 = vmatpush1.msra.mxu0 %v3964
        %4030 = vmatprep.subr.mxu0 %v3967
        %4031 = vmatpush1.msra.mxu0 %v3966
        %4032 = vmatprep.subr.mxu0 %v3969
        %4033 = vmatpush1.msra.mxu0 %v3968
        %4034 = vmatprep.subr.mxu0 %v3971
        %4035 = vmatpush1.msra.mxu0 %v3970
        %4036 = vmatprep.subr.mxu0 %v3973
        %4037 = vmatpush1.msra.mxu0 %v3972
        %4038 = vmatprep.subr.mxu0 %v3975
        %4039 = vmatpush1.msra.mxu0 %v3974
        %4040 = vmatprep.subr.mxu0 %v3977
        %4041 = vmatpush1.msra.mxu0 %v3976
        %4042 = vmatprep.subr.mxu0 %v3979
        %4043 = vmatpush1.msra.mxu0 %v3978
        %4044 = vmatprep.subr.mxu0 %v3981
        %4045 = vmatpush1.msra.mxu0 %v3980
        %4046 = vmatprep.subr.mxu0 %v3983
        %4047 = vmatpush1.msra.mxu0 %v3982
        %4048 = vmatprep.subr.mxu0 %v3985
        %4049 = vmatpush1.msra.mxu0 %v3984
        %4050 = vmatprep.subr.mxu0 %v3987
        %4051 = vmatpush1.msra.mxu0 %v3986
        %4052 = vmatprep.subr.mxu0 %v3989
        %4053 = vmatpush1.msra.mxu0 %v3988
        %4054 = vmatprep.subr.mxu0 %v3991
        %4055 = vmatpush1.msra.mxu0 %v3990
        %4056 = vmatprep.subr.mxu0 %v3993
        %4057 = vmatpush1.msra.mxu0 %v3992
        %4058 = vmatprep.subr.mxu0 %v3995
        %4059 = vmatpush1.msra.mxu0 %v3994
        %4060 = vmatprep.subr.mxu0 %v3997
        %4061 = vmatpush1.msra.mxu0 %v3996
        %4062 = vmatprep.subr.mxu0 %v3999
        %4063 = vmatpush1.msra.mxu0 %v3998
        %4064 = vmatprep.subr.mxu0 %v4001
        %4065 = vmatpush1.msra.mxu0 %v4000
        %4066 = vmatprep.subr.mxu0 %v4003
        %4067 = vmatpush1.msra.mxu0 %v4002
        %4068 = vmatprep.subr.mxu0 %v4005
        %4069 = vmatpush1.msra.mxu0 %v4004
        %4070 = vmatprep.subr.mxu0 %v4007
        %4071 = vmatpush1.msra.mxu0 %v4006
        %4072 = vmatprep.subr.mxu0 %v4009
        %4073 = vmatpush1.msra.mxu0 %v4008
        %4074 = vmatprep.subr.mxu0 %v4011
        %4075 = vmatpush1.msra.mxu0 %v4010
        %4076 = vmatprep.subr.mxu0 %v4013
        %4077 = vmatpush1.msra.mxu0 %v4012
        %4078 = vmatprep.subr.mxu0 %v4015
        %4079 = vmatpush1.msra.mxu0 %v4014
        %4080 = vmatprep.subr.mxu0 %v4017
        %4081 = vmatpush1.msra.mxu0 %v4016
        %4082 = vmatprep.subr.mxu0 %v4019
        %4083 = vmatpush1.msra.mxu0 %v4018
        %4084 = vmatprep.subr.mxu0 %v4021
        %4085 = vmatpush1.msra.mxu0 %v4020
        %4086 = vmatprep.mubr.f32.mxu0 %v3735
        %4087 = vmatmul.mubr.f32.gmra.mrb[0].mxu0 %v3734
        %v4088 = vpop.f32.mrb[0].mxu0
        %v4089 = vadd.f32 0.0, %v4088
        %v4090 = vpop.f32.mrb[0].mxu0
        %v4091 = vadd.f32 0.0, %v4090
        %4092 = vmatprep.mubr.f32.mxu0 %v3737
        %4093 = vmatmul.mubr.f32.gmra.mrb[0].mxu0 %v3736
        %v4094 = vpop.f32.mrb[0].mxu0
        %v4095 = vadd.f32 0.0, %v4094
        %v4096 = vpop.f32.mrb[0].mxu0
        %v4097 = vadd.f32 0.0, %v4096
        %4098 = vdwg.mxu0
        %4099 = vmatprep.subr.mxu0 %v3894
        %4100 = vmatpush1.msra.mxu0 %v3893
        %4101 = vmatprep.subr.mxu0 %v3896
        %4102 = vmatpush1.msra.mxu0 %v3895
        %4103 = vmatprep.subr.mxu0 %v3898
        %4104 = vmatpush1.msra.mxu0 %v3897
        %4105 = vmatprep.subr.mxu0 %v3900
        %4106 = vmatpush1.msra.mxu0 %v3899
        %4107 = vmatprep.subr.mxu0 %v3902
        %4108 = vmatpush1.msra.mxu0 %v3901
        %4109 = vmatprep.subr.mxu0 %v3904
        %4110 = vmatpush1.msra.mxu0 %v3903
        %4111 = vmatprep.subr.mxu0 %v3906
        %4112 = vmatpush1.msra.mxu0 %v3905
        %4113 = vmatprep.subr.mxu0 %v3908
        %4114 = vmatpush1.msra.mxu0 %v3907
        %4115 = vmatprep.subr.mxu0 %v3910
        %4116 = vmatpush1.msra.mxu0 %v3909
        %4117 = vmatprep.subr.mxu0 %v3912
        %4118 = vmatpush1.msra.mxu0 %v3911
        %4119 = vmatprep.subr.mxu0 %v3914
        %4120 = vmatpush1.msra.mxu0 %v3913
        %4121 = vmatprep.subr.mxu0 %v3916
        %4122 = vmatpush1.msra.mxu0 %v3915
        %4123 = vmatprep.subr.mxu0 %v3918
        %4124 = vmatpush1.msra.mxu0 %v3917
        %4125 = vmatprep.subr.mxu0 %v3920
        %4126 = vmatpush1.msra.mxu0 %v3919
        %4127 = vmatprep.subr.mxu0 %v3922
        %4128 = vmatpush1.msra.mxu0 %v3921
        %4129 = vmatprep.subr.mxu0 %v3924
        %4130 = vmatpush1.msra.mxu0 %v3923
        %4131 = vmatprep.subr.mxu0 %v3926
        %4132 = vmatpush1.msra.mxu0 %v3925
        %4133 = vmatprep.subr.mxu0 %v3928
        %4134 = vmatpush1.msra.mxu0 %v3927
        %4135 = vmatprep.subr.mxu0 %v3930
        %4136 = vmatpush1.msra.mxu0 %v3929
        %4137 = vmatprep.subr.mxu0 %v3932
        %4138 = vmatpush1.msra.mxu0 %v3931
        %4139 = vmatprep.subr.mxu0 %v3934
        %4140 = vmatpush1.msra.mxu0 %v3933
        %4141 = vmatprep.subr.mxu0 %v3936
        %4142 = vmatpush1.msra.mxu0 %v3935
        %4143 = vmatprep.subr.mxu0 %v3938
        %4144 = vmatpush1.msra.mxu0 %v3937
        %4145 = vmatprep.subr.mxu0 %v3940
        %4146 = vmatpush1.msra.mxu0 %v3939
        %4147 = vmatprep.subr.mxu0 %v3942
        %4148 = vmatpush1.msra.mxu0 %v3941
        %4149 = vmatprep.subr.mxu0 %v3944
        %4150 = vmatpush1.msra.mxu0 %v3943
        %4151 = vmatprep.subr.mxu0 %v3946
        %4152 = vmatpush1.msra.mxu0 %v3945
        %4153 = vmatprep.subr.mxu0 %v3948
        %4154 = vmatpush1.msra.mxu0 %v3947
        %4155 = vmatprep.subr.mxu0 %v3950
        %4156 = vmatpush1.msra.mxu0 %v3949
        %4157 = vmatprep.subr.mxu0 %v3952
        %4158 = vmatpush1.msra.mxu0 %v3951
        %4159 = vmatprep.subr.mxu0 %v3954
        %4160 = vmatpush1.msra.mxu0 %v3953
        %4161 = vmatprep.subr.mxu0 %v3956
        %4162 = vmatpush1.msra.mxu0 %v3955
        %4163 = vmatprep.mubr.f32.mxu0 %v3807
        %4164 = vmatmul.mubr.f32.gmra.mrb[0].mxu0 %v3805
        %v4165 = vpop.f32.mrb[0].mxu0
        %v4166 = vadd.f32 %v4089, %v4165
        %v4167 = vpop.f32.mrb[0].mxu0
        %v4168 = vadd.f32 %v4091, %v4167
        %4169 = vmatprep.mubr.f32.mxu0 %v3813
        %4170 = vmatmul.mubr.f32.gmra.mrb[0].mxu0 %v3811
        %v4171 = vpop.f32.mrb[0].mxu0
        %v4172 = vadd.f32 %v4095, %v4171
        %v4173 = vpop.f32.mrb[0].mxu0
        %v4174 = vadd.f32 %v4097, %v4173
        %4175 = vdwg.mxu0
        %s4176 = scalar_lea.vmem [#allocation10], 4096
        %v4177 = vld [vmem:[%s4176] sm:$0xff]
        %v4178 = vld [vmem:[%s4176 + $0x8] sm:$0xff]
        %v4179 = vld [vmem:[%s4176 + $0x10] sm:$0xff]
        %v4180 = vld [vmem:[%s4176 + $0x18] sm:$0xff]
        %v4181 = vld [vmem:[%s4176 + $0x20] sm:$0xff]
        %v4182 = vld [vmem:[%s4176 + $0x28] sm:$0xff]
        %v4183 = vld [vmem:[%s4176 + $0x30] sm:$0xff]
        %v4184 = vld [vmem:[%s4176 + $0x38] sm:$0xff]
        %v4185 = vld [vmem:[%s4176 + $0x40] sm:$0xff]
        %v4186 = vld [vmem:[%s4176 + $0x48] sm:$0xff]
        %v4187 = vld [vmem:[%s4176 + $0x50] sm:$0xff]
        %v4188 = vld [vmem:[%s4176 + $0x58] sm:$0xff]
        %v4189 = vld [vmem:[%s4176 + $0x60] sm:$0xff]
        %v4190 = vld [vmem:[%s4176 + $0x68] sm:$0xff]
        %v4191 = vld [vmem:[%s4176 + $0x70] sm:$0xff]
        %v4192 = vld [vmem:[%s4176 + $0x78] sm:$0xff]
        %v4193 = vld [vmem:[%s4176 + $0x80] sm:$0xff]
        %v4194 = vld [vmem:[%s4176 + $0x88] sm:$0xff]
        %v4195 = vld [vmem:[%s4176 + $0x90] sm:$0xff]
        %v4196 = vld [vmem:[%s4176 + $0x98] sm:$0xff]
        %v4197 = vld [vmem:[%s4176 + $0xa0] sm:$0xff]
        %v4198 = vld [vmem:[%s4176 + $0xa8] sm:$0xff]
        %v4199 = vld [vmem:[%s4176 + $0xb0] sm:$0xff]
        %v4200 = vld [vmem:[%s4176 + $0xb8] sm:$0xff]
        %v4201 = vld [vmem:[%s4176 + $0xc0] sm:$0xff]
        %v4202 = vld [vmem:[%s4176 + $0xc8] sm:$0xff]
        %v4203 = vld [vmem:[%s4176 + $0xd0] sm:$0xff]
        %v4204 = vld [vmem:[%s4176 + $0xd8] sm:$0xff]
        %v4205 = vld [vmem:[%s4176 + $0xe0] sm:$0xff]
        %v4206 = vld [vmem:[%s4176 + $0xe8] sm:$0xff]
        %v4207 = vld [vmem:[%s4176 + $0xf0] sm:$0xff]
        %v4208 = vld [vmem:[%s4176 + $0xf8] sm:$0xff]
        %v4209 = vld [vmem:[%s4176 + $0x100] sm:$0xff]
        %v4210 = vld [vmem:[%s4176 + $0x108] sm:$0xff]
        %v4211 = vld [vmem:[%s4176 + $0x110] sm:$0xff]
        %v4212 = vld [vmem:[%s4176 + $0x118] sm:$0xff]
        %v4213 = vld [vmem:[%s4176 + $0x120] sm:$0xff]
        %v4214 = vld [vmem:[%s4176 + $0x128] sm:$0xff]
        %v4215 = vld [vmem:[%s4176 + $0x130] sm:$0xff]
        %v4216 = vld [vmem:[%s4176 + $0x138] sm:$0xff]
        %v4217 = vld [vmem:[%s4176 + $0x140] sm:$0xff]
        %v4218 = vld [vmem:[%s4176 + $0x148] sm:$0xff]
        %v4219 = vld [vmem:[%s4176 + $0x150] sm:$0xff]
        %v4220 = vld [vmem:[%s4176 + $0x158] sm:$0xff]
        %v4221 = vld [vmem:[%s4176 + $0x160] sm:$0xff]
        %v4222 = vld [vmem:[%s4176 + $0x168] sm:$0xff]
        %v4223 = vld [vmem:[%s4176 + $0x170] sm:$0xff]
        %v4224 = vld [vmem:[%s4176 + $0x178] sm:$0xff]
        %v4225 = vld [vmem:[%s4176 + $0x180] sm:$0xff]
        %v4226 = vld [vmem:[%s4176 + $0x188] sm:$0xff]
        %v4227 = vld [vmem:[%s4176 + $0x190] sm:$0xff]
        %v4228 = vld [vmem:[%s4176 + $0x198] sm:$0xff]
        %v4229 = vld [vmem:[%s4176 + $0x1a0] sm:$0xff]
        %v4230 = vld [vmem:[%s4176 + $0x1a8] sm:$0xff]
        %v4231 = vld [vmem:[%s4176 + $0x1b0] sm:$0xff]
        %v4232 = vld [vmem:[%s4176 + $0x1b8] sm:$0xff]
        %v4233 = vld [vmem:[%s4176 + $0x1c0] sm:$0xff]
        %v4234 = vld [vmem:[%s4176 + $0x1c8] sm:$0xff]
        %v4235 = vld [vmem:[%s4176 + $0x1d0] sm:$0xff]
        %v4236 = vld [vmem:[%s4176 + $0x1d8] sm:$0xff]
        %v4237 = vld [vmem:[%s4176 + $0x1e0] sm:$0xff]
        %v4238 = vld [vmem:[%s4176 + $0x1e8] sm:$0xff]
        %v4239 = vld [vmem:[%s4176 + $0x1f0] sm:$0xff]
        %v4240 = vld [vmem:[%s4176 + $0x1f8] sm:$0xff]
        %4241 = vmatprep.subr.mxu0 %v4178
        %4242 = vmatpush1.msra.mxu0 %v4177
        %4243 = vmatprep.subr.mxu0 %v4180
        %4244 = vmatpush1.msra.mxu0 %v4179
        %4245 = vmatprep.subr.mxu0 %v4182
        %4246 = vmatpush1.msra.mxu0 %v4181
        %4247 = vmatprep.subr.mxu0 %v4184
        %4248 = vmatpush1.msra.mxu0 %v4183
        %4249 = vmatprep.subr.mxu0 %v4186
        %4250 = vmatpush1.msra.mxu0 %v4185
        %4251 = vmatprep.subr.mxu0 %v4188
        %4252 = vmatpush1.msra.mxu0 %v4187
        %4253 = vmatprep.subr.mxu0 %v4190
        %4254 = vmatpush1.msra.mxu0 %v4189
        %4255 = vmatprep.subr.mxu0 %v4192
        %4256 = vmatpush1.msra.mxu0 %v4191
        %4257 = vmatprep.subr.mxu0 %v4194
        %4258 = vmatpush1.msra.mxu0 %v4193
        %4259 = vmatprep.subr.mxu0 %v4196
        %4260 = vmatpush1.msra.mxu0 %v4195
        %4261 = vmatprep.subr.mxu0 %v4198
        %4262 = vmatpush1.msra.mxu0 %v4197
        %4263 = vmatprep.subr.mxu0 %v4200
        %4264 = vmatpush1.msra.mxu0 %v4199
        %4265 = vmatprep.subr.mxu0 %v4202
        %4266 = vmatpush1.msra.mxu0 %v4201
        %4267 = vmatprep.subr.mxu0 %v4204
        %4268 = vmatpush1.msra.mxu0 %v4203
        %4269 = vmatprep.subr.mxu0 %v4206
        %4270 = vmatpush1.msra.mxu0 %v4205
        %4271 = vmatprep.subr.mxu0 %v4208
        %4272 = vmatpush1.msra.mxu0 %v4207
        %4273 = vmatprep.subr.mxu0 %v4210
        %4274 = vmatpush1.msra.mxu0 %v4209
        %4275 = vmatprep.subr.mxu0 %v4212
        %4276 = vmatpush1.msra.mxu0 %v4211
        %4277 = vmatprep.subr.mxu0 %v4214
        %4278 = vmatpush1.msra.mxu0 %v4213
        %4279 = vmatprep.subr.mxu0 %v4216
        %4280 = vmatpush1.msra.mxu0 %v4215
        %4281 = vmatprep.subr.mxu0 %v4218
        %4282 = vmatpush1.msra.mxu0 %v4217
        %4283 = vmatprep.subr.mxu0 %v4220
        %4284 = vmatpush1.msra.mxu0 %v4219
        %4285 = vmatprep.subr.mxu0 %v4222
        %4286 = vmatpush1.msra.mxu0 %v4221
        %4287 = vmatprep.subr.mxu0 %v4224
        %4288 = vmatpush1.msra.mxu0 %v4223
        %4289 = vmatprep.subr.mxu0 %v4226
        %4290 = vmatpush1.msra.mxu0 %v4225
        %4291 = vmatprep.subr.mxu0 %v4228
        %4292 = vmatpush1.msra.mxu0 %v4227
        %4293 = vmatprep.subr.mxu0 %v4230
        %4294 = vmatpush1.msra.mxu0 %v4229
        %4295 = vmatprep.subr.mxu0 %v4232
        %4296 = vmatpush1.msra.mxu0 %v4231
        %4297 = vmatprep.subr.mxu0 %v4234
        %4298 = vmatpush1.msra.mxu0 %v4233
        %4299 = vmatprep.subr.mxu0 %v4236
        %4300 = vmatpush1.msra.mxu0 %v4235
        %4301 = vmatprep.subr.mxu0 %v4238
        %4302 = vmatpush1.msra.mxu0 %v4237
        %4303 = vmatprep.subr.mxu0 %v4240
        %4304 = vmatpush1.msra.mxu0 %v4239
        %4305 = vmatprep.mubr.f32.mxu0 %v3884
        %4306 = vmatmul.mubr.f32.gmra.mrb[0].mxu0 %v3882
        %v4307 = vpop.f32.mrb[0].mxu0
        %v4308 = vadd.f32 0.0, %v4307
        %v4309 = vpop.f32.mrb[0].mxu0
        %v4310 = vadd.f32 0.0, %v4309
        %4311 = vmatprep.mubr.f32.mxu0 %v3890
        %4312 = vmatmul.mubr.f32.gmra.mrb[0].mxu0 %v3888
        %v4313 = vpop.f32.mrb[0].mxu0
        %v4314 = vadd.f32 0.0, %v4313
        %v4315 = vpop.f32.mrb[0].mxu0
        %v4316 = vadd.f32 0.0, %v4315
        %4317 = vdwg.mxu0
        %v4318 = vadd.f32 %v4166, %v4308
        %v4319 = vadd.f32 %v4168, %v4310
        %v4320 = vadd.f32 %v4172, %v4314
        %v4321 = vadd.f32 %v4174, %v4316
        %s4322 = scalar_lea.vmem [#allocation11], 4
        %v4323 = vld [vmem:[%s4322] sm:$0x3]
        %v4325 = vlaneseq
        %v4326 = vshrl.u32 %v4325, 7
        %v4327 = vsub.s32 0, %v4326
        %v4328 = vrot.slane %v4323, %v4327
        %v4329 = vlaneseq
        %v4330 = vshrl.u32 %v4329, 7
        %v4331 = vsub.s32 1, %v4330
        %v4332 = vrot.slane %v4323, %v4331
        %v4335 = vadd.f32 %v4318, %v4328
        %v4336 = vadd.f32 %v4319, %v4332
        %v4337 = vadd.f32 %v4320, %v4328
        %v4338 = vadd.f32 %v4321, %v4332
        %v4339 = vadd.f32 %v4335, %v3112
        %v4340 = vadd.f32 %v4336, %v3113
        %v4341 = vadd.f32 %v4337, %v3114
        %v4342 = vadd.f32 %v4338, %v3115
        %v4343 = vmax.f32 %v4339, 0.0
        %v4344 = vmax.f32 %v4340, 0.0
        %v4345 = vmax.f32 %v4341, 0.0
        %v4346 = vmax.f32 %v4342, 0.0
        %4347 = vmatprep.subr.mxu0 %v4344
        %4348 = vmatpush1.msra.mxu0 %v4343
        %4349 = vmatprep.subr.mxu0 %v4346
        %4350 = vmatpush1.msra.mxu0 %v4345
        %4351 = vmatprep.subr.mxu0 0.0
        %4352 = vmatpush1.msra.mxu0 0.0
        %4353 = vmatprep.subr.mxu0 0.0
        %4354 = vmatpush1.msra.mxu0 0.0
        %4355 = vmatprep.subr.mxu0 0.0
        %4356 = vmatpush1.msra.mxu0 0.0
        %4357 = vmatprep.subr.mxu0 0.0
        %4358 = vmatpush1.msra.mxu0 0.0
        %4359 = vmatprep.subr.mxu0 0.0
        %4360 = vmatpush1.msra.mxu0 0.0
        %4361 = vmatprep.subr.mxu0 0.0
        %4362 = vmatpush1.msra.mxu0 0.0
        %4363 = vmatprep.subr.mxu0 0.0
        %4364 = vmatpush1.msra.mxu0 0.0
        %4365 = vmatprep.subr.mxu0 0.0
        %4366 = vmatpush1.msra.mxu0 0.0
        %4367 = vmatprep.subr.mxu0 0.0
        %4368 = vmatpush1.msra.mxu0 0.0
        %4369 = vmatprep.subr.mxu0 0.0
        %4370 = vmatpush1.msra.mxu0 0.0
        %4371 = vmatprep.subr.mxu0 0.0
        %4372 = vmatpush1.msra.mxu0 0.0
        %4373 = vmatprep.subr.mxu0 0.0
        %4374 = vmatpush1.msra.mxu0 0.0
        %4375 = vmatprep.subr.mxu0 0.0
        %4376 = vmatpush1.msra.mxu0 0.0
        %4377 = vmatprep.subr.mxu0 0.0
        %4378 = vmatpush1.msra.mxu0 0.0
        %4379 = vmatprep.subr.mxu0 0.0
        %4380 = vmatpush1.msra.mxu0 0.0
        %4381 = vmatprep.subr.mxu0 0.0
        %4382 = vmatpush1.msra.mxu0 0.0
        %4383 = vmatprep.subr.mxu0 0.0
        %4384 = vmatpush1.msra.mxu0 0.0
        %4385 = vmatprep.subr.mxu0 0.0
        %4386 = vmatpush1.msra.mxu0 0.0
        %4387 = vmatprep.subr.mxu0 0.0
        %4388 = vmatpush1.msra.mxu0 0.0
        %4389 = vmatprep.subr.mxu0 0.0
        %4390 = vmatpush1.msra.mxu0 0.0
        %4391 = vmatprep.subr.mxu0 0.0
        %4392 = vmatpush1.msra.mxu0 0.0
        %4393 = vmatprep.subr.mxu0 0.0
        %4394 = vmatpush1.msra.mxu0 0.0
        %4395 = vmatprep.subr.mxu0 0.0
        %4396 = vmatpush1.msra.mxu0 0.0
        %4397 = vmatprep.subr.mxu0 0.0
        %4398 = vmatpush1.msra.mxu0 0.0
        %4399 = vmatprep.subr.mxu0 0.0
        %4400 = vmatpush1.msra.mxu0 0.0
        %4401 = vmatprep.subr.mxu0 0.0
        %4402 = vmatpush1.msra.mxu0 0.0
        %4403 = vmatprep.subr.mxu0 0.0
        %4404 = vmatpush1.msra.mxu0 0.0
        %4405 = vmatprep.subr.mxu0 0.0
        %4406 = vmatpush1.msra.mxu0 0.0
        %4407 = vmatprep.subr.mxu0 0.0
        %4408 = vmatpush1.msra.mxu0 0.0
        %4409 = vmatprep.subr.mxu0 0.0
        %4410 = vmatpush1.msra.mxu0 0.0
        %4411 = vmatprep.mubr.f32.mxu0 0.0
        %4412 = vmatmul.mubr.f32.gmra.mrb[0].mxu0 %v645
        %v4413 = vpop.f32.mrb[0].mxu0
        %v4414 = vadd.f32 0.0, %v4413
        %v4415 = vpop.f32.mrb[0].mxu0
        %v4416 = vadd.f32 0.0, %v4415
        %4417 = vmatprep.mubr.f32.mxu0 0.0
        %4418 = vmatmul.mubr.f32.gmra.mrb[0].mxu0 %v648
        %v4419 = vpop.f32.mrb[0].mxu0
        %v4420 = vadd.f32 0.0, %v4419
        %v4421 = vpop.f32.mrb[0].mxu0
        %v4422 = vadd.f32 0.0, %v4421
        %4423 = vdwg.mxu0
        %4424 = vmatprep.subr.mxu0 %v4344
        %4425 = vmatpush1.msra.mxu0 %v4343
        %4426 = vmatprep.subr.mxu0 %v4346
        %4427 = vmatpush1.msra.mxu0 %v4345
        %4428 = vmatprep.subr.mxu0 0.0
        %4429 = vmatpush1.msra.mxu0 0.0
        %4430 = vmatprep.subr.mxu0 0.0
        %4431 = vmatpush1.msra.mxu0 0.0
        %4432 = vmatprep.subr.mxu0 0.0
        %4433 = vmatpush1.msra.mxu0 0.0
        %4434 = vmatprep.subr.mxu0 0.0
        %4435 = vmatpush1.msra.mxu0 0.0
        %4436 = vmatprep.subr.mxu0 0.0
        %4437 = vmatpush1.msra.mxu0 0.0
        %4438 = vmatprep.subr.mxu0 0.0
        %4439 = vmatpush1.msra.mxu0 0.0
        %4440 = vmatprep.subr.mxu0 0.0
        %4441 = vmatpush1.msra.mxu0 0.0
        %4442 = vmatprep.subr.mxu0 0.0
        %4443 = vmatpush1.msra.mxu0 0.0
        %4444 = vmatprep.subr.mxu0 0.0
        %4445 = vmatpush1.msra.mxu0 0.0
        %4446 = vmatprep.subr.mxu0 0.0
        %4447 = vmatpush1.msra.mxu0 0.0
        %4448 = vmatprep.subr.mxu0 0.0
        %4449 = vmatpush1.msra.mxu0 0.0
        %4450 = vmatprep.subr.mxu0 0.0
        %4451 = vmatpush1.msra.mxu0 0.0
        %4452 = vmatprep.subr.mxu0 0.0
        %4453 = vmatpush1.msra.mxu0 0.0
        %4454 = vmatprep.subr.mxu0 0.0
        %4455 = vmatpush1.msra.mxu0 0.0
        %4456 = vmatprep.subr.mxu0 0.0
        %4457 = vmatpush1.msra.mxu0 0.0
        %4458 = vmatprep.subr.mxu0 0.0
        %4459 = vmatpush1.msra.mxu0 0.0
        %4460 = vmatprep.subr.mxu0 0.0
        %4461 = vmatpush1.msra.mxu0 0.0
        %4462 = vmatprep.subr.mxu0 0.0
        %4463 = vmatpush1.msra.mxu0 0.0
        %4464 = vmatprep.subr.mxu0 0.0
        %4465 = vmatpush1.msra.mxu0 0.0
        %4466 = vmatprep.subr.mxu0 0.0
        %4467 = vmatpush1.msra.mxu0 0.0
        %4468 = vmatprep.subr.mxu0 0.0
        %4469 = vmatpush1.msra.mxu0 0.0
        %4470 = vmatprep.subr.mxu0 0.0
        %4471 = vmatpush1.msra.mxu0 0.0
        %4472 = vmatprep.subr.mxu0 0.0
        %4473 = vmatpush1.msra.mxu0 0.0
        %4474 = vmatprep.subr.mxu0 0.0
        %4475 = vmatpush1.msra.mxu0 0.0
        %4476 = vmatprep.subr.mxu0 0.0
        %4477 = vmatpush1.msra.mxu0 0.0
        %4478 = vmatprep.subr.mxu0 0.0
        %4479 = vmatpush1.msra.mxu0 0.0
        %4480 = vmatprep.subr.mxu0 0.0
        %4481 = vmatpush1.msra.mxu0 0.0
        %4482 = vmatprep.subr.mxu0 0.0
        %4483 = vmatpush1.msra.mxu0 0.0
        %4484 = vmatprep.subr.mxu0 0.0
        %4485 = vmatpush1.msra.mxu0 0.0
        %4486 = vmatprep.subr.mxu0 0.0
        %4487 = vmatpush1.msra.mxu0 0.0
        %4488 = vmatprep.mubr.f32.mxu0 0.0
        %4489 = vmatmul.mubr.f32.gmra.mrb[0].mxu0 %v731
        %v4490 = vpop.f32.mrb[0].mxu0
        %v4491 = vadd.f32 0.0, %v4490
        %v4492 = vpop.f32.mrb[0].mxu0
        %v4493 = vadd.f32 0.0, %v4492
        %4494 = vmatprep.mubr.f32.mxu0 0.0
        %4495 = vmatmul.mubr.f32.gmra.mrb[0].mxu0 %v734
        %v4496 = vpop.f32.mrb[0].mxu0
        %v4497 = vadd.f32 0.0, %v4496
        %v4498 = vpop.f32.mrb[0].mxu0
        %v4499 = vadd.f32 0.0, %v4498
        %4500 = vdwg.mxu0
        %s4501 = scalar_lea.vmem [#allocation5], 4608
        %v4502 = vld [vmem:[%s4501] sm:$0xff]
        %v4503 = vld [vmem:[%s4501 + $0x8] sm:$0xff]
        %v4504 = vld [vmem:[%s4501 + $0x10] sm:$0xff]
        %v4505 = vld [vmem:[%s4501 + $0x18] sm:$0xff]
        %v4506 = vld [vmem:[%s4501 + $0x20] sm:$0xff]
        %v4507 = vld [vmem:[%s4501 + $0x28] sm:$0xff]
        %v4508 = vld [vmem:[%s4501 + $0x30] sm:$0xff]
        %v4509 = vld [vmem:[%s4501 + $0x38] sm:$0xff]
        %v4510 = vld [vmem:[%s4501 + $0x40] sm:$0xff]
        %v4511 = vld [vmem:[%s4501 + $0x48] sm:$0xff]
        %v4512 = vld [vmem:[%s4501 + $0x50] sm:$0xff]
        %v4513 = vld [vmem:[%s4501 + $0x58] sm:$0xff]
        %v4514 = vld [vmem:[%s4501 + $0x60] sm:$0xff]
        %v4515 = vld [vmem:[%s4501 + $0x68] sm:$0xff]
        %v4516 = vld [vmem:[%s4501 + $0x70] sm:$0xff]
        %v4517 = vld [vmem:[%s4501 + $0x78] sm:$0xff]
        %v4518 = vld [vmem:[%s4501 + $0x80] sm:$0xff]
        %v4519 = vld [vmem:[%s4501 + $0x88] sm:$0xff]
        %v4520 = vld [vmem:[%s4501 + $0x90] sm:$0xff]
        %v4521 = vld [vmem:[%s4501 + $0x98] sm:$0xff]
        %v4522 = vld [vmem:[%s4501 + $0xa0] sm:$0xff]
        %v4523 = vld [vmem:[%s4501 + $0xa8] sm:$0xff]
        %v4524 = vld [vmem:[%s4501 + $0xb0] sm:$0xff]
        %v4525 = vld [vmem:[%s4501 + $0xb8] sm:$0xff]
        %v4526 = vld [vmem:[%s4501 + $0xc0] sm:$0xff]
        %v4527 = vld [vmem:[%s4501 + $0xc8] sm:$0xff]
        %v4528 = vld [vmem:[%s4501 + $0xd0] sm:$0xff]
        %v4529 = vld [vmem:[%s4501 + $0xd8] sm:$0xff]
        %v4530 = vld [vmem:[%s4501 + $0xe0] sm:$0xff]
        %v4531 = vld [vmem:[%s4501 + $0xe8] sm:$0xff]
        %v4532 = vld [vmem:[%s4501 + $0xf0] sm:$0xff]
        %v4533 = vld [vmem:[%s4501 + $0xf8] sm:$0xff]
        %v4534 = vld [vmem:[%s4501 + $0x100] sm:$0xff]
        %v4535 = vld [vmem:[%s4501 + $0x108] sm:$0xff]
        %v4536 = vld [vmem:[%s4501 + $0x110] sm:$0xff]
        %v4537 = vld [vmem:[%s4501 + $0x118] sm:$0xff]
        %v4538 = vld [vmem:[%s4501 + $0x120] sm:$0xff]
        %v4539 = vld [vmem:[%s4501 + $0x128] sm:$0xff]
        %v4540 = vld [vmem:[%s4501 + $0x130] sm:$0xff]
        %v4541 = vld [vmem:[%s4501 + $0x138] sm:$0xff]
        %v4542 = vld [vmem:[%s4501 + $0x140] sm:$0xff]
        %v4543 = vld [vmem:[%s4501 + $0x148] sm:$0xff]
        %v4544 = vld [vmem:[%s4501 + $0x150] sm:$0xff]
        %v4545 = vld [vmem:[%s4501 + $0x158] sm:$0xff]
        %v4546 = vld [vmem:[%s4501 + $0x160] sm:$0xff]
        %v4547 = vld [vmem:[%s4501 + $0x168] sm:$0xff]
        %v4548 = vld [vmem:[%s4501 + $0x170] sm:$0xff]
        %v4549 = vld [vmem:[%s4501 + $0x178] sm:$0xff]
        %v4550 = vld [vmem:[%s4501 + $0x180] sm:$0xff]
        %v4551 = vld [vmem:[%s4501 + $0x188] sm:$0xff]
        %v4552 = vld [vmem:[%s4501 + $0x190] sm:$0xff]
        %v4553 = vld [vmem:[%s4501 + $0x198] sm:$0xff]
        %v4554 = vld [vmem:[%s4501 + $0x1a0] sm:$0xff]
        %v4555 = vld [vmem:[%s4501 + $0x1a8] sm:$0xff]
        %v4556 = vld [vmem:[%s4501 + $0x1b0] sm:$0xff]
        %v4557 = vld [vmem:[%s4501 + $0x1b8] sm:$0xff]
        %v4558 = vld [vmem:[%s4501 + $0x1c0] sm:$0xff]
        %v4559 = vld [vmem:[%s4501 + $0x1c8] sm:$0xff]
        %v4560 = vld [vmem:[%s4501 + $0x1d0] sm:$0xff]
        %v4561 = vld [vmem:[%s4501 + $0x1d8] sm:$0xff]
        %v4562 = vld [vmem:[%s4501 + $0x1e0] sm:$0xff]
        %v4563 = vld [vmem:[%s4501 + $0x1e8] sm:$0xff]
        %v4564 = vld [vmem:[%s4501 + $0x1f0] sm:$0xff]
        %v4565 = vld [vmem:[%s4501 + $0x1f8] sm:$0xff]
        %s4566 = scalar_lea.vmem [#allocation5], 5120
        %v4567 = vld [vmem:[%s4566] sm:$0xff]
        %v4568 = vld [vmem:[%s4566 + $0x8] sm:$0xff]
        %v4569 = vld [vmem:[%s4566 + $0x10] sm:$0xff]
        %v4570 = vld [vmem:[%s4566 + $0x18] sm:$0xff]
        %v4571 = vld [vmem:[%s4566 + $0x20] sm:$0xff]
        %v4572 = vld [vmem:[%s4566 + $0x28] sm:$0xff]
        %v4573 = vld [vmem:[%s4566 + $0x30] sm:$0xff]
        %v4574 = vld [vmem:[%s4566 + $0x38] sm:$0xff]
        %v4575 = vld [vmem:[%s4566 + $0x40] sm:$0xff]
        %v4576 = vld [vmem:[%s4566 + $0x48] sm:$0xff]
        %v4577 = vld [vmem:[%s4566 + $0x50] sm:$0xff]
        %v4578 = vld [vmem:[%s4566 + $0x58] sm:$0xff]
        %v4579 = vld [vmem:[%s4566 + $0x60] sm:$0xff]
        %v4580 = vld [vmem:[%s4566 + $0x68] sm:$0xff]
        %v4581 = vld [vmem:[%s4566 + $0x70] sm:$0xff]
        %v4582 = vld [vmem:[%s4566 + $0x78] sm:$0xff]
        %v4583 = vld [vmem:[%s4566 + $0x80] sm:$0xff]
        %v4584 = vld [vmem:[%s4566 + $0x88] sm:$0xff]
        %v4585 = vld [vmem:[%s4566 + $0x90] sm:$0xff]
        %v4586 = vld [vmem:[%s4566 + $0x98] sm:$0xff]
        %v4587 = vld [vmem:[%s4566 + $0xa0] sm:$0xff]
        %v4588 = vld [vmem:[%s4566 + $0xa8] sm:$0xff]
        %v4589 = vld [vmem:[%s4566 + $0xb0] sm:$0xff]
        %v4590 = vld [vmem:[%s4566 + $0xb8] sm:$0xff]
        %v4591 = vld [vmem:[%s4566 + $0xc0] sm:$0xff]
        %v4592 = vld [vmem:[%s4566 + $0xc8] sm:$0xff]
        %v4593 = vld [vmem:[%s4566 + $0xd0] sm:$0xff]
        %v4594 = vld [vmem:[%s4566 + $0xd8] sm:$0xff]
        %v4595 = vld [vmem:[%s4566 + $0xe0] sm:$0xff]
        %v4596 = vld [vmem:[%s4566 + $0xe8] sm:$0xff]
        %v4597 = vld [vmem:[%s4566 + $0xf0] sm:$0xff]
        %v4598 = vld [vmem:[%s4566 + $0xf8] sm:$0xff]
        %v4599 = vld [vmem:[%s4566 + $0x100] sm:$0xff]
        %v4600 = vld [vmem:[%s4566 + $0x108] sm:$0xff]
        %v4601 = vld [vmem:[%s4566 + $0x110] sm:$0xff]
        %v4602 = vld [vmem:[%s4566 + $0x118] sm:$0xff]
        %v4603 = vld [vmem:[%s4566 + $0x120] sm:$0xff]
        %v4604 = vld [vmem:[%s4566 + $0x128] sm:$0xff]
        %v4605 = vld [vmem:[%s4566 + $0x130] sm:$0xff]
        %v4606 = vld [vmem:[%s4566 + $0x138] sm:$0xff]
        %v4607 = vld [vmem:[%s4566 + $0x140] sm:$0xff]
        %v4608 = vld [vmem:[%s4566 + $0x148] sm:$0xff]
        %v4609 = vld [vmem:[%s4566 + $0x150] sm:$0xff]
        %v4610 = vld [vmem:[%s4566 + $0x158] sm:$0xff]
        %v4611 = vld [vmem:[%s4566 + $0x160] sm:$0xff]
        %v4612 = vld [vmem:[%s4566 + $0x168] sm:$0xff]
        %v4613 = vld [vmem:[%s4566 + $0x170] sm:$0xff]
        %v4614 = vld [vmem:[%s4566 + $0x178] sm:$0xff]
        %v4615 = vld [vmem:[%s4566 + $0x180] sm:$0xff]
        %v4616 = vld [vmem:[%s4566 + $0x188] sm:$0xff]
        %v4617 = vld [vmem:[%s4566 + $0x190] sm:$0xff]
        %v4618 = vld [vmem:[%s4566 + $0x198] sm:$0xff]
        %v4619 = vld [vmem:[%s4566 + $0x1a0] sm:$0xff]
        %v4620 = vld [vmem:[%s4566 + $0x1a8] sm:$0xff]
        %v4621 = vld [vmem:[%s4566 + $0x1b0] sm:$0xff]
        %v4622 = vld [vmem:[%s4566 + $0x1b8] sm:$0xff]
        %v4623 = vld [vmem:[%s4566 + $0x1c0] sm:$0xff]
        %v4624 = vld [vmem:[%s4566 + $0x1c8] sm:$0xff]
        %v4625 = vld [vmem:[%s4566 + $0x1d0] sm:$0xff]
        %v4626 = vld [vmem:[%s4566 + $0x1d8] sm:$0xff]
        %v4627 = vld [vmem:[%s4566 + $0x1e0] sm:$0xff]
        %v4628 = vld [vmem:[%s4566 + $0x1e8] sm:$0xff]
        %v4629 = vld [vmem:[%s4566 + $0x1f0] sm:$0xff]
        %v4630 = vld [vmem:[%s4566 + $0x1f8] sm:$0xff]
        %4631 = vmatprep.subr.mxu0 %v4568
        %4632 = vmatpush1.msra.mxu0 %v4567
        %4633 = vmatprep.subr.mxu0 %v4570
        %4634 = vmatpush1.msra.mxu0 %v4569
        %4635 = vmatprep.subr.mxu0 %v4572
        %4636 = vmatpush1.msra.mxu0 %v4571
        %4637 = vmatprep.subr.mxu0 %v4574
        %4638 = vmatpush1.msra.mxu0 %v4573
        %4639 = vmatprep.subr.mxu0 %v4576
        %4640 = vmatpush1.msra.mxu0 %v4575
        %4641 = vmatprep.subr.mxu0 %v4578
        %4642 = vmatpush1.msra.mxu0 %v4577
        %4643 = vmatprep.subr.mxu0 %v4580
        %4644 = vmatpush1.msra.mxu0 %v4579
        %4645 = vmatprep.subr.mxu0 %v4582
        %4646 = vmatpush1.msra.mxu0 %v4581
        %4647 = vmatprep.subr.mxu0 %v4584
        %4648 = vmatpush1.msra.mxu0 %v4583
        %4649 = vmatprep.subr.mxu0 %v4586
        %4650 = vmatpush1.msra.mxu0 %v4585
        %4651 = vmatprep.subr.mxu0 %v4588
        %4652 = vmatpush1.msra.mxu0 %v4587
        %4653 = vmatprep.subr.mxu0 %v4590
        %4654 = vmatpush1.msra.mxu0 %v4589
        %4655 = vmatprep.subr.mxu0 %v4592
        %4656 = vmatpush1.msra.mxu0 %v4591
        %4657 = vmatprep.subr.mxu0 %v4594
        %4658 = vmatpush1.msra.mxu0 %v4593
        %4659 = vmatprep.subr.mxu0 %v4596
        %4660 = vmatpush1.msra.mxu0 %v4595
        %4661 = vmatprep.subr.mxu0 %v4598
        %4662 = vmatpush1.msra.mxu0 %v4597
        %4663 = vmatprep.subr.mxu0 %v4600
        %4664 = vmatpush1.msra.mxu0 %v4599
        %4665 = vmatprep.subr.mxu0 %v4602
        %4666 = vmatpush1.msra.mxu0 %v4601
        %4667 = vmatprep.subr.mxu0 %v4604
        %4668 = vmatpush1.msra.mxu0 %v4603
        %4669 = vmatprep.subr.mxu0 %v4606
        %4670 = vmatpush1.msra.mxu0 %v4605
        %4671 = vmatprep.subr.mxu0 %v4608
        %4672 = vmatpush1.msra.mxu0 %v4607
        %4673 = vmatprep.subr.mxu0 %v4610
        %4674 = vmatpush1.msra.mxu0 %v4609
        %4675 = vmatprep.subr.mxu0 %v4612
        %4676 = vmatpush1.msra.mxu0 %v4611
        %4677 = vmatprep.subr.mxu0 %v4614
        %4678 = vmatpush1.msra.mxu0 %v4613
        %4679 = vmatprep.subr.mxu0 %v4616
        %4680 = vmatpush1.msra.mxu0 %v4615
        %4681 = vmatprep.subr.mxu0 %v4618
        %4682 = vmatpush1.msra.mxu0 %v4617
        %4683 = vmatprep.subr.mxu0 %v4620
        %4684 = vmatpush1.msra.mxu0 %v4619
        %4685 = vmatprep.subr.mxu0 %v4622
        %4686 = vmatpush1.msra.mxu0 %v4621
        %4687 = vmatprep.subr.mxu0 %v4624
        %4688 = vmatpush1.msra.mxu0 %v4623
        %4689 = vmatprep.subr.mxu0 %v4626
        %4690 = vmatpush1.msra.mxu0 %v4625
        %4691 = vmatprep.subr.mxu0 %v4628
        %4692 = vmatpush1.msra.mxu0 %v4627
        %4693 = vmatprep.subr.mxu0 %v4630
        %4694 = vmatpush1.msra.mxu0 %v4629
        %4695 = vmatprep.mubr.f32.mxu0 %v4344
        %4696 = vmatmul.mubr.f32.gmra.mrb[0].mxu0 %v4343
        %v4697 = vpop.f32.mrb[0].mxu0
        %v4698 = vadd.f32 0.0, %v4697
        %v4699 = vpop.f32.mrb[0].mxu0
        %v4700 = vadd.f32 0.0, %v4699
        %4701 = vmatprep.mubr.f32.mxu0 %v4346
        %4702 = vmatmul.mubr.f32.gmra.mrb[0].mxu0 %v4345
        %v4703 = vpop.f32.mrb[0].mxu0
        %v4704 = vadd.f32 0.0, %v4703
        %v4705 = vpop.f32.mrb[0].mxu0
        %v4706 = vadd.f32 0.0, %v4705
        %4707 = vdwg.mxu0
        %4708 = vmatprep.subr.mxu0 %v4503
        %4709 = vmatpush1.msra.mxu0 %v4502
        %4710 = vmatprep.subr.mxu0 %v4505
        %4711 = vmatpush1.msra.mxu0 %v4504
        %4712 = vmatprep.subr.mxu0 %v4507
        %4713 = vmatpush1.msra.mxu0 %v4506
        %4714 = vmatprep.subr.mxu0 %v4509
        %4715 = vmatpush1.msra.mxu0 %v4508
        %4716 = vmatprep.subr.mxu0 %v4511
        %4717 = vmatpush1.msra.mxu0 %v4510
        %4718 = vmatprep.subr.mxu0 %v4513
        %4719 = vmatpush1.msra.mxu0 %v4512
        %4720 = vmatprep.subr.mxu0 %v4515
        %4721 = vmatpush1.msra.mxu0 %v4514
        %4722 = vmatprep.subr.mxu0 %v4517
        %4723 = vmatpush1.msra.mxu0 %v4516
        %4724 = vmatprep.subr.mxu0 %v4519
        %4725 = vmatpush1.msra.mxu0 %v4518
        %4726 = vmatprep.subr.mxu0 %v4521
        %4727 = vmatpush1.msra.mxu0 %v4520
        %4728 = vmatprep.subr.mxu0 %v4523
        %4729 = vmatpush1.msra.mxu0 %v4522
        %4730 = vmatprep.subr.mxu0 %v4525
        %4731 = vmatpush1.msra.mxu0 %v4524
        %4732 = vmatprep.subr.mxu0 %v4527
        %4733 = vmatpush1.msra.mxu0 %v4526
        %4734 = vmatprep.subr.mxu0 %v4529
        %4735 = vmatpush1.msra.mxu0 %v4528
        %4736 = vmatprep.subr.mxu0 %v4531
        %4737 = vmatpush1.msra.mxu0 %v4530
        %4738 = vmatprep.subr.mxu0 %v4533
        %4739 = vmatpush1.msra.mxu0 %v4532
        %4740 = vmatprep.subr.mxu0 %v4535
        %4741 = vmatpush1.msra.mxu0 %v4534
        %4742 = vmatprep.subr.mxu0 %v4537
        %4743 = vmatpush1.msra.mxu0 %v4536
        %4744 = vmatprep.subr.mxu0 %v4539
        %4745 = vmatpush1.msra.mxu0 %v4538
        %4746 = vmatprep.subr.mxu0 %v4541
        %4747 = vmatpush1.msra.mxu0 %v4540
        %4748 = vmatprep.subr.mxu0 %v4543
        %4749 = vmatpush1.msra.mxu0 %v4542
        %4750 = vmatprep.subr.mxu0 %v4545
        %4751 = vmatpush1.msra.mxu0 %v4544
        %4752 = vmatprep.subr.mxu0 %v4547
        %4753 = vmatpush1.msra.mxu0 %v4546
        %4754 = vmatprep.subr.mxu0 %v4549
        %4755 = vmatpush1.msra.mxu0 %v4548
        %4756 = vmatprep.subr.mxu0 %v4551
        %4757 = vmatpush1.msra.mxu0 %v4550
        %4758 = vmatprep.subr.mxu0 %v4553
        %4759 = vmatpush1.msra.mxu0 %v4552
        %4760 = vmatprep.subr.mxu0 %v4555
        %4761 = vmatpush1.msra.mxu0 %v4554
        %4762 = vmatprep.subr.mxu0 %v4557
        %4763 = vmatpush1.msra.mxu0 %v4556
        %4764 = vmatprep.subr.mxu0 %v4559
        %4765 = vmatpush1.msra.mxu0 %v4558
        %4766 = vmatprep.subr.mxu0 %v4561
        %4767 = vmatpush1.msra.mxu0 %v4560
        %4768 = vmatprep.subr.mxu0 %v4563
        %4769 = vmatpush1.msra.mxu0 %v4562
        %4770 = vmatprep.subr.mxu0 %v4565
        %4771 = vmatpush1.msra.mxu0 %v4564
        %4772 = vmatprep.mubr.f32.mxu0 %v4416
        %4773 = vmatmul.mubr.f32.gmra.mrb[0].mxu0 %v4414
        %v4774 = vpop.f32.mrb[0].mxu0
        %v4775 = vadd.f32 %v4698, %v4774
        %v4776 = vpop.f32.mrb[0].mxu0
        %v4777 = vadd.f32 %v4700, %v4776
        %4778 = vmatprep.mubr.f32.mxu0 %v4422
        %4779 = vmatmul.mubr.f32.gmra.mrb[0].mxu0 %v4420
        %v4780 = vpop.f32.mrb[0].mxu0
        %v4781 = vadd.f32 %v4704, %v4780
        %v4782 = vpop.f32.mrb[0].mxu0
        %v4783 = vadd.f32 %v4706, %v4782
        %4784 = vdwg.mxu0
        %s4785 = scalar_lea.vmem [#allocation5], 5632
        %v4786 = vld [vmem:[%s4785] sm:$0xff]
        %v4787 = vld [vmem:[%s4785 + $0x8] sm:$0xff]
        %v4788 = vld [vmem:[%s4785 + $0x10] sm:$0xff]
        %v4789 = vld [vmem:[%s4785 + $0x18] sm:$0xff]
        %v4790 = vld [vmem:[%s4785 + $0x20] sm:$0xff]
        %v4791 = vld [vmem:[%s4785 + $0x28] sm:$0xff]
        %v4792 = vld [vmem:[%s4785 + $0x30] sm:$0xff]
        %v4793 = vld [vmem:[%s4785 + $0x38] sm:$0xff]
        %v4794 = vld [vmem:[%s4785 + $0x40] sm:$0xff]
        %v4795 = vld [vmem:[%s4785 + $0x48] sm:$0xff]
        %v4796 = vld [vmem:[%s4785 + $0x50] sm:$0xff]
        %v4797 = vld [vmem:[%s4785 + $0x58] sm:$0xff]
        %v4798 = vld [vmem:[%s4785 + $0x60] sm:$0xff]
        %v4799 = vld [vmem:[%s4785 + $0x68] sm:$0xff]
        %v4800 = vld [vmem:[%s4785 + $0x70] sm:$0xff]
        %v4801 = vld [vmem:[%s4785 + $0x78] sm:$0xff]
        %v4802 = vld [vmem:[%s4785 + $0x80] sm:$0xff]
        %v4803 = vld [vmem:[%s4785 + $0x88] sm:$0xff]
        %v4804 = vld [vmem:[%s4785 + $0x90] sm:$0xff]
        %v4805 = vld [vmem:[%s4785 + $0x98] sm:$0xff]
        %v4806 = vld [vmem:[%s4785 + $0xa0] sm:$0xff]
        %v4807 = vld [vmem:[%s4785 + $0xa8] sm:$0xff]
        %v4808 = vld [vmem:[%s4785 + $0xb0] sm:$0xff]
        %v4809 = vld [vmem:[%s4785 + $0xb8] sm:$0xff]
        %v4810 = vld [vmem:[%s4785 + $0xc0] sm:$0xff]
        %v4811 = vld [vmem:[%s4785 + $0xc8] sm:$0xff]
        %v4812 = vld [vmem:[%s4785 + $0xd0] sm:$0xff]
        %v4813 = vld [vmem:[%s4785 + $0xd8] sm:$0xff]
        %v4814 = vld [vmem:[%s4785 + $0xe0] sm:$0xff]
        %v4815 = vld [vmem:[%s4785 + $0xe8] sm:$0xff]
        %v4816 = vld [vmem:[%s4785 + $0xf0] sm:$0xff]
        %v4817 = vld [vmem:[%s4785 + $0xf8] sm:$0xff]
        %v4818 = vld [vmem:[%s4785 + $0x100] sm:$0xff]
        %v4819 = vld [vmem:[%s4785 + $0x108] sm:$0xff]
        %v4820 = vld [vmem:[%s4785 + $0x110] sm:$0xff]
        %v4821 = vld [vmem:[%s4785 + $0x118] sm:$0xff]
        %v4822 = vld [vmem:[%s4785 + $0x120] sm:$0xff]
        %v4823 = vld [vmem:[%s4785 + $0x128] sm:$0xff]
        %v4824 = vld [vmem:[%s4785 + $0x130] sm:$0xff]
        %v4825 = vld [vmem:[%s4785 + $0x138] sm:$0xff]
        %v4826 = vld [vmem:[%s4785 + $0x140] sm:$0xff]
        %v4827 = vld [vmem:[%s4785 + $0x148] sm:$0xff]
        %v4828 = vld [vmem:[%s4785 + $0x150] sm:$0xff]
        %v4829 = vld [vmem:[%s4785 + $0x158] sm:$0xff]
        %v4830 = vld [vmem:[%s4785 + $0x160] sm:$0xff]
        %v4831 = vld [vmem:[%s4785 + $0x168] sm:$0xff]
        %v4832 = vld [vmem:[%s4785 + $0x170] sm:$0xff]
        %v4833 = vld [vmem:[%s4785 + $0x178] sm:$0xff]
        %v4834 = vld [vmem:[%s4785 + $0x180] sm:$0xff]
        %v4835 = vld [vmem:[%s4785 + $0x188] sm:$0xff]
        %v4836 = vld [vmem:[%s4785 + $0x190] sm:$0xff]
        %v4837 = vld [vmem:[%s4785 + $0x198] sm:$0xff]
        %v4838 = vld [vmem:[%s4785 + $0x1a0] sm:$0xff]
        %v4839 = vld [vmem:[%s4785 + $0x1a8] sm:$0xff]
        %v4840 = vld [vmem:[%s4785 + $0x1b0] sm:$0xff]
        %v4841 = vld [vmem:[%s4785 + $0x1b8] sm:$0xff]
        %v4842 = vld [vmem:[%s4785 + $0x1c0] sm:$0xff]
        %v4843 = vld [vmem:[%s4785 + $0x1c8] sm:$0xff]
        %v4844 = vld [vmem:[%s4785 + $0x1d0] sm:$0xff]
        %v4845 = vld [vmem:[%s4785 + $0x1d8] sm:$0xff]
        %v4846 = vld [vmem:[%s4785 + $0x1e0] sm:$0xff]
        %v4847 = vld [vmem:[%s4785 + $0x1e8] sm:$0xff]
        %v4848 = vld [vmem:[%s4785 + $0x1f0] sm:$0xff]
        %v4849 = vld [vmem:[%s4785 + $0x1f8] sm:$0xff]
        %4850 = vmatprep.subr.mxu0 %v4787
        %4851 = vmatpush1.msra.mxu0 %v4786
        %4852 = vmatprep.subr.mxu0 %v4789
        %4853 = vmatpush1.msra.mxu0 %v4788
        %4854 = vmatprep.subr.mxu0 %v4791
        %4855 = vmatpush1.msra.mxu0 %v4790
        %4856 = vmatprep.subr.mxu0 %v4793
        %4857 = vmatpush1.msra.mxu0 %v4792
        %4858 = vmatprep.subr.mxu0 %v4795
        %4859 = vmatpush1.msra.mxu0 %v4794
        %4860 = vmatprep.subr.mxu0 %v4797
        %4861 = vmatpush1.msra.mxu0 %v4796
        %4862 = vmatprep.subr.mxu0 %v4799
        %4863 = vmatpush1.msra.mxu0 %v4798
        %4864 = vmatprep.subr.mxu0 %v4801
        %4865 = vmatpush1.msra.mxu0 %v4800
        %4866 = vmatprep.subr.mxu0 %v4803
        %4867 = vmatpush1.msra.mxu0 %v4802
        %4868 = vmatprep.subr.mxu0 %v4805
        %4869 = vmatpush1.msra.mxu0 %v4804
        %4870 = vmatprep.subr.mxu0 %v4807
        %4871 = vmatpush1.msra.mxu0 %v4806
        %4872 = vmatprep.subr.mxu0 %v4809
        %4873 = vmatpush1.msra.mxu0 %v4808
        %4874 = vmatprep.subr.mxu0 %v4811
        %4875 = vmatpush1.msra.mxu0 %v4810
        %4876 = vmatprep.subr.mxu0 %v4813
        %4877 = vmatpush1.msra.mxu0 %v4812
        %4878 = vmatprep.subr.mxu0 %v4815
        %4879 = vmatpush1.msra.mxu0 %v4814
        %4880 = vmatprep.subr.mxu0 %v4817
        %4881 = vmatpush1.msra.mxu0 %v4816
        %4882 = vmatprep.subr.mxu0 %v4819
        %4883 = vmatpush1.msra.mxu0 %v4818
        %4884 = vmatprep.subr.mxu0 %v4821
        %4885 = vmatpush1.msra.mxu0 %v4820
        %4886 = vmatprep.subr.mxu0 %v4823
        %4887 = vmatpush1.msra.mxu0 %v4822
        %4888 = vmatprep.subr.mxu0 %v4825
        %4889 = vmatpush1.msra.mxu0 %v4824
        %4890 = vmatprep.subr.mxu0 %v4827
        %4891 = vmatpush1.msra.mxu0 %v4826
        %4892 = vmatprep.subr.mxu0 %v4829
        %4893 = vmatpush1.msra.mxu0 %v4828
        %4894 = vmatprep.subr.mxu0 %v4831
        %4895 = vmatpush1.msra.mxu0 %v4830
        %4896 = vmatprep.subr.mxu0 %v4833
        %4897 = vmatpush1.msra.mxu0 %v4832
        %4898 = vmatprep.subr.mxu0 %v4835
        %4899 = vmatpush1.msra.mxu0 %v4834
        %4900 = vmatprep.subr.mxu0 %v4837
        %4901 = vmatpush1.msra.mxu0 %v4836
        %4902 = vmatprep.subr.mxu0 %v4839
        %4903 = vmatpush1.msra.mxu0 %v4838
        %4904 = vmatprep.subr.mxu0 %v4841
        %4905 = vmatpush1.msra.mxu0 %v4840
        %4906 = vmatprep.subr.mxu0 %v4843
        %4907 = vmatpush1.msra.mxu0 %v4842
        %4908 = vmatprep.subr.mxu0 %v4845
        %4909 = vmatpush1.msra.mxu0 %v4844
        %4910 = vmatprep.subr.mxu0 %v4847
        %4911 = vmatpush1.msra.mxu0 %v4846
        %4912 = vmatprep.subr.mxu0 %v4849
        %4913 = vmatpush1.msra.mxu0 %v4848
        %4914 = vmatprep.mubr.f32.mxu0 %v4493
        %4915 = vmatmul.mubr.f32.gmra.mrb[0].mxu0 %v4491
        %v4916 = vpop.f32.mrb[0].mxu0
        %v4917 = vadd.f32 0.0, %v4916
        %v4918 = vpop.f32.mrb[0].mxu0
        %v4919 = vadd.f32 0.0, %v4918
        %4920 = vmatprep.mubr.f32.mxu0 %v4499
        %4921 = vmatmul.mubr.f32.gmra.mrb[0].mxu0 %v4497
        %v4922 = vpop.f32.mrb[0].mxu0
        %v4923 = vadd.f32 0.0, %v4922
        %v4924 = vpop.f32.mrb[0].mxu0
        %v4925 = vadd.f32 0.0, %v4924
        %4926 = vdwg.mxu0
        %v4927 = vadd.f32 %v4775, %v4917
        %v4928 = vadd.f32 %v4777, %v4919
        %v4929 = vadd.f32 %v4781, %v4923
        %v4930 = vadd.f32 %v4783, %v4925
        %s4931 = scalar_lea.vmem [#allocation7], 6
        %v4932 = vld [vmem:[%s4931] sm:$0x3]
        %v4934 = vlaneseq
        %v4935 = vshrl.u32 %v4934, 7
        %v4936 = vsub.s32 0, %v4935
        %v4937 = vrot.slane %v4932, %v4936
        %v4938 = vlaneseq
        %v4939 = vshrl.u32 %v4938, 7
        %v4940 = vsub.s32 1, %v4939
        %v4941 = vrot.slane %v4932, %v4940
        %v4944 = vmul.f32 %v4927, %v4937
        %v4945 = vmul.f32 %v4928, %v4941
        %v4946 = vmul.f32 %v4929, %v4937
        %v4947 = vmul.f32 %v4930, %v4941
        %s4948 = scalar_lea.vmem [#allocation8], 6
        %v4949 = vld [vmem:[%s4948] sm:$0x3]
        %v4951 = vlaneseq
        %v4952 = vshrl.u32 %v4951, 7
        %v4953 = vsub.s32 0, %v4952
        %v4954 = vrot.slane %v4949, %v4953
        %v4955 = vlaneseq
        %v4956 = vshrl.u32 %v4955, 7
        %v4957 = vsub.s32 1, %v4956
        %v4958 = vrot.slane %v4949, %v4957
        %v4961 = vadd.f32 %v4944, %v4954
        %v4962 = vadd.f32 %v4945, %v4958
        %v4963 = vadd.f32 %v4946, %v4954
        %v4964 = vadd.f32 %v4947, %v4958
        %v4965 = vmax.f32 %v4961, 0.0
        %v4966 = vmax.f32 %v4962, 0.0
        %v4967 = vmax.f32 %v4963, 0.0
        %v4968 = vmax.f32 %v4964, 0.0
        %4969 = vmatprep.subr.mxu0 %v4966
        %4970 = vmatpush1.msra.mxu0 %v4965
        %4971 = vmatprep.subr.mxu0 %v4968
        %4972 = vmatpush1.msra.mxu0 %v4967
        %4973 = vmatprep.subr.mxu0 0.0
        %4974 = vmatpush1.msra.mxu0 0.0
        %4975 = vmatprep.subr.mxu0 0.0
        %4976 = vmatpush1.msra.mxu0 0.0
        %4977 = vmatprep.subr.mxu0 0.0
        %4978 = vmatpush1.msra.mxu0 0.0
        %4979 = vmatprep.subr.mxu0 0.0
        %4980 = vmatpush1.msra.mxu0 0.0
        %4981 = vmatprep.subr.mxu0 0.0
        %4982 = vmatpush1.msra.mxu0 0.0
        %4983 = vmatprep.subr.mxu0 0.0
        %4984 = vmatpush1.msra.mxu0 0.0
        %4985 = vmatprep.subr.mxu0 0.0
        %4986 = vmatpush1.msra.mxu0 0.0
        %4987 = vmatprep.subr.mxu0 0.0
        %4988 = vmatpush1.msra.mxu0 0.0
        %4989 = vmatprep.subr.mxu0 0.0
        %4990 = vmatpush1.msra.mxu0 0.0
        %4991 = vmatprep.subr.mxu0 0.0
        %4992 = vmatpush1.msra.mxu0 0.0
        %4993 = vmatprep.subr.mxu0 0.0
        %4994 = vmatpush1.msra.mxu0 0.0
        %4995 = vmatprep.subr.mxu0 0.0
        %4996 = vmatpush1.msra.mxu0 0.0
        %4997 = vmatprep.subr.mxu0 0.0
        %4998 = vmatpush1.msra.mxu0 0.0
        %4999 = vmatprep.subr.mxu0 0.0
        %5000 = vmatpush1.msra.mxu0 0.0
        %5001 = vmatprep.subr.mxu0 0.0
        %5002 = vmatpush1.msra.mxu0 0.0
        %5003 = vmatprep.subr.mxu0 0.0
        %5004 = vmatpush1.msra.mxu0 0.0
        %5005 = vmatprep.subr.mxu0 0.0
        %5006 = vmatpush1.msra.mxu0 0.0
        %5007 = vmatprep.subr.mxu0 0.0
        %5008 = vmatpush1.msra.mxu0 0.0
        %5009 = vmatprep.subr.mxu0 0.0
        %5010 = vmatpush1.msra.mxu0 0.0
        %5011 = vmatprep.subr.mxu0 0.0
        %5012 = vmatpush1.msra.mxu0 0.0
        %5013 = vmatprep.subr.mxu0 0.0
        %5014 = vmatpush1.msra.mxu0 0.0
        %5015 = vmatprep.subr.mxu0 0.0
        %5016 = vmatpush1.msra.mxu0 0.0
        %5017 = vmatprep.subr.mxu0 0.0
        %5018 = vmatpush1.msra.mxu0 0.0
        %5019 = vmatprep.subr.mxu0 0.0
        %5020 = vmatpush1.msra.mxu0 0.0
        %5021 = vmatprep.subr.mxu0 0.0
        %5022 = vmatpush1.msra.mxu0 0.0
        %5023 = vmatprep.subr.mxu0 0.0
        %5024 = vmatpush1.msra.mxu0 0.0
        %5025 = vmatprep.subr.mxu0 0.0
        %5026 = vmatpush1.msra.mxu0 0.0
        %5027 = vmatprep.subr.mxu0 0.0
        %5028 = vmatpush1.msra.mxu0 0.0
        %5029 = vmatprep.subr.mxu0 0.0
        %5030 = vmatpush1.msra.mxu0 0.0
        %5031 = vmatprep.subr.mxu0 0.0
        %5032 = vmatpush1.msra.mxu0 0.0
        %5033 = vmatprep.mubr.f32.mxu0 0.0
        %5034 = vmatmul.mubr.f32.gmra.mrb[0].mxu0 %v645
        %v5035 = vpop.f32.mrb[0].mxu0
        %v5036 = vadd.f32 0.0, %v5035
        %v5037 = vpop.f32.mrb[0].mxu0
        %v5038 = vadd.f32 0.0, %v5037
        %5039 = vmatprep.mubr.f32.mxu0 0.0
        %5040 = vmatmul.mubr.f32.gmra.mrb[0].mxu0 %v648
        %v5041 = vpop.f32.mrb[0].mxu0
        %v5042 = vadd.f32 0.0, %v5041
        %v5043 = vpop.f32.mrb[0].mxu0
        %v5044 = vadd.f32 0.0, %v5043
        %5045 = vdwg.mxu0
        %5046 = vmatprep.subr.mxu0 %v4966
        %5047 = vmatpush1.msra.mxu0 %v4965
        %5048 = vmatprep.subr.mxu0 %v4968
        %5049 = vmatpush1.msra.mxu0 %v4967
        %5050 = vmatprep.subr.mxu0 0.0
        %5051 = vmatpush1.msra.mxu0 0.0
        %5052 = vmatprep.subr.mxu0 0.0
        %5053 = vmatpush1.msra.mxu0 0.0
        %5054 = vmatprep.subr.mxu0 0.0
        %5055 = vmatpush1.msra.mxu0 0.0
        %5056 = vmatprep.subr.mxu0 0.0
        %5057 = vmatpush1.msra.mxu0 0.0
        %5058 = vmatprep.subr.mxu0 0.0
        %5059 = vmatpush1.msra.mxu0 0.0
        %5060 = vmatprep.subr.mxu0 0.0
        %5061 = vmatpush1.msra.mxu0 0.0
        %5062 = vmatprep.subr.mxu0 0.0
        %5063 = vmatpush1.msra.mxu0 0.0
        %5064 = vmatprep.subr.mxu0 0.0
        %5065 = vmatpush1.msra.mxu0 0.0
        %5066 = vmatprep.subr.mxu0 0.0
        %5067 = vmatpush1.msra.mxu0 0.0
        %5068 = vmatprep.subr.mxu0 0.0
        %5069 = vmatpush1.msra.mxu0 0.0
        %5070 = vmatprep.subr.mxu0 0.0
        %5071 = vmatpush1.msra.mxu0 0.0
        %5072 = vmatprep.subr.mxu0 0.0
        %5073 = vmatpush1.msra.mxu0 0.0
        %5074 = vmatprep.subr.mxu0 0.0
        %5075 = vmatpush1.msra.mxu0 0.0
        %5076 = vmatprep.subr.mxu0 0.0
        %5077 = vmatpush1.msra.mxu0 0.0
        %5078 = vmatprep.subr.mxu0 0.0
        %5079 = vmatpush1.msra.mxu0 0.0
        %5080 = vmatprep.subr.mxu0 0.0
        %5081 = vmatpush1.msra.mxu0 0.0
        %5082 = vmatprep.subr.mxu0 0.0
        %5083 = vmatpush1.msra.mxu0 0.0
        %5084 = vmatprep.subr.mxu0 0.0
        %5085 = vmatpush1.msra.mxu0 0.0
        %5086 = vmatprep.subr.mxu0 0.0
        %5087 = vmatpush1.msra.mxu0 0.0
        %5088 = vmatprep.subr.mxu0 0.0
        %5089 = vmatpush1.msra.mxu0 0.0
        %5090 = vmatprep.subr.mxu0 0.0
        %5091 = vmatpush1.msra.mxu0 0.0
        %5092 = vmatprep.subr.mxu0 0.0
        %5093 = vmatpush1.msra.mxu0 0.0
        %5094 = vmatprep.subr.mxu0 0.0
        %5095 = vmatpush1.msra.mxu0 0.0
        %5096 = vmatprep.subr.mxu0 0.0
        %5097 = vmatpush1.msra.mxu0 0.0
        %5098 = vmatprep.subr.mxu0 0.0
        %5099 = vmatpush1.msra.mxu0 0.0
        %5100 = vmatprep.subr.mxu0 0.0
        %5101 = vmatpush1.msra.mxu0 0.0
        %5102 = vmatprep.subr.mxu0 0.0
        %5103 = vmatpush1.msra.mxu0 0.0
        %5104 = vmatprep.subr.mxu0 0.0
        %5105 = vmatpush1.msra.mxu0 0.0
        %5106 = vmatprep.subr.mxu0 0.0
        %5107 = vmatpush1.msra.mxu0 0.0
        %5108 = vmatprep.subr.mxu0 0.0
        %5109 = vmatpush1.msra.mxu0 0.0
        %5110 = vmatprep.mubr.f32.mxu0 0.0
        %5111 = vmatmul.mubr.f32.gmra.mrb[0].mxu0 %v731
        %v5112 = vpop.f32.mrb[0].mxu0
        %v5113 = vadd.f32 0.0, %v5112
        %v5114 = vpop.f32.mrb[0].mxu0
        %v5115 = vadd.f32 0.0, %v5114
        %5116 = vmatprep.mubr.f32.mxu0 0.0
        %5117 = vmatmul.mubr.f32.gmra.mrb[0].mxu0 %v734
        %v5118 = vpop.f32.mrb[0].mxu0
        %v5119 = vadd.f32 0.0, %v5118
        %v5120 = vpop.f32.mrb[0].mxu0
        %v5121 = vadd.f32 0.0, %v5120
        %5122 = vdwg.mxu0
        %s5123 = scalar_lea.vmem [#allocation10], 4608
        %v5124 = vld [vmem:[%s5123] sm:$0xff]
        %v5125 = vld [vmem:[%s5123 + $0x8] sm:$0xff]
        %v5126 = vld [vmem:[%s5123 + $0x10] sm:$0xff]
        %v5127 = vld [vmem:[%s5123 + $0x18] sm:$0xff]
        %v5128 = vld [vmem:[%s5123 + $0x20] sm:$0xff]
        %v5129 = vld [vmem:[%s5123 + $0x28] sm:$0xff]
        %v5130 = vld [vmem:[%s5123 + $0x30] sm:$0xff]
        %v5131 = vld [vmem:[%s5123 + $0x38] sm:$0xff]
        %v5132 = vld [vmem:[%s5123 + $0x40] sm:$0xff]
        %v5133 = vld [vmem:[%s5123 + $0x48] sm:$0xff]
        %v5134 = vld [vmem:[%s5123 + $0x50] sm:$0xff]
        %v5135 = vld [vmem:[%s5123 + $0x58] sm:$0xff]
        %v5136 = vld [vmem:[%s5123 + $0x60] sm:$0xff]
        %v5137 = vld [vmem:[%s5123 + $0x68] sm:$0xff]
        %v5138 = vld [vmem:[%s5123 + $0x70] sm:$0xff]
        %v5139 = vld [vmem:[%s5123 + $0x78] sm:$0xff]
        %v5140 = vld [vmem:[%s5123 + $0x80] sm:$0xff]
        %v5141 = vld [vmem:[%s5123 + $0x88] sm:$0xff]
        %v5142 = vld [vmem:[%s5123 + $0x90] sm:$0xff]
        %v5143 = vld [vmem:[%s5123 + $0x98] sm:$0xff]
        %v5144 = vld [vmem:[%s5123 + $0xa0] sm:$0xff]
        %v5145 = vld [vmem:[%s5123 + $0xa8] sm:$0xff]
        %v5146 = vld [vmem:[%s5123 + $0xb0] sm:$0xff]
        %v5147 = vld [vmem:[%s5123 + $0xb8] sm:$0xff]
        %v5148 = vld [vmem:[%s5123 + $0xc0] sm:$0xff]
        %v5149 = vld [vmem:[%s5123 + $0xc8] sm:$0xff]
        %v5150 = vld [vmem:[%s5123 + $0xd0] sm:$0xff]
        %v5151 = vld [vmem:[%s5123 + $0xd8] sm:$0xff]
        %v5152 = vld [vmem:[%s5123 + $0xe0] sm:$0xff]
        %v5153 = vld [vmem:[%s5123 + $0xe8] sm:$0xff]
        %v5154 = vld [vmem:[%s5123 + $0xf0] sm:$0xff]
        %v5155 = vld [vmem:[%s5123 + $0xf8] sm:$0xff]
        %v5156 = vld [vmem:[%s5123 + $0x100] sm:$0xff]
        %v5157 = vld [vmem:[%s5123 + $0x108] sm:$0xff]
        %v5158 = vld [vmem:[%s5123 + $0x110] sm:$0xff]
        %v5159 = vld [vmem:[%s5123 + $0x118] sm:$0xff]
        %v5160 = vld [vmem:[%s5123 + $0x120] sm:$0xff]
        %v5161 = vld [vmem:[%s5123 + $0x128] sm:$0xff]
        %v5162 = vld [vmem:[%s5123 + $0x130] sm:$0xff]
        %v5163 = vld [vmem:[%s5123 + $0x138] sm:$0xff]
        %v5164 = vld [vmem:[%s5123 + $0x140] sm:$0xff]
        %v5165 = vld [vmem:[%s5123 + $0x148] sm:$0xff]
        %v5166 = vld [vmem:[%s5123 + $0x150] sm:$0xff]
        %v5167 = vld [vmem:[%s5123 + $0x158] sm:$0xff]
        %v5168 = vld [vmem:[%s5123 + $0x160] sm:$0xff]
        %v5169 = vld [vmem:[%s5123 + $0x168] sm:$0xff]
        %v5170 = vld [vmem:[%s5123 + $0x170] sm:$0xff]
        %v5171 = vld [vmem:[%s5123 + $0x178] sm:$0xff]
        %v5172 = vld [vmem:[%s5123 + $0x180] sm:$0xff]
        %v5173 = vld [vmem:[%s5123 + $0x188] sm:$0xff]
        %v5174 = vld [vmem:[%s5123 + $0x190] sm:$0xff]
        %v5175 = vld [vmem:[%s5123 + $0x198] sm:$0xff]
        %v5176 = vld [vmem:[%s5123 + $0x1a0] sm:$0xff]
        %v5177 = vld [vmem:[%s5123 + $0x1a8] sm:$0xff]
        %v5178 = vld [vmem:[%s5123 + $0x1b0] sm:$0xff]
        %v5179 = vld [vmem:[%s5123 + $0x1b8] sm:$0xff]
        %v5180 = vld [vmem:[%s5123 + $0x1c0] sm:$0xff]
        %v5181 = vld [vmem:[%s5123 + $0x1c8] sm:$0xff]
        %v5182 = vld [vmem:[%s5123 + $0x1d0] sm:$0xff]
        %v5183 = vld [vmem:[%s5123 + $0x1d8] sm:$0xff]
        %v5184 = vld [vmem:[%s5123 + $0x1e0] sm:$0xff]
        %v5185 = vld [vmem:[%s5123 + $0x1e8] sm:$0xff]
        %v5186 = vld [vmem:[%s5123 + $0x1f0] sm:$0xff]
        %v5187 = vld [vmem:[%s5123 + $0x1f8] sm:$0xff]
        %s5188 = scalar_lea.vmem [#allocation10], 5120
        %v5189 = vld [vmem:[%s5188] sm:$0xff]
        %v5190 = vld [vmem:[%s5188 + $0x8] sm:$0xff]
        %v5191 = vld [vmem:[%s5188 + $0x10] sm:$0xff]
        %v5192 = vld [vmem:[%s5188 + $0x18] sm:$0xff]
        %v5193 = vld [vmem:[%s5188 + $0x20] sm:$0xff]
        %v5194 = vld [vmem:[%s5188 + $0x28] sm:$0xff]
        %v5195 = vld [vmem:[%s5188 + $0x30] sm:$0xff]
        %v5196 = vld [vmem:[%s5188 + $0x38] sm:$0xff]
        %v5197 = vld [vmem:[%s5188 + $0x40] sm:$0xff]
        %v5198 = vld [vmem:[%s5188 + $0x48] sm:$0xff]
        %v5199 = vld [vmem:[%s5188 + $0x50] sm:$0xff]
        %v5200 = vld [vmem:[%s5188 + $0x58] sm:$0xff]
        %v5201 = vld [vmem:[%s5188 + $0x60] sm:$0xff]
        %v5202 = vld [vmem:[%s5188 + $0x68] sm:$0xff]
        %v5203 = vld [vmem:[%s5188 + $0x70] sm:$0xff]
        %v5204 = vld [vmem:[%s5188 + $0x78] sm:$0xff]
        %v5205 = vld [vmem:[%s5188 + $0x80] sm:$0xff]
        %v5206 = vld [vmem:[%s5188 + $0x88] sm:$0xff]
        %v5207 = vld [vmem:[%s5188 + $0x90] sm:$0xff]
        %v5208 = vld [vmem:[%s5188 + $0x98] sm:$0xff]
        %v5209 = vld [vmem:[%s5188 + $0xa0] sm:$0xff]
        %v5210 = vld [vmem:[%s5188 + $0xa8] sm:$0xff]
        %v5211 = vld [vmem:[%s5188 + $0xb0] sm:$0xff]
        %v5212 = vld [vmem:[%s5188 + $0xb8] sm:$0xff]
        %v5213 = vld [vmem:[%s5188 + $0xc0] sm:$0xff]
        %v5214 = vld [vmem:[%s5188 + $0xc8] sm:$0xff]
        %v5215 = vld [vmem:[%s5188 + $0xd0] sm:$0xff]
        %v5216 = vld [vmem:[%s5188 + $0xd8] sm:$0xff]
        %v5217 = vld [vmem:[%s5188 + $0xe0] sm:$0xff]
        %v5218 = vld [vmem:[%s5188 + $0xe8] sm:$0xff]
        %v5219 = vld [vmem:[%s5188 + $0xf0] sm:$0xff]
        %v5220 = vld [vmem:[%s5188 + $0xf8] sm:$0xff]
        %v5221 = vld [vmem:[%s5188 + $0x100] sm:$0xff]
        %v5222 = vld [vmem:[%s5188 + $0x108] sm:$0xff]
        %v5223 = vld [vmem:[%s5188 + $0x110] sm:$0xff]
        %v5224 = vld [vmem:[%s5188 + $0x118] sm:$0xff]
        %v5225 = vld [vmem:[%s5188 + $0x120] sm:$0xff]
        %v5226 = vld [vmem:[%s5188 + $0x128] sm:$0xff]
        %v5227 = vld [vmem:[%s5188 + $0x130] sm:$0xff]
        %v5228 = vld [vmem:[%s5188 + $0x138] sm:$0xff]
        %v5229 = vld [vmem:[%s5188 + $0x140] sm:$0xff]
        %v5230 = vld [vmem:[%s5188 + $0x148] sm:$0xff]
        %v5231 = vld [vmem:[%s5188 + $0x150] sm:$0xff]
        %v5232 = vld [vmem:[%s5188 + $0x158] sm:$0xff]
        %v5233 = vld [vmem:[%s5188 + $0x160] sm:$0xff]
        %v5234 = vld [vmem:[%s5188 + $0x168] sm:$0xff]
        %v5235 = vld [vmem:[%s5188 + $0x170] sm:$0xff]
        %v5236 = vld [vmem:[%s5188 + $0x178] sm:$0xff]
        %v5237 = vld [vmem:[%s5188 + $0x180] sm:$0xff]
        %v5238 = vld [vmem:[%s5188 + $0x188] sm:$0xff]
        %v5239 = vld [vmem:[%s5188 + $0x190] sm:$0xff]
        %v5240 = vld [vmem:[%s5188 + $0x198] sm:$0xff]
        %v5241 = vld [vmem:[%s5188 + $0x1a0] sm:$0xff]
        %v5242 = vld [vmem:[%s5188 + $0x1a8] sm:$0xff]
        %v5243 = vld [vmem:[%s5188 + $0x1b0] sm:$0xff]
        %v5244 = vld [vmem:[%s5188 + $0x1b8] sm:$0xff]
        %v5245 = vld [vmem:[%s5188 + $0x1c0] sm:$0xff]
        %v5246 = vld [vmem:[%s5188 + $0x1c8] sm:$0xff]
        %v5247 = vld [vmem:[%s5188 + $0x1d0] sm:$0xff]
        %v5248 = vld [vmem:[%s5188 + $0x1d8] sm:$0xff]
        %v5249 = vld [vmem:[%s5188 + $0x1e0] sm:$0xff]
        %v5250 = vld [vmem:[%s5188 + $0x1e8] sm:$0xff]
        %v5251 = vld [vmem:[%s5188 + $0x1f0] sm:$0xff]
        %v5252 = vld [vmem:[%s5188 + $0x1f8] sm:$0xff]
        %5253 = vmatprep.subr.mxu0 %v5190
        %5254 = vmatpush1.msra.mxu0 %v5189
        %5255 = vmatprep.subr.mxu0 %v5192
        %5256 = vmatpush1.msra.mxu0 %v5191
        %5257 = vmatprep.subr.mxu0 %v5194
        %5258 = vmatpush1.msra.mxu0 %v5193
        %5259 = vmatprep.subr.mxu0 %v5196
        %5260 = vmatpush1.msra.mxu0 %v5195
        %5261 = vmatprep.subr.mxu0 %v5198
        %5262 = vmatpush1.msra.mxu0 %v5197
        %5263 = vmatprep.subr.mxu0 %v5200
        %5264 = vmatpush1.msra.mxu0 %v5199
        %5265 = vmatprep.subr.mxu0 %v5202
        %5266 = vmatpush1.msra.mxu0 %v5201
        %5267 = vmatprep.subr.mxu0 %v5204
        %5268 = vmatpush1.msra.mxu0 %v5203
        %5269 = vmatprep.subr.mxu0 %v5206
        %5270 = vmatpush1.msra.mxu0 %v5205
        %5271 = vmatprep.subr.mxu0 %v5208
        %5272 = vmatpush1.msra.mxu0 %v5207
        %5273 = vmatprep.subr.mxu0 %v5210
        %5274 = vmatpush1.msra.mxu0 %v5209
        %5275 = vmatprep.subr.mxu0 %v5212
        %5276 = vmatpush1.msra.mxu0 %v5211
        %5277 = vmatprep.subr.mxu0 %v5214
        %5278 = vmatpush1.msra.mxu0 %v5213
        %5279 = vmatprep.subr.mxu0 %v5216
        %5280 = vmatpush1.msra.mxu0 %v5215
        %5281 = vmatprep.subr.mxu0 %v5218
        %5282 = vmatpush1.msra.mxu0 %v5217
        %5283 = vmatprep.subr.mxu0 %v5220
        %5284 = vmatpush1.msra.mxu0 %v5219
        %5285 = vmatprep.subr.mxu0 %v5222
        %5286 = vmatpush1.msra.mxu0 %v5221
        %5287 = vmatprep.subr.mxu0 %v5224
        %5288 = vmatpush1.msra.mxu0 %v5223
        %5289 = vmatprep.subr.mxu0 %v5226
        %5290 = vmatpush1.msra.mxu0 %v5225
        %5291 = vmatprep.subr.mxu0 %v5228
        %5292 = vmatpush1.msra.mxu0 %v5227
        %5293 = vmatprep.subr.mxu0 %v5230
        %5294 = vmatpush1.msra.mxu0 %v5229
        %5295 = vmatprep.subr.mxu0 %v5232
        %5296 = vmatpush1.msra.mxu0 %v5231
        %5297 = vmatprep.subr.mxu0 %v5234
        %5298 = vmatpush1.msra.mxu0 %v5233
        %5299 = vmatprep.subr.mxu0 %v5236
        %5300 = vmatpush1.msra.mxu0 %v5235
        %5301 = vmatprep.subr.mxu0 %v5238
        %5302 = vmatpush1.msra.mxu0 %v5237
        %5303 = vmatprep.subr.mxu0 %v5240
        %5304 = vmatpush1.msra.mxu0 %v5239
        %5305 = vmatprep.subr.mxu0 %v5242
        %5306 = vmatpush1.msra.mxu0 %v5241
        %5307 = vmatprep.subr.mxu0 %v5244
        %5308 = vmatpush1.msra.mxu0 %v5243
        %5309 = vmatprep.subr.mxu0 %v5246
        %5310 = vmatpush1.msra.mxu0 %v5245
        %5311 = vmatprep.subr.mxu0 %v5248
        %5312 = vmatpush1.msra.mxu0 %v5247
        %5313 = vmatprep.subr.mxu0 %v5250
        %5314 = vmatpush1.msra.mxu0 %v5249
        %5315 = vmatprep.subr.mxu0 %v5252
        %5316 = vmatpush1.msra.mxu0 %v5251
        %5317 = vmatprep.mubr.f32.mxu0 %v4966
        %5318 = vmatmul.mubr.f32.gmra.mrb[0].mxu0 %v4965
        %v5319 = vpop.f32.mrb[0].mxu0
        %v5320 = vadd.f32 0.0, %v5319
        %v5321 = vpop.f32.mrb[0].mxu0
        %v5322 = vadd.f32 0.0, %v5321
        %5323 = vmatprep.mubr.f32.mxu0 %v4968
        %5324 = vmatmul.mubr.f32.gmra.mrb[0].mxu0 %v4967
        %v5325 = vpop.f32.mrb[0].mxu0
        %v5326 = vadd.f32 0.0, %v5325
        %v5327 = vpop.f32.mrb[0].mxu0
        %v5328 = vadd.f32 0.0, %v5327
        %5329 = vdwg.mxu0
        %5330 = vmatprep.subr.mxu0 %v5125
        %5331 = vmatpush1.msra.mxu0 %v5124
        %5332 = vmatprep.subr.mxu0 %v5127
        %5333 = vmatpush1.msra.mxu0 %v5126
        %5334 = vmatprep.subr.mxu0 %v5129
        %5335 = vmatpush1.msra.mxu0 %v5128
        %5336 = vmatprep.subr.mxu0 %v5131
        %5337 = vmatpush1.msra.mxu0 %v5130
        %5338 = vmatprep.subr.mxu0 %v5133
        %5339 = vmatpush1.msra.mxu0 %v5132
        %5340 = vmatprep.subr.mxu0 %v5135
        %5341 = vmatpush1.msra.mxu0 %v5134
        %5342 = vmatprep.subr.mxu0 %v5137
        %5343 = vmatpush1.msra.mxu0 %v5136
        %5344 = vmatprep.subr.mxu0 %v5139
        %5345 = vmatpush1.msra.mxu0 %v5138
        %5346 = vmatprep.subr.mxu0 %v5141
        %5347 = vmatpush1.msra.mxu0 %v5140
        %5348 = vmatprep.subr.mxu0 %v5143
        %5349 = vmatpush1.msra.mxu0 %v5142
        %5350 = vmatprep.subr.mxu0 %v5145
        %5351 = vmatpush1.msra.mxu0 %v5144
        %5352 = vmatprep.subr.mxu0 %v5147
        %5353 = vmatpush1.msra.mxu0 %v5146
        %5354 = vmatprep.subr.mxu0 %v5149
        %5355 = vmatpush1.msra.mxu0 %v5148
        %5356 = vmatprep.subr.mxu0 %v5151
        %5357 = vmatpush1.msra.mxu0 %v5150
        %5358 = vmatprep.subr.mxu0 %v5153
        %5359 = vmatpush1.msra.mxu0 %v5152
        %5360 = vmatprep.subr.mxu0 %v5155
        %5361 = vmatpush1.msra.mxu0 %v5154
        %5362 = vmatprep.subr.mxu0 %v5157
        %5363 = vmatpush1.msra.mxu0 %v5156
        %5364 = vmatprep.subr.mxu0 %v5159
        %5365 = vmatpush1.msra.mxu0 %v5158
        %5366 = vmatprep.subr.mxu0 %v5161
        %5367 = vmatpush1.msra.mxu0 %v5160
        %5368 = vmatprep.subr.mxu0 %v5163
        %5369 = vmatpush1.msra.mxu0 %v5162
        %5370 = vmatprep.subr.mxu0 %v5165
        %5371 = vmatpush1.msra.mxu0 %v5164
        %5372 = vmatprep.subr.mxu0 %v5167
        %5373 = vmatpush1.msra.mxu0 %v5166
        %5374 = vmatprep.subr.mxu0 %v5169
        %5375 = vmatpush1.msra.mxu0 %v5168
        %5376 = vmatprep.subr.mxu0 %v5171
        %5377 = vmatpush1.msra.mxu0 %v5170
        %5378 = vmatprep.subr.mxu0 %v5173
        %5379 = vmatpush1.msra.mxu0 %v5172
        %5380 = vmatprep.subr.mxu0 %v5175
        %5381 = vmatpush1.msra.mxu0 %v5174
        %5382 = vmatprep.subr.mxu0 %v5177
        %5383 = vmatpush1.msra.mxu0 %v5176
        %5384 = vmatprep.subr.mxu0 %v5179
        %5385 = vmatpush1.msra.mxu0 %v5178
        %5386 = vmatprep.subr.mxu0 %v5181
        %5387 = vmatpush1.msra.mxu0 %v5180
        %5388 = vmatprep.subr.mxu0 %v5183
        %5389 = vmatpush1.msra.mxu0 %v5182
        %5390 = vmatprep.subr.mxu0 %v5185
        %5391 = vmatpush1.msra.mxu0 %v5184
        %5392 = vmatprep.subr.mxu0 %v5187
        %5393 = vmatpush1.msra.mxu0 %v5186
        %5394 = vmatprep.mubr.f32.mxu0 %v5038
        %5395 = vmatmul.mubr.f32.gmra.mrb[0].mxu0 %v5036
        %v5396 = vpop.f32.mrb[0].mxu0
        %v5397 = vadd.f32 %v5320, %v5396
        %v5398 = vpop.f32.mrb[0].mxu0
        %v5399 = vadd.f32 %v5322, %v5398
        %5400 = vmatprep.mubr.f32.mxu0 %v5044
        %5401 = vmatmul.mubr.f32.gmra.mrb[0].mxu0 %v5042
        %v5402 = vpop.f32.mrb[0].mxu0
        %v5403 = vadd.f32 %v5326, %v5402
        %v5404 = vpop.f32.mrb[0].mxu0
        %v5405 = vadd.f32 %v5328, %v5404
        %5406 = vdwg.mxu0
        %s5407 = scalar_lea.vmem [#allocation10], 5632
        %v5408 = vld [vmem:[%s5407] sm:$0xff]
        %v5409 = vld [vmem:[%s5407 + $0x8] sm:$0xff]
        %v5410 = vld [vmem:[%s5407 + $0x10] sm:$0xff]
        %v5411 = vld [vmem:[%s5407 + $0x18] sm:$0xff]
        %v5412 = vld [vmem:[%s5407 + $0x20] sm:$0xff]
        %v5413 = vld [vmem:[%s5407 + $0x28] sm:$0xff]
        %v5414 = vld [vmem:[%s5407 + $0x30] sm:$0xff]
        %v5415 = vld [vmem:[%s5407 + $0x38] sm:$0xff]
        %v5416 = vld [vmem:[%s5407 + $0x40] sm:$0xff]
        %v5417 = vld [vmem:[%s5407 + $0x48] sm:$0xff]
        %v5418 = vld [vmem:[%s5407 + $0x50] sm:$0xff]
        %v5419 = vld [vmem:[%s5407 + $0x58] sm:$0xff]
        %v5420 = vld [vmem:[%s5407 + $0x60] sm:$0xff]
        %v5421 = vld [vmem:[%s5407 + $0x68] sm:$0xff]
        %v5422 = vld [vmem:[%s5407 + $0x70] sm:$0xff]
        %v5423 = vld [vmem:[%s5407 + $0x78] sm:$0xff]
        %v5424 = vld [vmem:[%s5407 + $0x80] sm:$0xff]
        %v5425 = vld [vmem:[%s5407 + $0x88] sm:$0xff]
        %v5426 = vld [vmem:[%s5407 + $0x90] sm:$0xff]
        %v5427 = vld [vmem:[%s5407 + $0x98] sm:$0xff]
        %v5428 = vld [vmem:[%s5407 + $0xa0] sm:$0xff]
        %v5429 = vld [vmem:[%s5407 + $0xa8] sm:$0xff]
        %v5430 = vld [vmem:[%s5407 + $0xb0] sm:$0xff]
        %v5431 = vld [vmem:[%s5407 + $0xb8] sm:$0xff]
        %v5432 = vld [vmem:[%s5407 + $0xc0] sm:$0xff]
        %v5433 = vld [vmem:[%s5407 + $0xc8] sm:$0xff]
        %v5434 = vld [vmem:[%s5407 + $0xd0] sm:$0xff]
        %v5435 = vld [vmem:[%s5407 + $0xd8] sm:$0xff]
        %v5436 = vld [vmem:[%s5407 + $0xe0] sm:$0xff]
        %v5437 = vld [vmem:[%s5407 + $0xe8] sm:$0xff]
        %v5438 = vld [vmem:[%s5407 + $0xf0] sm:$0xff]
        %v5439 = vld [vmem:[%s5407 + $0xf8] sm:$0xff]
        %v5440 = vld [vmem:[%s5407 + $0x100] sm:$0xff]
        %v5441 = vld [vmem:[%s5407 + $0x108] sm:$0xff]
        %v5442 = vld [vmem:[%s5407 + $0x110] sm:$0xff]
        %v5443 = vld [vmem:[%s5407 + $0x118] sm:$0xff]
        %v5444 = vld [vmem:[%s5407 + $0x120] sm:$0xff]
        %v5445 = vld [vmem:[%s5407 + $0x128] sm:$0xff]
        %v5446 = vld [vmem:[%s5407 + $0x130] sm:$0xff]
        %v5447 = vld [vmem:[%s5407 + $0x138] sm:$0xff]
        %v5448 = vld [vmem:[%s5407 + $0x140] sm:$0xff]
        %v5449 = vld [vmem:[%s5407 + $0x148] sm:$0xff]
        %v5450 = vld [vmem:[%s5407 + $0x150] sm:$0xff]
        %v5451 = vld [vmem:[%s5407 + $0x158] sm:$0xff]
        %v5452 = vld [vmem:[%s5407 + $0x160] sm:$0xff]
        %v5453 = vld [vmem:[%s5407 + $0x168] sm:$0xff]
        %v5454 = vld [vmem:[%s5407 + $0x170] sm:$0xff]
        %v5455 = vld [vmem:[%s5407 + $0x178] sm:$0xff]
        %v5456 = vld [vmem:[%s5407 + $0x180] sm:$0xff]
        %v5457 = vld [vmem:[%s5407 + $0x188] sm:$0xff]
        %v5458 = vld [vmem:[%s5407 + $0x190] sm:$0xff]
        %v5459 = vld [vmem:[%s5407 + $0x198] sm:$0xff]
        %v5460 = vld [vmem:[%s5407 + $0x1a0] sm:$0xff]
        %v5461 = vld [vmem:[%s5407 + $0x1a8] sm:$0xff]
        %v5462 = vld [vmem:[%s5407 + $0x1b0] sm:$0xff]
        %v5463 = vld [vmem:[%s5407 + $0x1b8] sm:$0xff]
        %v5464 = vld [vmem:[%s5407 + $0x1c0] sm:$0xff]
        %v5465 = vld [vmem:[%s5407 + $0x1c8] sm:$0xff]
        %v5466 = vld [vmem:[%s5407 + $0x1d0] sm:$0xff]
        %v5467 = vld [vmem:[%s5407 + $0x1d8] sm:$0xff]
        %v5468 = vld [vmem:[%s5407 + $0x1e0] sm:$0xff]
        %v5469 = vld [vmem:[%s5407 + $0x1e8] sm:$0xff]
        %v5470 = vld [vmem:[%s5407 + $0x1f0] sm:$0xff]
        %v5471 = vld [vmem:[%s5407 + $0x1f8] sm:$0xff]
        %5472 = vmatprep.subr.mxu0 %v5409
        %5473 = vmatpush1.msra.mxu0 %v5408
        %5474 = vmatprep.subr.mxu0 %v5411
        %5475 = vmatpush1.msra.mxu0 %v5410
        %5476 = vmatprep.subr.mxu0 %v5413
        %5477 = vmatpush1.msra.mxu0 %v5412
        %5478 = vmatprep.subr.mxu0 %v5415
        %5479 = vmatpush1.msra.mxu0 %v5414
        %5480 = vmatprep.subr.mxu0 %v5417
        %5481 = vmatpush1.msra.mxu0 %v5416
        %5482 = vmatprep.subr.mxu0 %v5419
        %5483 = vmatpush1.msra.mxu0 %v5418
        %5484 = vmatprep.subr.mxu0 %v5421
        %5485 = vmatpush1.msra.mxu0 %v5420
        %5486 = vmatprep.subr.mxu0 %v5423
        %5487 = vmatpush1.msra.mxu0 %v5422
        %5488 = vmatprep.subr.mxu0 %v5425
        %5489 = vmatpush1.msra.mxu0 %v5424
        %5490 = vmatprep.subr.mxu0 %v5427
        %5491 = vmatpush1.msra.mxu0 %v5426
        %5492 = vmatprep.subr.mxu0 %v5429
        %5493 = vmatpush1.msra.mxu0 %v5428
        %5494 = vmatprep.subr.mxu0 %v5431
        %5495 = vmatpush1.msra.mxu0 %v5430
        %5496 = vmatprep.subr.mxu0 %v5433
        %5497 = vmatpush1.msra.mxu0 %v5432
        %5498 = vmatprep.subr.mxu0 %v5435
        %5499 = vmatpush1.msra.mxu0 %v5434
        %5500 = vmatprep.subr.mxu0 %v5437
        %5501 = vmatpush1.msra.mxu0 %v5436
        %5502 = vmatprep.subr.mxu0 %v5439
        %5503 = vmatpush1.msra.mxu0 %v5438
        %5504 = vmatprep.subr.mxu0 %v5441
        %5505 = vmatpush1.msra.mxu0 %v5440
        %5506 = vmatprep.subr.mxu0 %v5443
        %5507 = vmatpush1.msra.mxu0 %v5442
        %5508 = vmatprep.subr.mxu0 %v5445
        %5509 = vmatpush1.msra.mxu0 %v5444
        %5510 = vmatprep.subr.mxu0 %v5447
        %5511 = vmatpush1.msra.mxu0 %v5446
        %5512 = vmatprep.subr.mxu0 %v5449
        %5513 = vmatpush1.msra.mxu0 %v5448
        %5514 = vmatprep.subr.mxu0 %v5451
        %5515 = vmatpush1.msra.mxu0 %v5450
        %5516 = vmatprep.subr.mxu0 %v5453
        %5517 = vmatpush1.msra.mxu0 %v5452
        %5518 = vmatprep.subr.mxu0 %v5455
        %5519 = vmatpush1.msra.mxu0 %v5454
        %5520 = vmatprep.subr.mxu0 %v5457
        %5521 = vmatpush1.msra.mxu0 %v5456
        %5522 = vmatprep.subr.mxu0 %v5459
        %5523 = vmatpush1.msra.mxu0 %v5458
        %5524 = vmatprep.subr.mxu0 %v5461
        %5525 = vmatpush1.msra.mxu0 %v5460
        %5526 = vmatprep.subr.mxu0 %v5463
        %5527 = vmatpush1.msra.mxu0 %v5462
        %5528 = vmatprep.subr.mxu0 %v5465
        %5529 = vmatpush1.msra.mxu0 %v5464
        %5530 = vmatprep.subr.mxu0 %v5467
        %5531 = vmatpush1.msra.mxu0 %v5466
        %5532 = vmatprep.subr.mxu0 %v5469
        %5533 = vmatpush1.msra.mxu0 %v5468
        %5534 = vmatprep.subr.mxu0 %v5471
        %5535 = vmatpush1.msra.mxu0 %v5470
        %5536 = vmatprep.mubr.f32.mxu0 %v5115
        %5537 = vmatmul.mubr.f32.gmra.mrb[0].mxu0 %v5113
        %v5538 = vpop.f32.mrb[0].mxu0
        %v5539 = vadd.f32 0.0, %v5538
        %v5540 = vpop.f32.mrb[0].mxu0
        %v5541 = vadd.f32 0.0, %v5540
        %5542 = vmatprep.mubr.f32.mxu0 %v5121
        %5543 = vmatmul.mubr.f32.gmra.mrb[0].mxu0 %v5119
        %v5544 = vpop.f32.mrb[0].mxu0
        %v5545 = vadd.f32 0.0, %v5544
        %v5546 = vpop.f32.mrb[0].mxu0
        %v5547 = vadd.f32 0.0, %v5546
        %5548 = vdwg.mxu0
        %v5549 = vadd.f32 %v5397, %v5539
        %v5550 = vadd.f32 %v5399, %v5541
        %v5551 = vadd.f32 %v5403, %v5545
        %v5552 = vadd.f32 %v5405, %v5547
        %s5553 = scalar_lea.vmem [#allocation11], 6
        %v5554 = vld [vmem:[%s5553] sm:$0x3]
        %v5556 = vlaneseq
        %v5557 = vshrl.u32 %v5556, 7
        %v5558 = vsub.s32 0, %v5557
        %v5559 = vrot.slane %v5554, %v5558
        %v5560 = vlaneseq
        %v5561 = vshrl.u32 %v5560, 7
        %v5562 = vsub.s32 1, %v5561
        %v5563 = vrot.slane %v5554, %v5562
        %v5566 = vadd.f32 %v5549, %v5559
        %v5567 = vadd.f32 %v5550, %v5563
        %v5568 = vadd.f32 %v5551, %v5559
        %v5569 = vadd.f32 %v5552, %v5563
        %v5570 = vadd.f32 %v5566, %v4343
        %v5571 = vadd.f32 %v5567, %v4344
        %v5572 = vadd.f32 %v5568, %v4345
        %v5573 = vadd.f32 %v5569, %v4346
        %v5574 = vmax.f32 %v5570, 0.0
        %v5575 = vmax.f32 %v5571, 0.0
        %v5576 = vmax.f32 %v5572, 0.0
        %v5577 = vmax.f32 %v5573, 0.0
        %v5578 = vld [vmem:[#allocation13] sm:$0xff]
        %v5579 = vld [vmem:[#allocation13 + $0x8] sm:$0xff]
        %v5580 = vld [vmem:[#allocation13 + $0x10] sm:$0xff]
        %v5581 = vld [vmem:[#allocation13 + $0x18] sm:$0xff]
        %v5582 = vld [vmem:[#allocation13 + $0x20] sm:$0xff]
        %v5583 = vld [vmem:[#allocation13 + $0x28] sm:$0xff]
        %v5584 = vld [vmem:[#allocation13 + $0x30] sm:$0xff]
        %v5585 = vld [vmem:[#allocation13 + $0x38] sm:$0xff]
        %v5586 = vld [vmem:[#allocation13 + $0x40] sm:$0xff]
        %v5587 = vld [vmem:[#allocation13 + $0x48] sm:$0xff]
        %v5588 = vld [vmem:[#allocation13 + $0x50] sm:$0xff]
        %v5589 = vld [vmem:[#allocation13 + $0x58] sm:$0xff]
        %v5590 = vld [vmem:[#allocation13 + $0x60] sm:$0xff]
        %v5591 = vld [vmem:[#allocation13 + $0x68] sm:$0xff]
        %v5592 = vld [vmem:[#allocation13 + $0x70] sm:$0xff]
        %v5593 = vld [vmem:[#allocation13 + $0x78] sm:$0xff]
        %v5594 = vld [vmem:[#allocation13 + $0x80] sm:$0xff]
        %v5595 = vld [vmem:[#allocation13 + $0x88] sm:$0xff]
        %v5596 = vld [vmem:[#allocation13 + $0x90] sm:$0xff]
        %v5597 = vld [vmem:[#allocation13 + $0x98] sm:$0xff]
        %v5598 = vld [vmem:[#allocation13 + $0xa0] sm:$0xff]
        %v5599 = vld [vmem:[#allocation13 + $0xa8] sm:$0xff]
        %v5600 = vld [vmem:[#allocation13 + $0xb0] sm:$0xff]
        %v5601 = vld [vmem:[#allocation13 + $0xb8] sm:$0xff]
        %v5602 = vld [vmem:[#allocation13 + $0xc0] sm:$0xff]
        %v5603 = vld [vmem:[#allocation13 + $0xc8] sm:$0xff]
        %v5604 = vld [vmem:[#allocation13 + $0xd0] sm:$0xff]
        %v5605 = vld [vmem:[#allocation13 + $0xd8] sm:$0xff]
        %v5606 = vld [vmem:[#allocation13 + $0xe0] sm:$0xff]
        %v5607 = vld [vmem:[#allocation13 + $0xe8] sm:$0xff]
        %v5608 = vld [vmem:[#allocation13 + $0xf0] sm:$0xff]
        %v5609 = vld [vmem:[#allocation13 + $0xf8] sm:$0xff]
        %v5610 = vld [vmem:[#allocation13 + $0x100] sm:$0xff]
        %v5611 = vld [vmem:[#allocation13 + $0x108] sm:$0xff]
        %v5612 = vld [vmem:[#allocation13 + $0x110] sm:$0xff]
        %v5613 = vld [vmem:[#allocation13 + $0x118] sm:$0xff]
        %v5614 = vld [vmem:[#allocation13 + $0x120] sm:$0xff]
        %v5615 = vld [vmem:[#allocation13 + $0x128] sm:$0xff]
        %v5616 = vld [vmem:[#allocation13 + $0x130] sm:$0xff]
        %v5617 = vld [vmem:[#allocation13 + $0x138] sm:$0xff]
        %v5618 = vld [vmem:[#allocation13 + $0x140] sm:$0xff]
        %v5619 = vld [vmem:[#allocation13 + $0x148] sm:$0xff]
        %v5620 = vld [vmem:[#allocation13 + $0x150] sm:$0xff]
        %v5621 = vld [vmem:[#allocation13 + $0x158] sm:$0xff]
        %v5622 = vld [vmem:[#allocation13 + $0x160] sm:$0xff]
        %v5623 = vld [vmem:[#allocation13 + $0x168] sm:$0xff]
        %v5624 = vld [vmem:[#allocation13 + $0x170] sm:$0xff]
        %v5625 = vld [vmem:[#allocation13 + $0x178] sm:$0xff]
        %v5626 = vld [vmem:[#allocation13 + $0x180] sm:$0xff]
        %v5627 = vld [vmem:[#allocation13 + $0x188] sm:$0xff]
        %v5628 = vld [vmem:[#allocation13 + $0x190] sm:$0xff]
        %v5629 = vld [vmem:[#allocation13 + $0x198] sm:$0xff]
        %v5630 = vld [vmem:[#allocation13 + $0x1a0] sm:$0xff]
        %v5631 = vld [vmem:[#allocation13 + $0x1a8] sm:$0xff]
        %v5632 = vld [vmem:[#allocation13 + $0x1b0] sm:$0xff]
        %v5633 = vld [vmem:[#allocation13 + $0x1b8] sm:$0xff]
        %v5634 = vld [vmem:[#allocation13 + $0x1c0] sm:$0xff]
        %v5635 = vld [vmem:[#allocation13 + $0x1c8] sm:$0xff]
        %v5636 = vld [vmem:[#allocation13 + $0x1d0] sm:$0xff]
        %v5637 = vld [vmem:[#allocation13 + $0x1d8] sm:$0xff]
        %v5638 = vld [vmem:[#allocation13 + $0x1e0] sm:$0xff]
        %v5639 = vld [vmem:[#allocation13 + $0x1e8] sm:$0xff]
        %v5640 = vld [vmem:[#allocation13 + $0x1f0] sm:$0xff]
        %v5641 = vld [vmem:[#allocation13 + $0x1f8] sm:$0xff]
        %s5642 = scalar_lea.vmem [#allocation13], 512
        %v5643 = vld [vmem:[%s5642] sm:$0xff]
        %v5644 = vld [vmem:[%s5642 + $0x8] sm:$0xff]
        %v5645 = vld [vmem:[%s5642 + $0x10] sm:$0xff]
        %v5646 = vld [vmem:[%s5642 + $0x18] sm:$0xff]
        %v5647 = vld [vmem:[%s5642 + $0x20] sm:$0xff]
        %v5648 = vld [vmem:[%s5642 + $0x28] sm:$0xff]
        %v5649 = vld [vmem:[%s5642 + $0x30] sm:$0xff]
        %v5650 = vld [vmem:[%s5642 + $0x38] sm:$0xff]
        %v5651 = vld [vmem:[%s5642 + $0x40] sm:$0xff]
        %v5652 = vld [vmem:[%s5642 + $0x48] sm:$0xff]
        %v5653 = vld [vmem:[%s5642 + $0x50] sm:$0xff]
        %v5654 = vld [vmem:[%s5642 + $0x58] sm:$0xff]
        %v5655 = vld [vmem:[%s5642 + $0x60] sm:$0xff]
        %v5656 = vld [vmem:[%s5642 + $0x68] sm:$0xff]
        %v5657 = vld [vmem:[%s5642 + $0x70] sm:$0xff]
        %v5658 = vld [vmem:[%s5642 + $0x78] sm:$0xff]
        %v5659 = vld [vmem:[%s5642 + $0x80] sm:$0xff]
        %v5660 = vld [vmem:[%s5642 + $0x88] sm:$0xff]
        %v5661 = vld [vmem:[%s5642 + $0x90] sm:$0xff]
        %v5662 = vld [vmem:[%s5642 + $0x98] sm:$0xff]
        %v5663 = vld [vmem:[%s5642 + $0xa0] sm:$0xff]
        %v5664 = vld [vmem:[%s5642 + $0xa8] sm:$0xff]
        %v5665 = vld [vmem:[%s5642 + $0xb0] sm:$0xff]
        %v5666 = vld [vmem:[%s5642 + $0xb8] sm:$0xff]
        %v5667 = vld [vmem:[%s5642 + $0xc0] sm:$0xff]
        %v5668 = vld [vmem:[%s5642 + $0xc8] sm:$0xff]
        %v5669 = vld [vmem:[%s5642 + $0xd0] sm:$0xff]
        %v5670 = vld [vmem:[%s5642 + $0xd8] sm:$0xff]
        %v5671 = vld [vmem:[%s5642 + $0xe0] sm:$0xff]
        %v5672 = vld [vmem:[%s5642 + $0xe8] sm:$0xff]
        %v5673 = vld [vmem:[%s5642 + $0xf0] sm:$0xff]
        %v5674 = vld [vmem:[%s5642 + $0xf8] sm:$0xff]
        %v5675 = vld [vmem:[%s5642 + $0x100] sm:$0xff]
        %v5676 = vld [vmem:[%s5642 + $0x108] sm:$0xff]
        %v5677 = vld [vmem:[%s5642 + $0x110] sm:$0xff]
        %v5678 = vld [vmem:[%s5642 + $0x118] sm:$0xff]
        %v5679 = vld [vmem:[%s5642 + $0x120] sm:$0xff]
        %v5680 = vld [vmem:[%s5642 + $0x128] sm:$0xff]
        %v5681 = vld [vmem:[%s5642 + $0x130] sm:$0xff]
        %v5682 = vld [vmem:[%s5642 + $0x138] sm:$0xff]
        %v5683 = vld [vmem:[%s5642 + $0x140] sm:$0xff]
        %v5684 = vld [vmem:[%s5642 + $0x148] sm:$0xff]
        %v5685 = vld [vmem:[%s5642 + $0x150] sm:$0xff]
        %v5686 = vld [vmem:[%s5642 + $0x158] sm:$0xff]
        %v5687 = vld [vmem:[%s5642 + $0x160] sm:$0xff]
        %v5688 = vld [vmem:[%s5642 + $0x168] sm:$0xff]
        %v5689 = vld [vmem:[%s5642 + $0x170] sm:$0xff]
        %v5690 = vld [vmem:[%s5642 + $0x178] sm:$0xff]
        %v5691 = vld [vmem:[%s5642 + $0x180] sm:$0xff]
        %v5692 = vld [vmem:[%s5642 + $0x188] sm:$0xff]
        %v5693 = vld [vmem:[%s5642 + $0x190] sm:$0xff]
        %v5694 = vld [vmem:[%s5642 + $0x198] sm:$0xff]
        %v5695 = vld [vmem:[%s5642 + $0x1a0] sm:$0xff]
        %v5696 = vld [vmem:[%s5642 + $0x1a8] sm:$0xff]
        %v5697 = vld [vmem:[%s5642 + $0x1b0] sm:$0xff]
        %v5698 = vld [vmem:[%s5642 + $0x1b8] sm:$0xff]
        %v5699 = vld [vmem:[%s5642 + $0x1c0] sm:$0xff]
        %v5700 = vld [vmem:[%s5642 + $0x1c8] sm:$0xff]
        %v5701 = vld [vmem:[%s5642 + $0x1d0] sm:$0xff]
        %v5702 = vld [vmem:[%s5642 + $0x1d8] sm:$0xff]
        %v5703 = vld [vmem:[%s5642 + $0x1e0] sm:$0xff]
        %v5704 = vld [vmem:[%s5642 + $0x1e8] sm:$0xff]
        %v5705 = vld [vmem:[%s5642 + $0x1f0] sm:$0xff]
        %v5706 = vld [vmem:[%s5642 + $0x1f8] sm:$0xff]
        %5707 = vmatprep.subr.mxu0 %v5644
        %5708 = vmatpush1.msra.mxu0 %v5643
        %5709 = vmatprep.subr.mxu0 %v5646
        %5710 = vmatpush1.msra.mxu0 %v5645
        %5711 = vmatprep.subr.mxu0 %v5648
        %5712 = vmatpush1.msra.mxu0 %v5647
        %5713 = vmatprep.subr.mxu0 %v5650
        %5714 = vmatpush1.msra.mxu0 %v5649
        %5715 = vmatprep.subr.mxu0 %v5652
        %5716 = vmatpush1.msra.mxu0 %v5651
        %5717 = vmatprep.subr.mxu0 %v5654
        %5718 = vmatpush1.msra.mxu0 %v5653
        %5719 = vmatprep.subr.mxu0 %v5656
        %5720 = vmatpush1.msra.mxu0 %v5655
        %5721 = vmatprep.subr.mxu0 %v5658
        %5722 = vmatpush1.msra.mxu0 %v5657
        %5723 = vmatprep.subr.mxu0 %v5660
        %5724 = vmatpush1.msra.mxu0 %v5659
        %5725 = vmatprep.subr.mxu0 %v5662
        %5726 = vmatpush1.msra.mxu0 %v5661
        %5727 = vmatprep.subr.mxu0 %v5664
        %5728 = vmatpush1.msra.mxu0 %v5663
        %5729 = vmatprep.subr.mxu0 %v5666
        %5730 = vmatpush1.msra.mxu0 %v5665
        %5731 = vmatprep.subr.mxu0 %v5668
        %5732 = vmatpush1.msra.mxu0 %v5667
        %5733 = vmatprep.subr.mxu0 %v5670
        %5734 = vmatpush1.msra.mxu0 %v5669
        %5735 = vmatprep.subr.mxu0 %v5672
        %5736 = vmatpush1.msra.mxu0 %v5671
        %5737 = vmatprep.subr.mxu0 %v5674
        %5738 = vmatpush1.msra.mxu0 %v5673
        %5739 = vmatprep.subr.mxu0 %v5676
        %5740 = vmatpush1.msra.mxu0 %v5675
        %5741 = vmatprep.subr.mxu0 %v5678
        %5742 = vmatpush1.msra.mxu0 %v5677
        %5743 = vmatprep.subr.mxu0 %v5680
        %5744 = vmatpush1.msra.mxu0 %v5679
        %5745 = vmatprep.subr.mxu0 %v5682
        %5746 = vmatpush1.msra.mxu0 %v5681
        %5747 = vmatprep.subr.mxu0 %v5684
        %5748 = vmatpush1.msra.mxu0 %v5683
        %5749 = vmatprep.subr.mxu0 %v5686
        %5750 = vmatpush1.msra.mxu0 %v5685
        %5751 = vmatprep.subr.mxu0 %v5688
        %5752 = vmatpush1.msra.mxu0 %v5687
        %5753 = vmatprep.subr.mxu0 %v5690
        %5754 = vmatpush1.msra.mxu0 %v5689
        %5755 = vmatprep.subr.mxu0 %v5692
        %5756 = vmatpush1.msra.mxu0 %v5691
        %5757 = vmatprep.subr.mxu0 %v5694
        %5758 = vmatpush1.msra.mxu0 %v5693
        %5759 = vmatprep.subr.mxu0 %v5696
        %5760 = vmatpush1.msra.mxu0 %v5695
        %5761 = vmatprep.subr.mxu0 %v5698
        %5762 = vmatpush1.msra.mxu0 %v5697
        %5763 = vmatprep.subr.mxu0 %v5700
        %5764 = vmatpush1.msra.mxu0 %v5699
        %5765 = vmatprep.subr.mxu0 %v5702
        %5766 = vmatpush1.msra.mxu0 %v5701
        %5767 = vmatprep.subr.mxu0 %v5704
        %5768 = vmatpush1.msra.mxu0 %v5703
        %5769 = vmatprep.subr.mxu0 %v5706
        %5770 = vmatpush1.msra.mxu0 %v5705
        %5771 = vmatprep.mubr.f32.mxu0 %v638
        %5772 = vmatmul.mubr.f32.gmra.mrb[0].mxu0 %v637
        %v5773 = vpop.f32.mrb[0].mxu0
        %v5774 = vadd.f32 0.0, %v5773
        %v5775 = vpop.f32.mrb[0].mxu0
        %v5776 = vadd.f32 0.0, %v5775
        %5777 = vmatprep.mubr.f32.mxu0 %v640
        %5778 = vmatmul.mubr.f32.gmra.mrb[0].mxu0 %v639
        %v5779 = vpop.f32.mrb[0].mxu0
        %v5780 = vadd.f32 0.0, %v5779
        %v5781 = vpop.f32.mrb[0].mxu0
        %v5782 = vadd.f32 0.0, %v5781
        %5783 = vdwg.mxu0
        %5784 = vmatprep.subr.mxu0 %v5579
        %5785 = vmatpush1.msra.mxu0 %v5578
        %5786 = vmatprep.subr.mxu0 %v5581
        %5787 = vmatpush1.msra.mxu0 %v5580
        %5788 = vmatprep.subr.mxu0 %v5583
        %5789 = vmatpush1.msra.mxu0 %v5582
        %5790 = vmatprep.subr.mxu0 %v5585
        %5791 = vmatpush1.msra.mxu0 %v5584
        %5792 = vmatprep.subr.mxu0 %v5587
        %5793 = vmatpush1.msra.mxu0 %v5586
        %5794 = vmatprep.subr.mxu0 %v5589
        %5795 = vmatpush1.msra.mxu0 %v5588
        %5796 = vmatprep.subr.mxu0 %v5591
        %5797 = vmatpush1.msra.mxu0 %v5590
        %5798 = vmatprep.subr.mxu0 %v5593
        %5799 = vmatpush1.msra.mxu0 %v5592
        %5800 = vmatprep.subr.mxu0 %v5595
        %5801 = vmatpush1.msra.mxu0 %v5594
        %5802 = vmatprep.subr.mxu0 %v5597
        %5803 = vmatpush1.msra.mxu0 %v5596
        %5804 = vmatprep.subr.mxu0 %v5599
        %5805 = vmatpush1.msra.mxu0 %v5598
        %5806 = vmatprep.subr.mxu0 %v5601
        %5807 = vmatpush1.msra.mxu0 %v5600
        %5808 = vmatprep.subr.mxu0 %v5603
        %5809 = vmatpush1.msra.mxu0 %v5602
        %5810 = vmatprep.subr.mxu0 %v5605
        %5811 = vmatpush1.msra.mxu0 %v5604
        %5812 = vmatprep.subr.mxu0 %v5607
        %5813 = vmatpush1.msra.mxu0 %v5606
        %5814 = vmatprep.subr.mxu0 %v5609
        %5815 = vmatpush1.msra.mxu0 %v5608
        %5816 = vmatprep.subr.mxu0 %v5611
        %5817 = vmatpush1.msra.mxu0 %v5610
        %5818 = vmatprep.subr.mxu0 %v5613
        %5819 = vmatpush1.msra.mxu0 %v5612
        %5820 = vmatprep.subr.mxu0 %v5615
        %5821 = vmatpush1.msra.mxu0 %v5614
        %5822 = vmatprep.subr.mxu0 %v5617
        %5823 = vmatpush1.msra.mxu0 %v5616
        %5824 = vmatprep.subr.mxu0 %v5619
        %5825 = vmatpush1.msra.mxu0 %v5618
        %5826 = vmatprep.subr.mxu0 %v5621
        %5827 = vmatpush1.msra.mxu0 %v5620
        %5828 = vmatprep.subr.mxu0 %v5623
        %5829 = vmatpush1.msra.mxu0 %v5622
        %5830 = vmatprep.subr.mxu0 %v5625
        %5831 = vmatpush1.msra.mxu0 %v5624
        %5832 = vmatprep.subr.mxu0 %v5627
        %5833 = vmatpush1.msra.mxu0 %v5626
        %5834 = vmatprep.subr.mxu0 %v5629
        %5835 = vmatpush1.msra.mxu0 %v5628
        %5836 = vmatprep.subr.mxu0 %v5631
        %5837 = vmatpush1.msra.mxu0 %v5630
        %5838 = vmatprep.subr.mxu0 %v5633
        %5839 = vmatpush1.msra.mxu0 %v5632
        %5840 = vmatprep.subr.mxu0 %v5635
        %5841 = vmatpush1.msra.mxu0 %v5634
        %5842 = vmatprep.subr.mxu0 %v5637
        %5843 = vmatpush1.msra.mxu0 %v5636
        %5844 = vmatprep.subr.mxu0 %v5639
        %5845 = vmatpush1.msra.mxu0 %v5638
        %5846 = vmatprep.subr.mxu0 %v5641
        %5847 = vmatpush1.msra.mxu0 %v5640
        %5848 = vmatprep.mubr.f32.mxu0 %v719
        %5849 = vmatmul.mubr.f32.gmra.mrb[0].mxu0 %v717
        %v5850 = vpop.f32.mrb[0].mxu0
        %v5851 = vadd.f32 %v5774, %v5850
        %v5852 = vpop.f32.mrb[0].mxu0
        %v5853 = vadd.f32 %v5776, %v5852
        %5854 = vmatprep.mubr.f32.mxu0 %v725
        %5855 = vmatmul.mubr.f32.gmra.mrb[0].mxu0 %v723
        %v5856 = vpop.f32.mrb[0].mxu0
        %v5857 = vadd.f32 %v5780, %v5856
        %v5858 = vpop.f32.mrb[0].mxu0
        %v5859 = vadd.f32 %v5782, %v5858
        %5860 = vdwg.mxu0
        %s5861 = scalar_lea.vmem [#allocation13], 1024
        %v5862 = vld [vmem:[%s5861] sm:$0xff]
        %v5863 = vld [vmem:[%s5861 + $0x8] sm:$0xff]
        %v5864 = vld [vmem:[%s5861 + $0x10] sm:$0xff]
        %v5865 = vld [vmem:[%s5861 + $0x18] sm:$0xff]
        %v5866 = vld [vmem:[%s5861 + $0x20] sm:$0xff]
        %v5867 = vld [vmem:[%s5861 + $0x28] sm:$0xff]
        %v5868 = vld [vmem:[%s5861 + $0x30] sm:$0xff]
        %v5869 = vld [vmem:[%s5861 + $0x38] sm:$0xff]
        %v5870 = vld [vmem:[%s5861 + $0x40] sm:$0xff]
        %v5871 = vld [vmem:[%s5861 + $0x48] sm:$0xff]
        %v5872 = vld [vmem:[%s5861 + $0x50] sm:$0xff]
        %v5873 = vld [vmem:[%s5861 + $0x58] sm:$0xff]
        %v5874 = vld [vmem:[%s5861 + $0x60] sm:$0xff]
        %v5875 = vld [vmem:[%s5861 + $0x68] sm:$0xff]
        %v5876 = vld [vmem:[%s5861 + $0x70] sm:$0xff]
        %v5877 = vld [vmem:[%s5861 + $0x78] sm:$0xff]
        %v5878 = vld [vmem:[%s5861 + $0x80] sm:$0xff]
        %v5879 = vld [vmem:[%s5861 + $0x88] sm:$0xff]
        %v5880 = vld [vmem:[%s5861 + $0x90] sm:$0xff]
        %v5881 = vld [vmem:[%s5861 + $0x98] sm:$0xff]
        %v5882 = vld [vmem:[%s5861 + $0xa0] sm:$0xff]
        %v5883 = vld [vmem:[%s5861 + $0xa8] sm:$0xff]
        %v5884 = vld [vmem:[%s5861 + $0xb0] sm:$0xff]
        %v5885 = vld [vmem:[%s5861 + $0xb8] sm:$0xff]
        %v5886 = vld [vmem:[%s5861 + $0xc0] sm:$0xff]
        %v5887 = vld [vmem:[%s5861 + $0xc8] sm:$0xff]
        %v5888 = vld [vmem:[%s5861 + $0xd0] sm:$0xff]
        %v5889 = vld [vmem:[%s5861 + $0xd8] sm:$0xff]
        %v5890 = vld [vmem:[%s5861 + $0xe0] sm:$0xff]
        %v5891 = vld [vmem:[%s5861 + $0xe8] sm:$0xff]
        %v5892 = vld [vmem:[%s5861 + $0xf0] sm:$0xff]
        %v5893 = vld [vmem:[%s5861 + $0xf8] sm:$0xff]
        %v5894 = vld [vmem:[%s5861 + $0x100] sm:$0xff]
        %v5895 = vld [vmem:[%s5861 + $0x108] sm:$0xff]
        %v5896 = vld [vmem:[%s5861 + $0x110] sm:$0xff]
        %v5897 = vld [vmem:[%s5861 + $0x118] sm:$0xff]
        %v5898 = vld [vmem:[%s5861 + $0x120] sm:$0xff]
        %v5899 = vld [vmem:[%s5861 + $0x128] sm:$0xff]
        %v5900 = vld [vmem:[%s5861 + $0x130] sm:$0xff]
        %v5901 = vld [vmem:[%s5861 + $0x138] sm:$0xff]
        %v5902 = vld [vmem:[%s5861 + $0x140] sm:$0xff]
        %v5903 = vld [vmem:[%s5861 + $0x148] sm:$0xff]
        %v5904 = vld [vmem:[%s5861 + $0x150] sm:$0xff]
        %v5905 = vld [vmem:[%s5861 + $0x158] sm:$0xff]
        %v5906 = vld [vmem:[%s5861 + $0x160] sm:$0xff]
        %v5907 = vld [vmem:[%s5861 + $0x168] sm:$0xff]
        %v5908 = vld [vmem:[%s5861 + $0x170] sm:$0xff]
        %v5909 = vld [vmem:[%s5861 + $0x178] sm:$0xff]
        %v5910 = vld [vmem:[%s5861 + $0x180] sm:$0xff]
        %v5911 = vld [vmem:[%s5861 + $0x188] sm:$0xff]
        %v5912 = vld [vmem:[%s5861 + $0x190] sm:$0xff]
        %v5913 = vld [vmem:[%s5861 + $0x198] sm:$0xff]
        %v5914 = vld [vmem:[%s5861 + $0x1a0] sm:$0xff]
        %v5915 = vld [vmem:[%s5861 + $0x1a8] sm:$0xff]
        %v5916 = vld [vmem:[%s5861 + $0x1b0] sm:$0xff]
        %v5917 = vld [vmem:[%s5861 + $0x1b8] sm:$0xff]
        %v5918 = vld [vmem:[%s5861 + $0x1c0] sm:$0xff]
        %v5919 = vld [vmem:[%s5861 + $0x1c8] sm:$0xff]
        %v5920 = vld [vmem:[%s5861 + $0x1d0] sm:$0xff]
        %v5921 = vld [vmem:[%s5861 + $0x1d8] sm:$0xff]
        %v5922 = vld [vmem:[%s5861 + $0x1e0] sm:$0xff]
        %v5923 = vld [vmem:[%s5861 + $0x1e8] sm:$0xff]
        %v5924 = vld [vmem:[%s5861 + $0x1f0] sm:$0xff]
        %v5925 = vld [vmem:[%s5861 + $0x1f8] sm:$0xff]
        %5926 = vmatprep.subr.mxu0 %v5863
        %5927 = vmatpush1.msra.mxu0 %v5862
        %5928 = vmatprep.subr.mxu0 %v5865
        %5929 = vmatpush1.msra.mxu0 %v5864
        %5930 = vmatprep.subr.mxu0 %v5867
        %5931 = vmatpush1.msra.mxu0 %v5866
        %5932 = vmatprep.subr.mxu0 %v5869
        %5933 = vmatpush1.msra.mxu0 %v5868
        %5934 = vmatprep.subr.mxu0 %v5871
        %5935 = vmatpush1.msra.mxu0 %v5870
        %5936 = vmatprep.subr.mxu0 %v5873
        %5937 = vmatpush1.msra.mxu0 %v5872
        %5938 = vmatprep.subr.mxu0 %v5875
        %5939 = vmatpush1.msra.mxu0 %v5874
        %5940 = vmatprep.subr.mxu0 %v5877
        %5941 = vmatpush1.msra.mxu0 %v5876
        %5942 = vmatprep.subr.mxu0 %v5879
        %5943 = vmatpush1.msra.mxu0 %v5878
        %5944 = vmatprep.subr.mxu0 %v5881
        %5945 = vmatpush1.msra.mxu0 %v5880
        %5946 = vmatprep.subr.mxu0 %v5883
        %5947 = vmatpush1.msra.mxu0 %v5882
        %5948 = vmatprep.subr.mxu0 %v5885
        %5949 = vmatpush1.msra.mxu0 %v5884
        %5950 = vmatprep.subr.mxu0 %v5887
        %5951 = vmatpush1.msra.mxu0 %v5886
        %5952 = vmatprep.subr.mxu0 %v5889
        %5953 = vmatpush1.msra.mxu0 %v5888
        %5954 = vmatprep.subr.mxu0 %v5891
        %5955 = vmatpush1.msra.mxu0 %v5890
        %5956 = vmatprep.subr.mxu0 %v5893
        %5957 = vmatpush1.msra.mxu0 %v5892
        %5958 = vmatprep.subr.mxu0 %v5895
        %5959 = vmatpush1.msra.mxu0 %v5894
        %5960 = vmatprep.subr.mxu0 %v5897
        %5961 = vmatpush1.msra.mxu0 %v5896
        %5962 = vmatprep.subr.mxu0 %v5899
        %5963 = vmatpush1.msra.mxu0 %v5898
        %5964 = vmatprep.subr.mxu0 %v5901
        %5965 = vmatpush1.msra.mxu0 %v5900
        %5966 = vmatprep.subr.mxu0 %v5903
        %5967 = vmatpush1.msra.mxu0 %v5902
        %5968 = vmatprep.subr.mxu0 %v5905
        %5969 = vmatpush1.msra.mxu0 %v5904
        %5970 = vmatprep.subr.mxu0 %v5907
        %5971 = vmatpush1.msra.mxu0 %v5906
        %5972 = vmatprep.subr.mxu0 %v5909
        %5973 = vmatpush1.msra.mxu0 %v5908
        %5974 = vmatprep.subr.mxu0 %v5911
        %5975 = vmatpush1.msra.mxu0 %v5910
        %5976 = vmatprep.subr.mxu0 %v5913
        %5977 = vmatpush1.msra.mxu0 %v5912
        %5978 = vmatprep.subr.mxu0 %v5915
        %5979 = vmatpush1.msra.mxu0 %v5914
        %5980 = vmatprep.subr.mxu0 %v5917
        %5981 = vmatpush1.msra.mxu0 %v5916
        %5982 = vmatprep.subr.mxu0 %v5919
        %5983 = vmatpush1.msra.mxu0 %v5918
        %5984 = vmatprep.subr.mxu0 %v5921
        %5985 = vmatpush1.msra.mxu0 %v5920
        %5986 = vmatprep.subr.mxu0 %v5923
        %5987 = vmatpush1.msra.mxu0 %v5922
        %5988 = vmatprep.subr.mxu0 %v5925
        %5989 = vmatpush1.msra.mxu0 %v5924
        %5990 = vmatprep.mubr.f32.mxu0 %v805
        %5991 = vmatmul.mubr.f32.gmra.mrb[0].mxu0 %v803
        %v5992 = vpop.f32.mrb[0].mxu0
        %v5993 = vadd.f32 0.0, %v5992
        %v5994 = vpop.f32.mrb[0].mxu0
        %v5995 = vadd.f32 0.0, %v5994
        %5996 = vmatprep.mubr.f32.mxu0 %v811
        %5997 = vmatmul.mubr.f32.gmra.mrb[0].mxu0 %v809
        %v5998 = vpop.f32.mrb[0].mxu0
        %v5999 = vadd.f32 0.0, %v5998
        %v6000 = vpop.f32.mrb[0].mxu0
        %v6001 = vadd.f32 0.0, %v6000
        %6002 = vdwg.mxu0
        %v6003 = vadd.f32 %v5851, %v5993
        %v6004 = vadd.f32 %v5853, %v5995
        %v6005 = vadd.f32 %v5857, %v5999
        %v6006 = vadd.f32 %v5859, %v6001
        %6007 = vmatprep.subr.mxu0 %v5575
        %6008 = vmatpush1.msra.mxu0 %v5574
        %6009 = vmatprep.subr.mxu0 %v5577
        %6010 = vmatpush1.msra.mxu0 %v5576
        %6011 = vmatprep.subr.mxu0 0.0
        %6012 = vmatpush1.msra.mxu0 0.0
        %6013 = vmatprep.subr.mxu0 0.0
        %6014 = vmatpush1.msra.mxu0 0.0
        %6015 = vmatprep.subr.mxu0 0.0
        %6016 = vmatpush1.msra.mxu0 0.0
        %6017 = vmatprep.subr.mxu0 0.0
        %6018 = vmatpush1.msra.mxu0 0.0
        %6019 = vmatprep.subr.mxu0 0.0
        %6020 = vmatpush1.msra.mxu0 0.0
        %6021 = vmatprep.subr.mxu0 0.0
        %6022 = vmatpush1.msra.mxu0 0.0
        %6023 = vmatprep.subr.mxu0 0.0
        %6024 = vmatpush1.msra.mxu0 0.0
        %6025 = vmatprep.subr.mxu0 0.0
        %6026 = vmatpush1.msra.mxu0 0.0
        %6027 = vmatprep.subr.mxu0 0.0
        %6028 = vmatpush1.msra.mxu0 0.0
        %6029 = vmatprep.subr.mxu0 0.0
        %6030 = vmatpush1.msra.mxu0 0.0
        %6031 = vmatprep.subr.mxu0 0.0
        %6032 = vmatpush1.msra.mxu0 0.0
        %6033 = vmatprep.subr.mxu0 0.0
        %6034 = vmatpush1.msra.mxu0 0.0
        %6035 = vmatprep.subr.mxu0 0.0
        %6036 = vmatpush1.msra.mxu0 0.0
        %6037 = vmatprep.subr.mxu0 0.0
        %6038 = vmatpush1.msra.mxu0 0.0
        %6039 = vmatprep.subr.mxu0 0.0
        %6040 = vmatpush1.msra.mxu0 0.0
        %6041 = vmatprep.subr.mxu0 0.0
        %6042 = vmatpush1.msra.mxu0 0.0
        %6043 = vmatprep.subr.mxu0 0.0
        %6044 = vmatpush1.msra.mxu0 0.0
        %6045 = vmatprep.subr.mxu0 0.0
        %6046 = vmatpush1.msra.mxu0 0.0
        %6047 = vmatprep.subr.mxu0 0.0
        %6048 = vmatpush1.msra.mxu0 0.0
        %6049 = vmatprep.subr.mxu0 0.0
        %6050 = vmatpush1.msra.mxu0 0.0
        %6051 = vmatprep.subr.mxu0 0.0
        %6052 = vmatpush1.msra.mxu0 0.0
        %6053 = vmatprep.subr.mxu0 0.0
        %6054 = vmatpush1.msra.mxu0 0.0
        %6055 = vmatprep.subr.mxu0 0.0
        %6056 = vmatpush1.msra.mxu0 0.0
        %6057 = vmatprep.subr.mxu0 0.0
        %6058 = vmatpush1.msra.mxu0 0.0
        %6059 = vmatprep.subr.mxu0 0.0
        %6060 = vmatpush1.msra.mxu0 0.0
        %6061 = vmatprep.subr.mxu0 0.0
        %6062 = vmatpush1.msra.mxu0 0.0
        %6063 = vmatprep.subr.mxu0 0.0
        %6064 = vmatpush1.msra.mxu0 0.0
        %6065 = vmatprep.subr.mxu0 0.0
        %6066 = vmatpush1.msra.mxu0 0.0
        %6067 = vmatprep.subr.mxu0 0.0
        %6068 = vmatpush1.msra.mxu0 0.0
        %6069 = vmatprep.subr.mxu0 0.0
        %6070 = vmatpush1.msra.mxu0 0.0
        %6071 = vmatprep.mubr.f32.mxu0 0.0
        %6072 = vmatmul.mubr.f32.gmra.mrb[0].mxu0 %v645
        %v6073 = vpop.f32.mrb[0].mxu0
        %v6074 = vadd.f32 0.0, %v6073
        %v6075 = vpop.f32.mrb[0].mxu0
        %v6076 = vadd.f32 0.0, %v6075
        %6077 = vmatprep.mubr.f32.mxu0 0.0
        %6078 = vmatmul.mubr.f32.gmra.mrb[0].mxu0 %v648
        %v6079 = vpop.f32.mrb[0].mxu0
        %v6080 = vadd.f32 0.0, %v6079
        %v6081 = vpop.f32.mrb[0].mxu0
        %v6082 = vadd.f32 0.0, %v6081
        %6083 = vdwg.mxu0
        %6084 = vmatprep.subr.mxu0 %v5575
        %6085 = vmatpush1.msra.mxu0 %v5574
        %6086 = vmatprep.subr.mxu0 %v5577
        %6087 = vmatpush1.msra.mxu0 %v5576
        %6088 = vmatprep.subr.mxu0 0.0
        %6089 = vmatpush1.msra.mxu0 0.0
        %6090 = vmatprep.subr.mxu0 0.0
        %6091 = vmatpush1.msra.mxu0 0.0
        %6092 = vmatprep.subr.mxu0 0.0
        %6093 = vmatpush1.msra.mxu0 0.0
        %6094 = vmatprep.subr.mxu0 0.0
        %6095 = vmatpush1.msra.mxu0 0.0
        %6096 = vmatprep.subr.mxu0 0.0
        %6097 = vmatpush1.msra.mxu0 0.0
        %6098 = vmatprep.subr.mxu0 0.0
        %6099 = vmatpush1.msra.mxu0 0.0
        %6100 = vmatprep.subr.mxu0 0.0
        %6101 = vmatpush1.msra.mxu0 0.0
        %6102 = vmatprep.subr.mxu0 0.0
        %6103 = vmatpush1.msra.mxu0 0.0
        %6104 = vmatprep.subr.mxu0 0.0
        %6105 = vmatpush1.msra.mxu0 0.0
        %6106 = vmatprep.subr.mxu0 0.0
        %6107 = vmatpush1.msra.mxu0 0.0
        %6108 = vmatprep.subr.mxu0 0.0
        %6109 = vmatpush1.msra.mxu0 0.0
        %6110 = vmatprep.subr.mxu0 0.0
        %6111 = vmatpush1.msra.mxu0 0.0
        %6112 = vmatprep.subr.mxu0 0.0
        %6113 = vmatpush1.msra.mxu0 0.0
        %6114 = vmatprep.subr.mxu0 0.0
        %6115 = vmatpush1.msra.mxu0 0.0
        %6116 = vmatprep.subr.mxu0 0.0
        %6117 = vmatpush1.msra.mxu0 0.0
        %6118 = vmatprep.subr.mxu0 0.0
        %6119 = vmatpush1.msra.mxu0 0.0
        %6120 = vmatprep.subr.mxu0 0.0
        %6121 = vmatpush1.msra.mxu0 0.0
        %6122 = vmatprep.subr.mxu0 0.0
        %6123 = vmatpush1.msra.mxu0 0.0
        %6124 = vmatprep.subr.mxu0 0.0
        %6125 = vmatpush1.msra.mxu0 0.0
        %6126 = vmatprep.subr.mxu0 0.0
        %6127 = vmatpush1.msra.mxu0 0.0
        %6128 = vmatprep.subr.mxu0 0.0
        %6129 = vmatpush1.msra.mxu0 0.0
        %6130 = vmatprep.subr.mxu0 0.0
        %6131 = vmatpush1.msra.mxu0 0.0
        %6132 = vmatprep.subr.mxu0 0.0
        %6133 = vmatpush1.msra.mxu0 0.0
        %6134 = vmatprep.subr.mxu0 0.0
        %6135 = vmatpush1.msra.mxu0 0.0
        %6136 = vmatprep.subr.mxu0 0.0
        %6137 = vmatpush1.msra.mxu0 0.0
        %6138 = vmatprep.subr.mxu0 0.0
        %6139 = vmatpush1.msra.mxu0 0.0
        %6140 = vmatprep.subr.mxu0 0.0
        %6141 = vmatpush1.msra.mxu0 0.0
        %6142 = vmatprep.subr.mxu0 0.0
        %6143 = vmatpush1.msra.mxu0 0.0
        %6144 = vmatprep.subr.mxu0 0.0
        %6145 = vmatpush1.msra.mxu0 0.0
        %6146 = vmatprep.subr.mxu0 0.0
        %6147 = vmatpush1.msra.mxu0 0.0
        %6148 = vmatprep.mubr.f32.mxu0 0.0
        %6149 = vmatmul.mubr.f32.gmra.mrb[0].mxu0 %v731
        %v6150 = vpop.f32.mrb[0].mxu0
        %v6151 = vadd.f32 0.0, %v6150
        %v6152 = vpop.f32.mrb[0].mxu0
        %v6153 = vadd.f32 0.0, %v6152
        %6154 = vmatprep.mubr.f32.mxu0 0.0
        %6155 = vmatmul.mubr.f32.gmra.mrb[0].mxu0 %v734
        %v6156 = vpop.f32.mrb[0].mxu0
        %v6157 = vadd.f32 0.0, %v6156
        %v6158 = vpop.f32.mrb[0].mxu0
        %v6159 = vadd.f32 0.0, %v6158
        %6160 = vdwg.mxu0
        %v6161 = vld [vmem:[#allocation14] sm:$0xff]
        %v6162 = vld [vmem:[#allocation14 + $0x8] sm:$0xff]
        %v6163 = vld [vmem:[#allocation14 + $0x10] sm:$0xff]
        %v6164 = vld [vmem:[#allocation14 + $0x18] sm:$0xff]
        %v6165 = vld [vmem:[#allocation14 + $0x20] sm:$0xff]
        %v6166 = vld [vmem:[#allocation14 + $0x28] sm:$0xff]
        %v6167 = vld [vmem:[#allocation14 + $0x30] sm:$0xff]
        %v6168 = vld [vmem:[#allocation14 + $0x38] sm:$0xff]
        %v6169 = vld [vmem:[#allocation14 + $0x40] sm:$0xff]
        %v6170 = vld [vmem:[#allocation14 + $0x48] sm:$0xff]
        %v6171 = vld [vmem:[#allocation14 + $0x50] sm:$0xff]
        %v6172 = vld [vmem:[#allocation14 + $0x58] sm:$0xff]
        %v6173 = vld [vmem:[#allocation14 + $0x60] sm:$0xff]
        %v6174 = vld [vmem:[#allocation14 + $0x68] sm:$0xff]
        %v6175 = vld [vmem:[#allocation14 + $0x70] sm:$0xff]
        %v6176 = vld [vmem:[#allocation14 + $0x78] sm:$0xff]
        %v6177 = vld [vmem:[#allocation14 + $0x80] sm:$0xff]
        %v6178 = vld [vmem:[#allocation14 + $0x88] sm:$0xff]
        %v6179 = vld [vmem:[#allocation14 + $0x90] sm:$0xff]
        %v6180 = vld [vmem:[#allocation14 + $0x98] sm:$0xff]
        %v6181 = vld [vmem:[#allocation14 + $0xa0] sm:$0xff]
        %v6182 = vld [vmem:[#allocation14 + $0xa8] sm:$0xff]
        %v6183 = vld [vmem:[#allocation14 + $0xb0] sm:$0xff]
        %v6184 = vld [vmem:[#allocation14 + $0xb8] sm:$0xff]
        %v6185 = vld [vmem:[#allocation14 + $0xc0] sm:$0xff]
        %v6186 = vld [vmem:[#allocation14 + $0xc8] sm:$0xff]
        %v6187 = vld [vmem:[#allocation14 + $0xd0] sm:$0xff]
        %v6188 = vld [vmem:[#allocation14 + $0xd8] sm:$0xff]
        %v6189 = vld [vmem:[#allocation14 + $0xe0] sm:$0xff]
        %v6190 = vld [vmem:[#allocation14 + $0xe8] sm:$0xff]
        %v6191 = vld [vmem:[#allocation14 + $0xf0] sm:$0xff]
        %v6192 = vld [vmem:[#allocation14 + $0xf8] sm:$0xff]
        %v6193 = vld [vmem:[#allocation14 + $0x100] sm:$0xff]
        %v6194 = vld [vmem:[#allocation14 + $0x108] sm:$0xff]
        %v6195 = vld [vmem:[#allocation14 + $0x110] sm:$0xff]
        %v6196 = vld [vmem:[#allocation14 + $0x118] sm:$0xff]
        %v6197 = vld [vmem:[#allocation14 + $0x120] sm:$0xff]
        %v6198 = vld [vmem:[#allocation14 + $0x128] sm:$0xff]
        %v6199 = vld [vmem:[#allocation14 + $0x130] sm:$0xff]
        %v6200 = vld [vmem:[#allocation14 + $0x138] sm:$0xff]
        %v6201 = vld [vmem:[#allocation14 + $0x140] sm:$0xff]
        %v6202 = vld [vmem:[#allocation14 + $0x148] sm:$0xff]
        %v6203 = vld [vmem:[#allocation14 + $0x150] sm:$0xff]
        %v6204 = vld [vmem:[#allocation14 + $0x158] sm:$0xff]
        %v6205 = vld [vmem:[#allocation14 + $0x160] sm:$0xff]
        %v6206 = vld [vmem:[#allocation14 + $0x168] sm:$0xff]
        %v6207 = vld [vmem:[#allocation14 + $0x170] sm:$0xff]
        %v6208 = vld [vmem:[#allocation14 + $0x178] sm:$0xff]
        %v6209 = vld [vmem:[#allocation14 + $0x180] sm:$0xff]
        %v6210 = vld [vmem:[#allocation14 + $0x188] sm:$0xff]
        %v6211 = vld [vmem:[#allocation14 + $0x190] sm:$0xff]
        %v6212 = vld [vmem:[#allocation14 + $0x198] sm:$0xff]
        %v6213 = vld [vmem:[#allocation14 + $0x1a0] sm:$0xff]
        %v6214 = vld [vmem:[#allocation14 + $0x1a8] sm:$0xff]
        %v6215 = vld [vmem:[#allocation14 + $0x1b0] sm:$0xff]
        %v6216 = vld [vmem:[#allocation14 + $0x1b8] sm:$0xff]
        %v6217 = vld [vmem:[#allocation14 + $0x1c0] sm:$0xff]
        %v6218 = vld [vmem:[#allocation14 + $0x1c8] sm:$0xff]
        %v6219 = vld [vmem:[#allocation14 + $0x1d0] sm:$0xff]
        %v6220 = vld [vmem:[#allocation14 + $0x1d8] sm:$0xff]
        %v6221 = vld [vmem:[#allocation14 + $0x1e0] sm:$0xff]
        %v6222 = vld [vmem:[#allocation14 + $0x1e8] sm:$0xff]
        %v6223 = vld [vmem:[#allocation14 + $0x1f0] sm:$0xff]
        %v6224 = vld [vmem:[#allocation14 + $0x1f8] sm:$0xff]
        %s6225 = scalar_lea.vmem [#allocation14], 512
        %v6226 = vld [vmem:[%s6225] sm:$0xff]
        %v6227 = vld [vmem:[%s6225 + $0x8] sm:$0xff]
        %v6228 = vld [vmem:[%s6225 + $0x10] sm:$0xff]
        %v6229 = vld [vmem:[%s6225 + $0x18] sm:$0xff]
        %v6230 = vld [vmem:[%s6225 + $0x20] sm:$0xff]
        %v6231 = vld [vmem:[%s6225 + $0x28] sm:$0xff]
        %v6232 = vld [vmem:[%s6225 + $0x30] sm:$0xff]
        %v6233 = vld [vmem:[%s6225 + $0x38] sm:$0xff]
        %v6234 = vld [vmem:[%s6225 + $0x40] sm:$0xff]
        %v6235 = vld [vmem:[%s6225 + $0x48] sm:$0xff]
        %v6236 = vld [vmem:[%s6225 + $0x50] sm:$0xff]
        %v6237 = vld [vmem:[%s6225 + $0x58] sm:$0xff]
        %v6238 = vld [vmem:[%s6225 + $0x60] sm:$0xff]
        %v6239 = vld [vmem:[%s6225 + $0x68] sm:$0xff]
        %v6240 = vld [vmem:[%s6225 + $0x70] sm:$0xff]
        %v6241 = vld [vmem:[%s6225 + $0x78] sm:$0xff]
        %v6242 = vld [vmem:[%s6225 + $0x80] sm:$0xff]
        %v6243 = vld [vmem:[%s6225 + $0x88] sm:$0xff]
        %v6244 = vld [vmem:[%s6225 + $0x90] sm:$0xff]
        %v6245 = vld [vmem:[%s6225 + $0x98] sm:$0xff]
        %v6246 = vld [vmem:[%s6225 + $0xa0] sm:$0xff]
        %v6247 = vld [vmem:[%s6225 + $0xa8] sm:$0xff]
        %v6248 = vld [vmem:[%s6225 + $0xb0] sm:$0xff]
        %v6249 = vld [vmem:[%s6225 + $0xb8] sm:$0xff]
        %v6250 = vld [vmem:[%s6225 + $0xc0] sm:$0xff]
        %v6251 = vld [vmem:[%s6225 + $0xc8] sm:$0xff]
        %v6252 = vld [vmem:[%s6225 + $0xd0] sm:$0xff]
        %v6253 = vld [vmem:[%s6225 + $0xd8] sm:$0xff]
        %v6254 = vld [vmem:[%s6225 + $0xe0] sm:$0xff]
        %v6255 = vld [vmem:[%s6225 + $0xe8] sm:$0xff]
        %v6256 = vld [vmem:[%s6225 + $0xf0] sm:$0xff]
        %v6257 = vld [vmem:[%s6225 + $0xf8] sm:$0xff]
        %v6258 = vld [vmem:[%s6225 + $0x100] sm:$0xff]
        %v6259 = vld [vmem:[%s6225 + $0x108] sm:$0xff]
        %v6260 = vld [vmem:[%s6225 + $0x110] sm:$0xff]
        %v6261 = vld [vmem:[%s6225 + $0x118] sm:$0xff]
        %v6262 = vld [vmem:[%s6225 + $0x120] sm:$0xff]
        %v6263 = vld [vmem:[%s6225 + $0x128] sm:$0xff]
        %v6264 = vld [vmem:[%s6225 + $0x130] sm:$0xff]
        %v6265 = vld [vmem:[%s6225 + $0x138] sm:$0xff]
        %v6266 = vld [vmem:[%s6225 + $0x140] sm:$0xff]
        %v6267 = vld [vmem:[%s6225 + $0x148] sm:$0xff]
        %v6268 = vld [vmem:[%s6225 + $0x150] sm:$0xff]
        %v6269 = vld [vmem:[%s6225 + $0x158] sm:$0xff]
        %v6270 = vld [vmem:[%s6225 + $0x160] sm:$0xff]
        %v6271 = vld [vmem:[%s6225 + $0x168] sm:$0xff]
        %v6272 = vld [vmem:[%s6225 + $0x170] sm:$0xff]
        %v6273 = vld [vmem:[%s6225 + $0x178] sm:$0xff]
        %v6274 = vld [vmem:[%s6225 + $0x180] sm:$0xff]
        %v6275 = vld [vmem:[%s6225 + $0x188] sm:$0xff]
        %v6276 = vld [vmem:[%s6225 + $0x190] sm:$0xff]
        %v6277 = vld [vmem:[%s6225 + $0x198] sm:$0xff]
        %v6278 = vld [vmem:[%s6225 + $0x1a0] sm:$0xff]
        %v6279 = vld [vmem:[%s6225 + $0x1a8] sm:$0xff]
        %v6280 = vld [vmem:[%s6225 + $0x1b0] sm:$0xff]
        %v6281 = vld [vmem:[%s6225 + $0x1b8] sm:$0xff]
        %v6282 = vld [vmem:[%s6225 + $0x1c0] sm:$0xff]
        %v6283 = vld [vmem:[%s6225 + $0x1c8] sm:$0xff]
        %v6284 = vld [vmem:[%s6225 + $0x1d0] sm:$0xff]
        %v6285 = vld [vmem:[%s6225 + $0x1d8] sm:$0xff]
        %v6286 = vld [vmem:[%s6225 + $0x1e0] sm:$0xff]
        %v6287 = vld [vmem:[%s6225 + $0x1e8] sm:$0xff]
        %v6288 = vld [vmem:[%s6225 + $0x1f0] sm:$0xff]
        %v6289 = vld [vmem:[%s6225 + $0x1f8] sm:$0xff]
        %6290 = vmatprep.subr.mxu0 %v6227
        %6291 = vmatpush1.msra.mxu0 %v6226
        %6292 = vmatprep.subr.mxu0 %v6229
        %6293 = vmatpush1.msra.mxu0 %v6228
        %6294 = vmatprep.subr.mxu0 %v6231
        %6295 = vmatpush1.msra.mxu0 %v6230
        %6296 = vmatprep.subr.mxu0 %v6233
        %6297 = vmatpush1.msra.mxu0 %v6232
        %6298 = vmatprep.subr.mxu0 %v6235
        %6299 = vmatpush1.msra.mxu0 %v6234
        %6300 = vmatprep.subr.mxu0 %v6237
        %6301 = vmatpush1.msra.mxu0 %v6236
        %6302 = vmatprep.subr.mxu0 %v6239
        %6303 = vmatpush1.msra.mxu0 %v6238
        %6304 = vmatprep.subr.mxu0 %v6241
        %6305 = vmatpush1.msra.mxu0 %v6240
        %6306 = vmatprep.subr.mxu0 %v6243
        %6307 = vmatpush1.msra.mxu0 %v6242
        %6308 = vmatprep.subr.mxu0 %v6245
        %6309 = vmatpush1.msra.mxu0 %v6244
        %6310 = vmatprep.subr.mxu0 %v6247
        %6311 = vmatpush1.msra.mxu0 %v6246
        %6312 = vmatprep.subr.mxu0 %v6249
        %6313 = vmatpush1.msra.mxu0 %v6248
        %6314 = vmatprep.subr.mxu0 %v6251
        %6315 = vmatpush1.msra.mxu0 %v6250
        %6316 = vmatprep.subr.mxu0 %v6253
        %6317 = vmatpush1.msra.mxu0 %v6252
        %6318 = vmatprep.subr.mxu0 %v6255
        %6319 = vmatpush1.msra.mxu0 %v6254
        %6320 = vmatprep.subr.mxu0 %v6257
        %6321 = vmatpush1.msra.mxu0 %v6256
        %6322 = vmatprep.subr.mxu0 %v6259
        %6323 = vmatpush1.msra.mxu0 %v6258
        %6324 = vmatprep.subr.mxu0 %v6261
        %6325 = vmatpush1.msra.mxu0 %v6260
        %6326 = vmatprep.subr.mxu0 %v6263
        %6327 = vmatpush1.msra.mxu0 %v6262
        %6328 = vmatprep.subr.mxu0 %v6265
        %6329 = vmatpush1.msra.mxu0 %v6264
        %6330 = vmatprep.subr.mxu0 %v6267
        %6331 = vmatpush1.msra.mxu0 %v6266
        %6332 = vmatprep.subr.mxu0 %v6269
        %6333 = vmatpush1.msra.mxu0 %v6268
        %6334 = vmatprep.subr.mxu0 %v6271
        %6335 = vmatpush1.msra.mxu0 %v6270
        %6336 = vmatprep.subr.mxu0 %v6273
        %6337 = vmatpush1.msra.mxu0 %v6272
        %6338 = vmatprep.subr.mxu0 %v6275
        %6339 = vmatpush1.msra.mxu0 %v6274
        %6340 = vmatprep.subr.mxu0 %v6277
        %6341 = vmatpush1.msra.mxu0 %v6276
        %6342 = vmatprep.subr.mxu0 %v6279
        %6343 = vmatpush1.msra.mxu0 %v6278
        %6344 = vmatprep.subr.mxu0 %v6281
        %6345 = vmatpush1.msra.mxu0 %v6280
        %6346 = vmatprep.subr.mxu0 %v6283
        %6347 = vmatpush1.msra.mxu0 %v6282
        %6348 = vmatprep.subr.mxu0 %v6285
        %6349 = vmatpush1.msra.mxu0 %v6284
        %6350 = vmatprep.subr.mxu0 %v6287
        %6351 = vmatpush1.msra.mxu0 %v6286
        %6352 = vmatprep.subr.mxu0 %v6289
        %6353 = vmatpush1.msra.mxu0 %v6288
        %6354 = vmatprep.mubr.f32.mxu0 %v5575
        %6355 = vmatmul.mubr.f32.gmra.mrb[0].mxu0 %v5574
        %v6356 = vpop.f32.mrb[0].mxu0
        %v6357 = vadd.f32 0.0, %v6356
        %v6358 = vpop.f32.mrb[0].mxu0
        %v6359 = vadd.f32 0.0, %v6358
        %6360 = vmatprep.mubr.f32.mxu0 %v5577
        %6361 = vmatmul.mubr.f32.gmra.mrb[0].mxu0 %v5576
        %v6362 = vpop.f32.mrb[0].mxu0
        %v6363 = vadd.f32 0.0, %v6362
        %v6364 = vpop.f32.mrb[0].mxu0
        %v6365 = vadd.f32 0.0, %v6364
        %6366 = vdwg.mxu0
        %6367 = vmatprep.subr.mxu0 %v6162
        %6368 = vmatpush1.msra.mxu0 %v6161
        %6369 = vmatprep.subr.mxu0 %v6164
        %6370 = vmatpush1.msra.mxu0 %v6163
        %6371 = vmatprep.subr.mxu0 %v6166
        %6372 = vmatpush1.msra.mxu0 %v6165
        %6373 = vmatprep.subr.mxu0 %v6168
        %6374 = vmatpush1.msra.mxu0 %v6167
        %6375 = vmatprep.subr.mxu0 %v6170
        %6376 = vmatpush1.msra.mxu0 %v6169
        %6377 = vmatprep.subr.mxu0 %v6172
        %6378 = vmatpush1.msra.mxu0 %v6171
        %6379 = vmatprep.subr.mxu0 %v6174
        %6380 = vmatpush1.msra.mxu0 %v6173
        %6381 = vmatprep.subr.mxu0 %v6176
        %6382 = vmatpush1.msra.mxu0 %v6175
        %6383 = vmatprep.subr.mxu0 %v6178
        %6384 = vmatpush1.msra.mxu0 %v6177
        %6385 = vmatprep.subr.mxu0 %v6180
        %6386 = vmatpush1.msra.mxu0 %v6179
        %6387 = vmatprep.subr.mxu0 %v6182
        %6388 = vmatpush1.msra.mxu0 %v6181
        %6389 = vmatprep.subr.mxu0 %v6184
        %6390 = vmatpush1.msra.mxu0 %v6183
        %6391 = vmatprep.subr.mxu0 %v6186
        %6392 = vmatpush1.msra.mxu0 %v6185
        %6393 = vmatprep.subr.mxu0 %v6188
        %6394 = vmatpush1.msra.mxu0 %v6187
        %6395 = vmatprep.subr.mxu0 %v6190
        %6396 = vmatpush1.msra.mxu0 %v6189
        %6397 = vmatprep.subr.mxu0 %v6192
        %6398 = vmatpush1.msra.mxu0 %v6191
        %6399 = vmatprep.subr.mxu0 %v6194
        %6400 = vmatpush1.msra.mxu0 %v6193
        %6401 = vmatprep.subr.mxu0 %v6196
        %6402 = vmatpush1.msra.mxu0 %v6195
        %6403 = vmatprep.subr.mxu0 %v6198
        %6404 = vmatpush1.msra.mxu0 %v6197
        %6405 = vmatprep.subr.mxu0 %v6200
        %6406 = vmatpush1.msra.mxu0 %v6199
        %6407 = vmatprep.subr.mxu0 %v6202
        %6408 = vmatpush1.msra.mxu0 %v6201
        %6409 = vmatprep.subr.mxu0 %v6204
        %6410 = vmatpush1.msra.mxu0 %v6203
        %6411 = vmatprep.subr.mxu0 %v6206
        %6412 = vmatpush1.msra.mxu0 %v6205
        %6413 = vmatprep.subr.mxu0 %v6208
        %6414 = vmatpush1.msra.mxu0 %v6207
        %6415 = vmatprep.subr.mxu0 %v6210
        %6416 = vmatpush1.msra.mxu0 %v6209
        %6417 = vmatprep.subr.mxu0 %v6212
        %6418 = vmatpush1.msra.mxu0 %v6211
        %6419 = vmatprep.subr.mxu0 %v6214
        %6420 = vmatpush1.msra.mxu0 %v6213
        %6421 = vmatprep.subr.mxu0 %v6216
        %6422 = vmatpush1.msra.mxu0 %v6215
        %6423 = vmatprep.subr.mxu0 %v6218
        %6424 = vmatpush1.msra.mxu0 %v6217
        %6425 = vmatprep.subr.mxu0 %v6220
        %6426 = vmatpush1.msra.mxu0 %v6219
        %6427 = vmatprep.subr.mxu0 %v6222
        %6428 = vmatpush1.msra.mxu0 %v6221
        %6429 = vmatprep.subr.mxu0 %v6224
        %6430 = vmatpush1.msra.mxu0 %v6223
        %6431 = vmatprep.mubr.f32.mxu0 %v6076
        %6432 = vmatmul.mubr.f32.gmra.mrb[0].mxu0 %v6074
        %v6433 = vpop.f32.mrb[0].mxu0
        %v6434 = vadd.f32 %v6357, %v6433
        %v6435 = vpop.f32.mrb[0].mxu0
        %v6436 = vadd.f32 %v6359, %v6435
        %6437 = vmatprep.mubr.f32.mxu0 %v6082
        %6438 = vmatmul.mubr.f32.gmra.mrb[0].mxu0 %v6080
        %v6439 = vpop.f32.mrb[0].mxu0
        %v6440 = vadd.f32 %v6363, %v6439
        %v6441 = vpop.f32.mrb[0].mxu0
        %v6442 = vadd.f32 %v6365, %v6441
        %6443 = vdwg.mxu0
        %s6444 = scalar_lea.vmem [#allocation14], 1024
        %v6445 = vld [vmem:[%s6444] sm:$0xff]
        %v6446 = vld [vmem:[%s6444 + $0x8] sm:$0xff]
        %v6447 = vld [vmem:[%s6444 + $0x10] sm:$0xff]
        %v6448 = vld [vmem:[%s6444 + $0x18] sm:$0xff]
        %v6449 = vld [vmem:[%s6444 + $0x20] sm:$0xff]
        %v6450 = vld [vmem:[%s6444 + $0x28] sm:$0xff]
        %v6451 = vld [vmem:[%s6444 + $0x30] sm:$0xff]
        %v6452 = vld [vmem:[%s6444 + $0x38] sm:$0xff]
        %v6453 = vld [vmem:[%s6444 + $0x40] sm:$0xff]
        %v6454 = vld [vmem:[%s6444 + $0x48] sm:$0xff]
        %v6455 = vld [vmem:[%s6444 + $0x50] sm:$0xff]
        %v6456 = vld [vmem:[%s6444 + $0x58] sm:$0xff]
        %v6457 = vld [vmem:[%s6444 + $0x60] sm:$0xff]
        %v6458 = vld [vmem:[%s6444 + $0x68] sm:$0xff]
        %v6459 = vld [vmem:[%s6444 + $0x70] sm:$0xff]
        %v6460 = vld [vmem:[%s6444 + $0x78] sm:$0xff]
        %v6461 = vld [vmem:[%s6444 + $0x80] sm:$0xff]
        %v6462 = vld [vmem:[%s6444 + $0x88] sm:$0xff]
        %v6463 = vld [vmem:[%s6444 + $0x90] sm:$0xff]
        %v6464 = vld [vmem:[%s6444 + $0x98] sm:$0xff]
        %v6465 = vld [vmem:[%s6444 + $0xa0] sm:$0xff]
        %v6466 = vld [vmem:[%s6444 + $0xa8] sm:$0xff]
        %v6467 = vld [vmem:[%s6444 + $0xb0] sm:$0xff]
        %v6468 = vld [vmem:[%s6444 + $0xb8] sm:$0xff]
        %v6469 = vld [vmem:[%s6444 + $0xc0] sm:$0xff]
        %v6470 = vld [vmem:[%s6444 + $0xc8] sm:$0xff]
        %v6471 = vld [vmem:[%s6444 + $0xd0] sm:$0xff]
        %v6472 = vld [vmem:[%s6444 + $0xd8] sm:$0xff]
        %v6473 = vld [vmem:[%s6444 + $0xe0] sm:$0xff]
        %v6474 = vld [vmem:[%s6444 + $0xe8] sm:$0xff]
        %v6475 = vld [vmem:[%s6444 + $0xf0] sm:$0xff]
        %v6476 = vld [vmem:[%s6444 + $0xf8] sm:$0xff]
        %v6477 = vld [vmem:[%s6444 + $0x100] sm:$0xff]
        %v6478 = vld [vmem:[%s6444 + $0x108] sm:$0xff]
        %v6479 = vld [vmem:[%s6444 + $0x110] sm:$0xff]
        %v6480 = vld [vmem:[%s6444 + $0x118] sm:$0xff]
        %v6481 = vld [vmem:[%s6444 + $0x120] sm:$0xff]
        %v6482 = vld [vmem:[%s6444 + $0x128] sm:$0xff]
        %v6483 = vld [vmem:[%s6444 + $0x130] sm:$0xff]
        %v6484 = vld [vmem:[%s6444 + $0x138] sm:$0xff]
        %v6485 = vld [vmem:[%s6444 + $0x140] sm:$0xff]
        %v6486 = vld [vmem:[%s6444 + $0x148] sm:$0xff]
        %v6487 = vld [vmem:[%s6444 + $0x150] sm:$0xff]
        %v6488 = vld [vmem:[%s6444 + $0x158] sm:$0xff]
        %v6489 = vld [vmem:[%s6444 + $0x160] sm:$0xff]
        %v6490 = vld [vmem:[%s6444 + $0x168] sm:$0xff]
        %v6491 = vld [vmem:[%s6444 + $0x170] sm:$0xff]
        %v6492 = vld [vmem:[%s6444 + $0x178] sm:$0xff]
        %v6493 = vld [vmem:[%s6444 + $0x180] sm:$0xff]
        %v6494 = vld [vmem:[%s6444 + $0x188] sm:$0xff]
        %v6495 = vld [vmem:[%s6444 + $0x190] sm:$0xff]
        %v6496 = vld [vmem:[%s6444 + $0x198] sm:$0xff]
        %v6497 = vld [vmem:[%s6444 + $0x1a0] sm:$0xff]
        %v6498 = vld [vmem:[%s6444 + $0x1a8] sm:$0xff]
        %v6499 = vld [vmem:[%s6444 + $0x1b0] sm:$0xff]
        %v6500 = vld [vmem:[%s6444 + $0x1b8] sm:$0xff]
        %v6501 = vld [vmem:[%s6444 + $0x1c0] sm:$0xff]
        %v6502 = vld [vmem:[%s6444 + $0x1c8] sm:$0xff]
        %v6503 = vld [vmem:[%s6444 + $0x1d0] sm:$0xff]
        %v6504 = vld [vmem:[%s6444 + $0x1d8] sm:$0xff]
        %v6505 = vld [vmem:[%s6444 + $0x1e0] sm:$0xff]
        %v6506 = vld [vmem:[%s6444 + $0x1e8] sm:$0xff]
        %v6507 = vld [vmem:[%s6444 + $0x1f0] sm:$0xff]
        %v6508 = vld [vmem:[%s6444 + $0x1f8] sm:$0xff]
        %6509 = vmatprep.subr.mxu0 %v6446
        %6510 = vmatpush1.msra.mxu0 %v6445
        %6511 = vmatprep.subr.mxu0 %v6448
        %6512 = vmatpush1.msra.mxu0 %v6447
        %6513 = vmatprep.subr.mxu0 %v6450
        %6514 = vmatpush1.msra.mxu0 %v6449
        %6515 = vmatprep.subr.mxu0 %v6452
        %6516 = vmatpush1.msra.mxu0 %v6451
        %6517 = vmatprep.subr.mxu0 %v6454
        %6518 = vmatpush1.msra.mxu0 %v6453
        %6519 = vmatprep.subr.mxu0 %v6456
        %6520 = vmatpush1.msra.mxu0 %v6455
        %6521 = vmatprep.subr.mxu0 %v6458
        %6522 = vmatpush1.msra.mxu0 %v6457
        %6523 = vmatprep.subr.mxu0 %v6460
        %6524 = vmatpush1.msra.mxu0 %v6459
        %6525 = vmatprep.subr.mxu0 %v6462
        %6526 = vmatpush1.msra.mxu0 %v6461
        %6527 = vmatprep.subr.mxu0 %v6464
        %6528 = vmatpush1.msra.mxu0 %v6463
        %6529 = vmatprep.subr.mxu0 %v6466
        %6530 = vmatpush1.msra.mxu0 %v6465
        %6531 = vmatprep.subr.mxu0 %v6468
        %6532 = vmatpush1.msra.mxu0 %v6467
        %6533 = vmatprep.subr.mxu0 %v6470
        %6534 = vmatpush1.msra.mxu0 %v6469
        %6535 = vmatprep.subr.mxu0 %v6472
        %6536 = vmatpush1.msra.mxu0 %v6471
        %6537 = vmatprep.subr.mxu0 %v6474
        %6538 = vmatpush1.msra.mxu0 %v6473
        %6539 = vmatprep.subr.mxu0 %v6476
        %6540 = vmatpush1.msra.mxu0 %v6475
        %6541 = vmatprep.subr.mxu0 %v6478
        %6542 = vmatpush1.msra.mxu0 %v6477
        %6543 = vmatprep.subr.mxu0 %v6480
        %6544 = vmatpush1.msra.mxu0 %v6479
        %6545 = vmatprep.subr.mxu0 %v6482
        %6546 = vmatpush1.msra.mxu0 %v6481
        %6547 = vmatprep.subr.mxu0 %v6484
        %6548 = vmatpush1.msra.mxu0 %v6483
        %6549 = vmatprep.subr.mxu0 %v6486
        %6550 = vmatpush1.msra.mxu0 %v6485
        %6551 = vmatprep.subr.mxu0 %v6488
        %6552 = vmatpush1.msra.mxu0 %v6487
        %6553 = vmatprep.subr.mxu0 %v6490
        %6554 = vmatpush1.msra.mxu0 %v6489
        %6555 = vmatprep.subr.mxu0 %v6492
        %6556 = vmatpush1.msra.mxu0 %v6491
        %6557 = vmatprep.subr.mxu0 %v6494
        %6558 = vmatpush1.msra.mxu0 %v6493
        %6559 = vmatprep.subr.mxu0 %v6496
        %6560 = vmatpush1.msra.mxu0 %v6495
        %6561 = vmatprep.subr.mxu0 %v6498
        %6562 = vmatpush1.msra.mxu0 %v6497
        %6563 = vmatprep.subr.mxu0 %v6500
        %6564 = vmatpush1.msra.mxu0 %v6499
        %6565 = vmatprep.subr.mxu0 %v6502
        %6566 = vmatpush1.msra.mxu0 %v6501
        %6567 = vmatprep.subr.mxu0 %v6504
        %6568 = vmatpush1.msra.mxu0 %v6503
        %6569 = vmatprep.subr.mxu0 %v6506
        %6570 = vmatpush1.msra.mxu0 %v6505
        %6571 = vmatprep.subr.mxu0 %v6508
        %6572 = vmatpush1.msra.mxu0 %v6507
        %6573 = vmatprep.mubr.f32.mxu0 %v6153
        %6574 = vmatmul.mubr.f32.gmra.mrb[0].mxu0 %v6151
        %v6575 = vpop.f32.mrb[0].mxu0
        %v6576 = vadd.f32 0.0, %v6575
        %v6577 = vpop.f32.mrb[0].mxu0
        %v6578 = vadd.f32 0.0, %v6577
        %6579 = vmatprep.mubr.f32.mxu0 %v6159
        %6580 = vmatmul.mubr.f32.gmra.mrb[0].mxu0 %v6157
        %v6581 = vpop.f32.mrb[0].mxu0
        %v6582 = vadd.f32 0.0, %v6581
        %v6583 = vpop.f32.mrb[0].mxu0
        %v6584 = vadd.f32 0.0, %v6583
        %6585 = vdwg.mxu0
        %v6586 = vadd.f32 %v6434, %v6576
        %v6587 = vadd.f32 %v6436, %v6578
        %v6588 = vadd.f32 %v6440, %v6582
        %v6589 = vadd.f32 %v6442, %v6584
        %v6590 = vadd.f32 %v6003, %v6586
        %v6591 = vadd.f32 %v6004, %v6587
        %v6592 = vadd.f32 %v6005, %v6588
        %v6593 = vadd.f32 %v6006, %v6589
        %v6594 = vld [vmem:[#allocation16] sm:$0x3]
        %v6596 = vlaneseq
        %v6597 = vshrl.u32 %v6596, 7
        %v6598 = vsub.s32 0, %v6597
        %v6599 = vrot.slane %v6594, %v6598
        %v6600 = vlaneseq
        %v6601 = vshrl.u32 %v6600, 7
        %v6602 = vsub.s32 1, %v6601
        %v6603 = vrot.slane %v6594, %v6602
        %v6606 = vadd.f32 %v6590, %v6599
        %v6607 = vadd.f32 %v6591, %v6603
        %v6608 = vadd.f32 %v6592, %v6599
        %v6609 = vadd.f32 %v6593, %v6603
        %v6610 = vadd.f32 %v6606, %v6608
        %v6611 = vrot.slane %v6610, 4
        %v6612 = vadd.f32 %v6610, %v6611
        %v6613 = vrot.slane %v6612, 2
        %v6614 = vadd.f32 %v6612, %v6613
        %v6615 = vrot.slane %v6614, 1
        %v6616 = vadd.f32 %v6614, %v6615
        %v6617 = vadd.f32 %v6607, %v6609
        %v6618 = vrot.slane %v6617, 4
        %v6619 = vadd.f32 %v6617, %v6618
        %v6620 = vrot.slane %v6619, 2
        %v6621 = vadd.f32 %v6619, %v6620
        %v6622 = vrot.slane %v6621, 1
        %v6623 = vadd.f32 %v6621, %v6622
        %v6624 = vld [vmem:[#allocation20] sm:$0x3]
        %v6625 = vld [vmem:[#allocation17] sm:$0x3]
        %v6627 = vlaneseq
        %v6628 = vshrl.u32 %v6627, 7
        %v6629 = vsub.s32 0, %v6628
        %v6630 = vrot.slane %v6625, %v6629
        %v6631 = vlaneseq
        %v6632 = vshrl.u32 %v6631, 7
        %v6633 = vsub.s32 1, %v6632
        %v6634 = vrot.slane %v6625, %v6633
        %v6637 = vmul.f32 %v6616, %v6630
        %v6638 = vmul.f32 %v6623, %v6634
        %vm6639 = vcmask 1040384
        %v6640 = vsel %vm6639, %v6637, 0.0
        %v6641 = vsel %vm6639, %v6638, 0.0
        %v6642 = vadd.f32 %v6640, %v6641
        %6643 = vadd.xlane.f32.xlu0 %v6642
        %v6644 = vpop.xlane.xlu0 %6643
        %v6645 = vmul.f32 %v6644, 0.00390625
        %v6646 = vld [vmem:[#allocation2] sm:$0x1]
        %v6647 = vadd.f32 %v6645, %v6646
        %v6648 = vmax.f32 %v6647, 0.0
        %v6649 = vld [vmem:[#allocation19] sm:$0x3]
        %6651 = vset.pattern.permute.xlu0 0
        %6652 = vperm.xlu0 %6651, %v6648
        %v6653 = vpop.permute.xlu0 %6652
        %v6656 = vlaneseq
        %v6657 = vshrl.u32 %v6656, 7
        %v6658 = vsub.s32 0, %v6657
        %v6659 = vrot.slane %v6649, %v6658
        %v6660 = vlaneseq
        %v6661 = vshrl.u32 %v6660, 7
        %v6662 = vsub.s32 1, %v6661
        %v6663 = vrot.slane %v6649, %v6662
        %v6666 = vmul.f32 %v6653, %v6659
        %v6667 = vmul.f32 %v6653, %v6663
        %v6670 = vcombine.low %v6666, %v6667
        %v6672 = vunpack.c.l.s4 1966171168
        %v6673 = vunpack.c.0.s8 %v6672
        %v6674 = vlaneseq
        %v6675 = vshrl.u32 %v6674, 7
        %v6676 = vsub.s32 %v6673, %v6675
        %v6677 = vrot.slane %v6670, %v6676
        %v6679 = vunpack.c.l.s4 1966171168
        %v6680 = vunpack.c.0.s8 %v6679
        %v6681 = vlaneseq
        %v6682 = vshrl.u32 %v6681, 7
        %v6683 = vsub.s32 %v6680, %v6682
        %v6684 = vrot.slane %v6677, %v6683
        %v6686 = vadd.f32 %v6624, %v6684
        %v6687 = vsub.f32 0.0, %v6686
        %v6688 = vmul.f32 %v6687, 1.442695
        %v6689 = vpow.pop %v6688
        %v6690 = vadd.f32 %v6689, 1.0
        %v6691 = vrcp.pop %v6690
        %v6692 = vmul.f32 1.0, %v6691
        %v6694 = vlaneseq
        %v6695 = vshrl.u32 %v6694, 7
        %v6696 = vsub.s32 0, %v6695
        %v6697 = vrot.slane %v6692, %v6696
        %v6698 = vlaneseq
        %v6699 = vshrl.u32 %v6698, 7
        %v6700 = vsub.s32 1, %v6699
        %v6701 = vrot.slane %v6692, %v6700
        %v6704 = vmul.f32 %v6606, %v6697
        %v6705 = vmul.f32 %v6607, %v6701
        %v6706 = vmul.f32 %v6608, %v6697
        %v6707 = vmul.f32 %v6609, %v6701
        %6708 = vst [vmem:[%s636] sm:$0xff] %v6704
        %6709 = vst [vmem:[%s636 + $0x8] sm:$0xff] %v6705
        %6710 = vst [vmem:[%s636 + $0x10] sm:$0xff] %v6706
        %6711 = vst [vmem:[%s636 + $0x18] sm:$0xff] %v6707
        %p6712 = scmp.lt.s32.totalorder %s34, 1
        %s6713 = scalar_select %p6712, %s34, 1
        %s6714 = smul.addr %s6713, 4
        %s6715 = smul.addr %s6714, 8
        %s6716 = scalar_lea.vmem %s14, %s6715
        // Predicated region
        $region125: #{forward.1} parent=75 // pred_check
          %p6717 = pneg %p351
        $region126: #{forward.1} parent=75 // pred_check_branch
          %6719 = sbr.rel (%p6717) target = $region128
        $region127: #{forward.1} parent=75 // pred_region
          _
        $region128: #{forward.1} parent=75 // pred_fallthru
          _
      $region76: #{forward.1} parent=5 // pred_fallthru
        _
      %p6720 = scmp.le.s32.totalorder 2, %s29
      // Predicated region
      $region129: #{forward.1} parent=5 // pred_check
        %p6721 = pneg %p6720
      $region130: #{forward.1} parent=5 // pred_check_branch
        %6723 = sbr.rel (%p6721) target = $region132
      $region131: #{forward.1} parent=5 // pred_region
        %s6724 = ssub.s32 %s29, 2
        // Predicated region
        $region133: #{forward.1} parent=131 // pred_check
          %p6725 = pneg %p357
        $region134: #{forward.1} parent=131 // pred_check_branch
          %6727 = sbr.rel (%p6725) target = $region136
        $region135: #{forward.1} parent=131 // pred_region
          %p6728 = scmp.lt.s32.totalorder %s35, 1
          %s6729 = scalar_select %p6728, %s35, 1
          %s6730 = smul.addr %s6729, 4
          %s6731 = smul.addr %s6730, 8
          %s6732 = scalar_lea.vmem %s14, %s6731
        $region136: #{forward.1} parent=131 // pred_fallthru
          _
      $region132: #{forward.1} parent=5 // pred_fallthru
        _
    $region6: #{forward.1} parent=1 // loop_footer
      %s33 = sadd.s32 1, %s29
    $region7: #{forward.1} parent=1 // loop_footer_branch
      %28 = sbr.rel target = $region3
    $region8: #{forward.1} parent=1 // loop_exit
      _
    %6733 = vsyncpa [#allocation4], 1
    %s6734 = scalar_lea.sflag [#allocation4], 1
    %6735 = vsyncpa %s6734, 1
    %6736 = vsyncpa [#allocation6], 1
    %6737 = vsyncpa [#allocation9], 1
    %6738 = vsyncpa [#allocation12], 1
    %6739 = vsyncpa [#allocation15], 1
    %6740 = vsyncpa [#allocation18], 1
    %6741 = vsyncpa [#allocation21], 1

</llo_original>
